<compile_context>
chip_gen: v7x
topology: tpu7x:2x2x1
jax: 0.10.0
libtpu: 0.0.40
codegen_flags: <defaults>
</compile_context>

<pallas_src>
import functools

import jax
import jax.numpy as jnp
from jax import lax
from jax.experimental import pallas as pl
from jax.experimental.pallas import tpu as pltpu


def _lane_shift(v, s, n):
    """Returns t with t[:, i] = v[:, (i + s) % n] (static shift, exact semantics)."""
    s = s % n
    if s == 0:
        return v
    return jnp.concatenate([v[:, s:], v[:, :s]], axis=1)


def _attn_kernel(x_ref, w_qkv_ref, b_qkv_ref, w_pe_ref, b_pe_ref,
                 w_proj_ref, b_proj_ref, mask_ref, out_ref,
                 *, num_heads, key_dim, head_dim, img_w, scale):
    C = x_ref.shape[1]
    N = x_ref.shape[2]
    kd, hd = key_dim, head_dim
    nhkd = num_heads * kd

    x = x_ref[0]                                                 # (C, N)

    # ---- fused QKV 1x1 conv (BN folded): one MXU matmul, contraction over C ----
    qkv = jnp.dot(w_qkv_ref[...], x,
                  preferred_element_type=jnp.float32) + b_qkv_ref[...]   # (h, N)
    q_all = qkv[:nhkd, :]                                        # (nh*kd, N)
    k_all = qkv[nhkd:2 * nhkd, :]                                # (nh*kd, N)
    v_all = qkv[2 * nhkd:, :]                                    # (C, N)

    # ---- per-head attention ----
    outs = []
    for h in range(num_heads):
        q_h = q_all[h * kd:(h + 1) * kd, :]                      # (kd, N)
        k_h = k_all[h * kd:(h + 1) * kd, :]                      # (kd, N)
        v_h = v_all[h * hd:(h + 1) * hd, :]                      # (hd, N)

        # logits[i, j] = scale * sum_c q[c, i] * k[c, j]
        logits = lax.dot_general(
            q_h, k_h, (((0,), (0,)), ((), ())),
            preferred_element_type=jnp.float32) * scale          # (N, N)
        m = jnp.max(logits, axis=-1, keepdims=True)
        e = jnp.exp(logits - m)
        attn = e / jnp.sum(e, axis=-1, keepdims=True)            # softmax over j

        # o[d, i] = sum_j v[d, j] * attn[i, j]   (NT matmul, no transpose)
        o_h = lax.dot_general(v_h, attn, (((1,), (1,)), ((), ())),
                              preferred_element_type=jnp.float32)  # (hd, N)
        outs.append(o_h)
    attn_out = jnp.concatenate(outs, axis=0)                     # (C, N)

    # ---- depthwise 3x3 conv (pe) on v, zero padding 1 ----
    # 9 static lane shifts; per-tap validity masks (precomputed in the wrapper)
    # zero out every neighbor that falls outside the HxW image.
    w_pe = w_pe_ref[...]                                         # (C, 9)
    masks = mask_ref[...]                                        # (9, N)
    pe = jnp.broadcast_to(b_pe_ref[...], (C, N))                 # per-channel bias
    tap = 0
    for dy in (-1, 0, 1):
        for dx in (-1, 0, 1):
            s = dy * img_w + dx
            shifted = _lane_shift(v_all, s, N)                   # (C, N)
            pe = pe + w_pe[:, tap:tap + 1] * (shifted * masks[tap:tap + 1, :])
            tap += 1

    # ---- projection 1x1 conv ----
    y = attn_out + pe                                            # (C, N)
    out = jnp.dot(w_proj_ref[...], y,
                  preferred_element_type=jnp.float32) + b_proj_ref[...]
    out_ref[...] = out[None]


def attention_forward(x_nchw, params, num_heads=8, attn_ratio=0.5):
    """x_nchw: (B, C, H, W) float32.  Returns (B, C, H, W)."""
    B, C, H, W = x_nchw.shape
    N = H * W
    head_dim = C // num_heads
    key_dim = int(head_dim * attn_ratio)
    scale = float(key_dim) ** -0.5
    per_head = 2 * key_dim + head_dim
    h_total = C + 2 * key_dim * num_heads

    # NCHW -> (B, C, N): pure reshape, no transpose (lane-dense N everywhere).
    x_flat = x_nchw.reshape(B, C, N).astype(jnp.float32)

    # Permute QKV rows once so the kernel sees [all-q | all-k | all-v].
    q_rows, k_rows, v_rows = [], [], []
    for h in range(num_heads):
        base = h * per_head
        q_rows += list(range(base, base + key_dim))
        k_rows += list(range(base + key_dim, base + 2 * key_dim))
        v_rows += list(range(base + 2 * key_dim, base + per_head))
    perm = jnp.asarray(q_rows + k_rows + v_rows, dtype=jnp.int32)
    w_qkv = params["w_qkv"][perm]
    b_qkv = params["b_qkv"][perm]

    # Per-tap validity masks for the zero-padded depthwise 3x3 conv.
    pos = jnp.arange(N, dtype=jnp.int32)
    row = pos // W
    col = pos % W
    tap_masks = []
    for dy in (-1, 0, 1):
        for dx in (-1, 0, 1):
            ok = ((row + dy >= 0) & (row + dy < H) &
                  (col + dx >= 0) & (col + dx < W))
            tap_masks.append(ok.astype(jnp.float32))
    tap_mask = jnp.stack(tap_masks, axis=0)                      # (9, N)

    kernel = functools.partial(_attn_kernel, num_heads=num_heads,
                               key_dim=key_dim, head_dim=head_dim,
                               img_w=W, scale=scale)

    def full(shape):
        return pl.BlockSpec(shape, lambda b, _n=len(shape): (0,) * _n)

    out = pl.pallas_call(
        kernel,
        out_shape=jax.ShapeDtypeStruct((B, C, N), jnp.float32),
        grid=(B,),
        in_specs=[
            pl.BlockSpec((1, C, N), lambda b: (b, 0, 0)),        # x
            full((h_total, C)), full((h_total, 1)),              # qkv conv (folded)
            full((C, 9)), full((C, 1)),                          # pe depthwise conv
            full((C, C)), full((C, 1)),                          # proj conv
            full((9, N)),                                        # tap validity masks
        ],
        out_specs=pl.BlockSpec((1, C, N), lambda b: (b, 0, 0)),
        compiler_params=pltpu.CompilerParams(
            dimension_semantics=("parallel",)),
    )(x_flat, w_qkv, b_qkv, params["w_pe"], params["b_pe"],
      params["w_proj"], params["b_proj"], tap_mask)

    return out.reshape(B, C, H, W)


def init_params(key, C, num_heads=8, attn_ratio=0.5):
    head_dim = C // num_heads
    key_dim = int(head_dim * attn_ratio)
    h_total = C + 2 * key_dim * num_heads
    ks = jax.random.split(key, 6)
    s = 0.1
    return {
        "w_qkv": s * jax.random.normal(ks[0], (h_total, C), jnp.float32),
        "b_qkv": s * jax.random.normal(ks[1], (h_total, 1), jnp.float32),
        "w_pe": s * jax.random.normal(ks[2], (C, 9), jnp.float32),
        "b_pe": s * jax.random.normal(ks[3], (C, 1), jnp.float32),
        "w_proj": s * jax.random.normal(ks[4], (C, C), jnp.float32),
        "b_proj": s * jax.random.normal(ks[5], (C, 1), jnp.float32),
    }


def reference_attention(x, p, num_heads=8, attn_ratio=0.5):
    """Pure-JAX reference mirroring the PyTorch forward (NCHW)."""
    B, C, H, W = x.shape
    N = H * W
    head_dim = C // num_heads
    key_dim = int(head_dim * attn_ratio)
    scale = float(key_dim) ** -0.5
    hi = jax.lax.Precision.HIGHEST

    xf = x.reshape(B, C, N).astype(jnp.float32)
    qkv = jnp.einsum("oc,bcn->bon", p["w_qkv"], xf, precision=hi) + p["b_qkv"][None]
    qkv = qkv.reshape(B, num_heads, 2 * key_dim + head_dim, N)
    q = qkv[:, :, :key_dim]
    k = qkv[:, :, key_dim:2 * key_dim]
    v = qkv[:, :, 2 * key_dim:]

    attn = jnp.einsum("bhcn,bhcm->bhnm", q, k, precision=hi) * scale
    attn = jax.nn.softmax(attn, axis=-1)
    o = jnp.einsum("bhdm,bhnm->bhdn", v, attn, precision=hi).reshape(B, C, N)

    vimg = v.reshape(B, C, H, W)
    w_pe_conv = p["w_pe"].reshape(C, 1, 3, 3)
    pe = lax.conv_general_dilated(
        vimg, w_pe_conv, window_strides=(1, 1), padding="SAME",
        feature_group_count=C,
        dimension_numbers=("NCHW", "OIHW", "NCHW"))
    pe = pe + p["b_pe"].reshape(1, C, 1, 1)

    y = (o.reshape(B, C, H, W) + pe).reshape(B, C, N)
    out = jnp.einsum("oc,bcn->bon", p["w_proj"], y, precision=hi) + p["b_proj"][None]
    return out.reshape(B, C, H, W)


if __name__ == "__main__":
    B, C, H, W = 2, 64, 16, 16          # num_heads=8 -> head_dim=8, key_dim=4
    num_heads = 8

    key = jax.random.PRNGKey(0)
    kx, kp = jax.random.split(key)
    x = jax.random.normal(kx, (B, C, H, W), jnp.float32)
    params = init_params(kp, C, num_heads)

    fn = jax.jit(functools.partial(attention_forward, params=params,
                                   num_heads=num_heads))
    out = jax.block_until_ready(fn(x))

    ref = jax.block_until_ready(reference_attention(x, params, num_heads))
    assert out.shape == (B, C, H, W)
    err = float(jnp.max(jnp.abs(out - ref)))
    assert err < 2e-3, err

    print("KERNEL_OK")
</pallas_src>

<mosaic_0001>
module attributes {stable_mosaic.version = 11 : i64} {
  func.func @_attn_kernel(%arg0: i32, %arg1: memref<1x64x256xf32, #tpu.memory_space<vmem>>, %arg2: memref<128x64xf32, #tpu.memory_space<vmem>>, %arg3: memref<128x1xf32, #tpu.memory_space<vmem>>, %arg4: memref<64x9xf32, #tpu.memory_space<vmem>>, %arg5: memref<64x1xf32, #tpu.memory_space<vmem>>, %arg6: memref<64x64xf32, #tpu.memory_space<vmem>>, %arg7: memref<64x1xf32, #tpu.memory_space<vmem>>, %arg8: memref<9x256xf32, #tpu.memory_space<vmem>>, %arg9: memref<1x64x256xf32, #tpu.memory_space<vmem>>) attributes {dimension_semantics = [#tpu.dimension_semantics<parallel>], iteration_bounds = array<i64: 2>, scalar_prefetch = 0 : i64, scratch_operands = 0 : i64, tpu.core_type = #tpu.core_type<tc>, window_params = [{transform_indices = @transform_0, window_bounds = array<i64: 1, 64, 256>}, {pipeline_mode = #tpu.pipeline_mode<synchronous>, transform_indices = @transform_1, window_bounds = array<i64: 128, 64>}, {pipeline_mode = #tpu.pipeline_mode<synchronous>, transform_indices = @transform_2, window_bounds = array<i64: 128, 1>}, {pipeline_mode = #tpu.pipeline_mode<synchronous>, transform_indices = @transform_3, window_bounds = array<i64: 64, 9>}, {pipeline_mode = #tpu.pipeline_mode<synchronous>, transform_indices = @transform_4, window_bounds = array<i64: 64, 1>}, {pipeline_mode = #tpu.pipeline_mode<synchronous>, transform_indices = @transform_5, window_bounds = array<i64: 64, 64>}, {pipeline_mode = #tpu.pipeline_mode<synchronous>, transform_indices = @transform_6, window_bounds = array<i64: 64, 1>}, {pipeline_mode = #tpu.pipeline_mode<synchronous>, transform_indices = @transform_7, window_bounds = array<i64: 9, 256>}, {transform_indices = @transform_8, window_bounds = array<i64: 1, 64, 256>}]} {
    %c0 = arith.constant 0 : index
    %c0_0 = arith.constant 0 : index
    %c0_1 = arith.constant 0 : index
    %0 = vector.load %arg1[%c0, %c0_0, %c0_1] : memref<1x64x256xf32, #tpu.memory_space<vmem>>, vector<1x64x256xf32>
    %1 = vector.shape_cast %0 : vector<1x64x256xf32> to vector<64x256xf32>
    %c0_2 = arith.constant 0 : index
    %c0_3 = arith.constant 0 : index
    %2 = vector.load %arg2[%c0_2, %c0_3] : memref<128x64xf32, #tpu.memory_space<vmem>>, vector<128x64xf32>
    %cst = arith.constant dense<0.000000e+00> : vector<128x256xf32>
    %3 = tpu.matmul %2, %1, %cst {dimension_numbers = #tpu.dot_dimension_numbers<[1], [0], [0], [1], [0, 0, 1, 1], [], []>} : vector<128x64xf32>, vector<64x256xf32>, vector<128x256xf32> -> vector<128x256xf32>
    %c0_4 = arith.constant 0 : index
    %c0_5 = arith.constant 0 : index
    %4 = vector.load %arg3[%c0_4, %c0_5] : memref<128x1xf32, #tpu.memory_space<vmem>>, vector<128x1xf32>
    %5 = vector.broadcast %4 : vector<128x1xf32> to vector<128x256xf32>
    %6 = arith.addf %3, %5 : vector<128x256xf32>
    %7 = vector.extract_strided_slice %6 {offsets = [0, 0], sizes = [32, 256], strides = [1, 1]} : vector<128x256xf32> to vector<32x256xf32>
    %8 = vector.extract_strided_slice %6 {offsets = [32, 0], sizes = [32, 256], strides = [1, 1]} : vector<128x256xf32> to vector<32x256xf32>
    %9 = vector.extract_strided_slice %6 {offsets = [64, 0], sizes = [64, 256], strides = [1, 1]} : vector<128x256xf32> to vector<64x256xf32>
    %10 = vector.extract_strided_slice %7 {offsets = [0, 0], sizes = [4, 256], strides = [1, 1]} : vector<32x256xf32> to vector<4x256xf32>
    %11 = vector.extract_strided_slice %8 {offsets = [0, 0], sizes = [4, 256], strides = [1, 1]} : vector<32x256xf32> to vector<4x256xf32>
    %12 = vector.extract_strided_slice %9 {offsets = [0, 0], sizes = [8, 256], strides = [1, 1]} : vector<64x256xf32> to vector<8x256xf32>
    %cst_6 = arith.constant dense<0.000000e+00> : vector<256x256xf32>
    %13 = tpu.matmul %10, %11, %cst_6 {dimension_numbers = #tpu.dot_dimension_numbers<[0], [0], [1], [1], [0, 1, 1, 1], [], []>} : vector<4x256xf32>, vector<4x256xf32>, vector<256x256xf32> -> vector<256x256xf32>
    %cst_7 = arith.constant 5.000000e-01 : f32
    %14 = vector.broadcast %cst_7 : f32 to vector<256x256xf32>
    %15 = arith.mulf %13, %14 : vector<256x256xf32>
    %cst_8 = arith.constant dense<0xFF800000> : vector<256xf32>
    %16 = vector.multi_reduction <maximumf>, %15, %cst_8 [1] : vector<256x256xf32> to vector<256xf32>
    %17 = vector.shape_cast %16 : vector<256xf32> to vector<256x1xf32>
    %18 = vector.broadcast %17 : vector<256x1xf32> to vector<256x256xf32>
    %19 = arith.subf %15, %18 : vector<256x256xf32>
    %20 = math.exp %19 : vector<256x256xf32>
    %cst_9 = arith.constant dense<0.000000e+00> : vector<256xf32>
    %21 = vector.multi_reduction <add>, %20, %cst_9 [1] : vector<256x256xf32> to vector<256xf32>
    %22 = vector.shape_cast %21 : vector<256xf32> to vector<256x1xf32>
    %23 = vector.broadcast %22 : vector<256x1xf32> to vector<256x256xf32>
    %24 = arith.divf %20, %23 : vector<256x256xf32>
    %cst_10 = arith.constant dense<0.000000e+00> : vector<8x256xf32>
    %25 = tpu.matmul %12, %24, %cst_10 {dimension_numbers = #tpu.dot_dimension_numbers<[1], [1], [0], [0], [0, 0, 1, 0], [], []>} : vector<8x256xf32>, vector<256x256xf32>, vector<8x256xf32> -> vector<8x256xf32>
    %26 = vector.extract_strided_slice %7 {offsets = [4, 0], sizes = [4, 256], strides = [1, 1]} : vector<32x256xf32> to vector<4x256xf32>
    %27 = vector.extract_strided_slice %8 {offsets = [4, 0], sizes = [4, 256], strides = [1, 1]} : vector<32x256xf32> to vector<4x256xf32>
    %28 = vector.extract_strided_slice %9 {offsets = [8, 0], sizes = [8, 256], strides = [1, 1]} : vector<64x256xf32> to vector<8x256xf32>
    %cst_11 = arith.constant dense<0.000000e+00> : vector<256x256xf32>
    %29 = tpu.matmul %26, %27, %cst_11 {dimension_numbers = #tpu.dot_dimension_numbers<[0], [0], [1], [1], [0, 1, 1, 1], [], []>} : vector<4x256xf32>, vector<4x256xf32>, vector<256x256xf32> -> vector<256x256xf32>
    %cst_12 = arith.constant 5.000000e-01 : f32
    %30 = vector.broadcast %cst_12 : f32 to vector<256x256xf32>
    %31 = arith.mulf %29, %30 : vector<256x256xf32>
    %cst_13 = arith.constant dense<0xFF800000> : vector<256xf32>
    %32 = vector.multi_reduction <maximumf>, %31, %cst_13 [1] : vector<256x256xf32> to vector<256xf32>
    %33 = vector.shape_cast %32 : vector<256xf32> to vector<256x1xf32>
    %34 = vector.broadcast %33 : vector<256x1xf32> to vector<256x256xf32>
    %35 = arith.subf %31, %34 : vector<256x256xf32>
    %36 = math.exp %35 : vector<256x256xf32>
    %cst_14 = arith.constant dense<0.000000e+00> : vector<256xf32>
    %37 = vector.multi_reduction <add>, %36, %cst_14 [1] : vector<256x256xf32> to vector<256xf32>
    %38 = vector.shape_cast %37 : vector<256xf32> to vector<256x1xf32>
    %39 = vector.broadcast %38 : vector<256x1xf32> to vector<256x256xf32>
    %40 = arith.divf %36, %39 : vector<256x256xf32>
    %cst_15 = arith.constant dense<0.000000e+00> : vector<8x256xf32>
    %41 = tpu.matmul %28, %40, %cst_15 {dimension_numbers = #tpu.dot_dimension_numbers<[1], [1], [0], [0], [0, 0, 1, 0], [], []>} : vector<8x256xf32>, vector<256x256xf32>, vector<8x256xf32> -> vector<8x256xf32>
    %42 = vector.extract_strided_slice %7 {offsets = [8, 0], sizes = [4, 256], strides = [1, 1]} : vector<32x256xf32> to vector<4x256xf32>
    %43 = vector.extract_strided_slice %8 {offsets = [8, 0], sizes = [4, 256], strides = [1, 1]} : vector<32x256xf32> to vector<4x256xf32>
    %44 = vector.extract_strided_slice %9 {offsets = [16, 0], sizes = [8, 256], strides = [1, 1]} : vector<64x256xf32> to vector<8x256xf32>
    %cst_16 = arith.constant dense<0.000000e+00> : vector<256x256xf32>
    %45 = tpu.matmul %42, %43, %cst_16 {dimension_numbers = #tpu.dot_dimension_numbers<[0], [0], [1], [1], [0, 1, 1, 1], [], []>} : vector<4x256xf32>, vector<4x256xf32>, vector<256x256xf32> -> vector<256x256xf32>
    %cst_17 = arith.constant 5.000000e-01 : f32
    %46 = vector.broadcast %cst_17 : f32 to vector<256x256xf32>
    %47 = arith.mulf %45, %46 : vector<256x256xf32>
    %cst_18 = arith.constant dense<0xFF800000> : vector<256xf32>
    %48 = vector.multi_reduction <maximumf>, %47, %cst_18 [1] : vector<256x256xf32> to vector<256xf32>
    %49 = vector.shape_cast %48 : vector<256xf32> to vector<256x1xf32>
    %50 = vector.broadcast %49 : vector<256x1xf32> to vector<256x256xf32>
    %51 = arith.subf %47, %50 : vector<256x256xf32>
    %52 = math.exp %51 : vector<256x256xf32>
    %cst_19 = arith.constant dense<0.000000e+00> : vector<256xf32>
    %53 = vector.multi_reduction <add>, %52, %cst_19 [1] : vector<256x256xf32> to vector<256xf32>
    %54 = vector.shape_cast %53 : vector<256xf32> to vector<256x1xf32>
    %55 = vector.broadcast %54 : vector<256x1xf32> to vector<256x256xf32>
    %56 = arith.divf %52, %55 : vector<256x256xf32>
    %cst_20 = arith.constant dense<0.000000e+00> : vector<8x256xf32>
    %57 = tpu.matmul %44, %56, %cst_20 {dimension_numbers = #tpu.dot_dimension_numbers<[1], [1], [0], [0], [0, 0, 1, 0], [], []>} : vector<8x256xf32>, vector<256x256xf32>, vector<8x256xf32> -> vector<8x256xf32>
    %58 = vector.extract_strided_slice %7 {offsets = [12, 0], sizes = [4, 256], strides = [1, 1]} : vector<32x256xf32> to vector<4x256xf32>
    %59 = vector.extract_strided_slice %8 {offsets = [12, 0], sizes = [4, 256], strides = [1, 1]} : vector<32x256xf32> to vector<4x256xf32>
    %60 = vector.extract_strided_slice %9 {offsets = [24, 0], sizes = [8, 256], strides = [1, 1]} : vector<64x256xf32> to vector<8x256xf32>
    %cst_21 = arith.constant dense<0.000000e+00> : vector<256x256xf32>
    %61 = tpu.matmul %58, %59, %cst_21 {dimension_numbers = #tpu.dot_dimension_numbers<[0], [0], [1], [1], [0, 1, 1, 1], [], []>} : vector<4x256xf32>, vector<4x256xf32>, vector<256x256xf32> -> vector<256x256xf32>
    %cst_22 = arith.constant 5.000000e-01 : f32
    %62 = vector.broadcast %cst_22 : f32 to vector<256x256xf32>
    %63 = arith.mulf %61, %62 : vector<256x256xf32>
    %cst_23 = arith.constant dense<0xFF800000> : vector<256xf32>
    %64 = vector.multi_reduction <maximumf>, %63, %cst_23 [1] : vector<256x256xf32> to vector<256xf32>
    %65 = vector.shape_cast %64 : vector<256xf32> to vector<256x1xf32>
    %66 = vector.broadcast %65 : vector<256x1xf32> to vector<256x256xf32>
    %67 = arith.subf %63, %66 : vector<256x256xf32>
    %68 = math.exp %67 : vector<256x256xf32>
    %cst_24 = arith.constant dense<0.000000e+00> : vector<256xf32>
    %69 = vector.multi_reduction <add>, %68, %cst_24 [1] : vector<256x256xf32> to vector<256xf32>
    %70 = vector.shape_cast %69 : vector<256xf32> to vector<256x1xf32>
    %71 = vector.broadcast %70 : vector<256x1xf32> to vector<256x256xf32>
    %72 = arith.divf %68, %71 : vector<256x256xf32>
    %cst_25 = arith.constant dense<0.000000e+00> : vector<8x256xf32>
    %73 = tpu.matmul %60, %72, %cst_25 {dimension_numbers = #tpu.dot_dimension_numbers<[1], [1], [0], [0], [0, 0, 1, 0], [], []>} : vector<8x256xf32>, vector<256x256xf32>, vector<8x256xf32> -> vector<8x256xf32>
    %74 = vector.extract_strided_slice %7 {offsets = [16, 0], sizes = [4, 256], strides = [1, 1]} : vector<32x256xf32> to vector<4x256xf32>
    %75 = vector.extract_strided_slice %8 {offsets = [16, 0], sizes = [4, 256], strides = [1, 1]} : vector<32x256xf32> to vector<4x256xf32>
    %76 = vector.extract_strided_slice %9 {offsets = [32, 0], sizes = [8, 256], strides = [1, 1]} : vector<64x256xf32> to vector<8x256xf32>
    %cst_26 = arith.constant dense<0.000000e+00> : vector<256x256xf32>
    %77 = tpu.matmul %74, %75, %cst_26 {dimension_numbers = #tpu.dot_dimension_numbers<[0], [0], [1], [1], [0, 1, 1, 1], [], []>} : vector<4x256xf32>, vector<4x256xf32>, vector<256x256xf32> -> vector<256x256xf32>
    %cst_27 = arith.constant 5.000000e-01 : f32
    %78 = vector.broadcast %cst_27 : f32 to vector<256x256xf32>
    %79 = arith.mulf %77, %78 : vector<256x256xf32>
    %cst_28 = arith.constant dense<0xFF800000> : vector<256xf32>
    %80 = vector.multi_reduction <maximumf>, %79, %cst_28 [1] : vector<256x256xf32> to vector<256xf32>
    %81 = vector.shape_cast %80 : vector<256xf32> to vector<256x1xf32>
    %82 = vector.broadcast %81 : vector<256x1xf32> to vector<256x256xf32>
    %83 = arith.subf %79, %82 : vector<256x256xf32>
    %84 = math.exp %83 : vector<256x256xf32>
    %cst_29 = arith.constant dense<0.000000e+00> : vector<256xf32>
    %85 = vector.multi_reduction <add>, %84, %cst_29 [1] : vector<256x256xf32> to vector<256xf32>
    %86 = vector.shape_cast %85 : vector<256xf32> to vector<256x1xf32>
    %87 = vector.broadcast %86 : vector<256x1xf32> to vector<256x256xf32>
    %88 = arith.divf %84, %87 : vector<256x256xf32>
    %cst_30 = arith.constant dense<0.000000e+00> : vector<8x256xf32>
    %89 = tpu.matmul %76, %88, %cst_30 {dimension_numbers = #tpu.dot_dimension_numbers<[1], [1], [0], [0], [0, 0, 1, 0], [], []>} : vector<8x256xf32>, vector<256x256xf32>, vector<8x256xf32> -> vector<8x256xf32>
    %90 = vector.extract_strided_slice %7 {offsets = [20, 0], sizes = [4, 256], strides = [1, 1]} : vector<32x256xf32> to vector<4x256xf32>
    %91 = vector.extract_strided_slice %8 {offsets = [20, 0], sizes = [4, 256], strides = [1, 1]} : vector<32x256xf32> to vector<4x256xf32>
    %92 = vector.extract_strided_slice %9 {offsets = [40, 0], sizes = [8, 256], strides = [1, 1]} : vector<64x256xf32> to vector<8x256xf32>
    %cst_31 = arith.constant dense<0.000000e+00> : vector<256x256xf32>
    %93 = tpu.matmul %90, %91, %cst_31 {dimension_numbers = #tpu.dot_dimension_numbers<[0], [0], [1], [1], [0, 1, 1, 1], [], []>} : vector<4x256xf32>, vector<4x256xf32>, vector<256x256xf32> -> vector<256x256xf32>
    %cst_32 = arith.constant 5.000000e-01 : f32
    %94 = vector.broadcast %cst_32 : f32 to vector<256x256xf32>
    %95 = arith.mulf %93, %94 : vector<256x256xf32>
    %cst_33 = arith.constant dense<0xFF800000> : vector<256xf32>
    %96 = vector.multi_reduction <maximumf>, %95, %cst_33 [1] : vector<256x256xf32> to vector<256xf32>
    %97 = vector.shape_cast %96 : vector<256xf32> to vector<256x1xf32>
    %98 = vector.broadcast %97 : vector<256x1xf32> to vector<256x256xf32>
    %99 = arith.subf %95, %98 : vector<256x256xf32>
    %100 = math.exp %99 : vector<256x256xf32>
    %cst_34 = arith.constant dense<0.000000e+00> : vector<256xf32>
    %101 = vector.multi_reduction <add>, %100, %cst_34 [1] : vector<256x256xf32> to vector<256xf32>
    %102 = vector.shape_cast %101 : vector<256xf32> to vector<256x1xf32>
    %103 = vector.broadcast %102 : vector<256x1xf32> to vector<256x256xf32>
    %104 = arith.divf %100, %103 : vector<256x256xf32>
    %cst_35 = arith.constant dense<0.000000e+00> : vector<8x256xf32>
    %105 = tpu.matmul %92, %104, %cst_35 {dimension_numbers = #tpu.dot_dimension_numbers<[1], [1], [0], [0], [0, 0, 1, 0], [], []>} : vector<8x256xf32>, vector<256x256xf32>, vector<8x256xf32> -> vector<8x256xf32>
    %106 = vector.extract_strided_slice %7 {offsets = [24, 0], sizes = [4, 256], strides = [1, 1]} : vector<32x256xf32> to vector<4x256xf32>
    %107 = vector.extract_strided_slice %8 {offsets = [24, 0], sizes = [4, 256], strides = [1, 1]} : vector<32x256xf32> to vector<4x256xf32>
    %108 = vector.extract_strided_slice %9 {offsets = [48, 0], sizes = [8, 256], strides = [1, 1]} : vector<64x256xf32> to vector<8x256xf32>
    %cst_36 = arith.constant dense<0.000000e+00> : vector<256x256xf32>
    %109 = tpu.matmul %106, %107, %cst_36 {dimension_numbers = #tpu.dot_dimension_numbers<[0], [0], [1], [1], [0, 1, 1, 1], [], []>} : vector<4x256xf32>, vector<4x256xf32>, vector<256x256xf32> -> vector<256x256xf32>
    %cst_37 = arith.constant 5.000000e-01 : f32
    %110 = vector.broadcast %cst_37 : f32 to vector<256x256xf32>
    %111 = arith.mulf %109, %110 : vector<256x256xf32>
    %cst_38 = arith.constant dense<0xFF800000> : vector<256xf32>
    %112 = vector.multi_reduction <maximumf>, %111, %cst_38 [1] : vector<256x256xf32> to vector<256xf32>
    %113 = vector.shape_cast %112 : vector<256xf32> to vector<256x1xf32>
    %114 = vector.broadcast %113 : vector<256x1xf32> to vector<256x256xf32>
    %115 = arith.subf %111, %114 : vector<256x256xf32>
    %116 = math.exp %115 : vector<256x256xf32>
    %cst_39 = arith.constant dense<0.000000e+00> : vector<256xf32>
    %117 = vector.multi_reduction <add>, %116, %cst_39 [1] : vector<256x256xf32> to vector<256xf32>
    %118 = vector.shape_cast %117 : vector<256xf32> to vector<256x1xf32>
    %119 = vector.broadcast %118 : vector<256x1xf32> to vector<256x256xf32>
    %120 = arith.divf %116, %119 : vector<256x256xf32>
    %cst_40 = arith.constant dense<0.000000e+00> : vector<8x256xf32>
    %121 = tpu.matmul %108, %120, %cst_40 {dimension_numbers = #tpu.dot_dimension_numbers<[1], [1], [0], [0], [0, 0, 1, 0], [], []>} : vector<8x256xf32>, vector<256x256xf32>, vector<8x256xf32> -> vector<8x256xf32>
    %122 = vector.extract_strided_slice %7 {offsets = [28, 0], sizes = [4, 256], strides = [1, 1]} : vector<32x256xf32> to vector<4x256xf32>
    %123 = vector.extract_strided_slice %8 {offsets = [28, 0], sizes = [4, 256], strides = [1, 1]} : vector<32x256xf32> to vector<4x256xf32>
    %124 = vector.extract_strided_slice %9 {offsets = [56, 0], sizes = [8, 256], strides = [1, 1]} : vector<64x256xf32> to vector<8x256xf32>
    %cst_41 = arith.constant dense<0.000000e+00> : vector<256x256xf32>
    %125 = tpu.matmul %122, %123, %cst_41 {dimension_numbers = #tpu.dot_dimension_numbers<[0], [0], [1], [1], [0, 1, 1, 1], [], []>} : vector<4x256xf32>, vector<4x256xf32>, vector<256x256xf32> -> vector<256x256xf32>
    %cst_42 = arith.constant 5.000000e-01 : f32
    %126 = vector.broadcast %cst_42 : f32 to vector<256x256xf32>
    %127 = arith.mulf %125, %126 : vector<256x256xf32>
    %cst_43 = arith.constant dense<0xFF800000> : vector<256xf32>
    %128 = vector.multi_reduction <maximumf>, %127, %cst_43 [1] : vector<256x256xf32> to vector<256xf32>
    %129 = vector.shape_cast %128 : vector<256xf32> to vector<256x1xf32>
    %130 = vector.broadcast %129 : vector<256x1xf32> to vector<256x256xf32>
    %131 = arith.subf %127, %130 : vector<256x256xf32>
    %132 = math.exp %131 : vector<256x256xf32>
    %cst_44 = arith.constant dense<0.000000e+00> : vector<256xf32>
    %133 = vector.multi_reduction <add>, %132, %cst_44 [1] : vector<256x256xf32> to vector<256xf32>
    %134 = vector.shape_cast %133 : vector<256xf32> to vector<256x1xf32>
    %135 = vector.broadcast %134 : vector<256x1xf32> to vector<256x256xf32>
    %136 = arith.divf %132, %135 : vector<256x256xf32>
    %cst_45 = arith.constant dense<0.000000e+00> : vector<8x256xf32>
    %137 = tpu.matmul %124, %136, %cst_45 {dimension_numbers = #tpu.dot_dimension_numbers<[1], [1], [0], [0], [0, 0, 1, 0], [], []>} : vector<8x256xf32>, vector<256x256xf32>, vector<8x256xf32> -> vector<8x256xf32>
    %138 = tpu.concatenate %25, %41, %57, %73, %89, %105, %121, %137 in 0 : vector<8x256xf32>, vector<8x256xf32>, vector<8x256xf32>, vector<8x256xf32>, vector<8x256xf32>, vector<8x256xf32>, vector<8x256xf32>, vector<8x256xf32> -> vector<64x256xf32>
    %c0_46 = arith.constant 0 : index
    %c0_47 = arith.constant 0 : index
    %139 = vector.load %arg4[%c0_46, %c0_47] : memref<64x9xf32, #tpu.memory_space<vmem>>, vector<64x9xf32>
    %c0_48 = arith.constant 0 : index
    %c0_49 = arith.constant 0 : index
    %140 = vector.load %arg8[%c0_48, %c0_49] : memref<9x256xf32, #tpu.memory_space<vmem>>, vector<9x256xf32>
    %c0_50 = arith.constant 0 : index
    %c0_51 = arith.constant 0 : index
    %141 = vector.load %arg5[%c0_50, %c0_51] : memref<64x1xf32, #tpu.memory_space<vmem>>, vector<64x1xf32>
    %142 = vector.shape_cast %141 : vector<64x1xf32> to vector<64x1xf32>
    %143 = vector.broadcast %142 : vector<64x1xf32> to vector<64x256xf32>
    %144 = vector.extract_strided_slice %9 {offsets = [0, 239], sizes = [64, 17], strides = [1, 1]} : vector<64x256xf32> to vector<64x17xf32>
    %145 = vector.extract_strided_slice %9 {offsets = [0, 0], sizes = [64, 239], strides = [1, 1]} : vector<64x256xf32> to vector<64x239xf32>
    %146 = tpu.concatenate %144, %145 in 1 : vector<64x17xf32>, vector<64x239xf32> -> vector<64x256xf32>
    %147 = vector.extract_strided_slice %139 {offsets = [0, 0], sizes = [64, 1], strides = [1, 1]} : vector<64x9xf32> to vector<64x1xf32>
    %148 = vector.extract_strided_slice %140 {offsets = [0, 0], sizes = [1, 256], strides = [1, 1]} : vector<9x256xf32> to vector<1x256xf32>
    %149 = vector.broadcast %148 : vector<1x256xf32> to vector<64x256xf32>
    %150 = arith.mulf %146, %149 : vector<64x256xf32>
    %151 = vector.broadcast %147 : vector<64x1xf32> to vector<64x256xf32>
    %152 = arith.mulf %151, %150 : vector<64x256xf32>
    %153 = arith.addf %143, %152 : vector<64x256xf32>
    %154 = vector.extract_strided_slice %9 {offsets = [0, 240], sizes = [64, 16], strides = [1, 1]} : vector<64x256xf32> to vector<64x16xf32>
    %155 = vector.extract_strided_slice %9 {offsets = [0, 0], sizes = [64, 240], strides = [1, 1]} : vector<64x256xf32> to vector<64x240xf32>
    %156 = tpu.concatenate %154, %155 in 1 : vector<64x16xf32>, vector<64x240xf32> -> vector<64x256xf32>
    %157 = vector.extract_strided_slice %139 {offsets = [0, 1], sizes = [64, 1], strides = [1, 1]} : vector<64x9xf32> to vector<64x1xf32>
    %158 = vector.extract_strided_slice %140 {offsets = [1, 0], sizes = [1, 256], strides = [1, 1]} : vector<9x256xf32> to vector<1x256xf32>
    %159 = vector.broadcast %158 : vector<1x256xf32> to vector<64x256xf32>
    %160 = arith.mulf %156, %159 : vector<64x256xf32>
    %161 = vector.broadcast %157 : vector<64x1xf32> to vector<64x256xf32>
    %162 = arith.mulf %161, %160 : vector<64x256xf32>
    %163 = arith.addf %153, %162 : vector<64x256xf32>
    %164 = vector.extract_strided_slice %9 {offsets = [0, 241], sizes = [64, 15], strides = [1, 1]} : vector<64x256xf32> to vector<64x15xf32>
    %165 = vector.extract_strided_slice %9 {offsets = [0, 0], sizes = [64, 241], strides = [1, 1]} : vector<64x256xf32> to vector<64x241xf32>
    %166 = tpu.concatenate %164, %165 in 1 : vector<64x15xf32>, vector<64x241xf32> -> vector<64x256xf32>
    %167 = vector.extract_strided_slice %139 {offsets = [0, 2], sizes = [64, 1], strides = [1, 1]} : vector<64x9xf32> to vector<64x1xf32>
    %168 = vector.extract_strided_slice %140 {offsets = [2, 0], sizes = [1, 256], strides = [1, 1]} : vector<9x256xf32> to vector<1x256xf32>
    %169 = vector.broadcast %168 : vector<1x256xf32> to vector<64x256xf32>
    %170 = arith.mulf %166, %169 : vector<64x256xf32>
    %171 = vector.broadcast %167 : vector<64x1xf32> to vector<64x256xf32>
    %172 = arith.mulf %171, %170 : vector<64x256xf32>
    %173 = arith.addf %163, %172 : vector<64x256xf32>
    %174 = vector.extract_strided_slice %9 {offsets = [0, 255], sizes = [64, 1], strides = [1, 1]} : vector<64x256xf32> to vector<64x1xf32>
    %175 = vector.extract_strided_slice %9 {offsets = [0, 0], sizes = [64, 255], strides = [1, 1]} : vector<64x256xf32> to vector<64x255xf32>
    %176 = tpu.concatenate %174, %175 in 1 : vector<64x1xf32>, vector<64x255xf32> -> vector<64x256xf32>
    %177 = vector.extract_strided_slice %139 {offsets = [0, 3], sizes = [64, 1], strides = [1, 1]} : vector<64x9xf32> to vector<64x1xf32>
    %178 = vector.extract_strided_slice %140 {offsets = [3, 0], sizes = [1, 256], strides = [1, 1]} : vector<9x256xf32> to vector<1x256xf32>
    %179 = vector.broadcast %178 : vector<1x256xf32> to vector<64x256xf32>
    %180 = arith.mulf %176, %179 : vector<64x256xf32>
    %181 = vector.broadcast %177 : vector<64x1xf32> to vector<64x256xf32>
    %182 = arith.mulf %181, %180 : vector<64x256xf32>
    %183 = arith.addf %173, %182 : vector<64x256xf32>
    %184 = vector.extract_strided_slice %139 {offsets = [0, 4], sizes = [64, 1], strides = [1, 1]} : vector<64x9xf32> to vector<64x1xf32>
    %185 = vector.extract_strided_slice %140 {offsets = [4, 0], sizes = [1, 256], strides = [1, 1]} : vector<9x256xf32> to vector<1x256xf32>
    %186 = vector.broadcast %185 : vector<1x256xf32> to vector<64x256xf32>
    %187 = arith.mulf %9, %186 : vector<64x256xf32>
    %188 = vector.broadcast %184 : vector<64x1xf32> to vector<64x256xf32>
    %189 = arith.mulf %188, %187 : vector<64x256xf32>
    %190 = arith.addf %183, %189 : vector<64x256xf32>
    %191 = vector.extract_strided_slice %9 {offsets = [0, 1], sizes = [64, 255], strides = [1, 1]} : vector<64x256xf32> to vector<64x255xf32>
    %192 = vector.extract_strided_slice %9 {offsets = [0, 0], sizes = [64, 1], strides = [1, 1]} : vector<64x256xf32> to vector<64x1xf32>
    %193 = tpu.concatenate %191, %192 in 1 : vector<64x255xf32>, vector<64x1xf32> -> vector<64x256xf32>
    %194 = vector.extract_strided_slice %139 {offsets = [0, 5], sizes = [64, 1], strides = [1, 1]} : vector<64x9xf32> to vector<64x1xf32>
    %195 = vector.extract_strided_slice %140 {offsets = [5, 0], sizes = [1, 256], strides = [1, 1]} : vector<9x256xf32> to vector<1x256xf32>
    %196 = vector.broadcast %195 : vector<1x256xf32> to vector<64x256xf32>
    %197 = arith.mulf %193, %196 : vector<64x256xf32>
    %198 = vector.broadcast %194 : vector<64x1xf32> to vector<64x256xf32>
    %199 = arith.mulf %198, %197 : vector<64x256xf32>
    %200 = arith.addf %190, %199 : vector<64x256xf32>
    %201 = vector.extract_strided_slice %9 {offsets = [0, 15], sizes = [64, 241], strides = [1, 1]} : vector<64x256xf32> to vector<64x241xf32>
    %202 = vector.extract_strided_slice %9 {offsets = [0, 0], sizes = [64, 15], strides = [1, 1]} : vector<64x256xf32> to vector<64x15xf32>
    %203 = tpu.concatenate %201, %202 in 1 : vector<64x241xf32>, vector<64x15xf32> -> vector<64x256xf32>
    %204 = vector.extract_strided_slice %139 {offsets = [0, 6], sizes = [64, 1], strides = [1, 1]} : vector<64x9xf32> to vector<64x1xf32>
    %205 = vector.extract_strided_slice %140 {offsets = [6, 0], sizes = [1, 256], strides = [1, 1]} : vector<9x256xf32> to vector<1x256xf32>
    %206 = vector.broadcast %205 : vector<1x256xf32> to vector<64x256xf32>
    %207 = arith.mulf %203, %206 : vector<64x256xf32>
    %208 = vector.broadcast %204 : vector<64x1xf32> to vector<64x256xf32>
    %209 = arith.mulf %208, %207 : vector<64x256xf32>
    %210 = arith.addf %200, %209 : vector<64x256xf32>
    %211 = vector.extract_strided_slice %9 {offsets = [0, 16], sizes = [64, 240], strides = [1, 1]} : vector<64x256xf32> to vector<64x240xf32>
    %212 = vector.extract_strided_slice %9 {offsets = [0, 0], sizes = [64, 16], strides = [1, 1]} : vector<64x256xf32> to vector<64x16xf32>
    %213 = tpu.concatenate %211, %212 in 1 : vector<64x240xf32>, vector<64x16xf32> -> vector<64x256xf32>
    %214 = vector.extract_strided_slice %139 {offsets = [0, 7], sizes = [64, 1], strides = [1, 1]} : vector<64x9xf32> to vector<64x1xf32>
    %215 = vector.extract_strided_slice %140 {offsets = [7, 0], sizes = [1, 256], strides = [1, 1]} : vector<9x256xf32> to vector<1x256xf32>
    %216 = vector.broadcast %215 : vector<1x256xf32> to vector<64x256xf32>
    %217 = arith.mulf %213, %216 : vector<64x256xf32>
    %218 = vector.broadcast %214 : vector<64x1xf32> to vector<64x256xf32>
    %219 = arith.mulf %218, %217 : vector<64x256xf32>
    %220 = arith.addf %210, %219 : vector<64x256xf32>
    %221 = vector.extract_strided_slice %9 {offsets = [0, 17], sizes = [64, 239], strides = [1, 1]} : vector<64x256xf32> to vector<64x239xf32>
    %222 = vector.extract_strided_slice %9 {offsets = [0, 0], sizes = [64, 17], strides = [1, 1]} : vector<64x256xf32> to vector<64x17xf32>
    %223 = tpu.concatenate %221, %222 in 1 : vector<64x239xf32>, vector<64x17xf32> -> vector<64x256xf32>
    %224 = vector.extract_strided_slice %139 {offsets = [0, 8], sizes = [64, 1], strides = [1, 1]} : vector<64x9xf32> to vector<64x1xf32>
    %225 = vector.extract_strided_slice %140 {offsets = [8, 0], sizes = [1, 256], strides = [1, 1]} : vector<9x256xf32> to vector<1x256xf32>
    %226 = vector.broadcast %225 : vector<1x256xf32> to vector<64x256xf32>
    %227 = arith.mulf %223, %226 : vector<64x256xf32>
    %228 = vector.broadcast %224 : vector<64x1xf32> to vector<64x256xf32>
    %229 = arith.mulf %228, %227 : vector<64x256xf32>
    %230 = arith.addf %220, %229 : vector<64x256xf32>
    %231 = arith.addf %138, %230 : vector<64x256xf32>
    %c0_52 = arith.constant 0 : index
    %c0_53 = arith.constant 0 : index
    %232 = vector.load %arg6[%c0_52, %c0_53] : memref<64x64xf32, #tpu.memory_space<vmem>>, vector<64x64xf32>
    %cst_54 = arith.constant dense<0.000000e+00> : vector<64x256xf32>
    %233 = tpu.matmul %232, %231, %cst_54 {dimension_numbers = #tpu.dot_dimension_numbers<[1], [0], [0], [1], [0, 0, 1, 1], [], []>} : vector<64x64xf32>, vector<64x256xf32>, vector<64x256xf32> -> vector<64x256xf32>
    %c0_55 = arith.constant 0 : index
    %c0_56 = arith.constant 0 : index
    %234 = vector.load %arg7[%c0_55, %c0_56] : memref<64x1xf32, #tpu.memory_space<vmem>>, vector<64x1xf32>
    %235 = vector.broadcast %234 : vector<64x1xf32> to vector<64x256xf32>
    %236 = arith.addf %233, %235 : vector<64x256xf32>
    %237 = vector.shape_cast %236 : vector<64x256xf32> to vector<1x64x256xf32>
    %c0_57 = arith.constant 0 : index
    %c0_58 = arith.constant 0 : index
    %c0_59 = arith.constant 0 : index
    %238 = vector.load %arg9[%c0_57, %c0_58, %c0_59] : memref<1x64x256xf32, #tpu.memory_space<vmem>>, vector<1x64x256xf32>
    tpu.vector_store %arg9[%c0_57, %c0_58, %c0_59], %237 {strides = array<i32>} : memref<1x64x256xf32, #tpu.memory_space<vmem>>, vector<1x64x256xf32>,
    return
  }
  func.func @transform_0(%arg0: i32) -> (i32, i32, i32) {
    %c0_i32 = arith.constant 0 : i32
    %c0_i32_0 = arith.constant 0 : i32
    %c0_i32_1 = arith.constant 0 : i32
    return %arg0, %c0_i32, %c0_i32_0 : i32, i32, i32
  }
  func.func @transform_1(%arg0: i32) -> (i32, i32) {
    %c0_i32 = arith.constant 0 : i32
    %c0_i32_0 = arith.constant 0 : i32
    %c0_i32_1 = arith.constant 0 : i32
    return %c0_i32, %c0_i32_0 : i32, i32
  }
  func.func @transform_2(%arg0: i32) -> (i32, i32) {
    %c0_i32 = arith.constant 0 : i32
    %c0_i32_0 = arith.constant 0 : i32
    %c0_i32_1 = arith.constant 0 : i32
    return %c0_i32, %c0_i32_0 : i32, i32
  }
  func.func @transform_3(%arg0: i32) -> (i32, i32) {
    %c0_i32 = arith.constant 0 : i32
    %c0_i32_0 = arith.constant 0 : i32
    %c0_i32_1 = arith.constant 0 : i32
    return %c0_i32, %c0_i32_0 : i32, i32
  }
  func.func @transform_4(%arg0: i32) -> (i32, i32) {
    %c0_i32 = arith.constant 0 : i32
    %c0_i32_0 = arith.constant 0 : i32
    %c0_i32_1 = arith.constant 0 : i32
    return %c0_i32, %c0_i32_0 : i32, i32
  }
  func.func @transform_5(%arg0: i32) -> (i32, i32) {
    %c0_i32 = arith.constant 0 : i32
    %c0_i32_0 = arith.constant 0 : i32
    %c0_i32_1 = arith.constant 0 : i32
    return %c0_i32, %c0_i32_0 : i32, i32
  }
  func.func @transform_6(%arg0: i32) -> (i32, i32) {
    %c0_i32 = arith.constant 0 : i32
    %c0_i32_0 = arith.constant 0 : i32
    %c0_i32_1 = arith.constant 0 : i32
    return %c0_i32, %c0_i32_0 : i32, i32
  }
  func.func @transform_7(%arg0: i32) -> (i32, i32) {
    %c0_i32 = arith.constant 0 : i32
    %c0_i32_0 = arith.constant 0 : i32
    %c0_i32_1 = arith.constant 0 : i32
    return %c0_i32, %c0_i32_0 : i32, i32
  }
  func.func @transform_8(%arg0: i32) -> (i32, i32, i32) {
    %c0_i32 = arith.constant 0 : i32
    %c0_i32_0 = arith.constant 0 : i32
    %c0_i32_1 = arith.constant 0 : i32
    return %arg0, %c0_i32, %c0_i32_0 : i32, i32, i32
  }
}

</mosaic_0001>

<llo_original>
// kernel: attention_forward.1
$region0: #{attention_forward.1}
  #allocation0 [shape = 'u32[]', space=smem, size = 0x4, offset = 0x4, fixed_abs, tag = 'smem constant byte address 0x4 - core index']
  #allocation1 [shape = 'u32[144,128]{1,0:T(1,128)}', space=vmem, size = 0x12000, scoped, tag = 'internal scratch']
  %s0 = inlined_call_operand.vmem [shape: f32[2,64,256], index: 0, kind: input, shape index: {}]
  %s1 = inlined_call_operand.vmem [shape: f32[128,64], index: 1, kind: input, shape index: {}]
  %s2 = inlined_call_operand.vmem [shape: f32[128,1], index: 2, kind: input, shape index: {}]
  %s3 = inlined_call_operand.vmem [shape: f32[64,9], index: 3, kind: input, shape index: {}]
  %s4 = inlined_call_operand.vmem [shape: f32[64,1], index: 4, kind: input, shape index: {}]
  %s5 = inlined_call_operand.vmem [shape: f32[64,64], index: 5, kind: input, shape index: {}]
  %s6 = inlined_call_operand.vmem [shape: f32[64,1], index: 6, kind: input, shape index: {}]
  %s7 = inlined_call_operand.vmem [shape: f32[9,256], index: 7, kind: input, shape index: {}]
  %s8 = inlined_call_operand.vmem [shape: f32[2,64,256], index: 8, kind: output, shape index: {}]
  %s9 = sld [smem:[#allocation0]]
  $region65: #{attention_forward.1} parent=0
    _
  %s11 = ssub.s32 1, %s9
  %s12 = scalar_select 0, %s11, %s9
  loop: start=0, step=1, limit=4
  $region2: #{attention_forward.1} parent=0 // loop_pre_header
    _
  $region3: #{attention_forward.1} parent=0 // loop_header
    %s14 = sphi 0, %s18
    %p15 = scmp.ge.s32.totalorder %s14, 4
    %s24 = sphi 0, %s26
    %s27 = sphi 0, %s24
    %s28 = sphi 0, %s27
    %s44 = sphi 0, %s28
    %s48 = sphi 0, %s48
    %s50 = sphi 0, %s48
    %s51 = sphi 0, %s50
    %s65 = sphi 0, %s51
    %s69 = sphi 0, %s69
    %s71 = sphi 0, %s69
    %s72 = sphi 0, %s71
    %s86 = sphi 0, %s72
    %s90 = sphi 0, %s90
    %s92 = sphi 0, %s90
    %s93 = sphi 0, %s92
    %s107 = sphi 0, %s93
    %s111 = sphi 0, %s111
    %s113 = sphi 0, %s111
    %s114 = sphi 0, %s113
    %s128 = sphi 0, %s114
    %s132 = sphi 0, %s132
    %s134 = sphi 0, %s132
    %s135 = sphi 0, %s134
    %s149 = sphi 0, %s135
    %s153 = sphi 0, %s153
    %s155 = sphi 0, %s153
    %s156 = sphi 0, %s155
    %s170 = sphi 0, %s156
    %s174 = sphi 0, %s174
    %s176 = sphi 0, %s174
    %s177 = sphi 0, %s176
    %s191 = sphi 0, %s177
    %s197 = sphi 0, %s199
    %s200 = sphi 0, %s197
    %s201 = sphi 0, %s200
    %s217 = sphi 0, %s201
  $region4: #{attention_forward.1} parent=0 // loop_header_branch
    %17 = sbr.rel (%p15) target = $region8
  $region5: #{attention_forward.1} parent=0 // loop_body
    %s19 = ssub.s32 %s14, 1
    %s20 = ssub.s32 %s14, 2
    %s21 = sadd.s32 %s14, 1
    %s22 = ssub.s32 %s14, %s21
    %p23 = scmp.eq.s32.totalorder %s22, 0
    %s25 = sadd.s32 %s24, 1
    %s26 = scalar_select %p23, %s24, %s25
    %p29 = pneg %p23
    %p30 = scmp.eq.s32.totalorder %s14, 1
    %p31 = por %p29, %p30
    %p32 = scmp.ne.s32.totalorder %s24, %s27
    %p33 = scmp.eq.s32.totalorder %s14, 0
    %p34 = por %p32, %p33
    %p35 = scmp.ne.s32.totalorder %s24, %s27
    %p36 = scmp.eq.s32.totalorder %s19, 1
    %p37 = por %p35, %p36
    %p38 = scmp.ne.s32.totalorder %s27, %s28
    %p39 = scmp.eq.s32.totalorder %s19, 0
    %p40 = por %p38, %p39
    %p41 = scmp.ne.s32.totalorder %s27, %s28
    %p42 = scmp.eq.s32.totalorder %s20, 1
    %p43 = por %p41, %p42
    %p45 = scmp.ne.s32.totalorder %s28, %s44
    %p46 = scmp.eq.s32.totalorder %s20, 0
    %p47 = por %p45, %p46
    %s49 = sadd.s32 %s48, 1
    %p52 = scmp.eq.s32.totalorder %s14, 1
    %p53 = scmp.ne.s32.totalorder %s48, %s50
    %p54 = scmp.eq.s32.totalorder %s14, 0
    %p55 = por %p53, %p54
    %p56 = scmp.ne.s32.totalorder %s48, %s50
    %p57 = scmp.eq.s32.totalorder %s19, 1
    %p58 = por %p56, %p57
    %p59 = scmp.ne.s32.totalorder %s50, %s51
    %p60 = scmp.eq.s32.totalorder %s19, 0
    %p61 = por %p59, %p60
    %p62 = scmp.ne.s32.totalorder %s50, %s51
    %p63 = scmp.eq.s32.totalorder %s20, 1
    %p64 = por %p62, %p63
    %p66 = scmp.ne.s32.totalorder %s51, %s65
    %p67 = scmp.eq.s32.totalorder %s20, 0
    %p68 = por %p66, %p67
    %s70 = sadd.s32 %s69, 1
    %p73 = scmp.eq.s32.totalorder %s14, 1
    %p74 = scmp.ne.s32.totalorder %s69, %s71
    %p75 = scmp.eq.s32.totalorder %s14, 0
    %p76 = por %p74, %p75
    %p77 = scmp.ne.s32.totalorder %s69, %s71
    %p78 = scmp.eq.s32.totalorder %s19, 1
    %p79 = por %p77, %p78
    %p80 = scmp.ne.s32.totalorder %s71, %s72
    %p81 = scmp.eq.s32.totalorder %s19, 0
    %p82 = por %p80, %p81
    %p83 = scmp.ne.s32.totalorder %s71, %s72
    %p84 = scmp.eq.s32.totalorder %s20, 1
    %p85 = por %p83, %p84
    %p87 = scmp.ne.s32.totalorder %s72, %s86
    %p88 = scmp.eq.s32.totalorder %s20, 0
    %p89 = por %p87, %p88
    %s91 = sadd.s32 %s90, 1
    %p94 = scmp.eq.s32.totalorder %s14, 1
    %p95 = scmp.ne.s32.totalorder %s90, %s92
    %p96 = scmp.eq.s32.totalorder %s14, 0
    %p97 = por %p95, %p96
    %p98 = scmp.ne.s32.totalorder %s90, %s92
    %p99 = scmp.eq.s32.totalorder %s19, 1
    %p100 = por %p98, %p99
    %p101 = scmp.ne.s32.totalorder %s92, %s93
    %p102 = scmp.eq.s32.totalorder %s19, 0
    %p103 = por %p101, %p102
    %p104 = scmp.ne.s32.totalorder %s92, %s93
    %p105 = scmp.eq.s32.totalorder %s20, 1
    %p106 = por %p104, %p105
    %p108 = scmp.ne.s32.totalorder %s93, %s107
    %p109 = scmp.eq.s32.totalorder %s20, 0
    %p110 = por %p108, %p109
    %s112 = sadd.s32 %s111, 1
    %p115 = scmp.eq.s32.totalorder %s14, 1
    %p116 = scmp.ne.s32.totalorder %s111, %s113
    %p117 = scmp.eq.s32.totalorder %s14, 0
    %p118 = por %p116, %p117
    %p119 = scmp.ne.s32.totalorder %s111, %s113
    %p120 = scmp.eq.s32.totalorder %s19, 1
    %p121 = por %p119, %p120
    %p122 = scmp.ne.s32.totalorder %s113, %s114
    %p123 = scmp.eq.s32.totalorder %s19, 0
    %p124 = por %p122, %p123
    %p125 = scmp.ne.s32.totalorder %s113, %s114
    %p126 = scmp.eq.s32.totalorder %s20, 1
    %p127 = por %p125, %p126
    %p129 = scmp.ne.s32.totalorder %s114, %s128
    %p130 = scmp.eq.s32.totalorder %s20, 0
    %p131 = por %p129, %p130
    %s133 = sadd.s32 %s132, 1
    %p136 = scmp.eq.s32.totalorder %s14, 1
    %p137 = scmp.ne.s32.totalorder %s132, %s134
    %p138 = scmp.eq.s32.totalorder %s14, 0
    %p139 = por %p137, %p138
    %p140 = scmp.ne.s32.totalorder %s132, %s134
    %p141 = scmp.eq.s32.totalorder %s19, 1
    %p142 = por %p140, %p141
    %p143 = scmp.ne.s32.totalorder %s134, %s135
    %p144 = scmp.eq.s32.totalorder %s19, 0
    %p145 = por %p143, %p144
    %p146 = scmp.ne.s32.totalorder %s134, %s135
    %p147 = scmp.eq.s32.totalorder %s20, 1
    %p148 = por %p146, %p147
    %p150 = scmp.ne.s32.totalorder %s135, %s149
    %p151 = scmp.eq.s32.totalorder %s20, 0
    %p152 = por %p150, %p151
    %s154 = sadd.s32 %s153, 1
    %p157 = scmp.eq.s32.totalorder %s14, 1
    %p158 = scmp.ne.s32.totalorder %s153, %s155
    %p159 = scmp.eq.s32.totalorder %s14, 0
    %p160 = por %p158, %p159
    %p161 = scmp.ne.s32.totalorder %s153, %s155
    %p162 = scmp.eq.s32.totalorder %s19, 1
    %p163 = por %p161, %p162
    %p164 = scmp.ne.s32.totalorder %s155, %s156
    %p165 = scmp.eq.s32.totalorder %s19, 0
    %p166 = por %p164, %p165
    %p167 = scmp.ne.s32.totalorder %s155, %s156
    %p168 = scmp.eq.s32.totalorder %s20, 1
    %p169 = por %p167, %p168
    %p171 = scmp.ne.s32.totalorder %s156, %s170
    %p172 = scmp.eq.s32.totalorder %s20, 0
    %p173 = por %p171, %p172
    %s175 = sadd.s32 %s174, 1
    %p178 = scmp.eq.s32.totalorder %s14, 1
    %p179 = scmp.ne.s32.totalorder %s174, %s176
    %p180 = scmp.eq.s32.totalorder %s14, 0
    %p181 = por %p179, %p180
    %p182 = scmp.ne.s32.totalorder %s174, %s176
    %p183 = scmp.eq.s32.totalorder %s19, 1
    %p184 = por %p182, %p183
    %p185 = scmp.ne.s32.totalorder %s176, %s177
    %p186 = scmp.eq.s32.totalorder %s19, 0
    %p187 = por %p185, %p186
    %p188 = scmp.ne.s32.totalorder %s176, %s177
    %p189 = scmp.eq.s32.totalorder %s20, 1
    %p190 = por %p188, %p189
    %p192 = scmp.ne.s32.totalorder %s177, %s191
    %p193 = scmp.eq.s32.totalorder %s20, 0
    %p194 = por %p192, %p193
    %s195 = ssub.s32 %s14, %s21
    %p196 = scmp.eq.s32.totalorder %s195, 0
    %s198 = sadd.s32 %s197, 1
    %s199 = scalar_select %p196, %s197, %s198
    %p202 = pneg %p196
    %p203 = scmp.eq.s32.totalorder %s14, 1
    %p204 = por %p202, %p203
    %p205 = scmp.ne.s32.totalorder %s197, %s200
    %p206 = scmp.eq.s32.totalorder %s14, 0
    %p207 = por %p205, %p206
    %p208 = scmp.ne.s32.totalorder %s197, %s200
    %p209 = scmp.eq.s32.totalorder %s19, 1
    %p210 = por %p208, %p209
    %p211 = scmp.ne.s32.totalorder %s200, %s201
    %p212 = scmp.eq.s32.totalorder %s19, 0
    %p213 = por %p211, %p212
    %p214 = scmp.ne.s32.totalorder %s200, %s201
    %p215 = scmp.eq.s32.totalorder %s20, 1
    %p216 = por %p214, %p215
    %p218 = scmp.ne.s32.totalorder %s201, %s217
    %p219 = scmp.eq.s32.totalorder %s20, 0
    %p220 = por %p218, %p219
    %p221 = scmp.le.s32.totalorder 1, %s14
    %p222 = scmp.lt.s32.totalorder %s14, 3
    %p223 = pnand %p221, %p222
    %p224 = pneg %p223
    // Predicated region
    $region9: #{attention_forward.1} parent=5 // pred_check
      _
    $region10: #{attention_forward.1} parent=5 // pred_check_branch
      %226 = sbr.rel (%p223) target = $region12
    $region11: #{attention_forward.1} parent=5 // pred_region
      %s227 = ssub.s32 %s14, 1
      // Predicated region
      $region13: #{attention_forward.1} parent=11 // pred_check
        %p228 = pneg %p61
      $region14: #{attention_forward.1} parent=11 // pred_check_branch
        %230 = sbr.rel (%p228) target = $region16
      $region15: #{attention_forward.1} parent=11 // pred_region
        _
      $region16: #{attention_forward.1} parent=11 // pred_fallthru
        _
      // Predicated region
      $region17: #{attention_forward.1} parent=11 // pred_check
        %p231 = pneg %p82
      $region18: #{attention_forward.1} parent=11 // pred_check_branch
        %233 = sbr.rel (%p231) target = $region20
      $region19: #{attention_forward.1} parent=11 // pred_region
        _
      $region20: #{attention_forward.1} parent=11 // pred_fallthru
        _
      // Predicated region
      $region21: #{attention_forward.1} parent=11 // pred_check
        %p234 = pneg %p103
      $region22: #{attention_forward.1} parent=11 // pred_check_branch
        %236 = sbr.rel (%p234) target = $region24
      $region23: #{attention_forward.1} parent=11 // pred_region
        _
      $region24: #{attention_forward.1} parent=11 // pred_fallthru
        _
      // Predicated region
      $region25: #{attention_forward.1} parent=11 // pred_check
        %p237 = pneg %p124
      $region26: #{attention_forward.1} parent=11 // pred_check_branch
        %239 = sbr.rel (%p237) target = $region28
      $region27: #{attention_forward.1} parent=11 // pred_region
        _
      $region28: #{attention_forward.1} parent=11 // pred_fallthru
        _
      // Predicated region
      $region29: #{attention_forward.1} parent=11 // pred_check
        %p240 = pneg %p145
      $region30: #{attention_forward.1} parent=11 // pred_check_branch
        %242 = sbr.rel (%p240) target = $region32
      $region31: #{attention_forward.1} parent=11 // pred_region
        _
      $region32: #{attention_forward.1} parent=11 // pred_fallthru
        _
      // Predicated region
      $region33: #{attention_forward.1} parent=11 // pred_check
        %p243 = pneg %p166
      $region34: #{attention_forward.1} parent=11 // pred_check_branch
        %245 = sbr.rel (%p243) target = $region36
      $region35: #{attention_forward.1} parent=11 // pred_region
        _
      $region36: #{attention_forward.1} parent=11 // pred_fallthru
        _
      // Predicated region
      $region37: #{attention_forward.1} parent=11 // pred_check
        %p246 = pneg %p187
      $region38: #{attention_forward.1} parent=11 // pred_check_branch
        %248 = sbr.rel (%p246) target = $region40
      $region39: #{attention_forward.1} parent=11 // pred_region
        _
      $region40: #{attention_forward.1} parent=11 // pred_fallthru
        _
    $region12: #{attention_forward.1} parent=5 // pred_fallthru
      _
    %p249 = scmp.lt.s32.totalorder %s14, 2
    // Predicated region
    $region41: #{attention_forward.1} parent=5 // pred_check
      %p250 = pneg %p249
    $region42: #{attention_forward.1} parent=5 // pred_check_branch
      %252 = sbr.rel (%p250) target = $region44
    $region43: #{attention_forward.1} parent=5 // pred_region
      // Predicated region
      $region45: #{attention_forward.1} parent=43 // pred_check
        %p253 = pneg %p34
      $region46: #{attention_forward.1} parent=43 // pred_check_branch
        %255 = sbr.rel (%p253) target = $region48
      $region47: #{attention_forward.1} parent=43 // pred_region
        %p256 = scmp.lt.s32.totalorder %s14, 1
        %s257 = scalar_select %p256, %s14, 1
        %s258 = smul.addr %s257, 16
        %s259 = smul.addr %s258, 8
        %s260 = scalar_lea.vmem %s0, %s259
      $region48: #{attention_forward.1} parent=43 // pred_fallthru
        _
    $region44: #{attention_forward.1} parent=5 // pred_fallthru
      _
    %p261 = scmp.le.s32.totalorder 1, %s14
    %p262 = scmp.lt.s32.totalorder %s14, 3
    %p263 = pnand %p261, %p262
    %p264 = pneg %p263
    // Predicated region
    $region49: #{attention_forward.1} parent=5 // pred_check
      _
    $region50: #{attention_forward.1} parent=5 // pred_check_branch
      %266 = sbr.rel (%p263) target = $region52
    $region51: #{attention_forward.1} parent=5 // pred_region
      %s267 = ssub.s32 %s14, 1
      %p268 = scmp.lt.s32.totalorder %s19, 1
      %s269 = scalar_select %p268, %s19, 1
      %s270 = smul.addr %s269, 16
      %s271 = smul.addr %s270, 8
      %s272 = scalar_lea.vmem %s0, %s271
      %p273 = pneg %p40
      %p274 = pneg %p37
      %p275 = pneg %p61
      %p276 = pneg %p58
      %p277 = pneg %p82
      %p278 = pneg %p79
      %p279 = pneg %p103
      %p280 = pneg %p100
      %p281 = pneg %p124
      %p282 = pneg %p121
      %p283 = pneg %p145
      %p284 = pneg %p142
      %p285 = pneg %p166
      %p286 = pneg %p163
      %p287 = pneg %p187
      %p288 = pneg %p184
      %p289 = pneg %p213
      %p290 = pneg %p210
      %p291 = scmp.lt.s32.totalorder %s19, 1
      %s292 = scalar_select %p291, %s19, 1
      %s293 = smul.addr %s292, 16
      %s294 = smul.addr %s293, 8
      %s295 = scalar_lea.vmem %s8, %s294
      %p296 = scmp.lt.s32.totalorder %s19, 1
      %s297 = scalar_select %p296, %s19, 1
      %s298 = smul.addr %s297, 16
      %s299 = smul.addr %s298, 8
      %s300 = scalar_lea.vmem %s0, %s299
      %p301 = scmp.lt.s32.totalorder %s19, 1
      %s302 = scalar_select %p301, %s19, 1
      %s303 = smul.addr %s302, 16
      %s304 = smul.addr %s303, 8
      %s305 = scalar_lea.vmem %s8, %s304
      %v306 = vld [vmem:[%s300] sm:$0xff]
      %v307 = vld [vmem:[%s300 + $0x8] sm:$0xff]
      %v308 = vld [vmem:[%s300 + $0x10] sm:$0xff]
      %v309 = vld [vmem:[%s300 + $0x18] sm:$0xff]
      %v310 = vld [vmem:[%s300 + $0x20] sm:$0xff]
      %v311 = vld [vmem:[%s300 + $0x28] sm:$0xff]
      %v312 = vld [vmem:[%s300 + $0x30] sm:$0xff]
      %v313 = vld [vmem:[%s300 + $0x38] sm:$0xff]
      %v314 = vld [vmem:[%s300 + $0x40] sm:$0xff]
      %v315 = vld [vmem:[%s300 + $0x48] sm:$0xff]
      %v316 = vld [vmem:[%s300 + $0x50] sm:$0xff]
      %v317 = vld [vmem:[%s300 + $0x58] sm:$0xff]
      %v318 = vld [vmem:[%s300 + $0x60] sm:$0xff]
      %v319 = vld [vmem:[%s300 + $0x68] sm:$0xff]
      %v320 = vld [vmem:[%s300 + $0x70] sm:$0xff]
      %v321 = vld [vmem:[%s300 + $0x78] sm:$0xff]
      %v322 = vld [vmem:[%s1] sm:$0xff]
      %v323 = vld [vmem:[%s1 + $0x8] sm:$0xff]
      %v324 = vld [vmem:[%s1 + $0x10] sm:$0xff]
      %v325 = vld [vmem:[%s1 + $0x18] sm:$0xff]
      %v326 = vld [vmem:[%s1 + $0x20] sm:$0xff]
      %v327 = vld [vmem:[%s1 + $0x28] sm:$0xff]
      %v328 = vld [vmem:[%s1 + $0x30] sm:$0xff]
      %v329 = vld [vmem:[%s1 + $0x38] sm:$0xff]
      %v330 = vld [vmem:[%s1 + $0x40] sm:$0xff]
      %v331 = vld [vmem:[%s1 + $0x48] sm:$0xff]
      %v332 = vld [vmem:[%s1 + $0x50] sm:$0xff]
      %v333 = vld [vmem:[%s1 + $0x58] sm:$0xff]
      %v334 = vld [vmem:[%s1 + $0x60] sm:$0xff]
      %v335 = vld [vmem:[%s1 + $0x68] sm:$0xff]
      %v336 = vld [vmem:[%s1 + $0x70] sm:$0xff]
      %v337 = vld [vmem:[%s1 + $0x78] sm:$0xff]
      %v338 = vld [vmem:[%s2] sm:$0xff]
      %v339 = vld [vmem:[%s2 + $0x8] sm:$0xff]
      %v340 = vld [vmem:[%s2 + $0x10] sm:$0xff]
      %v341 = vld [vmem:[%s2 + $0x18] sm:$0xff]
      %v342 = vld [vmem:[%s2 + $0x20] sm:$0xff]
      %v343 = vld [vmem:[%s2 + $0x28] sm:$0xff]
      %v344 = vld [vmem:[%s2 + $0x30] sm:$0xff]
      %v345 = vld [vmem:[%s2 + $0x38] sm:$0xff]
      %v346 = vld [vmem:[%s2 + $0x40] sm:$0xff]
      %v347 = vld [vmem:[%s2 + $0x48] sm:$0xff]
      %v348 = vld [vmem:[%s2 + $0x50] sm:$0xff]
      %v349 = vld [vmem:[%s2 + $0x58] sm:$0xff]
      %v350 = vld [vmem:[%s2 + $0x60] sm:$0xff]
      %v351 = vld [vmem:[%s2 + $0x68] sm:$0xff]
      %v352 = vld [vmem:[%s2 + $0x70] sm:$0xff]
      %v353 = vld [vmem:[%s2 + $0x78] sm:$0xff]
      %355 = vset.pattern.permute.xlu0 0
      %356 = vperm.xlu0 %355, %v338
      %v357 = vpop.permute.xlu0 %356
      %360 = vset.pattern.permute.xlu0 0
      %361 = vperm.xlu0 %360, %v339
      %v362 = vpop.permute.xlu0 %361
      %365 = vset.pattern.permute.xlu0 0
      %366 = vperm.xlu0 %365, %v340
      %v367 = vpop.permute.xlu0 %366
      %370 = vset.pattern.permute.xlu0 0
      %371 = vperm.xlu0 %370, %v341
      %v372 = vpop.permute.xlu0 %371
      %375 = vset.pattern.permute.xlu0 0
      %376 = vperm.xlu0 %375, %v342
      %v377 = vpop.permute.xlu0 %376
      %380 = vset.pattern.permute.xlu0 0
      %381 = vperm.xlu0 %380, %v343
      %v382 = vpop.permute.xlu0 %381
      %385 = vset.pattern.permute.xlu0 0
      %386 = vperm.xlu0 %385, %v344
      %v387 = vpop.permute.xlu0 %386
      %390 = vset.pattern.permute.xlu0 0
      %391 = vperm.xlu0 %390, %v345
      %v392 = vpop.permute.xlu0 %391
      %395 = vset.pattern.permute.xlu0 0
      %396 = vperm.xlu0 %395, %v346
      %v397 = vpop.permute.xlu0 %396
      %400 = vset.pattern.permute.xlu0 0
      %401 = vperm.xlu0 %400, %v347
      %v402 = vpop.permute.xlu0 %401
      %405 = vset.pattern.permute.xlu0 0
      %406 = vperm.xlu0 %405, %v348
      %v407 = vpop.permute.xlu0 %406
      %410 = vset.pattern.permute.xlu0 0
      %411 = vperm.xlu0 %410, %v349
      %v412 = vpop.permute.xlu0 %411
      %415 = vset.pattern.permute.xlu0 0
      %416 = vperm.xlu0 %415, %v350
      %v417 = vpop.permute.xlu0 %416
      %420 = vset.pattern.permute.xlu0 0
      %421 = vperm.xlu0 %420, %v351
      %v422 = vpop.permute.xlu0 %421
      %425 = vset.pattern.permute.xlu0 0
      %426 = vperm.xlu0 %425, %v352
      %v427 = vpop.permute.xlu0 %426
      %430 = vset.pattern.permute.xlu0 0
      %431 = vperm.xlu0 %430, %v353
      %v432 = vpop.permute.xlu0 %431
      %vm434 = vcmask 523264
      %v436 = vsel %vm434, %v322, 0
      %v439 = vsel %vm434, %v323, 0
      %v442 = vsel %vm434, %v324, 0
      %v445 = vsel %vm434, %v325, 0
      %v448 = vsel %vm434, %v326, 0
      %v451 = vsel %vm434, %v327, 0
      %v454 = vsel %vm434, %v328, 0
      %v457 = vsel %vm434, %v329, 0
      %v460 = vsel %vm434, %v330, 0
      %v463 = vsel %vm434, %v331, 0
      %v466 = vsel %vm434, %v332, 0
      %v469 = vsel %vm434, %v333, 0
      %v472 = vsel %vm434, %v334, 0
      %v475 = vsel %vm434, %v335, 0
      %v478 = vsel %vm434, %v336, 0
      %v481 = vsel %vm434, %v337, 0
      %483 = vmatprep.subr.mxu0 %v307
      %484 = vmatpush1.msra.mxu0 %v306
      %485 = vmatprep.subr.mxu0 %v309
      %486 = vmatpush1.msra.mxu0 %v308
      %487 = vmatprep.subr.mxu0 %v311
      %488 = vmatpush1.msra.mxu0 %v310
      %489 = vmatprep.subr.mxu0 %v313
      %490 = vmatpush1.msra.mxu0 %v312
      %491 = vmatprep.subr.mxu0 %v315
      %492 = vmatpush1.msra.mxu0 %v314
      %493 = vmatprep.subr.mxu0 %v317
      %494 = vmatpush1.msra.mxu0 %v316
      %495 = vmatprep.subr.mxu0 %v319
      %496 = vmatpush1.msra.mxu0 %v318
      %497 = vmatprep.subr.mxu0 %v321
      %498 = vmatpush1.msra.mxu0 %v320
      %499 = vmatprep.subr.mxu0 0.0
      %500 = vmatpush1.msra.mxu0 0.0
      %501 = vmatprep.subr.mxu0 0.0
      %502 = vmatpush1.msra.mxu0 0.0
      %503 = vmatprep.subr.mxu0 0.0
      %504 = vmatpush1.msra.mxu0 0.0
      %505 = vmatprep.subr.mxu0 0.0
      %506 = vmatpush1.msra.mxu0 0.0
      %507 = vmatprep.subr.mxu0 0.0
      %508 = vmatpush1.msra.mxu0 0.0
      %509 = vmatprep.subr.mxu0 0.0
      %510 = vmatpush1.msra.mxu0 0.0
      %511 = vmatprep.subr.mxu0 0.0
      %512 = vmatpush1.msra.mxu0 0.0
      %513 = vmatprep.subr.mxu0 0.0
      %514 = vmatpush1.msra.mxu0 0.0
      %515 = vmatprep.subr.mxu0 0.0
      %516 = vmatpush1.msra.mxu0 0.0
      %517 = vmatprep.subr.mxu0 0.0
      %518 = vmatpush1.msra.mxu0 0.0
      %519 = vmatprep.subr.mxu0 0.0
      %520 = vmatpush1.msra.mxu0 0.0
      %521 = vmatprep.subr.mxu0 0.0
      %522 = vmatpush1.msra.mxu0 0.0
      %523 = vmatprep.subr.mxu0 0.0
      %524 = vmatpush1.msra.mxu0 0.0
      %525 = vmatprep.subr.mxu0 0.0
      %526 = vmatpush1.msra.mxu0 0.0
      %527 = vmatprep.subr.mxu0 0.0
      %528 = vmatpush1.msra.mxu0 0.0
      %529 = vmatprep.subr.mxu0 0.0
      %530 = vmatpush1.msra.mxu0 0.0
      %531 = vmatprep.subr.mxu0 0.0
      %532 = vmatpush1.msra.mxu0 0.0
      %533 = vmatprep.subr.mxu0 0.0
      %534 = vmatpush1.msra.mxu0 0.0
      %535 = vmatprep.subr.mxu0 0.0
      %536 = vmatpush1.msra.mxu0 0.0
      %537 = vmatprep.subr.mxu0 0.0
      %538 = vmatpush1.msra.mxu0 0.0
      %539 = vmatprep.subr.mxu0 0.0
      %540 = vmatpush1.msra.mxu0 0.0
      %541 = vmatprep.subr.mxu0 0.0
      %542 = vmatpush1.msra.mxu0 0.0
      %543 = vmatprep.subr.mxu0 0.0
      %544 = vmatpush1.msra.mxu0 0.0
      %545 = vmatprep.subr.mxu0 0.0
      %546 = vmatpush1.msra.mxu0 0.0
      %547 = vmatprep.mubr.f32.mxu0 0.0
      %548 = vmatmul.mubr.f32.gmra.mrb[0].mxu0 %v436
      %v549 = vpop.f32.mrb[0].mxu0
      %v550 = vadd.f32 %v357, %v549
      %v551 = vpop.f32.mrb[0].mxu0
      %v552 = vadd.f32 %v357, %v551
      %553 = vmatprep.mubr.f32.mxu0 0.0
      %554 = vmatmul.mubr.f32.gmra.mrb[0].mxu0 %v439
      %v555 = vpop.f32.mrb[0].mxu0
      %v556 = vadd.f32 %v362, %v555
      %v557 = vpop.f32.mrb[0].mxu0
      %v558 = vadd.f32 %v362, %v557
      %559 = vmatprep.mubr.f32.mxu0 0.0
      %560 = vmatmul.mubr.f32.gmra.mrb[0].mxu0 %v442
      %v561 = vpop.f32.mrb[0].mxu0
      %v562 = vadd.f32 %v367, %v561
      %v563 = vpop.f32.mrb[0].mxu0
      %v564 = vadd.f32 %v367, %v563
      %565 = vmatprep.mubr.f32.mxu0 0.0
      %566 = vmatmul.mubr.f32.gmra.mrb[0].mxu0 %v445
      %v567 = vpop.f32.mrb[0].mxu0
      %v568 = vadd.f32 %v372, %v567
      %v569 = vpop.f32.mrb[0].mxu0
      %v570 = vadd.f32 %v372, %v569
      %571 = vmatprep.mubr.f32.mxu0 0.0
      %572 = vmatmul.mubr.f32.gmra.mrb[0].mxu0 %v448
      %v573 = vpop.f32.mrb[0].mxu0
      %v574 = vadd.f32 %v377, %v573
      %v575 = vpop.f32.mrb[0].mxu0
      %v576 = vadd.f32 %v377, %v575
      %577 = vmatprep.mubr.f32.mxu0 0.0
      %578 = vmatmul.mubr.f32.gmra.mrb[0].mxu0 %v451
      %v579 = vpop.f32.mrb[0].mxu0
      %v580 = vadd.f32 %v382, %v579
      %v581 = vpop.f32.mrb[0].mxu0
      %v582 = vadd.f32 %v382, %v581
      %583 = vmatprep.mubr.f32.mxu0 0.0
      %584 = vmatmul.mubr.f32.gmra.mrb[0].mxu0 %v454
      %v585 = vpop.f32.mrb[0].mxu0
      %v586 = vadd.f32 %v387, %v585
      %v587 = vpop.f32.mrb[0].mxu0
      %v588 = vadd.f32 %v387, %v587
      %589 = vmatprep.mubr.f32.mxu0 0.0
      %590 = vmatmul.mubr.f32.gmra.mrb[0].mxu0 %v457
      %v591 = vpop.f32.mrb[0].mxu0
      %v592 = vadd.f32 %v392, %v591
      %v593 = vpop.f32.mrb[0].mxu0
      %v594 = vadd.f32 %v392, %v593
      %595 = vmatprep.mubr.f32.mxu0 0.0
      %596 = vmatmul.mubr.f32.gmra.mrb[0].mxu0 %v460
      %v597 = vpop.f32.mrb[0].mxu0
      %v598 = vadd.f32 %v397, %v597
      %v599 = vpop.f32.mrb[0].mxu0
      %v600 = vadd.f32 %v397, %v599
      %601 = vmatprep.mubr.f32.mxu0 0.0
      %602 = vmatmul.mubr.f32.gmra.mrb[0].mxu0 %v463
      %v603 = vpop.f32.mrb[0].mxu0
      %v604 = vadd.f32 %v402, %v603
      %v605 = vpop.f32.mrb[0].mxu0
      %v606 = vadd.f32 %v402, %v605
      %607 = vmatprep.mubr.f32.mxu0 0.0
      %608 = vmatmul.mubr.f32.gmra.mrb[0].mxu0 %v466
      %v609 = vpop.f32.mrb[0].mxu0
      %v610 = vadd.f32 %v407, %v609
      %v611 = vpop.f32.mrb[0].mxu0
      %v612 = vadd.f32 %v407, %v611
      %613 = vmatprep.mubr.f32.mxu0 0.0
      %614 = vmatmul.mubr.f32.gmra.mrb[0].mxu0 %v469
      %v615 = vpop.f32.mrb[0].mxu0
      %v616 = vadd.f32 %v412, %v615
      %v617 = vpop.f32.mrb[0].mxu0
      %v618 = vadd.f32 %v412, %v617
      %619 = vmatprep.mubr.f32.mxu0 0.0
      %620 = vmatmul.mubr.f32.gmra.mrb[0].mxu0 %v472
      %v621 = vpop.f32.mrb[0].mxu0
      %v622 = vadd.f32 %v417, %v621
      %v623 = vpop.f32.mrb[0].mxu0
      %v624 = vadd.f32 %v417, %v623
      %625 = vmatprep.mubr.f32.mxu0 0.0
      %626 = vmatmul.mubr.f32.gmra.mrb[0].mxu0 %v475
      %v627 = vpop.f32.mrb[0].mxu0
      %v628 = vadd.f32 %v422, %v627
      %v629 = vpop.f32.mrb[0].mxu0
      %v630 = vadd.f32 %v422, %v629
      %631 = vmatprep.mubr.f32.mxu0 0.0
      %632 = vmatmul.mubr.f32.gmra.mrb[0].mxu0 %v478
      %v633 = vpop.f32.mrb[0].mxu0
      %v634 = vadd.f32 %v427, %v633
      %v635 = vpop.f32.mrb[0].mxu0
      %v636 = vadd.f32 %v427, %v635
      %637 = vmatprep.mubr.f32.mxu0 0.0
      %638 = vmatmul.mubr.f32.gmra.mrb[0].mxu0 %v481
      %v639 = vpop.f32.mrb[0].mxu0
      %v640 = vadd.f32 %v432, %v639
      %v641 = vpop.f32.mrb[0].mxu0
      %v642 = vadd.f32 %v432, %v641
      %643 = vdwg.mxu0
      %644 = vxpose.xlu0.b32.start [1/16] %v550, 128
      %645 = vxpose.xlu0.b32.cont [2/16] 0.0, 128
      %646 = vxpose.xlu0.b32.cont [3/16] 0.0, 128
      %647 = vxpose.xlu0.b32.cont [4/16] 0.0, 128
      %648 = vxpose.xlu0.b32.cont [5/16] 0.0, 128
      %649 = vxpose.xlu0.b32.cont [6/16] 0.0, 128
      %650 = vxpose.xlu0.b32.cont [7/16] 0.0, 128
      %651 = vxpose.xlu0.b32.cont [8/16] 0.0, 128
      %652 = vxpose.xlu0.b32.cont [9/16] 0.0, 128
      %653 = vxpose.xlu0.b32.cont [10/16] 0.0, 128
      %654 = vxpose.xlu0.b32.cont [11/16] 0.0, 128
      %655 = vxpose.xlu0.b32.cont [12/16] 0.0, 128
      %656 = vxpose.xlu0.b32.cont [13/16] 0.0, 128
      %657 = vxpose.xlu0.b32.cont [14/16] 0.0, 128
      %658 = vxpose.xlu0.b32.cont [15/16] 0.0, 128
      %659 = vxpose.xlu0.b32.end [16/16] 0.0, 128
      %v660 = vpop.trf.xlu0
      %v661 = vpop.trf.xlu0
      %v662 = vpop.trf.xlu0
      %v663 = vpop.trf.xlu0
      %v664 = vpop.trf.xlu0
      %v665 = vpop.trf.xlu0
      %v666 = vpop.trf.xlu0
      %v667 = vpop.trf.xlu0
      %v668 = vpop.trf.xlu0
      %v669 = vpop.trf.xlu0
      %v670 = vpop.trf.xlu0
      %v671 = vpop.trf.xlu0
      %v672 = vpop.trf.xlu0
      %v673 = vpop.trf.xlu0
      %v674 = vpop.trf.xlu0
      %v675 = vpop.trf.xlu0
      %676 = vxpose.xlu0.b32.start [1/16] %v552, 128
      %677 = vxpose.xlu0.b32.cont [2/16] 0.0, 128
      %678 = vxpose.xlu0.b32.cont [3/16] 0.0, 128
      %679 = vxpose.xlu0.b32.cont [4/16] 0.0, 128
      %680 = vxpose.xlu0.b32.cont [5/16] 0.0, 128
      %681 = vxpose.xlu0.b32.cont [6/16] 0.0, 128
      %682 = vxpose.xlu0.b32.cont [7/16] 0.0, 128
      %683 = vxpose.xlu0.b32.cont [8/16] 0.0, 128
      %684 = vxpose.xlu0.b32.cont [9/16] 0.0, 128
      %685 = vxpose.xlu0.b32.cont [10/16] 0.0, 128
      %686 = vxpose.xlu0.b32.cont [11/16] 0.0, 128
      %687 = vxpose.xlu0.b32.cont [12/16] 0.0, 128
      %688 = vxpose.xlu0.b32.cont [13/16] 0.0, 128
      %689 = vxpose.xlu0.b32.cont [14/16] 0.0, 128
      %690 = vxpose.xlu0.b32.cont [15/16] 0.0, 128
      %691 = vxpose.xlu0.b32.end [16/16] 0.0, 128
      %v692 = vpop.trf.xlu0
      %v693 = vpop.trf.xlu0
      %v694 = vpop.trf.xlu0
      %v695 = vpop.trf.xlu0
      %v696 = vpop.trf.xlu0
      %v697 = vpop.trf.xlu0
      %v698 = vpop.trf.xlu0
      %v699 = vpop.trf.xlu0
      %v700 = vpop.trf.xlu0
      %v701 = vpop.trf.xlu0
      %v702 = vpop.trf.xlu0
      %v703 = vpop.trf.xlu0
      %v704 = vpop.trf.xlu0
      %v705 = vpop.trf.xlu0
      %v706 = vpop.trf.xlu0
      %v707 = vpop.trf.xlu0
      %vm708 = vcmask 31744
      %v710 = vsel %vm708, %v660, 0
      %v713 = vsel %vm708, %v661, 0
      %v716 = vsel %vm708, %v662, 0
      %v719 = vsel %vm708, %v663, 0
      %v722 = vsel %vm708, %v664, 0
      %v725 = vsel %vm708, %v665, 0
      %v728 = vsel %vm708, %v666, 0
      %v731 = vsel %vm708, %v667, 0
      %v734 = vsel %vm708, %v668, 0
      %v737 = vsel %vm708, %v669, 0
      %v740 = vsel %vm708, %v670, 0
      %v743 = vsel %vm708, %v671, 0
      %v746 = vsel %vm708, %v672, 0
      %v749 = vsel %vm708, %v673, 0
      %v752 = vsel %vm708, %v674, 0
      %v755 = vsel %vm708, %v675, 0
      %v758 = vsel %vm708, %v692, 0
      %v761 = vsel %vm708, %v693, 0
      %v764 = vsel %vm708, %v694, 0
      %v767 = vsel %vm708, %v695, 0
      %v770 = vsel %vm708, %v696, 0
      %v773 = vsel %vm708, %v697, 0
      %v776 = vsel %vm708, %v698, 0
      %v779 = vsel %vm708, %v699, 0
      %v782 = vsel %vm708, %v700, 0
      %v785 = vsel %vm708, %v701, 0
      %v788 = vsel %vm708, %v702, 0
      %v791 = vsel %vm708, %v703, 0
      %v794 = vsel %vm708, %v704, 0
      %v797 = vsel %vm708, %v705, 0
      %v800 = vsel %vm708, %v706, 0
      %v803 = vsel %vm708, %v707, 0
      %vm805 = vcmask 1043456
      %v807 = vsel %vm805, %v574, 0
      %v810 = vsel %vm805, %v576, 0
      %812 = vmatprep.subr.mxu0 %v810
      %813 = vmatpush1.msra.mxu0 %v807
      %814 = vmatprep.subr.mxu0 0.0
      %815 = vmatpush1.msra.mxu0 0.0
      %816 = vmatprep.subr.mxu0 0.0
      %817 = vmatpush1.msra.mxu0 0.0
      %818 = vmatprep.subr.mxu0 0.0
      %819 = vmatpush1.msra.mxu0 0.0
      %820 = vmatprep.subr.mxu0 0.0
      %821 = vmatpush1.msra.mxu0 0.0
      %822 = vmatprep.subr.mxu0 0.0
      %823 = vmatpush1.msra.mxu0 0.0
      %824 = vmatprep.subr.mxu0 0.0
      %825 = vmatpush1.msra.mxu0 0.0
      %826 = vmatprep.subr.mxu0 0.0
      %827 = vmatpush1.msra.mxu0 0.0
      %828 = vmatprep.subr.mxu0 0.0
      %829 = vmatpush1.msra.mxu0 0.0
      %830 = vmatprep.subr.mxu0 0.0
      %831 = vmatpush1.msra.mxu0 0.0
      %832 = vmatprep.subr.mxu0 0.0
      %833 = vmatpush1.msra.mxu0 0.0
      %834 = vmatprep.subr.mxu0 0.0
      %835 = vmatpush1.msra.mxu0 0.0
      %836 = vmatprep.subr.mxu0 0.0
      %837 = vmatpush1.msra.mxu0 0.0
      %838 = vmatprep.subr.mxu0 0.0
      %839 = vmatpush1.msra.mxu0 0.0
      %840 = vmatprep.subr.mxu0 0.0
      %841 = vmatpush1.msra.mxu0 0.0
      %842 = vmatprep.subr.mxu0 0.0
      %843 = vmatpush1.msra.mxu0 0.0
      %844 = vmatprep.subr.mxu0 0.0
      %845 = vmatpush1.msra.mxu0 0.0
      %846 = vmatprep.subr.mxu0 0.0
      %847 = vmatpush1.msra.mxu0 0.0
      %848 = vmatprep.subr.mxu0 0.0
      %849 = vmatpush1.msra.mxu0 0.0
      %850 = vmatprep.subr.mxu0 0.0
      %851 = vmatpush1.msra.mxu0 0.0
      %852 = vmatprep.subr.mxu0 0.0
      %853 = vmatpush1.msra.mxu0 0.0
      %854 = vmatprep.subr.mxu0 0.0
      %855 = vmatpush1.msra.mxu0 0.0
      %856 = vmatprep.subr.mxu0 0.0
      %857 = vmatpush1.msra.mxu0 0.0
      %858 = vmatprep.subr.mxu0 0.0
      %859 = vmatpush1.msra.mxu0 0.0
      %860 = vmatprep.subr.mxu0 0.0
      %861 = vmatpush1.msra.mxu0 0.0
      %862 = vmatprep.subr.mxu0 0.0
      %863 = vmatpush1.msra.mxu0 0.0
      %864 = vmatprep.subr.mxu0 0.0
      %865 = vmatpush1.msra.mxu0 0.0
      %866 = vmatprep.subr.mxu0 0.0
      %867 = vmatpush1.msra.mxu0 0.0
      %868 = vmatprep.subr.mxu0 0.0
      %869 = vmatpush1.msra.mxu0 0.0
      %870 = vmatprep.subr.mxu0 0.0
      %871 = vmatpush1.msra.mxu0 0.0
      %872 = vmatprep.subr.mxu0 0.0
      %873 = vmatpush1.msra.mxu0 0.0
      %874 = vmatprep.subr.mxu0 0.0
      %875 = vmatpush1.msra.mxu0 0.0
      %876 = vmatprep.mubr.f32.mxu0 0.0
      %877 = vmatmul.mubr.f32.gmra.mrb[0].mxu0 %v710
      %v878 = vpop.f32.mrb[0].mxu0
      %v879 = vadd.f32 0.0, %v878
      %v880 = vpop.f32.mrb[0].mxu0
      %v881 = vadd.f32 0.0, %v880
      %882 = vmatprep.mubr.f32.mxu0 0.0
      %883 = vmatmul.mubr.f32.gmra.mrb[0].mxu0 %v713
      %v884 = vpop.f32.mrb[0].mxu0
      %v885 = vadd.f32 0.0, %v884
      %v886 = vpop.f32.mrb[0].mxu0
      %v887 = vadd.f32 0.0, %v886
      %888 = vmatprep.mubr.f32.mxu0 0.0
      %889 = vmatmul.mubr.f32.gmra.mrb[0].mxu0 %v716
      %v890 = vpop.f32.mrb[0].mxu0
      %v891 = vadd.f32 0.0, %v890
      %v892 = vpop.f32.mrb[0].mxu0
      %v893 = vadd.f32 0.0, %v892
      %894 = vmatprep.mubr.f32.mxu0 0.0
      %895 = vmatmul.mubr.f32.gmra.mrb[0].mxu0 %v719
      %v896 = vpop.f32.mrb[0].mxu0
      %v897 = vadd.f32 0.0, %v896
      %v898 = vpop.f32.mrb[0].mxu0
      %v899 = vadd.f32 0.0, %v898
      %900 = vmatprep.mubr.f32.mxu0 0.0
      %901 = vmatmul.mubr.f32.gmra.mrb[0].mxu0 %v722
      %v902 = vpop.f32.mrb[0].mxu0
      %v903 = vadd.f32 0.0, %v902
      %v904 = vpop.f32.mrb[0].mxu0
      %v905 = vadd.f32 0.0, %v904
      %906 = vmatprep.mubr.f32.mxu0 0.0
      %907 = vmatmul.mubr.f32.gmra.mrb[0].mxu0 %v725
      %v908 = vpop.f32.mrb[0].mxu0
      %v909 = vadd.f32 0.0, %v908
      %v910 = vpop.f32.mrb[0].mxu0
      %v911 = vadd.f32 0.0, %v910
      %912 = vmatprep.mubr.f32.mxu0 0.0
      %913 = vmatmul.mubr.f32.gmra.mrb[0].mxu0 %v728
      %v914 = vpop.f32.mrb[0].mxu0
      %v915 = vadd.f32 0.0, %v914
      %v916 = vpop.f32.mrb[0].mxu0
      %v917 = vadd.f32 0.0, %v916
      %918 = vmatprep.mubr.f32.mxu0 0.0
      %919 = vmatmul.mubr.f32.gmra.mrb[0].mxu0 %v731
      %v920 = vpop.f32.mrb[0].mxu0
      %v921 = vadd.f32 0.0, %v920
      %v922 = vpop.f32.mrb[0].mxu0
      %v923 = vadd.f32 0.0, %v922
      %924 = vmatprep.mubr.f32.mxu0 0.0
      %925 = vmatmul.mubr.f32.gmra.mrb[0].mxu0 %v734
      %v926 = vpop.f32.mrb[0].mxu0
      %v927 = vadd.f32 0.0, %v926
      %v928 = vpop.f32.mrb[0].mxu0
      %v929 = vadd.f32 0.0, %v928
      %930 = vmatprep.mubr.f32.mxu0 0.0
      %931 = vmatmul.mubr.f32.gmra.mrb[0].mxu0 %v737
      %v932 = vpop.f32.mrb[0].mxu0
      %v933 = vadd.f32 0.0, %v932
      %v934 = vpop.f32.mrb[0].mxu0
      %v935 = vadd.f32 0.0, %v934
      %936 = vmatprep.mubr.f32.mxu0 0.0
      %937 = vmatmul.mubr.f32.gmra.mrb[0].mxu0 %v740
      %v938 = vpop.f32.mrb[0].mxu0
      %v939 = vadd.f32 0.0, %v938
      %v940 = vpop.f32.mrb[0].mxu0
      %v941 = vadd.f32 0.0, %v940
      %942 = vmatprep.mubr.f32.mxu0 0.0
      %943 = vmatmul.mubr.f32.gmra.mrb[0].mxu0 %v743
      %v944 = vpop.f32.mrb[0].mxu0
      %v945 = vadd.f32 0.0, %v944
      %v946 = vpop.f32.mrb[0].mxu0
      %v947 = vadd.f32 0.0, %v946
      %948 = vmatprep.mubr.f32.mxu0 0.0
      %949 = vmatmul.mubr.f32.gmra.mrb[0].mxu0 %v746
      %v950 = vpop.f32.mrb[0].mxu0
      %v951 = vadd.f32 0.0, %v950
      %v952 = vpop.f32.mrb[0].mxu0
      %v953 = vadd.f32 0.0, %v952
      %954 = vmatprep.mubr.f32.mxu0 0.0
      %955 = vmatmul.mubr.f32.gmra.mrb[0].mxu0 %v749
      %v956 = vpop.f32.mrb[0].mxu0
      %v957 = vadd.f32 0.0, %v956
      %v958 = vpop.f32.mrb[0].mxu0
      %v959 = vadd.f32 0.0, %v958
      %960 = vmatprep.mubr.f32.mxu0 0.0
      %961 = vmatmul.mubr.f32.gmra.mrb[0].mxu0 %v752
      %v962 = vpop.f32.mrb[0].mxu0
      %v963 = vadd.f32 0.0, %v962
      %v964 = vpop.f32.mrb[0].mxu0
      %v965 = vadd.f32 0.0, %v964
      %966 = vmatprep.mubr.f32.mxu0 0.0
      %967 = vmatmul.mubr.f32.gmra.mrb[0].mxu0 %v755
      %v968 = vpop.f32.mrb[0].mxu0
      %v969 = vadd.f32 0.0, %v968
      %v970 = vpop.f32.mrb[0].mxu0
      %v971 = vadd.f32 0.0, %v970
      %972 = vmatprep.mubr.f32.mxu0 0.0
      %973 = vmatmul.mubr.f32.gmra.mrb[0].mxu0 %v758
      %v974 = vpop.f32.mrb[0].mxu0
      %v975 = vadd.f32 0.0, %v974
      %v976 = vpop.f32.mrb[0].mxu0
      %v977 = vadd.f32 0.0, %v976
      %978 = vmatprep.mubr.f32.mxu0 0.0
      %979 = vmatmul.mubr.f32.gmra.mrb[0].mxu0 %v761
      %v980 = vpop.f32.mrb[0].mxu0
      %v981 = vadd.f32 0.0, %v980
      %v982 = vpop.f32.mrb[0].mxu0
      %v983 = vadd.f32 0.0, %v982
      %984 = vmatprep.mubr.f32.mxu0 0.0
      %985 = vmatmul.mubr.f32.gmra.mrb[0].mxu0 %v764
      %v986 = vpop.f32.mrb[0].mxu0
      %v987 = vadd.f32 0.0, %v986
      %v988 = vpop.f32.mrb[0].mxu0
      %v989 = vadd.f32 0.0, %v988
      %990 = vmatprep.mubr.f32.mxu0 0.0
      %991 = vmatmul.mubr.f32.gmra.mrb[0].mxu0 %v767
      %v992 = vpop.f32.mrb[0].mxu0
      %v993 = vadd.f32 0.0, %v992
      %v994 = vpop.f32.mrb[0].mxu0
      %v995 = vadd.f32 0.0, %v994
      %996 = vmatprep.mubr.f32.mxu0 0.0
      %997 = vmatmul.mubr.f32.gmra.mrb[0].mxu0 %v770
      %v998 = vpop.f32.mrb[0].mxu0
      %v999 = vadd.f32 0.0, %v998
      %v1000 = vpop.f32.mrb[0].mxu0
      %v1001 = vadd.f32 0.0, %v1000
      %1002 = vmatprep.mubr.f32.mxu0 0.0
      %1003 = vmatmul.mubr.f32.gmra.mrb[0].mxu0 %v773
      %v1004 = vpop.f32.mrb[0].mxu0
      %v1005 = vadd.f32 0.0, %v1004
      %v1006 = vpop.f32.mrb[0].mxu0
      %v1007 = vadd.f32 0.0, %v1006
      %1008 = vmatprep.mubr.f32.mxu0 0.0
      %1009 = vmatmul.mubr.f32.gmra.mrb[0].mxu0 %v776
      %v1010 = vpop.f32.mrb[0].mxu0
      %v1011 = vadd.f32 0.0, %v1010
      %v1012 = vpop.f32.mrb[0].mxu0
      %v1013 = vadd.f32 0.0, %v1012
      %1014 = vmatprep.mubr.f32.mxu0 0.0
      %1015 = vmatmul.mubr.f32.gmra.mrb[0].mxu0 %v779
      %v1016 = vpop.f32.mrb[0].mxu0
      %v1017 = vadd.f32 0.0, %v1016
      %v1018 = vpop.f32.mrb[0].mxu0
      %v1019 = vadd.f32 0.0, %v1018
      %1020 = vmatprep.mubr.f32.mxu0 0.0
      %1021 = vmatmul.mubr.f32.gmra.mrb[0].mxu0 %v782
      %v1022 = vpop.f32.mrb[0].mxu0
      %v1023 = vadd.f32 0.0, %v1022
      %v1024 = vpop.f32.mrb[0].mxu0
      %v1025 = vadd.f32 0.0, %v1024
      %1026 = vmatprep.mubr.f32.mxu0 0.0
      %1027 = vmatmul.mubr.f32.gmra.mrb[0].mxu0 %v785
      %v1028 = vpop.f32.mrb[0].mxu0
      %v1029 = vadd.f32 0.0, %v1028
      %v1030 = vpop.f32.mrb[0].mxu0
      %v1031 = vadd.f32 0.0, %v1030
      %1032 = vmatprep.mubr.f32.mxu0 0.0
      %1033 = vmatmul.mubr.f32.gmra.mrb[0].mxu0 %v788
      %v1034 = vpop.f32.mrb[0].mxu0
      %v1035 = vadd.f32 0.0, %v1034
      %v1036 = vpop.f32.mrb[0].mxu0
      %v1037 = vadd.f32 0.0, %v1036
      %1038 = vmatprep.mubr.f32.mxu0 0.0
      %1039 = vmatmul.mubr.f32.gmra.mrb[0].mxu0 %v791
      %v1040 = vpop.f32.mrb[0].mxu0
      %v1041 = vadd.f32 0.0, %v1040
      %v1042 = vpop.f32.mrb[0].mxu0
      %v1043 = vadd.f32 0.0, %v1042
      %1044 = vmatprep.mubr.f32.mxu0 0.0
      %1045 = vmatmul.mubr.f32.gmra.mrb[0].mxu0 %v794
      %v1046 = vpop.f32.mrb[0].mxu0
      %v1047 = vadd.f32 0.0, %v1046
      %v1048 = vpop.f32.mrb[0].mxu0
      %v1049 = vadd.f32 0.0, %v1048
      %1050 = vmatprep.mubr.f32.mxu0 0.0
      %1051 = vmatmul.mubr.f32.gmra.mrb[0].mxu0 %v797
      %v1052 = vpop.f32.mrb[0].mxu0
      %v1053 = vadd.f32 0.0, %v1052
      %v1054 = vpop.f32.mrb[0].mxu0
      %v1055 = vadd.f32 0.0, %v1054
      %1056 = vmatprep.mubr.f32.mxu0 0.0
      %1057 = vmatmul.mubr.f32.gmra.mrb[0].mxu0 %v800
      %v1058 = vpop.f32.mrb[0].mxu0
      %v1059 = vadd.f32 0.0, %v1058
      %v1060 = vpop.f32.mrb[0].mxu0
      %v1061 = vadd.f32 0.0, %v1060
      %1062 = vmatprep.mubr.f32.mxu0 0.0
      %1063 = vmatmul.mubr.f32.gmra.mrb[0].mxu0 %v803
      %v1064 = vpop.f32.mrb[0].mxu0
      %v1065 = vadd.f32 0.0, %v1064
      %v1066 = vpop.f32.mrb[0].mxu0
      %v1067 = vadd.f32 0.0, %v1066
      %1068 = vdwg.mxu0
      %v1069 = vmul.f32 %v879, 0.5
      %v1070 = vmul.f32 %v881, 0.5
      %v1071 = vmul.f32 %v885, 0.5
      %v1072 = vmul.f32 %v887, 0.5
      %v1073 = vmul.f32 %v891, 0.5
      %v1074 = vmul.f32 %v893, 0.5
      %v1075 = vmul.f32 %v897, 0.5
      %v1076 = vmul.f32 %v899, 0.5
      %v1077 = vmul.f32 %v903, 0.5
      %v1078 = vmul.f32 %v905, 0.5
      %v1079 = vmul.f32 %v909, 0.5
      %v1080 = vmul.f32 %v911, 0.5
      %v1081 = vmul.f32 %v915, 0.5
      %v1082 = vmul.f32 %v917, 0.5
      %v1083 = vmul.f32 %v921, 0.5
      %v1084 = vmul.f32 %v923, 0.5
      %v1085 = vmul.f32 %v927, 0.5
      %v1086 = vmul.f32 %v929, 0.5
      %v1087 = vmul.f32 %v933, 0.5
      %v1088 = vmul.f32 %v935, 0.5
      %v1089 = vmul.f32 %v939, 0.5
      %v1090 = vmul.f32 %v941, 0.5
      %v1091 = vmul.f32 %v945, 0.5
      %v1092 = vmul.f32 %v947, 0.5
      %v1093 = vmul.f32 %v951, 0.5
      %v1094 = vmul.f32 %v953, 0.5
      %v1095 = vmul.f32 %v957, 0.5
      %v1096 = vmul.f32 %v959, 0.5
      %v1097 = vmul.f32 %v963, 0.5
      %v1098 = vmul.f32 %v965, 0.5
      %v1099 = vmul.f32 %v969, 0.5
      %v1100 = vmul.f32 %v971, 0.5
      %v1101 = vmul.f32 %v975, 0.5
      %v1102 = vmul.f32 %v977, 0.5
      %v1103 = vmul.f32 %v981, 0.5
      %v1104 = vmul.f32 %v983, 0.5
      %v1105 = vmul.f32 %v987, 0.5
      %v1106 = vmul.f32 %v989, 0.5
      %v1107 = vmul.f32 %v993, 0.5
      %v1108 = vmul.f32 %v995, 0.5
      %v1109 = vmul.f32 %v999, 0.5
      %v1110 = vmul.f32 %v1001, 0.5
      %v1111 = vmul.f32 %v1005, 0.5
      %v1112 = vmul.f32 %v1007, 0.5
      %v1113 = vmul.f32 %v1011, 0.5
      %v1114 = vmul.f32 %v1013, 0.5
      %v1115 = vmul.f32 %v1017, 0.5
      %v1116 = vmul.f32 %v1019, 0.5
      %v1117 = vmul.f32 %v1023, 0.5
      %v1118 = vmul.f32 %v1025, 0.5
      %v1119 = vmul.f32 %v1029, 0.5
      %v1120 = vmul.f32 %v1031, 0.5
      %v1121 = vmul.f32 %v1035, 0.5
      %v1122 = vmul.f32 %v1037, 0.5
      %v1123 = vmul.f32 %v1041, 0.5
      %v1124 = vmul.f32 %v1043, 0.5
      %v1125 = vmul.f32 %v1047, 0.5
      %v1126 = vmul.f32 %v1049, 0.5
      %v1127 = vmul.f32 %v1053, 0.5
      %v1128 = vmul.f32 %v1055, 0.5
      %v1129 = vmul.f32 %v1059, 0.5
      %v1130 = vmul.f32 %v1061, 0.5
      %v1131 = vmul.f32 %v1065, 0.5
      %v1132 = vmul.f32 %v1067, 0.5
      %v1133 = vmax.f32 %v1069, %v1070
      %1134 = vmax.xlane.f32.xlu0 %v1133
      %v1135 = vpop.xlane.xlu0 %1134
      %v1136 = vmax.f32 %v1071, %v1072
      %1137 = vmax.xlane.f32.xlu0 %v1136
      %v1138 = vpop.xlane.xlu0 %1137
      %v1139 = vmax.f32 %v1073, %v1074
      %1140 = vmax.xlane.f32.xlu0 %v1139
      %v1141 = vpop.xlane.xlu0 %1140
      %v1142 = vmax.f32 %v1075, %v1076
      %1143 = vmax.xlane.f32.xlu0 %v1142
      %v1144 = vpop.xlane.xlu0 %1143
      %v1145 = vmax.f32 %v1077, %v1078
      %1146 = vmax.xlane.f32.xlu0 %v1145
      %v1147 = vpop.xlane.xlu0 %1146
      %v1148 = vmax.f32 %v1079, %v1080
      %1149 = vmax.xlane.f32.xlu0 %v1148
      %v1150 = vpop.xlane.xlu0 %1149
      %v1151 = vmax.f32 %v1081, %v1082
      %1152 = vmax.xlane.f32.xlu0 %v1151
      %v1153 = vpop.xlane.xlu0 %1152
      %v1154 = vmax.f32 %v1083, %v1084
      %1155 = vmax.xlane.f32.xlu0 %v1154
      %v1156 = vpop.xlane.xlu0 %1155
      %v1157 = vmax.f32 %v1085, %v1086
      %1158 = vmax.xlane.f32.xlu0 %v1157
      %v1159 = vpop.xlane.xlu0 %1158
      %v1160 = vmax.f32 %v1087, %v1088
      %1161 = vmax.xlane.f32.xlu0 %v1160
      %v1162 = vpop.xlane.xlu0 %1161
      %v1163 = vmax.f32 %v1089, %v1090
      %1164 = vmax.xlane.f32.xlu0 %v1163
      %v1165 = vpop.xlane.xlu0 %1164
      %v1166 = vmax.f32 %v1091, %v1092
      %1167 = vmax.xlane.f32.xlu0 %v1166
      %v1168 = vpop.xlane.xlu0 %1167
      %v1169 = vmax.f32 %v1093, %v1094
      %1170 = vmax.xlane.f32.xlu0 %v1169
      %v1171 = vpop.xlane.xlu0 %1170
      %v1172 = vmax.f32 %v1095, %v1096
      %1173 = vmax.xlane.f32.xlu0 %v1172
      %v1174 = vpop.xlane.xlu0 %1173
      %v1175 = vmax.f32 %v1097, %v1098
      %1176 = vmax.xlane.f32.xlu0 %v1175
      %v1177 = vpop.xlane.xlu0 %1176
      %v1178 = vmax.f32 %v1099, %v1100
      %1179 = vmax.xlane.f32.xlu0 %v1178
      %v1180 = vpop.xlane.xlu0 %1179
      %v1181 = vmax.f32 %v1101, %v1102
      %1182 = vmax.xlane.f32.xlu0 %v1181
      %v1183 = vpop.xlane.xlu0 %1182
      %v1184 = vmax.f32 %v1103, %v1104
      %1185 = vmax.xlane.f32.xlu0 %v1184
      %v1186 = vpop.xlane.xlu0 %1185
      %v1187 = vmax.f32 %v1105, %v1106
      %1188 = vmax.xlane.f32.xlu0 %v1187
      %v1189 = vpop.xlane.xlu0 %1188
      %v1190 = vmax.f32 %v1107, %v1108
      %1191 = vmax.xlane.f32.xlu0 %v1190
      %v1192 = vpop.xlane.xlu0 %1191
      %v1193 = vmax.f32 %v1109, %v1110
      %1194 = vmax.xlane.f32.xlu0 %v1193
      %v1195 = vpop.xlane.xlu0 %1194
      %v1196 = vmax.f32 %v1111, %v1112
      %1197 = vmax.xlane.f32.xlu0 %v1196
      %v1198 = vpop.xlane.xlu0 %1197
      %v1199 = vmax.f32 %v1113, %v1114
      %1200 = vmax.xlane.f32.xlu0 %v1199
      %v1201 = vpop.xlane.xlu0 %1200
      %v1202 = vmax.f32 %v1115, %v1116
      %1203 = vmax.xlane.f32.xlu0 %v1202
      %v1204 = vpop.xlane.xlu0 %1203
      %v1205 = vmax.f32 %v1117, %v1118
      %1206 = vmax.xlane.f32.xlu0 %v1205
      %v1207 = vpop.xlane.xlu0 %1206
      %v1208 = vmax.f32 %v1119, %v1120
      %1209 = vmax.xlane.f32.xlu0 %v1208
      %v1210 = vpop.xlane.xlu0 %1209
      %v1211 = vmax.f32 %v1121, %v1122
      %1212 = vmax.xlane.f32.xlu0 %v1211
      %v1213 = vpop.xlane.xlu0 %1212
      %v1214 = vmax.f32 %v1123, %v1124
      %1215 = vmax.xlane.f32.xlu0 %v1214
      %v1216 = vpop.xlane.xlu0 %1215
      %v1217 = vmax.f32 %v1125, %v1126
      %1218 = vmax.xlane.f32.xlu0 %v1217
      %v1219 = vpop.xlane.xlu0 %1218
      %v1220 = vmax.f32 %v1127, %v1128
      %1221 = vmax.xlane.f32.xlu0 %v1220
      %v1222 = vpop.xlane.xlu0 %1221
      %v1223 = vmax.f32 %v1129, %v1130
      %1224 = vmax.xlane.f32.xlu0 %v1223
      %v1225 = vpop.xlane.xlu0 %1224
      %v1226 = vmax.f32 %v1131, %v1132
      %1227 = vmax.xlane.f32.xlu0 %v1226
      %v1228 = vpop.xlane.xlu0 %1227
      %v1229 = vsub.f32 %v1069, %v1135
      %v1230 = vsub.f32 %v1070, %v1135
      %v1231 = vsub.f32 %v1071, %v1138
      %v1232 = vsub.f32 %v1072, %v1138
      %v1233 = vsub.f32 %v1073, %v1141
      %v1234 = vsub.f32 %v1074, %v1141
      %v1235 = vsub.f32 %v1075, %v1144
      %v1236 = vsub.f32 %v1076, %v1144
      %v1237 = vsub.f32 %v1077, %v1147
      %v1238 = vsub.f32 %v1078, %v1147
      %v1239 = vsub.f32 %v1079, %v1150
      %v1240 = vsub.f32 %v1080, %v1150
      %v1241 = vsub.f32 %v1081, %v1153
      %v1242 = vsub.f32 %v1082, %v1153
      %v1243 = vsub.f32 %v1083, %v1156
      %v1244 = vsub.f32 %v1084, %v1156
      %v1245 = vsub.f32 %v1085, %v1159
      %v1246 = vsub.f32 %v1086, %v1159
      %v1247 = vsub.f32 %v1087, %v1162
      %v1248 = vsub.f32 %v1088, %v1162
      %v1249 = vsub.f32 %v1089, %v1165
      %v1250 = vsub.f32 %v1090, %v1165
      %v1251 = vsub.f32 %v1091, %v1168
      %v1252 = vsub.f32 %v1092, %v1168
      %v1253 = vsub.f32 %v1093, %v1171
      %v1254 = vsub.f32 %v1094, %v1171
      %v1255 = vsub.f32 %v1095, %v1174
      %v1256 = vsub.f32 %v1096, %v1174
      %v1257 = vsub.f32 %v1097, %v1177
      %v1258 = vsub.f32 %v1098, %v1177
      %v1259 = vsub.f32 %v1099, %v1180
      %v1260 = vsub.f32 %v1100, %v1180
      %v1261 = vsub.f32 %v1101, %v1183
      %v1262 = vsub.f32 %v1102, %v1183
      %v1263 = vsub.f32 %v1103, %v1186
      %v1264 = vsub.f32 %v1104, %v1186
      %v1265 = vsub.f32 %v1105, %v1189
      %v1266 = vsub.f32 %v1106, %v1189
      %v1267 = vsub.f32 %v1107, %v1192
      %v1268 = vsub.f32 %v1108, %v1192
      %v1269 = vsub.f32 %v1109, %v1195
      %v1270 = vsub.f32 %v1110, %v1195
      %v1271 = vsub.f32 %v1111, %v1198
      %v1272 = vsub.f32 %v1112, %v1198
      %v1273 = vsub.f32 %v1113, %v1201
      %v1274 = vsub.f32 %v1114, %v1201
      %v1275 = vsub.f32 %v1115, %v1204
      %v1276 = vsub.f32 %v1116, %v1204
      %v1277 = vsub.f32 %v1117, %v1207
      %v1278 = vsub.f32 %v1118, %v1207
      %v1279 = vsub.f32 %v1119, %v1210
      %v1280 = vsub.f32 %v1120, %v1210
      %v1281 = vsub.f32 %v1121, %v1213
      %v1282 = vsub.f32 %v1122, %v1213
      %v1283 = vsub.f32 %v1123, %v1216
      %v1284 = vsub.f32 %v1124, %v1216
      %v1285 = vsub.f32 %v1125, %v1219
      %v1286 = vsub.f32 %v1126, %v1219
      %v1287 = vsub.f32 %v1127, %v1222
      %v1288 = vsub.f32 %v1128, %v1222
      %v1289 = vsub.f32 %v1129, %v1225
      %v1290 = vsub.f32 %v1130, %v1225
      %v1291 = vsub.f32 %v1131, %v1228
      %v1292 = vsub.f32 %v1132, %v1228
      %v1293 = vmul.f32 %v1229, 1.442695
      %v1294 = vpow.pop %v1293
      %v1295 = vmul.f32 %v1230, 1.442695
      %v1296 = vpow.pop %v1295
      %v1297 = vmul.f32 %v1231, 1.442695
      %v1298 = vpow.pop %v1297
      %v1299 = vmul.f32 %v1232, 1.442695
      %v1300 = vpow.pop %v1299
      %v1301 = vmul.f32 %v1233, 1.442695
      %v1302 = vpow.pop %v1301
      %v1303 = vmul.f32 %v1234, 1.442695
      %v1304 = vpow.pop %v1303
      %v1305 = vmul.f32 %v1235, 1.442695
      %v1306 = vpow.pop %v1305
      %v1307 = vmul.f32 %v1236, 1.442695
      %v1308 = vpow.pop %v1307
      %v1309 = vmul.f32 %v1237, 1.442695
      %v1310 = vpow.pop %v1309
      %v1311 = vmul.f32 %v1238, 1.442695
      %v1312 = vpow.pop %v1311
      %v1313 = vmul.f32 %v1239, 1.442695
      %v1314 = vpow.pop %v1313
      %v1315 = vmul.f32 %v1240, 1.442695
      %v1316 = vpow.pop %v1315
      %v1317 = vmul.f32 %v1241, 1.442695
      %v1318 = vpow.pop %v1317
      %v1319 = vmul.f32 %v1242, 1.442695
      %v1320 = vpow.pop %v1319
      %v1321 = vmul.f32 %v1243, 1.442695
      %v1322 = vpow.pop %v1321
      %v1323 = vmul.f32 %v1244, 1.442695
      %v1324 = vpow.pop %v1323
      %v1325 = vmul.f32 %v1245, 1.442695
      %v1326 = vpow.pop %v1325
      %v1327 = vmul.f32 %v1246, 1.442695
      %v1328 = vpow.pop %v1327
      %v1329 = vmul.f32 %v1247, 1.442695
      %v1330 = vpow.pop %v1329
      %v1331 = vmul.f32 %v1248, 1.442695
      %v1332 = vpow.pop %v1331
      %v1333 = vmul.f32 %v1249, 1.442695
      %v1334 = vpow.pop %v1333
      %v1335 = vmul.f32 %v1250, 1.442695
      %v1336 = vpow.pop %v1335
      %v1337 = vmul.f32 %v1251, 1.442695
      %v1338 = vpow.pop %v1337
      %v1339 = vmul.f32 %v1252, 1.442695
      %v1340 = vpow.pop %v1339
      %v1341 = vmul.f32 %v1253, 1.442695
      %v1342 = vpow.pop %v1341
      %v1343 = vmul.f32 %v1254, 1.442695
      %v1344 = vpow.pop %v1343
      %v1345 = vmul.f32 %v1255, 1.442695
      %v1346 = vpow.pop %v1345
      %v1347 = vmul.f32 %v1256, 1.442695
      %v1348 = vpow.pop %v1347
      %v1349 = vmul.f32 %v1257, 1.442695
      %v1350 = vpow.pop %v1349
      %v1351 = vmul.f32 %v1258, 1.442695
      %v1352 = vpow.pop %v1351
      %v1353 = vmul.f32 %v1259, 1.442695
      %v1354 = vpow.pop %v1353
      %v1355 = vmul.f32 %v1260, 1.442695
      %v1356 = vpow.pop %v1355
      %v1357 = vmul.f32 %v1261, 1.442695
      %v1358 = vpow.pop %v1357
      %v1359 = vmul.f32 %v1262, 1.442695
      %v1360 = vpow.pop %v1359
      %v1361 = vmul.f32 %v1263, 1.442695
      %v1362 = vpow.pop %v1361
      %v1363 = vmul.f32 %v1264, 1.442695
      %v1364 = vpow.pop %v1363
      %v1365 = vmul.f32 %v1265, 1.442695
      %v1366 = vpow.pop %v1365
      %v1367 = vmul.f32 %v1266, 1.442695
      %v1368 = vpow.pop %v1367
      %v1369 = vmul.f32 %v1267, 1.442695
      %v1370 = vpow.pop %v1369
      %v1371 = vmul.f32 %v1268, 1.442695
      %v1372 = vpow.pop %v1371
      %v1373 = vmul.f32 %v1269, 1.442695
      %v1374 = vpow.pop %v1373
      %v1375 = vmul.f32 %v1270, 1.442695
      %v1376 = vpow.pop %v1375
      %v1377 = vmul.f32 %v1271, 1.442695
      %v1378 = vpow.pop %v1377
      %v1379 = vmul.f32 %v1272, 1.442695
      %v1380 = vpow.pop %v1379
      %v1381 = vmul.f32 %v1273, 1.442695
      %v1382 = vpow.pop %v1381
      %v1383 = vmul.f32 %v1274, 1.442695
      %v1384 = vpow.pop %v1383
      %v1385 = vmul.f32 %v1275, 1.442695
      %v1386 = vpow.pop %v1385
      %v1387 = vmul.f32 %v1276, 1.442695
      %v1388 = vpow.pop %v1387
      %v1389 = vmul.f32 %v1277, 1.442695
      %v1390 = vpow.pop %v1389
      %v1391 = vmul.f32 %v1278, 1.442695
      %v1392 = vpow.pop %v1391
      %v1393 = vmul.f32 %v1279, 1.442695
      %v1394 = vpow.pop %v1393
      %v1395 = vmul.f32 %v1280, 1.442695
      %v1396 = vpow.pop %v1395
      %v1397 = vmul.f32 %v1281, 1.442695
      %v1398 = vpow.pop %v1397
      %v1399 = vmul.f32 %v1282, 1.442695
      %v1400 = vpow.pop %v1399
      %v1401 = vmul.f32 %v1283, 1.442695
      %v1402 = vpow.pop %v1401
      %v1403 = vmul.f32 %v1284, 1.442695
      %v1404 = vpow.pop %v1403
      %v1405 = vmul.f32 %v1285, 1.442695
      %v1406 = vpow.pop %v1405
      %v1407 = vmul.f32 %v1286, 1.442695
      %v1408 = vpow.pop %v1407
      %v1409 = vmul.f32 %v1287, 1.442695
      %v1410 = vpow.pop %v1409
      %v1411 = vmul.f32 %v1288, 1.442695
      %v1412 = vpow.pop %v1411
      %v1413 = vmul.f32 %v1289, 1.442695
      %v1414 = vpow.pop %v1413
      %v1415 = vmul.f32 %v1290, 1.442695
      %v1416 = vpow.pop %v1415
      %v1417 = vmul.f32 %v1291, 1.442695
      %v1418 = vpow.pop %v1417
      %v1419 = vmul.f32 %v1292, 1.442695
      %v1420 = vpow.pop %v1419
      %v1421 = vadd.f32 %v1294, %v1296
      %1422 = vadd.xlane.f32.xlu0 %v1421
      %v1423 = vpop.xlane.xlu0 %1422
      %v1424 = vadd.f32 %v1298, %v1300
      %1425 = vadd.xlane.f32.xlu0 %v1424
      %v1426 = vpop.xlane.xlu0 %1425
      %v1427 = vadd.f32 %v1302, %v1304
      %1428 = vadd.xlane.f32.xlu0 %v1427
      %v1429 = vpop.xlane.xlu0 %1428
      %v1430 = vadd.f32 %v1306, %v1308
      %1431 = vadd.xlane.f32.xlu0 %v1430
      %v1432 = vpop.xlane.xlu0 %1431
      %v1433 = vadd.f32 %v1310, %v1312
      %1434 = vadd.xlane.f32.xlu0 %v1433
      %v1435 = vpop.xlane.xlu0 %1434
      %v1436 = vadd.f32 %v1314, %v1316
      %1437 = vadd.xlane.f32.xlu0 %v1436
      %v1438 = vpop.xlane.xlu0 %1437
      %v1439 = vadd.f32 %v1318, %v1320
      %1440 = vadd.xlane.f32.xlu0 %v1439
      %v1441 = vpop.xlane.xlu0 %1440
      %v1442 = vadd.f32 %v1322, %v1324
      %1443 = vadd.xlane.f32.xlu0 %v1442
      %v1444 = vpop.xlane.xlu0 %1443
      %v1445 = vadd.f32 %v1326, %v1328
      %1446 = vadd.xlane.f32.xlu0 %v1445
      %v1447 = vpop.xlane.xlu0 %1446
      %v1448 = vadd.f32 %v1330, %v1332
      %1449 = vadd.xlane.f32.xlu0 %v1448
      %v1450 = vpop.xlane.xlu0 %1449
      %v1451 = vadd.f32 %v1334, %v1336
      %1452 = vadd.xlane.f32.xlu0 %v1451
      %v1453 = vpop.xlane.xlu0 %1452
      %v1454 = vadd.f32 %v1338, %v1340
      %1455 = vadd.xlane.f32.xlu0 %v1454
      %v1456 = vpop.xlane.xlu0 %1455
      %v1457 = vadd.f32 %v1342, %v1344
      %1458 = vadd.xlane.f32.xlu0 %v1457
      %v1459 = vpop.xlane.xlu0 %1458
      %v1460 = vadd.f32 %v1346, %v1348
      %1461 = vadd.xlane.f32.xlu0 %v1460
      %v1462 = vpop.xlane.xlu0 %1461
      %v1463 = vadd.f32 %v1350, %v1352
      %1464 = vadd.xlane.f32.xlu0 %v1463
      %v1465 = vpop.xlane.xlu0 %1464
      %v1466 = vadd.f32 %v1354, %v1356
      %1467 = vadd.xlane.f32.xlu0 %v1466
      %v1468 = vpop.xlane.xlu0 %1467
      %v1469 = vadd.f32 %v1358, %v1360
      %1470 = vadd.xlane.f32.xlu0 %v1469
      %v1471 = vpop.xlane.xlu0 %1470
      %v1472 = vadd.f32 %v1362, %v1364
      %1473 = vadd.xlane.f32.xlu0 %v1472
      %v1474 = vpop.xlane.xlu0 %1473
      %v1475 = vadd.f32 %v1366, %v1368
      %1476 = vadd.xlane.f32.xlu0 %v1475
      %v1477 = vpop.xlane.xlu0 %1476
      %v1478 = vadd.f32 %v1370, %v1372
      %1479 = vadd.xlane.f32.xlu0 %v1478
      %v1480 = vpop.xlane.xlu0 %1479
      %v1481 = vadd.f32 %v1374, %v1376
      %1482 = vadd.xlane.f32.xlu0 %v1481
      %v1483 = vpop.xlane.xlu0 %1482
      %v1484 = vadd.f32 %v1378, %v1380
      %1485 = vadd.xlane.f32.xlu0 %v1484
      %v1486 = vpop.xlane.xlu0 %1485
      %v1487 = vadd.f32 %v1382, %v1384
      %1488 = vadd.xlane.f32.xlu0 %v1487
      %v1489 = vpop.xlane.xlu0 %1488
      %v1490 = vadd.f32 %v1386, %v1388
      %1491 = vadd.xlane.f32.xlu0 %v1490
      %v1492 = vpop.xlane.xlu0 %1491
      %v1493 = vadd.f32 %v1390, %v1392
      %1494 = vadd.xlane.f32.xlu0 %v1493
      %v1495 = vpop.xlane.xlu0 %1494
      %v1496 = vadd.f32 %v1394, %v1396
      %1497 = vadd.xlane.f32.xlu0 %v1496
      %v1498 = vpop.xlane.xlu0 %1497
      %v1499 = vadd.f32 %v1398, %v1400
      %1500 = vadd.xlane.f32.xlu0 %v1499
      %v1501 = vpop.xlane.xlu0 %1500
      %v1502 = vadd.f32 %v1402, %v1404
      %1503 = vadd.xlane.f32.xlu0 %v1502
      %v1504 = vpop.xlane.xlu0 %1503
      %v1505 = vadd.f32 %v1406, %v1408
      %1506 = vadd.xlane.f32.xlu0 %v1505
      %v1507 = vpop.xlane.xlu0 %1506
      %v1508 = vadd.f32 %v1410, %v1412
      %1509 = vadd.xlane.f32.xlu0 %v1508
      %v1510 = vpop.xlane.xlu0 %1509
      %v1511 = vadd.f32 %v1414, %v1416
      %1512 = vadd.xlane.f32.xlu0 %v1511
      %v1513 = vpop.xlane.xlu0 %1512
      %v1514 = vadd.f32 %v1418, %v1420
      %1515 = vadd.xlane.f32.xlu0 %v1514
      %v1516 = vpop.xlane.xlu0 %1515
      %v1517 = vrcp.pop %v1423
      %v1518 = vmul.f32 %v1294, %v1517
      %v1519 = vmul.f32 %v1296, %v1517
      %v1520 = vrcp.pop %v1426
      %v1521 = vmul.f32 %v1298, %v1520
      %v1522 = vmul.f32 %v1300, %v1520
      %v1523 = vrcp.pop %v1429
      %v1524 = vmul.f32 %v1302, %v1523
      %v1525 = vmul.f32 %v1304, %v1523
      %v1526 = vrcp.pop %v1432
      %v1527 = vmul.f32 %v1306, %v1526
      %v1528 = vmul.f32 %v1308, %v1526
      %v1529 = vrcp.pop %v1435
      %v1530 = vmul.f32 %v1310, %v1529
      %v1531 = vmul.f32 %v1312, %v1529
      %v1532 = vrcp.pop %v1438
      %v1533 = vmul.f32 %v1314, %v1532
      %v1534 = vmul.f32 %v1316, %v1532
      %v1535 = vrcp.pop %v1441
      %v1536 = vmul.f32 %v1318, %v1535
      %v1537 = vmul.f32 %v1320, %v1535
      %v1538 = vrcp.pop %v1444
      %v1539 = vmul.f32 %v1322, %v1538
      %v1540 = vmul.f32 %v1324, %v1538
      %v1541 = vrcp.pop %v1447
      %v1542 = vmul.f32 %v1326, %v1541
      %v1543 = vmul.f32 %v1328, %v1541
      %v1544 = vrcp.pop %v1450
      %v1545 = vmul.f32 %v1330, %v1544
      %v1546 = vmul.f32 %v1332, %v1544
      %v1547 = vrcp.pop %v1453
      %v1548 = vmul.f32 %v1334, %v1547
      %v1549 = vmul.f32 %v1336, %v1547
      %v1550 = vrcp.pop %v1456
      %v1551 = vmul.f32 %v1338, %v1550
      %v1552 = vmul.f32 %v1340, %v1550
      %v1553 = vrcp.pop %v1459
      %v1554 = vmul.f32 %v1342, %v1553
      %v1555 = vmul.f32 %v1344, %v1553
      %v1556 = vrcp.pop %v1462
      %v1557 = vmul.f32 %v1346, %v1556
      %v1558 = vmul.f32 %v1348, %v1556
      %v1559 = vrcp.pop %v1465
      %v1560 = vmul.f32 %v1350, %v1559
      %v1561 = vmul.f32 %v1352, %v1559
      %v1562 = vrcp.pop %v1468
      %v1563 = vmul.f32 %v1354, %v1562
      %v1564 = vmul.f32 %v1356, %v1562
      %v1565 = vrcp.pop %v1471
      %v1566 = vmul.f32 %v1358, %v1565
      %v1567 = vmul.f32 %v1360, %v1565
      %v1568 = vrcp.pop %v1474
      %v1569 = vmul.f32 %v1362, %v1568
      %v1570 = vmul.f32 %v1364, %v1568
      %v1571 = vrcp.pop %v1477
      %v1572 = vmul.f32 %v1366, %v1571
      %v1573 = vmul.f32 %v1368, %v1571
      %v1574 = vrcp.pop %v1480
      %v1575 = vmul.f32 %v1370, %v1574
      %v1576 = vmul.f32 %v1372, %v1574
      %v1577 = vrcp.pop %v1483
      %v1578 = vmul.f32 %v1374, %v1577
      %v1579 = vmul.f32 %v1376, %v1577
      %v1580 = vrcp.pop %v1486
      %v1581 = vmul.f32 %v1378, %v1580
      %v1582 = vmul.f32 %v1380, %v1580
      %v1583 = vrcp.pop %v1489
      %v1584 = vmul.f32 %v1382, %v1583
      %v1585 = vmul.f32 %v1384, %v1583
      %v1586 = vrcp.pop %v1492
      %v1587 = vmul.f32 %v1386, %v1586
      %v1588 = vmul.f32 %v1388, %v1586
      %v1589 = vrcp.pop %v1495
      %v1590 = vmul.f32 %v1390, %v1589
      %v1591 = vmul.f32 %v1392, %v1589
      %v1592 = vrcp.pop %v1498
      %v1593 = vmul.f32 %v1394, %v1592
      %v1594 = vmul.f32 %v1396, %v1592
      %v1595 = vrcp.pop %v1501
      %v1596 = vmul.f32 %v1398, %v1595
      %v1597 = vmul.f32 %v1400, %v1595
      %v1598 = vrcp.pop %v1504
      %v1599 = vmul.f32 %v1402, %v1598
      %v1600 = vmul.f32 %v1404, %v1598
      %v1601 = vrcp.pop %v1507
      %v1602 = vmul.f32 %v1406, %v1601
      %v1603 = vmul.f32 %v1408, %v1601
      %v1604 = vrcp.pop %v1510
      %v1605 = vmul.f32 %v1410, %v1604
      %v1606 = vmul.f32 %v1412, %v1604
      %v1607 = vrcp.pop %v1513
      %v1608 = vmul.f32 %v1414, %v1607
      %v1609 = vmul.f32 %v1416, %v1607
      %v1610 = vrcp.pop %v1516
      %v1611 = vmul.f32 %v1418, %v1610
      %v1612 = vmul.f32 %v1420, %v1610
      %1613 = vmatprep.subr.mxu0 %v1519
      %1614 = vmatpush1.xpose.msra.mxu0 %v1518
      %1615 = vmatprep.subr.mxu0 %v1522
      %1616 = vmatpush1.xpose.msra.mxu0 %v1521
      %1617 = vmatprep.subr.mxu0 %v1525
      %1618 = vmatpush1.xpose.msra.mxu0 %v1524
      %1619 = vmatprep.subr.mxu0 %v1528
      %1620 = vmatpush1.xpose.msra.mxu0 %v1527
      %1621 = vmatprep.subr.mxu0 %v1531
      %1622 = vmatpush1.xpose.msra.mxu0 %v1530
      %1623 = vmatprep.subr.mxu0 %v1534
      %1624 = vmatpush1.xpose.msra.mxu0 %v1533
      %1625 = vmatprep.subr.mxu0 %v1537
      %1626 = vmatpush1.xpose.msra.mxu0 %v1536
      %1627 = vmatprep.subr.mxu0 %v1540
      %1628 = vmatpush1.xpose.msra.mxu0 %v1539
      %1629 = vmatprep.subr.mxu0 %v1543
      %1630 = vmatpush1.xpose.msra.mxu0 %v1542
      %1631 = vmatprep.subr.mxu0 %v1546
      %1632 = vmatpush1.xpose.msra.mxu0 %v1545
      %1633 = vmatprep.subr.mxu0 %v1549
      %1634 = vmatpush1.xpose.msra.mxu0 %v1548
      %1635 = vmatprep.subr.mxu0 %v1552
      %1636 = vmatpush1.xpose.msra.mxu0 %v1551
      %1637 = vmatprep.subr.mxu0 %v1555
      %1638 = vmatpush1.xpose.msra.mxu0 %v1554
      %1639 = vmatprep.subr.mxu0 %v1558
      %1640 = vmatpush1.xpose.msra.mxu0 %v1557
      %1641 = vmatprep.subr.mxu0 %v1561
      %1642 = vmatpush1.xpose.msra.mxu0 %v1560
      %1643 = vmatprep.subr.mxu0 %v1564
      %1644 = vmatpush1.xpose.msra.mxu0 %v1563
      %1645 = vmatprep.subr.mxu0 %v1567
      %1646 = vmatpush1.xpose.msra.mxu0 %v1566
      %1647 = vmatprep.subr.mxu0 %v1570
      %1648 = vmatpush1.xpose.msra.mxu0 %v1569
      %1649 = vmatprep.subr.mxu0 %v1573
      %1650 = vmatpush1.xpose.msra.mxu0 %v1572
      %1651 = vmatprep.subr.mxu0 %v1576
      %1652 = vmatpush1.xpose.msra.mxu0 %v1575
      %1653 = vmatprep.subr.mxu0 %v1579
      %1654 = vmatpush1.xpose.msra.mxu0 %v1578
      %1655 = vmatprep.subr.mxu0 %v1582
      %1656 = vmatpush1.xpose.msra.mxu0 %v1581
      %1657 = vmatprep.subr.mxu0 %v1585
      %1658 = vmatpush1.xpose.msra.mxu0 %v1584
      %1659 = vmatprep.subr.mxu0 %v1588
      %1660 = vmatpush1.xpose.msra.mxu0 %v1587
      %1661 = vmatprep.subr.mxu0 %v1591
      %1662 = vmatpush1.xpose.msra.mxu0 %v1590
      %1663 = vmatprep.subr.mxu0 %v1594
      %1664 = vmatpush1.xpose.msra.mxu0 %v1593
      %1665 = vmatprep.subr.mxu0 %v1597
      %1666 = vmatpush1.xpose.msra.mxu0 %v1596
      %1667 = vmatprep.subr.mxu0 %v1600
      %1668 = vmatpush1.xpose.msra.mxu0 %v1599
      %1669 = vmatprep.subr.mxu0 %v1603
      %1670 = vmatpush1.xpose.msra.mxu0 %v1602
      %1671 = vmatprep.subr.mxu0 %v1606
      %1672 = vmatpush1.xpose.msra.mxu0 %v1605
      %1673 = vmatprep.subr.mxu0 %v1609
      %1674 = vmatpush1.xpose.msra.mxu0 %v1608
      %1675 = vmatprep.subr.mxu0 %v1612
      %1676 = vmatpush1.xpose.msra.mxu0 %v1611
      %1677 = vmatprep.mubr.f32.mxu0 %v600
      %1678 = vmatmul.mubr.f32.gmra.mrb[0].mxu0 %v598
      %v1679 = vpop.f32.mrb[0].mxu0
      %v1680 = vadd.f32 0.0, %v1679
      %v1681 = vpop.f32.mrb[0].mxu0
      %v1682 = vadd.f32 0.0, %v1681
      %1683 = vdwg.mxu0
      %v1686 = vrot.slane %v550, 4
      %v1687 = vrot.slane %v552, 4
      %1690 = vxpose.xlu0.b32.start [1/16] %v1686, 128
      %1691 = vxpose.xlu0.b32.cont [2/16] 0.0, 128
      %1692 = vxpose.xlu0.b32.cont [3/16] 0.0, 128
      %1693 = vxpose.xlu0.b32.cont [4/16] 0.0, 128
      %1694 = vxpose.xlu0.b32.cont [5/16] 0.0, 128
      %1695 = vxpose.xlu0.b32.cont [6/16] 0.0, 128
      %1696 = vxpose.xlu0.b32.cont [7/16] 0.0, 128
      %1697 = vxpose.xlu0.b32.cont [8/16] 0.0, 128
      %1698 = vxpose.xlu0.b32.cont [9/16] 0.0, 128
      %1699 = vxpose.xlu0.b32.cont [10/16] 0.0, 128
      %1700 = vxpose.xlu0.b32.cont [11/16] 0.0, 128
      %1701 = vxpose.xlu0.b32.cont [12/16] 0.0, 128
      %1702 = vxpose.xlu0.b32.cont [13/16] 0.0, 128
      %1703 = vxpose.xlu0.b32.cont [14/16] 0.0, 128
      %1704 = vxpose.xlu0.b32.cont [15/16] 0.0, 128
      %1705 = vxpose.xlu0.b32.end [16/16] 0.0, 128
      %v1706 = vpop.trf.xlu0
      %v1707 = vpop.trf.xlu0
      %v1708 = vpop.trf.xlu0
      %v1709 = vpop.trf.xlu0
      %v1710 = vpop.trf.xlu0
      %v1711 = vpop.trf.xlu0
      %v1712 = vpop.trf.xlu0
      %v1713 = vpop.trf.xlu0
      %v1714 = vpop.trf.xlu0
      %v1715 = vpop.trf.xlu0
      %v1716 = vpop.trf.xlu0
      %v1717 = vpop.trf.xlu0
      %v1718 = vpop.trf.xlu0
      %v1719 = vpop.trf.xlu0
      %v1720 = vpop.trf.xlu0
      %v1721 = vpop.trf.xlu0
      %1722 = vxpose.xlu0.b32.start [1/16] %v1687, 128
      %1723 = vxpose.xlu0.b32.cont [2/16] 0.0, 128
      %1724 = vxpose.xlu0.b32.cont [3/16] 0.0, 128
      %1725 = vxpose.xlu0.b32.cont [4/16] 0.0, 128
      %1726 = vxpose.xlu0.b32.cont [5/16] 0.0, 128
      %1727 = vxpose.xlu0.b32.cont [6/16] 0.0, 128
      %1728 = vxpose.xlu0.b32.cont [7/16] 0.0, 128
      %1729 = vxpose.xlu0.b32.cont [8/16] 0.0, 128
      %1730 = vxpose.xlu0.b32.cont [9/16] 0.0, 128
      %1731 = vxpose.xlu0.b32.cont [10/16] 0.0, 128
      %1732 = vxpose.xlu0.b32.cont [11/16] 0.0, 128
      %1733 = vxpose.xlu0.b32.cont [12/16] 0.0, 128
      %1734 = vxpose.xlu0.b32.cont [13/16] 0.0, 128
      %1735 = vxpose.xlu0.b32.cont [14/16] 0.0, 128
      %1736 = vxpose.xlu0.b32.cont [15/16] 0.0, 128
      %1737 = vxpose.xlu0.b32.end [16/16] 0.0, 128
      %v1738 = vpop.trf.xlu0
      %v1739 = vpop.trf.xlu0
      %v1740 = vpop.trf.xlu0
      %v1741 = vpop.trf.xlu0
      %v1742 = vpop.trf.xlu0
      %v1743 = vpop.trf.xlu0
      %v1744 = vpop.trf.xlu0
      %v1745 = vpop.trf.xlu0
      %v1746 = vpop.trf.xlu0
      %v1747 = vpop.trf.xlu0
      %v1748 = vpop.trf.xlu0
      %v1749 = vpop.trf.xlu0
      %v1750 = vpop.trf.xlu0
      %v1751 = vpop.trf.xlu0
      %v1752 = vpop.trf.xlu0
      %v1753 = vpop.trf.xlu0
      %v1754 = vrot.slane %v574, 4
      %v1755 = vrot.slane %v576, 4
      %v1757 = vsel %vm708, %v1706, 0
      %v1760 = vsel %vm708, %v1707, 0
      %v1763 = vsel %vm708, %v1708, 0
      %v1766 = vsel %vm708, %v1709, 0
      %v1769 = vsel %vm708, %v1710, 0
      %v1772 = vsel %vm708, %v1711, 0
      %v1775 = vsel %vm708, %v1712, 0
      %v1778 = vsel %vm708, %v1713, 0
      %v1781 = vsel %vm708, %v1714, 0
      %v1784 = vsel %vm708, %v1715, 0
      %v1787 = vsel %vm708, %v1716, 0
      %v1790 = vsel %vm708, %v1717, 0
      %v1793 = vsel %vm708, %v1718, 0
      %v1796 = vsel %vm708, %v1719, 0
      %v1799 = vsel %vm708, %v1720, 0
      %v1802 = vsel %vm708, %v1721, 0
      %v1805 = vsel %vm708, %v1738, 0
      %v1808 = vsel %vm708, %v1739, 0
      %v1811 = vsel %vm708, %v1740, 0
      %v1814 = vsel %vm708, %v1741, 0
      %v1817 = vsel %vm708, %v1742, 0
      %v1820 = vsel %vm708, %v1743, 0
      %v1823 = vsel %vm708, %v1744, 0
      %v1826 = vsel %vm708, %v1745, 0
      %v1829 = vsel %vm708, %v1746, 0
      %v1832 = vsel %vm708, %v1747, 0
      %v1835 = vsel %vm708, %v1748, 0
      %v1838 = vsel %vm708, %v1749, 0
      %v1841 = vsel %vm708, %v1750, 0
      %v1844 = vsel %vm708, %v1751, 0
      %v1847 = vsel %vm708, %v1752, 0
      %v1850 = vsel %vm708, %v1753, 0
      %v1852 = vsel %vm805, %v1754, 0
      %v1854 = vsel %vm805, %v1755, 0
      %1856 = vmatprep.subr.mxu0 %v1854
      %1857 = vmatpush1.msra.mxu0 %v1852
      %1858 = vmatprep.subr.mxu0 0.0
      %1859 = vmatpush1.msra.mxu0 0.0
      %1860 = vmatprep.subr.mxu0 0.0
      %1861 = vmatpush1.msra.mxu0 0.0
      %1862 = vmatprep.subr.mxu0 0.0
      %1863 = vmatpush1.msra.mxu0 0.0
      %1864 = vmatprep.subr.mxu0 0.0
      %1865 = vmatpush1.msra.mxu0 0.0
      %1866 = vmatprep.subr.mxu0 0.0
      %1867 = vmatpush1.msra.mxu0 0.0
      %1868 = vmatprep.subr.mxu0 0.0
      %1869 = vmatpush1.msra.mxu0 0.0
      %1870 = vmatprep.subr.mxu0 0.0
      %1871 = vmatpush1.msra.mxu0 0.0
      %1872 = vmatprep.subr.mxu0 0.0
      %1873 = vmatpush1.msra.mxu0 0.0
      %1874 = vmatprep.subr.mxu0 0.0
      %1875 = vmatpush1.msra.mxu0 0.0
      %1876 = vmatprep.subr.mxu0 0.0
      %1877 = vmatpush1.msra.mxu0 0.0
      %1878 = vmatprep.subr.mxu0 0.0
      %1879 = vmatpush1.msra.mxu0 0.0
      %1880 = vmatprep.subr.mxu0 0.0
      %1881 = vmatpush1.msra.mxu0 0.0
      %1882 = vmatprep.subr.mxu0 0.0
      %1883 = vmatpush1.msra.mxu0 0.0
      %1884 = vmatprep.subr.mxu0 0.0
      %1885 = vmatpush1.msra.mxu0 0.0
      %1886 = vmatprep.subr.mxu0 0.0
      %1887 = vmatpush1.msra.mxu0 0.0
      %1888 = vmatprep.subr.mxu0 0.0
      %1889 = vmatpush1.msra.mxu0 0.0
      %1890 = vmatprep.subr.mxu0 0.0
      %1891 = vmatpush1.msra.mxu0 0.0
      %1892 = vmatprep.subr.mxu0 0.0
      %1893 = vmatpush1.msra.mxu0 0.0
      %1894 = vmatprep.subr.mxu0 0.0
      %1895 = vmatpush1.msra.mxu0 0.0
      %1896 = vmatprep.subr.mxu0 0.0
      %1897 = vmatpush1.msra.mxu0 0.0
      %1898 = vmatprep.subr.mxu0 0.0
      %1899 = vmatpush1.msra.mxu0 0.0
      %1900 = vmatprep.subr.mxu0 0.0
      %1901 = vmatpush1.msra.mxu0 0.0
      %1902 = vmatprep.subr.mxu0 0.0
      %1903 = vmatpush1.msra.mxu0 0.0
      %1904 = vmatprep.subr.mxu0 0.0
      %1905 = vmatpush1.msra.mxu0 0.0
      %1906 = vmatprep.subr.mxu0 0.0
      %1907 = vmatpush1.msra.mxu0 0.0
      %1908 = vmatprep.subr.mxu0 0.0
      %1909 = vmatpush1.msra.mxu0 0.0
      %1910 = vmatprep.subr.mxu0 0.0
      %1911 = vmatpush1.msra.mxu0 0.0
      %1912 = vmatprep.subr.mxu0 0.0
      %1913 = vmatpush1.msra.mxu0 0.0
      %1914 = vmatprep.subr.mxu0 0.0
      %1915 = vmatpush1.msra.mxu0 0.0
      %1916 = vmatprep.subr.mxu0 0.0
      %1917 = vmatpush1.msra.mxu0 0.0
      %1918 = vmatprep.subr.mxu0 0.0
      %1919 = vmatpush1.msra.mxu0 0.0
      %1920 = vmatprep.mubr.f32.mxu0 0.0
      %1921 = vmatmul.mubr.f32.gmra.mrb[0].mxu0 %v1757
      %v1922 = vpop.f32.mrb[0].mxu0
      %v1923 = vadd.f32 0.0, %v1922
      %v1924 = vpop.f32.mrb[0].mxu0
      %v1925 = vadd.f32 0.0, %v1924
      %1926 = vmatprep.mubr.f32.mxu0 0.0
      %1927 = vmatmul.mubr.f32.gmra.mrb[0].mxu0 %v1760
      %v1928 = vpop.f32.mrb[0].mxu0
      %v1929 = vadd.f32 0.0, %v1928
      %v1930 = vpop.f32.mrb[0].mxu0
      %v1931 = vadd.f32 0.0, %v1930
      %1932 = vmatprep.mubr.f32.mxu0 0.0
      %1933 = vmatmul.mubr.f32.gmra.mrb[0].mxu0 %v1763
      %v1934 = vpop.f32.mrb[0].mxu0
      %v1935 = vadd.f32 0.0, %v1934
      %v1936 = vpop.f32.mrb[0].mxu0
      %v1937 = vadd.f32 0.0, %v1936
      %1938 = vmatprep.mubr.f32.mxu0 0.0
      %1939 = vmatmul.mubr.f32.gmra.mrb[0].mxu0 %v1766
      %v1940 = vpop.f32.mrb[0].mxu0
      %v1941 = vadd.f32 0.0, %v1940
      %v1942 = vpop.f32.mrb[0].mxu0
      %v1943 = vadd.f32 0.0, %v1942
      %1944 = vmatprep.mubr.f32.mxu0 0.0
      %1945 = vmatmul.mubr.f32.gmra.mrb[0].mxu0 %v1769
      %v1946 = vpop.f32.mrb[0].mxu0
      %v1947 = vadd.f32 0.0, %v1946
      %v1948 = vpop.f32.mrb[0].mxu0
      %v1949 = vadd.f32 0.0, %v1948
      %1950 = vmatprep.mubr.f32.mxu0 0.0
      %1951 = vmatmul.mubr.f32.gmra.mrb[0].mxu0 %v1772
      %v1952 = vpop.f32.mrb[0].mxu0
      %v1953 = vadd.f32 0.0, %v1952
      %v1954 = vpop.f32.mrb[0].mxu0
      %v1955 = vadd.f32 0.0, %v1954
      %1956 = vmatprep.mubr.f32.mxu0 0.0
      %1957 = vmatmul.mubr.f32.gmra.mrb[0].mxu0 %v1775
      %v1958 = vpop.f32.mrb[0].mxu0
      %v1959 = vadd.f32 0.0, %v1958
      %v1960 = vpop.f32.mrb[0].mxu0
      %v1961 = vadd.f32 0.0, %v1960
      %1962 = vmatprep.mubr.f32.mxu0 0.0
      %1963 = vmatmul.mubr.f32.gmra.mrb[0].mxu0 %v1778
      %v1964 = vpop.f32.mrb[0].mxu0
      %v1965 = vadd.f32 0.0, %v1964
      %v1966 = vpop.f32.mrb[0].mxu0
      %v1967 = vadd.f32 0.0, %v1966
      %1968 = vmatprep.mubr.f32.mxu0 0.0
      %1969 = vmatmul.mubr.f32.gmra.mrb[0].mxu0 %v1781
      %v1970 = vpop.f32.mrb[0].mxu0
      %v1971 = vadd.f32 0.0, %v1970
      %v1972 = vpop.f32.mrb[0].mxu0
      %v1973 = vadd.f32 0.0, %v1972
      %1974 = vmatprep.mubr.f32.mxu0 0.0
      %1975 = vmatmul.mubr.f32.gmra.mrb[0].mxu0 %v1784
      %v1976 = vpop.f32.mrb[0].mxu0
      %v1977 = vadd.f32 0.0, %v1976
      %v1978 = vpop.f32.mrb[0].mxu0
      %v1979 = vadd.f32 0.0, %v1978
      %1980 = vmatprep.mubr.f32.mxu0 0.0
      %1981 = vmatmul.mubr.f32.gmra.mrb[0].mxu0 %v1787
      %v1982 = vpop.f32.mrb[0].mxu0
      %v1983 = vadd.f32 0.0, %v1982
      %v1984 = vpop.f32.mrb[0].mxu0
      %v1985 = vadd.f32 0.0, %v1984
      %1986 = vmatprep.mubr.f32.mxu0 0.0
      %1987 = vmatmul.mubr.f32.gmra.mrb[0].mxu0 %v1790
      %v1988 = vpop.f32.mrb[0].mxu0
      %v1989 = vadd.f32 0.0, %v1988
      %v1990 = vpop.f32.mrb[0].mxu0
      %v1991 = vadd.f32 0.0, %v1990
      %1992 = vmatprep.mubr.f32.mxu0 0.0
      %1993 = vmatmul.mubr.f32.gmra.mrb[0].mxu0 %v1793
      %v1994 = vpop.f32.mrb[0].mxu0
      %v1995 = vadd.f32 0.0, %v1994
      %v1996 = vpop.f32.mrb[0].mxu0
      %v1997 = vadd.f32 0.0, %v1996
      %1998 = vmatprep.mubr.f32.mxu0 0.0
      %1999 = vmatmul.mubr.f32.gmra.mrb[0].mxu0 %v1796
      %v2000 = vpop.f32.mrb[0].mxu0
      %v2001 = vadd.f32 0.0, %v2000
      %v2002 = vpop.f32.mrb[0].mxu0
      %v2003 = vadd.f32 0.0, %v2002
      %2004 = vmatprep.mubr.f32.mxu0 0.0
      %2005 = vmatmul.mubr.f32.gmra.mrb[0].mxu0 %v1799
      %v2006 = vpop.f32.mrb[0].mxu0
      %v2007 = vadd.f32 0.0, %v2006
      %v2008 = vpop.f32.mrb[0].mxu0
      %v2009 = vadd.f32 0.0, %v2008
      %2010 = vmatprep.mubr.f32.mxu0 0.0
      %2011 = vmatmul.mubr.f32.gmra.mrb[0].mxu0 %v1802
      %v2012 = vpop.f32.mrb[0].mxu0
      %v2013 = vadd.f32 0.0, %v2012
      %v2014 = vpop.f32.mrb[0].mxu0
      %v2015 = vadd.f32 0.0, %v2014
      %2016 = vmatprep.mubr.f32.mxu0 0.0
      %2017 = vmatmul.mubr.f32.gmra.mrb[0].mxu0 %v1805
      %v2018 = vpop.f32.mrb[0].mxu0
      %v2019 = vadd.f32 0.0, %v2018
      %v2020 = vpop.f32.mrb[0].mxu0
      %v2021 = vadd.f32 0.0, %v2020
      %2022 = vmatprep.mubr.f32.mxu0 0.0
      %2023 = vmatmul.mubr.f32.gmra.mrb[0].mxu0 %v1808
      %v2024 = vpop.f32.mrb[0].mxu0
      %v2025 = vadd.f32 0.0, %v2024
      %v2026 = vpop.f32.mrb[0].mxu0
      %v2027 = vadd.f32 0.0, %v2026
      %2028 = vmatprep.mubr.f32.mxu0 0.0
      %2029 = vmatmul.mubr.f32.gmra.mrb[0].mxu0 %v1811
      %v2030 = vpop.f32.mrb[0].mxu0
      %v2031 = vadd.f32 0.0, %v2030
      %v2032 = vpop.f32.mrb[0].mxu0
      %v2033 = vadd.f32 0.0, %v2032
      %2034 = vmatprep.mubr.f32.mxu0 0.0
      %2035 = vmatmul.mubr.f32.gmra.mrb[0].mxu0 %v1814
      %v2036 = vpop.f32.mrb[0].mxu0
      %v2037 = vadd.f32 0.0, %v2036
      %v2038 = vpop.f32.mrb[0].mxu0
      %v2039 = vadd.f32 0.0, %v2038
      %2040 = vmatprep.mubr.f32.mxu0 0.0
      %2041 = vmatmul.mubr.f32.gmra.mrb[0].mxu0 %v1817
      %v2042 = vpop.f32.mrb[0].mxu0
      %v2043 = vadd.f32 0.0, %v2042
      %v2044 = vpop.f32.mrb[0].mxu0
      %v2045 = vadd.f32 0.0, %v2044
      %2046 = vmatprep.mubr.f32.mxu0 0.0
      %2047 = vmatmul.mubr.f32.gmra.mrb[0].mxu0 %v1820
      %v2048 = vpop.f32.mrb[0].mxu0
      %v2049 = vadd.f32 0.0, %v2048
      %v2050 = vpop.f32.mrb[0].mxu0
      %v2051 = vadd.f32 0.0, %v2050
      %2052 = vmatprep.mubr.f32.mxu0 0.0
      %2053 = vmatmul.mubr.f32.gmra.mrb[0].mxu0 %v1823
      %v2054 = vpop.f32.mrb[0].mxu0
      %v2055 = vadd.f32 0.0, %v2054
      %v2056 = vpop.f32.mrb[0].mxu0
      %v2057 = vadd.f32 0.0, %v2056
      %2058 = vmatprep.mubr.f32.mxu0 0.0
      %2059 = vmatmul.mubr.f32.gmra.mrb[0].mxu0 %v1826
      %v2060 = vpop.f32.mrb[0].mxu0
      %v2061 = vadd.f32 0.0, %v2060
      %v2062 = vpop.f32.mrb[0].mxu0
      %v2063 = vadd.f32 0.0, %v2062
      %2064 = vmatprep.mubr.f32.mxu0 0.0
      %2065 = vmatmul.mubr.f32.gmra.mrb[0].mxu0 %v1829
      %v2066 = vpop.f32.mrb[0].mxu0
      %v2067 = vadd.f32 0.0, %v2066
      %v2068 = vpop.f32.mrb[0].mxu0
      %v2069 = vadd.f32 0.0, %v2068
      %2070 = vmatprep.mubr.f32.mxu0 0.0
      %2071 = vmatmul.mubr.f32.gmra.mrb[0].mxu0 %v1832
      %v2072 = vpop.f32.mrb[0].mxu0
      %v2073 = vadd.f32 0.0, %v2072
      %v2074 = vpop.f32.mrb[0].mxu0
      %v2075 = vadd.f32 0.0, %v2074
      %2076 = vmatprep.mubr.f32.mxu0 0.0
      %2077 = vmatmul.mubr.f32.gmra.mrb[0].mxu0 %v1835
      %v2078 = vpop.f32.mrb[0].mxu0
      %v2079 = vadd.f32 0.0, %v2078
      %v2080 = vpop.f32.mrb[0].mxu0
      %v2081 = vadd.f32 0.0, %v2080
      %2082 = vmatprep.mubr.f32.mxu0 0.0
      %2083 = vmatmul.mubr.f32.gmra.mrb[0].mxu0 %v1838
      %v2084 = vpop.f32.mrb[0].mxu0
      %v2085 = vadd.f32 0.0, %v2084
      %v2086 = vpop.f32.mrb[0].mxu0
      %v2087 = vadd.f32 0.0, %v2086
      %2088 = vmatprep.mubr.f32.mxu0 0.0
      %2089 = vmatmul.mubr.f32.gmra.mrb[0].mxu0 %v1841
      %v2090 = vpop.f32.mrb[0].mxu0
      %v2091 = vadd.f32 0.0, %v2090
      %v2092 = vpop.f32.mrb[0].mxu0
      %v2093 = vadd.f32 0.0, %v2092
      %2094 = vmatprep.mubr.f32.mxu0 0.0
      %2095 = vmatmul.mubr.f32.gmra.mrb[0].mxu0 %v1844
      %v2096 = vpop.f32.mrb[0].mxu0
      %v2097 = vadd.f32 0.0, %v2096
      %v2098 = vpop.f32.mrb[0].mxu0
      %v2099 = vadd.f32 0.0, %v2098
      %2100 = vmatprep.mubr.f32.mxu0 0.0
      %2101 = vmatmul.mubr.f32.gmra.mrb[0].mxu0 %v1847
      %v2102 = vpop.f32.mrb[0].mxu0
      %v2103 = vadd.f32 0.0, %v2102
      %v2104 = vpop.f32.mrb[0].mxu0
      %v2105 = vadd.f32 0.0, %v2104
      %2106 = vmatprep.mubr.f32.mxu0 0.0
      %2107 = vmatmul.mubr.f32.gmra.mrb[0].mxu0 %v1850
      %v2108 = vpop.f32.mrb[0].mxu0
      %v2109 = vadd.f32 0.0, %v2108
      %v2110 = vpop.f32.mrb[0].mxu0
      %v2111 = vadd.f32 0.0, %v2110
      %2112 = vdwg.mxu0
      %v2113 = vmul.f32 %v1923, 0.5
      %v2114 = vmul.f32 %v1925, 0.5
      %v2115 = vmul.f32 %v1929, 0.5
      %v2116 = vmul.f32 %v1931, 0.5
      %v2117 = vmul.f32 %v1935, 0.5
      %v2118 = vmul.f32 %v1937, 0.5
      %v2119 = vmul.f32 %v1941, 0.5
      %v2120 = vmul.f32 %v1943, 0.5
      %v2121 = vmul.f32 %v1947, 0.5
      %v2122 = vmul.f32 %v1949, 0.5
      %v2123 = vmul.f32 %v1953, 0.5
      %v2124 = vmul.f32 %v1955, 0.5
      %v2125 = vmul.f32 %v1959, 0.5
      %v2126 = vmul.f32 %v1961, 0.5
      %v2127 = vmul.f32 %v1965, 0.5
      %v2128 = vmul.f32 %v1967, 0.5
      %v2129 = vmul.f32 %v1971, 0.5
      %v2130 = vmul.f32 %v1973, 0.5
      %v2131 = vmul.f32 %v1977, 0.5
      %v2132 = vmul.f32 %v1979, 0.5
      %v2133 = vmul.f32 %v1983, 0.5
      %v2134 = vmul.f32 %v1985, 0.5
      %v2135 = vmul.f32 %v1989, 0.5
      %v2136 = vmul.f32 %v1991, 0.5
      %v2137 = vmul.f32 %v1995, 0.5
      %v2138 = vmul.f32 %v1997, 0.5
      %v2139 = vmul.f32 %v2001, 0.5
      %v2140 = vmul.f32 %v2003, 0.5
      %v2141 = vmul.f32 %v2007, 0.5
      %v2142 = vmul.f32 %v2009, 0.5
      %v2143 = vmul.f32 %v2013, 0.5
      %v2144 = vmul.f32 %v2015, 0.5
      %v2145 = vmul.f32 %v2019, 0.5
      %v2146 = vmul.f32 %v2021, 0.5
      %v2147 = vmul.f32 %v2025, 0.5
      %v2148 = vmul.f32 %v2027, 0.5
      %v2149 = vmul.f32 %v2031, 0.5
      %v2150 = vmul.f32 %v2033, 0.5
      %v2151 = vmul.f32 %v2037, 0.5
      %v2152 = vmul.f32 %v2039, 0.5
      %v2153 = vmul.f32 %v2043, 0.5
      %v2154 = vmul.f32 %v2045, 0.5
      %v2155 = vmul.f32 %v2049, 0.5
      %v2156 = vmul.f32 %v2051, 0.5
      %v2157 = vmul.f32 %v2055, 0.5
      %v2158 = vmul.f32 %v2057, 0.5
      %v2159 = vmul.f32 %v2061, 0.5
      %v2160 = vmul.f32 %v2063, 0.5
      %v2161 = vmul.f32 %v2067, 0.5
      %v2162 = vmul.f32 %v2069, 0.5
      %v2163 = vmul.f32 %v2073, 0.5
      %v2164 = vmul.f32 %v2075, 0.5
      %v2165 = vmul.f32 %v2079, 0.5
      %v2166 = vmul.f32 %v2081, 0.5
      %v2167 = vmul.f32 %v2085, 0.5
      %v2168 = vmul.f32 %v2087, 0.5
      %v2169 = vmul.f32 %v2091, 0.5
      %v2170 = vmul.f32 %v2093, 0.5
      %v2171 = vmul.f32 %v2097, 0.5
      %v2172 = vmul.f32 %v2099, 0.5
      %v2173 = vmul.f32 %v2103, 0.5
      %v2174 = vmul.f32 %v2105, 0.5
      %v2175 = vmul.f32 %v2109, 0.5
      %v2176 = vmul.f32 %v2111, 0.5
      %v2177 = vmax.f32 %v2113, %v2114
      %2178 = vmax.xlane.f32.xlu0 %v2177
      %v2179 = vpop.xlane.xlu0 %2178
      %v2180 = vmax.f32 %v2115, %v2116
      %2181 = vmax.xlane.f32.xlu0 %v2180
      %v2182 = vpop.xlane.xlu0 %2181
      %v2183 = vmax.f32 %v2117, %v2118
      %2184 = vmax.xlane.f32.xlu0 %v2183
      %v2185 = vpop.xlane.xlu0 %2184
      %v2186 = vmax.f32 %v2119, %v2120
      %2187 = vmax.xlane.f32.xlu0 %v2186
      %v2188 = vpop.xlane.xlu0 %2187
      %v2189 = vmax.f32 %v2121, %v2122
      %2190 = vmax.xlane.f32.xlu0 %v2189
      %v2191 = vpop.xlane.xlu0 %2190
      %v2192 = vmax.f32 %v2123, %v2124
      %2193 = vmax.xlane.f32.xlu0 %v2192
      %v2194 = vpop.xlane.xlu0 %2193
      %v2195 = vmax.f32 %v2125, %v2126
      %2196 = vmax.xlane.f32.xlu0 %v2195
      %v2197 = vpop.xlane.xlu0 %2196
      %v2198 = vmax.f32 %v2127, %v2128
      %2199 = vmax.xlane.f32.xlu0 %v2198
      %v2200 = vpop.xlane.xlu0 %2199
      %v2201 = vmax.f32 %v2129, %v2130
      %2202 = vmax.xlane.f32.xlu0 %v2201
      %v2203 = vpop.xlane.xlu0 %2202
      %v2204 = vmax.f32 %v2131, %v2132
      %2205 = vmax.xlane.f32.xlu0 %v2204
      %v2206 = vpop.xlane.xlu0 %2205
      %v2207 = vmax.f32 %v2133, %v2134
      %2208 = vmax.xlane.f32.xlu0 %v2207
      %v2209 = vpop.xlane.xlu0 %2208
      %v2210 = vmax.f32 %v2135, %v2136
      %2211 = vmax.xlane.f32.xlu0 %v2210
      %v2212 = vpop.xlane.xlu0 %2211
      %v2213 = vmax.f32 %v2137, %v2138
      %2214 = vmax.xlane.f32.xlu0 %v2213
      %v2215 = vpop.xlane.xlu0 %2214
      %v2216 = vmax.f32 %v2139, %v2140
      %2217 = vmax.xlane.f32.xlu0 %v2216
      %v2218 = vpop.xlane.xlu0 %2217
      %v2219 = vmax.f32 %v2141, %v2142
      %2220 = vmax.xlane.f32.xlu0 %v2219
      %v2221 = vpop.xlane.xlu0 %2220
      %v2222 = vmax.f32 %v2143, %v2144
      %2223 = vmax.xlane.f32.xlu0 %v2222
      %v2224 = vpop.xlane.xlu0 %2223
      %v2225 = vmax.f32 %v2145, %v2146
      %2226 = vmax.xlane.f32.xlu0 %v2225
      %v2227 = vpop.xlane.xlu0 %2226
      %v2228 = vmax.f32 %v2147, %v2148
      %2229 = vmax.xlane.f32.xlu0 %v2228
      %v2230 = vpop.xlane.xlu0 %2229
      %v2231 = vmax.f32 %v2149, %v2150
      %2232 = vmax.xlane.f32.xlu0 %v2231
      %v2233 = vpop.xlane.xlu0 %2232
      %v2234 = vmax.f32 %v2151, %v2152
      %2235 = vmax.xlane.f32.xlu0 %v2234
      %v2236 = vpop.xlane.xlu0 %2235
      %v2237 = vmax.f32 %v2153, %v2154
      %2238 = vmax.xlane.f32.xlu0 %v2237
      %v2239 = vpop.xlane.xlu0 %2238
      %v2240 = vmax.f32 %v2155, %v2156
      %2241 = vmax.xlane.f32.xlu0 %v2240
      %v2242 = vpop.xlane.xlu0 %2241
      %v2243 = vmax.f32 %v2157, %v2158
      %2244 = vmax.xlane.f32.xlu0 %v2243
      %v2245 = vpop.xlane.xlu0 %2244
      %v2246 = vmax.f32 %v2159, %v2160
      %2247 = vmax.xlane.f32.xlu0 %v2246
      %v2248 = vpop.xlane.xlu0 %2247
      %v2249 = vmax.f32 %v2161, %v2162
      %2250 = vmax.xlane.f32.xlu0 %v2249
      %v2251 = vpop.xlane.xlu0 %2250
      %v2252 = vmax.f32 %v2163, %v2164
      %2253 = vmax.xlane.f32.xlu0 %v2252
      %v2254 = vpop.xlane.xlu0 %2253
      %v2255 = vmax.f32 %v2165, %v2166
      %2256 = vmax.xlane.f32.xlu0 %v2255
      %v2257 = vpop.xlane.xlu0 %2256
      %v2258 = vmax.f32 %v2167, %v2168
      %2259 = vmax.xlane.f32.xlu0 %v2258
      %v2260 = vpop.xlane.xlu0 %2259
      %v2261 = vmax.f32 %v2169, %v2170
      %2262 = vmax.xlane.f32.xlu0 %v2261
      %v2263 = vpop.xlane.xlu0 %2262
      %v2264 = vmax.f32 %v2171, %v2172
      %2265 = vmax.xlane.f32.xlu0 %v2264
      %v2266 = vpop.xlane.xlu0 %2265
      %v2267 = vmax.f32 %v2173, %v2174
      %2268 = vmax.xlane.f32.xlu0 %v2267
      %v2269 = vpop.xlane.xlu0 %2268
      %v2270 = vmax.f32 %v2175, %v2176
      %2271 = vmax.xlane.f32.xlu0 %v2270
      %v2272 = vpop.xlane.xlu0 %2271
      %v2273 = vsub.f32 %v2113, %v2179
      %v2274 = vsub.f32 %v2114, %v2179
      %v2275 = vsub.f32 %v2115, %v2182
      %v2276 = vsub.f32 %v2116, %v2182
      %v2277 = vsub.f32 %v2117, %v2185
      %v2278 = vsub.f32 %v2118, %v2185
      %v2279 = vsub.f32 %v2119, %v2188
      %v2280 = vsub.f32 %v2120, %v2188
      %v2281 = vsub.f32 %v2121, %v2191
      %v2282 = vsub.f32 %v2122, %v2191
      %v2283 = vsub.f32 %v2123, %v2194
      %v2284 = vsub.f32 %v2124, %v2194
      %v2285 = vsub.f32 %v2125, %v2197
      %v2286 = vsub.f32 %v2126, %v2197
      %v2287 = vsub.f32 %v2127, %v2200
      %v2288 = vsub.f32 %v2128, %v2200
      %v2289 = vsub.f32 %v2129, %v2203
      %v2290 = vsub.f32 %v2130, %v2203
      %v2291 = vsub.f32 %v2131, %v2206
      %v2292 = vsub.f32 %v2132, %v2206
      %v2293 = vsub.f32 %v2133, %v2209
      %v2294 = vsub.f32 %v2134, %v2209
      %v2295 = vsub.f32 %v2135, %v2212
      %v2296 = vsub.f32 %v2136, %v2212
      %v2297 = vsub.f32 %v2137, %v2215
      %v2298 = vsub.f32 %v2138, %v2215
      %v2299 = vsub.f32 %v2139, %v2218
      %v2300 = vsub.f32 %v2140, %v2218
      %v2301 = vsub.f32 %v2141, %v2221
      %v2302 = vsub.f32 %v2142, %v2221
      %v2303 = vsub.f32 %v2143, %v2224
      %v2304 = vsub.f32 %v2144, %v2224
      %v2305 = vsub.f32 %v2145, %v2227
      %v2306 = vsub.f32 %v2146, %v2227
      %v2307 = vsub.f32 %v2147, %v2230
      %v2308 = vsub.f32 %v2148, %v2230
      %v2309 = vsub.f32 %v2149, %v2233
      %v2310 = vsub.f32 %v2150, %v2233
      %v2311 = vsub.f32 %v2151, %v2236
      %v2312 = vsub.f32 %v2152, %v2236
      %v2313 = vsub.f32 %v2153, %v2239
      %v2314 = vsub.f32 %v2154, %v2239
      %v2315 = vsub.f32 %v2155, %v2242
      %v2316 = vsub.f32 %v2156, %v2242
      %v2317 = vsub.f32 %v2157, %v2245
      %v2318 = vsub.f32 %v2158, %v2245
      %v2319 = vsub.f32 %v2159, %v2248
      %v2320 = vsub.f32 %v2160, %v2248
      %v2321 = vsub.f32 %v2161, %v2251
      %v2322 = vsub.f32 %v2162, %v2251
      %v2323 = vsub.f32 %v2163, %v2254
      %v2324 = vsub.f32 %v2164, %v2254
      %v2325 = vsub.f32 %v2165, %v2257
      %v2326 = vsub.f32 %v2166, %v2257
      %v2327 = vsub.f32 %v2167, %v2260
      %v2328 = vsub.f32 %v2168, %v2260
      %v2329 = vsub.f32 %v2169, %v2263
      %v2330 = vsub.f32 %v2170, %v2263
      %v2331 = vsub.f32 %v2171, %v2266
      %v2332 = vsub.f32 %v2172, %v2266
      %v2333 = vsub.f32 %v2173, %v2269
      %v2334 = vsub.f32 %v2174, %v2269
      %v2335 = vsub.f32 %v2175, %v2272
      %v2336 = vsub.f32 %v2176, %v2272
      %v2337 = vmul.f32 %v2273, 1.442695
      %v2338 = vpow.pop %v2337
      %v2339 = vmul.f32 %v2274, 1.442695
      %v2340 = vpow.pop %v2339
      %v2341 = vmul.f32 %v2275, 1.442695
      %v2342 = vpow.pop %v2341
      %v2343 = vmul.f32 %v2276, 1.442695
      %v2344 = vpow.pop %v2343
      %v2345 = vmul.f32 %v2277, 1.442695
      %v2346 = vpow.pop %v2345
      %v2347 = vmul.f32 %v2278, 1.442695
      %v2348 = vpow.pop %v2347
      %v2349 = vmul.f32 %v2279, 1.442695
      %v2350 = vpow.pop %v2349
      %v2351 = vmul.f32 %v2280, 1.442695
      %v2352 = vpow.pop %v2351
      %v2353 = vmul.f32 %v2281, 1.442695
      %v2354 = vpow.pop %v2353
      %v2355 = vmul.f32 %v2282, 1.442695
      %v2356 = vpow.pop %v2355
      %v2357 = vmul.f32 %v2283, 1.442695
      %v2358 = vpow.pop %v2357
      %v2359 = vmul.f32 %v2284, 1.442695
      %v2360 = vpow.pop %v2359
      %v2361 = vmul.f32 %v2285, 1.442695
      %v2362 = vpow.pop %v2361
      %v2363 = vmul.f32 %v2286, 1.442695
      %v2364 = vpow.pop %v2363
      %v2365 = vmul.f32 %v2287, 1.442695
      %v2366 = vpow.pop %v2365
      %v2367 = vmul.f32 %v2288, 1.442695
      %v2368 = vpow.pop %v2367
      %v2369 = vmul.f32 %v2289, 1.442695
      %v2370 = vpow.pop %v2369
      %v2371 = vmul.f32 %v2290, 1.442695
      %v2372 = vpow.pop %v2371
      %v2373 = vmul.f32 %v2291, 1.442695
      %v2374 = vpow.pop %v2373
      %v2375 = vmul.f32 %v2292, 1.442695
      %v2376 = vpow.pop %v2375
      %v2377 = vmul.f32 %v2293, 1.442695
      %v2378 = vpow.pop %v2377
      %v2379 = vmul.f32 %v2294, 1.442695
      %v2380 = vpow.pop %v2379
      %v2381 = vmul.f32 %v2295, 1.442695
      %v2382 = vpow.pop %v2381
      %v2383 = vmul.f32 %v2296, 1.442695
      %v2384 = vpow.pop %v2383
      %v2385 = vmul.f32 %v2297, 1.442695
      %v2386 = vpow.pop %v2385
      %v2387 = vmul.f32 %v2298, 1.442695
      %v2388 = vpow.pop %v2387
      %v2389 = vmul.f32 %v2299, 1.442695
      %v2390 = vpow.pop %v2389
      %v2391 = vmul.f32 %v2300, 1.442695
      %v2392 = vpow.pop %v2391
      %v2393 = vmul.f32 %v2301, 1.442695
      %v2394 = vpow.pop %v2393
      %v2395 = vmul.f32 %v2302, 1.442695
      %v2396 = vpow.pop %v2395
      %v2397 = vmul.f32 %v2303, 1.442695
      %v2398 = vpow.pop %v2397
      %v2399 = vmul.f32 %v2304, 1.442695
      %v2400 = vpow.pop %v2399
      %v2401 = vmul.f32 %v2305, 1.442695
      %v2402 = vpow.pop %v2401
      %v2403 = vmul.f32 %v2306, 1.442695
      %v2404 = vpow.pop %v2403
      %v2405 = vmul.f32 %v2307, 1.442695
      %v2406 = vpow.pop %v2405
      %v2407 = vmul.f32 %v2308, 1.442695
      %v2408 = vpow.pop %v2407
      %v2409 = vmul.f32 %v2309, 1.442695
      %v2410 = vpow.pop %v2409
      %v2411 = vmul.f32 %v2310, 1.442695
      %v2412 = vpow.pop %v2411
      %v2413 = vmul.f32 %v2311, 1.442695
      %v2414 = vpow.pop %v2413
      %v2415 = vmul.f32 %v2312, 1.442695
      %v2416 = vpow.pop %v2415
      %v2417 = vmul.f32 %v2313, 1.442695
      %v2418 = vpow.pop %v2417
      %v2419 = vmul.f32 %v2314, 1.442695
      %v2420 = vpow.pop %v2419
      %v2421 = vmul.f32 %v2315, 1.442695
      %v2422 = vpow.pop %v2421
      %v2423 = vmul.f32 %v2316, 1.442695
      %v2424 = vpow.pop %v2423
      %v2425 = vmul.f32 %v2317, 1.442695
      %v2426 = vpow.pop %v2425
      %v2427 = vmul.f32 %v2318, 1.442695
      %v2428 = vpow.pop %v2427
      %v2429 = vmul.f32 %v2319, 1.442695
      %v2430 = vpow.pop %v2429
      %v2431 = vmul.f32 %v2320, 1.442695
      %v2432 = vpow.pop %v2431
      %v2433 = vmul.f32 %v2321, 1.442695
      %v2434 = vpow.pop %v2433
      %v2435 = vmul.f32 %v2322, 1.442695
      %v2436 = vpow.pop %v2435
      %v2437 = vmul.f32 %v2323, 1.442695
      %v2438 = vpow.pop %v2437
      %v2439 = vmul.f32 %v2324, 1.442695
      %v2440 = vpow.pop %v2439
      %v2441 = vmul.f32 %v2325, 1.442695
      %v2442 = vpow.pop %v2441
      %v2443 = vmul.f32 %v2326, 1.442695
      %v2444 = vpow.pop %v2443
      %v2445 = vmul.f32 %v2327, 1.442695
      %v2446 = vpow.pop %v2445
      %v2447 = vmul.f32 %v2328, 1.442695
      %v2448 = vpow.pop %v2447
      %v2449 = vmul.f32 %v2329, 1.442695
      %v2450 = vpow.pop %v2449
      %v2451 = vmul.f32 %v2330, 1.442695
      %v2452 = vpow.pop %v2451
      %v2453 = vmul.f32 %v2331, 1.442695
      %v2454 = vpow.pop %v2453
      %v2455 = vmul.f32 %v2332, 1.442695
      %v2456 = vpow.pop %v2455
      %v2457 = vmul.f32 %v2333, 1.442695
      %v2458 = vpow.pop %v2457
      %v2459 = vmul.f32 %v2334, 1.442695
      %v2460 = vpow.pop %v2459
      %v2461 = vmul.f32 %v2335, 1.442695
      %v2462 = vpow.pop %v2461
      %v2463 = vmul.f32 %v2336, 1.442695
      %v2464 = vpow.pop %v2463
      %v2465 = vadd.f32 %v2338, %v2340
      %2466 = vadd.xlane.f32.xlu0 %v2465
      %v2467 = vpop.xlane.xlu0 %2466
      %v2468 = vadd.f32 %v2342, %v2344
      %2469 = vadd.xlane.f32.xlu0 %v2468
      %v2470 = vpop.xlane.xlu0 %2469
      %v2471 = vadd.f32 %v2346, %v2348
      %2472 = vadd.xlane.f32.xlu0 %v2471
      %v2473 = vpop.xlane.xlu0 %2472
      %v2474 = vadd.f32 %v2350, %v2352
      %2475 = vadd.xlane.f32.xlu0 %v2474
      %v2476 = vpop.xlane.xlu0 %2475
      %v2477 = vadd.f32 %v2354, %v2356
      %2478 = vadd.xlane.f32.xlu0 %v2477
      %v2479 = vpop.xlane.xlu0 %2478
      %v2480 = vadd.f32 %v2358, %v2360
      %2481 = vadd.xlane.f32.xlu0 %v2480
      %v2482 = vpop.xlane.xlu0 %2481
      %v2483 = vadd.f32 %v2362, %v2364
      %2484 = vadd.xlane.f32.xlu0 %v2483
      %v2485 = vpop.xlane.xlu0 %2484
      %v2486 = vadd.f32 %v2366, %v2368
      %2487 = vadd.xlane.f32.xlu0 %v2486
      %v2488 = vpop.xlane.xlu0 %2487
      %v2489 = vadd.f32 %v2370, %v2372
      %2490 = vadd.xlane.f32.xlu0 %v2489
      %v2491 = vpop.xlane.xlu0 %2490
      %v2492 = vadd.f32 %v2374, %v2376
      %2493 = vadd.xlane.f32.xlu0 %v2492
      %v2494 = vpop.xlane.xlu0 %2493
      %v2495 = vadd.f32 %v2378, %v2380
      %2496 = vadd.xlane.f32.xlu0 %v2495
      %v2497 = vpop.xlane.xlu0 %2496
      %v2498 = vadd.f32 %v2382, %v2384
      %2499 = vadd.xlane.f32.xlu0 %v2498
      %v2500 = vpop.xlane.xlu0 %2499
      %v2501 = vadd.f32 %v2386, %v2388
      %2502 = vadd.xlane.f32.xlu0 %v2501
      %v2503 = vpop.xlane.xlu0 %2502
      %v2504 = vadd.f32 %v2390, %v2392
      %2505 = vadd.xlane.f32.xlu0 %v2504
      %v2506 = vpop.xlane.xlu0 %2505
      %v2507 = vadd.f32 %v2394, %v2396
      %2508 = vadd.xlane.f32.xlu0 %v2507
      %v2509 = vpop.xlane.xlu0 %2508
      %v2510 = vadd.f32 %v2398, %v2400
      %2511 = vadd.xlane.f32.xlu0 %v2510
      %v2512 = vpop.xlane.xlu0 %2511
      %v2513 = vadd.f32 %v2402, %v2404
      %2514 = vadd.xlane.f32.xlu0 %v2513
      %v2515 = vpop.xlane.xlu0 %2514
      %v2516 = vadd.f32 %v2406, %v2408
      %2517 = vadd.xlane.f32.xlu0 %v2516
      %v2518 = vpop.xlane.xlu0 %2517
      %v2519 = vadd.f32 %v2410, %v2412
      %2520 = vadd.xlane.f32.xlu0 %v2519
      %v2521 = vpop.xlane.xlu0 %2520
      %v2522 = vadd.f32 %v2414, %v2416
      %2523 = vadd.xlane.f32.xlu0 %v2522
      %v2524 = vpop.xlane.xlu0 %2523
      %v2525 = vadd.f32 %v2418, %v2420
      %2526 = vadd.xlane.f32.xlu0 %v2525
      %v2527 = vpop.xlane.xlu0 %2526
      %v2528 = vadd.f32 %v2422, %v2424
      %2529 = vadd.xlane.f32.xlu0 %v2528
      %v2530 = vpop.xlane.xlu0 %2529
      %v2531 = vadd.f32 %v2426, %v2428
      %2532 = vadd.xlane.f32.xlu0 %v2531
      %v2533 = vpop.xlane.xlu0 %2532
      %v2534 = vadd.f32 %v2430, %v2432
      %2535 = vadd.xlane.f32.xlu0 %v2534
      %v2536 = vpop.xlane.xlu0 %2535
      %v2537 = vadd.f32 %v2434, %v2436
      %2538 = vadd.xlane.f32.xlu0 %v2537
      %v2539 = vpop.xlane.xlu0 %2538
      %v2540 = vadd.f32 %v2438, %v2440
      %2541 = vadd.xlane.f32.xlu0 %v2540
      %v2542 = vpop.xlane.xlu0 %2541
      %v2543 = vadd.f32 %v2442, %v2444
      %2544 = vadd.xlane.f32.xlu0 %v2543
      %v2545 = vpop.xlane.xlu0 %2544
      %v2546 = vadd.f32 %v2446, %v2448
      %2547 = vadd.xlane.f32.xlu0 %v2546
      %v2548 = vpop.xlane.xlu0 %2547
      %v2549 = vadd.f32 %v2450, %v2452
      %2550 = vadd.xlane.f32.xlu0 %v2549
      %v2551 = vpop.xlane.xlu0 %2550
      %v2552 = vadd.f32 %v2454, %v2456
      %2553 = vadd.xlane.f32.xlu0 %v2552
      %v2554 = vpop.xlane.xlu0 %2553
      %v2555 = vadd.f32 %v2458, %v2460
      %2556 = vadd.xlane.f32.xlu0 %v2555
      %v2557 = vpop.xlane.xlu0 %2556
      %v2558 = vadd.f32 %v2462, %v2464
      %2559 = vadd.xlane.f32.xlu0 %v2558
      %v2560 = vpop.xlane.xlu0 %2559
      %v2561 = vrcp.pop %v2467
      %v2562 = vmul.f32 %v2338, %v2561
      %v2563 = vmul.f32 %v2340, %v2561
      %v2564 = vrcp.pop %v2470
      %v2565 = vmul.f32 %v2342, %v2564
      %v2566 = vmul.f32 %v2344, %v2564
      %v2567 = vrcp.pop %v2473
      %v2568 = vmul.f32 %v2346, %v2567
      %v2569 = vmul.f32 %v2348, %v2567
      %v2570 = vrcp.pop %v2476
      %v2571 = vmul.f32 %v2350, %v2570
      %v2572 = vmul.f32 %v2352, %v2570
      %v2573 = vrcp.pop %v2479
      %v2574 = vmul.f32 %v2354, %v2573
      %v2575 = vmul.f32 %v2356, %v2573
      %v2576 = vrcp.pop %v2482
      %v2577 = vmul.f32 %v2358, %v2576
      %v2578 = vmul.f32 %v2360, %v2576
      %v2579 = vrcp.pop %v2485
      %v2580 = vmul.f32 %v2362, %v2579
      %v2581 = vmul.f32 %v2364, %v2579
      %v2582 = vrcp.pop %v2488
      %v2583 = vmul.f32 %v2366, %v2582
      %v2584 = vmul.f32 %v2368, %v2582
      %v2585 = vrcp.pop %v2491
      %v2586 = vmul.f32 %v2370, %v2585
      %v2587 = vmul.f32 %v2372, %v2585
      %v2588 = vrcp.pop %v2494
      %v2589 = vmul.f32 %v2374, %v2588
      %v2590 = vmul.f32 %v2376, %v2588
      %v2591 = vrcp.pop %v2497
      %v2592 = vmul.f32 %v2378, %v2591
      %v2593 = vmul.f32 %v2380, %v2591
      %v2594 = vrcp.pop %v2500
      %v2595 = vmul.f32 %v2382, %v2594
      %v2596 = vmul.f32 %v2384, %v2594
      %v2597 = vrcp.pop %v2503
      %v2598 = vmul.f32 %v2386, %v2597
      %v2599 = vmul.f32 %v2388, %v2597
      %v2600 = vrcp.pop %v2506
      %v2601 = vmul.f32 %v2390, %v2600
      %v2602 = vmul.f32 %v2392, %v2600
      %v2603 = vrcp.pop %v2509
      %v2604 = vmul.f32 %v2394, %v2603
      %v2605 = vmul.f32 %v2396, %v2603
      %v2606 = vrcp.pop %v2512
      %v2607 = vmul.f32 %v2398, %v2606
      %v2608 = vmul.f32 %v2400, %v2606
      %v2609 = vrcp.pop %v2515
      %v2610 = vmul.f32 %v2402, %v2609
      %v2611 = vmul.f32 %v2404, %v2609
      %v2612 = vrcp.pop %v2518
      %v2613 = vmul.f32 %v2406, %v2612
      %v2614 = vmul.f32 %v2408, %v2612
      %v2615 = vrcp.pop %v2521
      %v2616 = vmul.f32 %v2410, %v2615
      %v2617 = vmul.f32 %v2412, %v2615
      %v2618 = vrcp.pop %v2524
      %v2619 = vmul.f32 %v2414, %v2618
      %v2620 = vmul.f32 %v2416, %v2618
      %v2621 = vrcp.pop %v2527
      %v2622 = vmul.f32 %v2418, %v2621
      %v2623 = vmul.f32 %v2420, %v2621
      %v2624 = vrcp.pop %v2530
      %v2625 = vmul.f32 %v2422, %v2624
      %v2626 = vmul.f32 %v2424, %v2624
      %v2627 = vrcp.pop %v2533
      %v2628 = vmul.f32 %v2426, %v2627
      %v2629 = vmul.f32 %v2428, %v2627
      %v2630 = vrcp.pop %v2536
      %v2631 = vmul.f32 %v2430, %v2630
      %v2632 = vmul.f32 %v2432, %v2630
      %v2633 = vrcp.pop %v2539
      %v2634 = vmul.f32 %v2434, %v2633
      %v2635 = vmul.f32 %v2436, %v2633
      %v2636 = vrcp.pop %v2542
      %v2637 = vmul.f32 %v2438, %v2636
      %v2638 = vmul.f32 %v2440, %v2636
      %v2639 = vrcp.pop %v2545
      %v2640 = vmul.f32 %v2442, %v2639
      %v2641 = vmul.f32 %v2444, %v2639
      %v2642 = vrcp.pop %v2548
      %v2643 = vmul.f32 %v2446, %v2642
      %v2644 = vmul.f32 %v2448, %v2642
      %v2645 = vrcp.pop %v2551
      %v2646 = vmul.f32 %v2450, %v2645
      %v2647 = vmul.f32 %v2452, %v2645
      %v2648 = vrcp.pop %v2554
      %v2649 = vmul.f32 %v2454, %v2648
      %v2650 = vmul.f32 %v2456, %v2648
      %v2651 = vrcp.pop %v2557
      %v2652 = vmul.f32 %v2458, %v2651
      %v2653 = vmul.f32 %v2460, %v2651
      %v2654 = vrcp.pop %v2560
      %v2655 = vmul.f32 %v2462, %v2654
      %v2656 = vmul.f32 %v2464, %v2654
      %2657 = vmatprep.subr.mxu0 %v2563
      %2658 = vmatpush1.xpose.msra.mxu0 %v2562
      %2659 = vmatprep.subr.mxu0 %v2566
      %2660 = vmatpush1.xpose.msra.mxu0 %v2565
      %2661 = vmatprep.subr.mxu0 %v2569
      %2662 = vmatpush1.xpose.msra.mxu0 %v2568
      %2663 = vmatprep.subr.mxu0 %v2572
      %2664 = vmatpush1.xpose.msra.mxu0 %v2571
      %2665 = vmatprep.subr.mxu0 %v2575
      %2666 = vmatpush1.xpose.msra.mxu0 %v2574
      %2667 = vmatprep.subr.mxu0 %v2578
      %2668 = vmatpush1.xpose.msra.mxu0 %v2577
      %2669 = vmatprep.subr.mxu0 %v2581
      %2670 = vmatpush1.xpose.msra.mxu0 %v2580
      %2671 = vmatprep.subr.mxu0 %v2584
      %2672 = vmatpush1.xpose.msra.mxu0 %v2583
      %2673 = vmatprep.subr.mxu0 %v2587
      %2674 = vmatpush1.xpose.msra.mxu0 %v2586
      %2675 = vmatprep.subr.mxu0 %v2590
      %2676 = vmatpush1.xpose.msra.mxu0 %v2589
      %2677 = vmatprep.subr.mxu0 %v2593
      %2678 = vmatpush1.xpose.msra.mxu0 %v2592
      %2679 = vmatprep.subr.mxu0 %v2596
      %2680 = vmatpush1.xpose.msra.mxu0 %v2595
      %2681 = vmatprep.subr.mxu0 %v2599
      %2682 = vmatpush1.xpose.msra.mxu0 %v2598
      %2683 = vmatprep.subr.mxu0 %v2602
      %2684 = vmatpush1.xpose.msra.mxu0 %v2601
      %2685 = vmatprep.subr.mxu0 %v2605
      %2686 = vmatpush1.xpose.msra.mxu0 %v2604
      %2687 = vmatprep.subr.mxu0 %v2608
      %2688 = vmatpush1.xpose.msra.mxu0 %v2607
      %2689 = vmatprep.subr.mxu0 %v2611
      %2690 = vmatpush1.xpose.msra.mxu0 %v2610
      %2691 = vmatprep.subr.mxu0 %v2614
      %2692 = vmatpush1.xpose.msra.mxu0 %v2613
      %2693 = vmatprep.subr.mxu0 %v2617
      %2694 = vmatpush1.xpose.msra.mxu0 %v2616
      %2695 = vmatprep.subr.mxu0 %v2620
      %2696 = vmatpush1.xpose.msra.mxu0 %v2619
      %2697 = vmatprep.subr.mxu0 %v2623
      %2698 = vmatpush1.xpose.msra.mxu0 %v2622
      %2699 = vmatprep.subr.mxu0 %v2626
      %2700 = vmatpush1.xpose.msra.mxu0 %v2625
      %2701 = vmatprep.subr.mxu0 %v2629
      %2702 = vmatpush1.xpose.msra.mxu0 %v2628
      %2703 = vmatprep.subr.mxu0 %v2632
      %2704 = vmatpush1.xpose.msra.mxu0 %v2631
      %2705 = vmatprep.subr.mxu0 %v2635
      %2706 = vmatpush1.xpose.msra.mxu0 %v2634
      %2707 = vmatprep.subr.mxu0 %v2638
      %2708 = vmatpush1.xpose.msra.mxu0 %v2637
      %2709 = vmatprep.subr.mxu0 %v2641
      %2710 = vmatpush1.xpose.msra.mxu0 %v2640
      %2711 = vmatprep.subr.mxu0 %v2644
      %2712 = vmatpush1.xpose.msra.mxu0 %v2643
      %2713 = vmatprep.subr.mxu0 %v2647
      %2714 = vmatpush1.xpose.msra.mxu0 %v2646
      %2715 = vmatprep.subr.mxu0 %v2650
      %2716 = vmatpush1.xpose.msra.mxu0 %v2649
      %2717 = vmatprep.subr.mxu0 %v2653
      %2718 = vmatpush1.xpose.msra.mxu0 %v2652
      %2719 = vmatprep.subr.mxu0 %v2656
      %2720 = vmatpush1.xpose.msra.mxu0 %v2655
      %2721 = vmatprep.mubr.f32.mxu0 %v606
      %2722 = vmatmul.mubr.f32.gmra.mrb[0].mxu0 %v604
      %v2723 = vpop.f32.mrb[0].mxu0
      %v2724 = vadd.f32 0.0, %v2723
      %v2725 = vpop.f32.mrb[0].mxu0
      %v2726 = vadd.f32 0.0, %v2725
      %2727 = vdwg.mxu0
      %2728 = vxpose.xlu0.b32.start [1/16] %v556, 128
      %2729 = vxpose.xlu0.b32.cont [2/16] 0.0, 128
      %2730 = vxpose.xlu0.b32.cont [3/16] 0.0, 128
      %2731 = vxpose.xlu0.b32.cont [4/16] 0.0, 128
      %2732 = vxpose.xlu0.b32.cont [5/16] 0.0, 128
      %2733 = vxpose.xlu0.b32.cont [6/16] 0.0, 128
      %2734 = vxpose.xlu0.b32.cont [7/16] 0.0, 128
      %2735 = vxpose.xlu0.b32.cont [8/16] 0.0, 128
      %2736 = vxpose.xlu0.b32.cont [9/16] 0.0, 128
      %2737 = vxpose.xlu0.b32.cont [10/16] 0.0, 128
      %2738 = vxpose.xlu0.b32.cont [11/16] 0.0, 128
      %2739 = vxpose.xlu0.b32.cont [12/16] 0.0, 128
      %2740 = vxpose.xlu0.b32.cont [13/16] 0.0, 128
      %2741 = vxpose.xlu0.b32.cont [14/16] 0.0, 128
      %2742 = vxpose.xlu0.b32.cont [15/16] 0.0, 128
      %2743 = vxpose.xlu0.b32.end [16/16] 0.0, 128
      %v2744 = vpop.trf.xlu0
      %v2745 = vpop.trf.xlu0
      %v2746 = vpop.trf.xlu0
      %v2747 = vpop.trf.xlu0
      %v2748 = vpop.trf.xlu0
      %v2749 = vpop.trf.xlu0
      %v2750 = vpop.trf.xlu0
      %v2751 = vpop.trf.xlu0
      %v2752 = vpop.trf.xlu0
      %v2753 = vpop.trf.xlu0
      %v2754 = vpop.trf.xlu0
      %v2755 = vpop.trf.xlu0
      %v2756 = vpop.trf.xlu0
      %v2757 = vpop.trf.xlu0
      %v2758 = vpop.trf.xlu0
      %v2759 = vpop.trf.xlu0
      %2760 = vxpose.xlu0.b32.start [1/16] %v558, 128
      %2761 = vxpose.xlu0.b32.cont [2/16] 0.0, 128
      %2762 = vxpose.xlu0.b32.cont [3/16] 0.0, 128
      %2763 = vxpose.xlu0.b32.cont [4/16] 0.0, 128
      %2764 = vxpose.xlu0.b32.cont [5/16] 0.0, 128
      %2765 = vxpose.xlu0.b32.cont [6/16] 0.0, 128
      %2766 = vxpose.xlu0.b32.cont [7/16] 0.0, 128
      %2767 = vxpose.xlu0.b32.cont [8/16] 0.0, 128
      %2768 = vxpose.xlu0.b32.cont [9/16] 0.0, 128
      %2769 = vxpose.xlu0.b32.cont [10/16] 0.0, 128
      %2770 = vxpose.xlu0.b32.cont [11/16] 0.0, 128
      %2771 = vxpose.xlu0.b32.cont [12/16] 0.0, 128
      %2772 = vxpose.xlu0.b32.cont [13/16] 0.0, 128
      %2773 = vxpose.xlu0.b32.cont [14/16] 0.0, 128
      %2774 = vxpose.xlu0.b32.cont [15/16] 0.0, 128
      %2775 = vxpose.xlu0.b32.end [16/16] 0.0, 128
      %v2776 = vpop.trf.xlu0
      %v2777 = vpop.trf.xlu0
      %v2778 = vpop.trf.xlu0
      %v2779 = vpop.trf.xlu0
      %v2780 = vpop.trf.xlu0
      %v2781 = vpop.trf.xlu0
      %v2782 = vpop.trf.xlu0
      %v2783 = vpop.trf.xlu0
      %v2784 = vpop.trf.xlu0
      %v2785 = vpop.trf.xlu0
      %v2786 = vpop.trf.xlu0
      %v2787 = vpop.trf.xlu0
      %v2788 = vpop.trf.xlu0
      %v2789 = vpop.trf.xlu0
      %v2790 = vpop.trf.xlu0
      %v2791 = vpop.trf.xlu0
      %v2793 = vsel %vm708, %v2744, 0
      %v2796 = vsel %vm708, %v2745, 0
      %v2799 = vsel %vm708, %v2746, 0
      %v2802 = vsel %vm708, %v2747, 0
      %v2805 = vsel %vm708, %v2748, 0
      %v2808 = vsel %vm708, %v2749, 0
      %v2811 = vsel %vm708, %v2750, 0
      %v2814 = vsel %vm708, %v2751, 0
      %v2817 = vsel %vm708, %v2752, 0
      %v2820 = vsel %vm708, %v2753, 0
      %v2823 = vsel %vm708, %v2754, 0
      %v2826 = vsel %vm708, %v2755, 0
      %v2829 = vsel %vm708, %v2756, 0
      %v2832 = vsel %vm708, %v2757, 0
      %v2835 = vsel %vm708, %v2758, 0
      %v2838 = vsel %vm708, %v2759, 0
      %v2841 = vsel %vm708, %v2776, 0
      %v2844 = vsel %vm708, %v2777, 0
      %v2847 = vsel %vm708, %v2778, 0
      %v2850 = vsel %vm708, %v2779, 0
      %v2853 = vsel %vm708, %v2780, 0
      %v2856 = vsel %vm708, %v2781, 0
      %v2859 = vsel %vm708, %v2782, 0
      %v2862 = vsel %vm708, %v2783, 0
      %v2865 = vsel %vm708, %v2784, 0
      %v2868 = vsel %vm708, %v2785, 0
      %v2871 = vsel %vm708, %v2786, 0
      %v2874 = vsel %vm708, %v2787, 0
      %v2877 = vsel %vm708, %v2788, 0
      %v2880 = vsel %vm708, %v2789, 0
      %v2883 = vsel %vm708, %v2790, 0
      %v2886 = vsel %vm708, %v2791, 0
      %v2889 = vsel %vm805, %v580, 0
      %v2892 = vsel %vm805, %v582, 0
      %2894 = vmatprep.subr.mxu0 %v2892
      %2895 = vmatpush1.msra.mxu0 %v2889
      %2896 = vmatprep.subr.mxu0 0.0
      %2897 = vmatpush1.msra.mxu0 0.0
      %2898 = vmatprep.subr.mxu0 0.0
      %2899 = vmatpush1.msra.mxu0 0.0
      %2900 = vmatprep.subr.mxu0 0.0
      %2901 = vmatpush1.msra.mxu0 0.0
      %2902 = vmatprep.subr.mxu0 0.0
      %2903 = vmatpush1.msra.mxu0 0.0
      %2904 = vmatprep.subr.mxu0 0.0
      %2905 = vmatpush1.msra.mxu0 0.0
      %2906 = vmatprep.subr.mxu0 0.0
      %2907 = vmatpush1.msra.mxu0 0.0
      %2908 = vmatprep.subr.mxu0 0.0
      %2909 = vmatpush1.msra.mxu0 0.0
      %2910 = vmatprep.subr.mxu0 0.0
      %2911 = vmatpush1.msra.mxu0 0.0
      %2912 = vmatprep.subr.mxu0 0.0
      %2913 = vmatpush1.msra.mxu0 0.0
      %2914 = vmatprep.subr.mxu0 0.0
      %2915 = vmatpush1.msra.mxu0 0.0
      %2916 = vmatprep.subr.mxu0 0.0
      %2917 = vmatpush1.msra.mxu0 0.0
      %2918 = vmatprep.subr.mxu0 0.0
      %2919 = vmatpush1.msra.mxu0 0.0
      %2920 = vmatprep.subr.mxu0 0.0
      %2921 = vmatpush1.msra.mxu0 0.0
      %2922 = vmatprep.subr.mxu0 0.0
      %2923 = vmatpush1.msra.mxu0 0.0
      %2924 = vmatprep.subr.mxu0 0.0
      %2925 = vmatpush1.msra.mxu0 0.0
      %2926 = vmatprep.subr.mxu0 0.0
      %2927 = vmatpush1.msra.mxu0 0.0
      %2928 = vmatprep.subr.mxu0 0.0
      %2929 = vmatpush1.msra.mxu0 0.0
      %2930 = vmatprep.subr.mxu0 0.0
      %2931 = vmatpush1.msra.mxu0 0.0
      %2932 = vmatprep.subr.mxu0 0.0
      %2933 = vmatpush1.msra.mxu0 0.0
      %2934 = vmatprep.subr.mxu0 0.0
      %2935 = vmatpush1.msra.mxu0 0.0
      %2936 = vmatprep.subr.mxu0 0.0
      %2937 = vmatpush1.msra.mxu0 0.0
      %2938 = vmatprep.subr.mxu0 0.0
      %2939 = vmatpush1.msra.mxu0 0.0
      %2940 = vmatprep.subr.mxu0 0.0
      %2941 = vmatpush1.msra.mxu0 0.0
      %2942 = vmatprep.subr.mxu0 0.0
      %2943 = vmatpush1.msra.mxu0 0.0
      %2944 = vmatprep.subr.mxu0 0.0
      %2945 = vmatpush1.msra.mxu0 0.0
      %2946 = vmatprep.subr.mxu0 0.0
      %2947 = vmatpush1.msra.mxu0 0.0
      %2948 = vmatprep.subr.mxu0 0.0
      %2949 = vmatpush1.msra.mxu0 0.0
      %2950 = vmatprep.subr.mxu0 0.0
      %2951 = vmatpush1.msra.mxu0 0.0
      %2952 = vmatprep.subr.mxu0 0.0
      %2953 = vmatpush1.msra.mxu0 0.0
      %2954 = vmatprep.subr.mxu0 0.0
      %2955 = vmatpush1.msra.mxu0 0.0
      %2956 = vmatprep.subr.mxu0 0.0
      %2957 = vmatpush1.msra.mxu0 0.0
      %2958 = vmatprep.mubr.f32.mxu0 0.0
      %2959 = vmatmul.mubr.f32.gmra.mrb[0].mxu0 %v2793
      %v2960 = vpop.f32.mrb[0].mxu0
      %v2961 = vadd.f32 0.0, %v2960
      %v2962 = vpop.f32.mrb[0].mxu0
      %v2963 = vadd.f32 0.0, %v2962
      %2964 = vmatprep.mubr.f32.mxu0 0.0
      %2965 = vmatmul.mubr.f32.gmra.mrb[0].mxu0 %v2796
      %v2966 = vpop.f32.mrb[0].mxu0
      %v2967 = vadd.f32 0.0, %v2966
      %v2968 = vpop.f32.mrb[0].mxu0
      %v2969 = vadd.f32 0.0, %v2968
      %2970 = vmatprep.mubr.f32.mxu0 0.0
      %2971 = vmatmul.mubr.f32.gmra.mrb[0].mxu0 %v2799
      %v2972 = vpop.f32.mrb[0].mxu0
      %v2973 = vadd.f32 0.0, %v2972
      %v2974 = vpop.f32.mrb[0].mxu0
      %v2975 = vadd.f32 0.0, %v2974
      %2976 = vmatprep.mubr.f32.mxu0 0.0
      %2977 = vmatmul.mubr.f32.gmra.mrb[0].mxu0 %v2802
      %v2978 = vpop.f32.mrb[0].mxu0
      %v2979 = vadd.f32 0.0, %v2978
      %v2980 = vpop.f32.mrb[0].mxu0
      %v2981 = vadd.f32 0.0, %v2980
      %2982 = vmatprep.mubr.f32.mxu0 0.0
      %2983 = vmatmul.mubr.f32.gmra.mrb[0].mxu0 %v2805
      %v2984 = vpop.f32.mrb[0].mxu0
      %v2985 = vadd.f32 0.0, %v2984
      %v2986 = vpop.f32.mrb[0].mxu0
      %v2987 = vadd.f32 0.0, %v2986
      %2988 = vmatprep.mubr.f32.mxu0 0.0
      %2989 = vmatmul.mubr.f32.gmra.mrb[0].mxu0 %v2808
      %v2990 = vpop.f32.mrb[0].mxu0
      %v2991 = vadd.f32 0.0, %v2990
      %v2992 = vpop.f32.mrb[0].mxu0
      %v2993 = vadd.f32 0.0, %v2992
      %2994 = vmatprep.mubr.f32.mxu0 0.0
      %2995 = vmatmul.mubr.f32.gmra.mrb[0].mxu0 %v2811
      %v2996 = vpop.f32.mrb[0].mxu0
      %v2997 = vadd.f32 0.0, %v2996
      %v2998 = vpop.f32.mrb[0].mxu0
      %v2999 = vadd.f32 0.0, %v2998
      %3000 = vmatprep.mubr.f32.mxu0 0.0
      %3001 = vmatmul.mubr.f32.gmra.mrb[0].mxu0 %v2814
      %v3002 = vpop.f32.mrb[0].mxu0
      %v3003 = vadd.f32 0.0, %v3002
      %v3004 = vpop.f32.mrb[0].mxu0
      %v3005 = vadd.f32 0.0, %v3004
      %3006 = vmatprep.mubr.f32.mxu0 0.0
      %3007 = vmatmul.mubr.f32.gmra.mrb[0].mxu0 %v2817
      %v3008 = vpop.f32.mrb[0].mxu0
      %v3009 = vadd.f32 0.0, %v3008
      %v3010 = vpop.f32.mrb[0].mxu0
      %v3011 = vadd.f32 0.0, %v3010
      %3012 = vmatprep.mubr.f32.mxu0 0.0
      %3013 = vmatmul.mubr.f32.gmra.mrb[0].mxu0 %v2820
      %v3014 = vpop.f32.mrb[0].mxu0
      %v3015 = vadd.f32 0.0, %v3014
      %v3016 = vpop.f32.mrb[0].mxu0
      %v3017 = vadd.f32 0.0, %v3016
      %3018 = vmatprep.mubr.f32.mxu0 0.0
      %3019 = vmatmul.mubr.f32.gmra.mrb[0].mxu0 %v2823
      %v3020 = vpop.f32.mrb[0].mxu0
      %v3021 = vadd.f32 0.0, %v3020
      %v3022 = vpop.f32.mrb[0].mxu0
      %v3023 = vadd.f32 0.0, %v3022
      %3024 = vmatprep.mubr.f32.mxu0 0.0
      %3025 = vmatmul.mubr.f32.gmra.mrb[0].mxu0 %v2826
      %v3026 = vpop.f32.mrb[0].mxu0
      %v3027 = vadd.f32 0.0, %v3026
      %v3028 = vpop.f32.mrb[0].mxu0
      %v3029 = vadd.f32 0.0, %v3028
      %3030 = vmatprep.mubr.f32.mxu0 0.0
      %3031 = vmatmul.mubr.f32.gmra.mrb[0].mxu0 %v2829
      %v3032 = vpop.f32.mrb[0].mxu0
      %v3033 = vadd.f32 0.0, %v3032
      %v3034 = vpop.f32.mrb[0].mxu0
      %v3035 = vadd.f32 0.0, %v3034
      %3036 = vmatprep.mubr.f32.mxu0 0.0
      %3037 = vmatmul.mubr.f32.gmra.mrb[0].mxu0 %v2832
      %v3038 = vpop.f32.mrb[0].mxu0
      %v3039 = vadd.f32 0.0, %v3038
      %v3040 = vpop.f32.mrb[0].mxu0
      %v3041 = vadd.f32 0.0, %v3040
      %3042 = vmatprep.mubr.f32.mxu0 0.0
      %3043 = vmatmul.mubr.f32.gmra.mrb[0].mxu0 %v2835
      %v3044 = vpop.f32.mrb[0].mxu0
      %v3045 = vadd.f32 0.0, %v3044
      %v3046 = vpop.f32.mrb[0].mxu0
      %v3047 = vadd.f32 0.0, %v3046
      %3048 = vmatprep.mubr.f32.mxu0 0.0
      %3049 = vmatmul.mubr.f32.gmra.mrb[0].mxu0 %v2838
      %v3050 = vpop.f32.mrb[0].mxu0
      %v3051 = vadd.f32 0.0, %v3050
      %v3052 = vpop.f32.mrb[0].mxu0
      %v3053 = vadd.f32 0.0, %v3052
      %3054 = vmatprep.mubr.f32.mxu0 0.0
      %3055 = vmatmul.mubr.f32.gmra.mrb[0].mxu0 %v2841
      %v3056 = vpop.f32.mrb[0].mxu0
      %v3057 = vadd.f32 0.0, %v3056
      %v3058 = vpop.f32.mrb[0].mxu0
      %v3059 = vadd.f32 0.0, %v3058
      %3060 = vmatprep.mubr.f32.mxu0 0.0
      %3061 = vmatmul.mubr.f32.gmra.mrb[0].mxu0 %v2844
      %v3062 = vpop.f32.mrb[0].mxu0
      %v3063 = vadd.f32 0.0, %v3062
      %v3064 = vpop.f32.mrb[0].mxu0
      %v3065 = vadd.f32 0.0, %v3064
      %3066 = vmatprep.mubr.f32.mxu0 0.0
      %3067 = vmatmul.mubr.f32.gmra.mrb[0].mxu0 %v2847
      %v3068 = vpop.f32.mrb[0].mxu0
      %v3069 = vadd.f32 0.0, %v3068
      %v3070 = vpop.f32.mrb[0].mxu0
      %v3071 = vadd.f32 0.0, %v3070
      %3072 = vmatprep.mubr.f32.mxu0 0.0
      %3073 = vmatmul.mubr.f32.gmra.mrb[0].mxu0 %v2850
      %v3074 = vpop.f32.mrb[0].mxu0
      %v3075 = vadd.f32 0.0, %v3074
      %v3076 = vpop.f32.mrb[0].mxu0
      %v3077 = vadd.f32 0.0, %v3076
      %3078 = vmatprep.mubr.f32.mxu0 0.0
      %3079 = vmatmul.mubr.f32.gmra.mrb[0].mxu0 %v2853
      %v3080 = vpop.f32.mrb[0].mxu0
      %v3081 = vadd.f32 0.0, %v3080
      %v3082 = vpop.f32.mrb[0].mxu0
      %v3083 = vadd.f32 0.0, %v3082
      %3084 = vmatprep.mubr.f32.mxu0 0.0
      %3085 = vmatmul.mubr.f32.gmra.mrb[0].mxu0 %v2856
      %v3086 = vpop.f32.mrb[0].mxu0
      %v3087 = vadd.f32 0.0, %v3086
      %v3088 = vpop.f32.mrb[0].mxu0
      %v3089 = vadd.f32 0.0, %v3088
      %3090 = vmatprep.mubr.f32.mxu0 0.0
      %3091 = vmatmul.mubr.f32.gmra.mrb[0].mxu0 %v2859
      %v3092 = vpop.f32.mrb[0].mxu0
      %v3093 = vadd.f32 0.0, %v3092
      %v3094 = vpop.f32.mrb[0].mxu0
      %v3095 = vadd.f32 0.0, %v3094
      %3096 = vmatprep.mubr.f32.mxu0 0.0
      %3097 = vmatmul.mubr.f32.gmra.mrb[0].mxu0 %v2862
      %v3098 = vpop.f32.mrb[0].mxu0
      %v3099 = vadd.f32 0.0, %v3098
      %v3100 = vpop.f32.mrb[0].mxu0
      %v3101 = vadd.f32 0.0, %v3100
      %3102 = vmatprep.mubr.f32.mxu0 0.0
      %3103 = vmatmul.mubr.f32.gmra.mrb[0].mxu0 %v2865
      %v3104 = vpop.f32.mrb[0].mxu0
      %v3105 = vadd.f32 0.0, %v3104
      %v3106 = vpop.f32.mrb[0].mxu0
      %v3107 = vadd.f32 0.0, %v3106
      %3108 = vmatprep.mubr.f32.mxu0 0.0
      %3109 = vmatmul.mubr.f32.gmra.mrb[0].mxu0 %v2868
      %v3110 = vpop.f32.mrb[0].mxu0
      %v3111 = vadd.f32 0.0, %v3110
      %v3112 = vpop.f32.mrb[0].mxu0
      %v3113 = vadd.f32 0.0, %v3112
      %3114 = vmatprep.mubr.f32.mxu0 0.0
      %3115 = vmatmul.mubr.f32.gmra.mrb[0].mxu0 %v2871
      %v3116 = vpop.f32.mrb[0].mxu0
      %v3117 = vadd.f32 0.0, %v3116
      %v3118 = vpop.f32.mrb[0].mxu0
      %v3119 = vadd.f32 0.0, %v3118
      %3120 = vmatprep.mubr.f32.mxu0 0.0
      %3121 = vmatmul.mubr.f32.gmra.mrb[0].mxu0 %v2874
      %v3122 = vpop.f32.mrb[0].mxu0
      %v3123 = vadd.f32 0.0, %v3122
      %v3124 = vpop.f32.mrb[0].mxu0
      %v3125 = vadd.f32 0.0, %v3124
      %3126 = vmatprep.mubr.f32.mxu0 0.0
      %3127 = vmatmul.mubr.f32.gmra.mrb[0].mxu0 %v2877
      %v3128 = vpop.f32.mrb[0].mxu0
      %v3129 = vadd.f32 0.0, %v3128
      %v3130 = vpop.f32.mrb[0].mxu0
      %v3131 = vadd.f32 0.0, %v3130
      %3132 = vmatprep.mubr.f32.mxu0 0.0
      %3133 = vmatmul.mubr.f32.gmra.mrb[0].mxu0 %v2880
      %v3134 = vpop.f32.mrb[0].mxu0
      %v3135 = vadd.f32 0.0, %v3134
      %v3136 = vpop.f32.mrb[0].mxu0
      %v3137 = vadd.f32 0.0, %v3136
      %3138 = vmatprep.mubr.f32.mxu0 0.0
      %3139 = vmatmul.mubr.f32.gmra.mrb[0].mxu0 %v2883
      %v3140 = vpop.f32.mrb[0].mxu0
      %v3141 = vadd.f32 0.0, %v3140
      %v3142 = vpop.f32.mrb[0].mxu0
      %v3143 = vadd.f32 0.0, %v3142
      %3144 = vmatprep.mubr.f32.mxu0 0.0
      %3145 = vmatmul.mubr.f32.gmra.mrb[0].mxu0 %v2886
      %v3146 = vpop.f32.mrb[0].mxu0
      %v3147 = vadd.f32 0.0, %v3146
      %v3148 = vpop.f32.mrb[0].mxu0
      %v3149 = vadd.f32 0.0, %v3148
      %3150 = vdwg.mxu0
      %v3151 = vmul.f32 %v2961, 0.5
      %v3152 = vmul.f32 %v2963, 0.5
      %v3153 = vmul.f32 %v2967, 0.5
      %v3154 = vmul.f32 %v2969, 0.5
      %v3155 = vmul.f32 %v2973, 0.5
      %v3156 = vmul.f32 %v2975, 0.5
      %v3157 = vmul.f32 %v2979, 0.5
      %v3158 = vmul.f32 %v2981, 0.5
      %v3159 = vmul.f32 %v2985, 0.5
      %v3160 = vmul.f32 %v2987, 0.5
      %v3161 = vmul.f32 %v2991, 0.5
      %v3162 = vmul.f32 %v2993, 0.5
      %v3163 = vmul.f32 %v2997, 0.5
      %v3164 = vmul.f32 %v2999, 0.5
      %v3165 = vmul.f32 %v3003, 0.5
      %v3166 = vmul.f32 %v3005, 0.5
      %v3167 = vmul.f32 %v3009, 0.5
      %v3168 = vmul.f32 %v3011, 0.5
      %v3169 = vmul.f32 %v3015, 0.5
      %v3170 = vmul.f32 %v3017, 0.5
      %v3171 = vmul.f32 %v3021, 0.5
      %v3172 = vmul.f32 %v3023, 0.5
      %v3173 = vmul.f32 %v3027, 0.5
      %v3174 = vmul.f32 %v3029, 0.5
      %v3175 = vmul.f32 %v3033, 0.5
      %v3176 = vmul.f32 %v3035, 0.5
      %v3177 = vmul.f32 %v3039, 0.5
      %v3178 = vmul.f32 %v3041, 0.5
      %v3179 = vmul.f32 %v3045, 0.5
      %v3180 = vmul.f32 %v3047, 0.5
      %v3181 = vmul.f32 %v3051, 0.5
      %v3182 = vmul.f32 %v3053, 0.5
      %v3183 = vmul.f32 %v3057, 0.5
      %v3184 = vmul.f32 %v3059, 0.5
      %v3185 = vmul.f32 %v3063, 0.5
      %v3186 = vmul.f32 %v3065, 0.5
      %v3187 = vmul.f32 %v3069, 0.5
      %v3188 = vmul.f32 %v3071, 0.5
      %v3189 = vmul.f32 %v3075, 0.5
      %v3190 = vmul.f32 %v3077, 0.5
      %v3191 = vmul.f32 %v3081, 0.5
      %v3192 = vmul.f32 %v3083, 0.5
      %v3193 = vmul.f32 %v3087, 0.5
      %v3194 = vmul.f32 %v3089, 0.5
      %v3195 = vmul.f32 %v3093, 0.5
      %v3196 = vmul.f32 %v3095, 0.5
      %v3197 = vmul.f32 %v3099, 0.5
      %v3198 = vmul.f32 %v3101, 0.5
      %v3199 = vmul.f32 %v3105, 0.5
      %v3200 = vmul.f32 %v3107, 0.5
      %v3201 = vmul.f32 %v3111, 0.5
      %v3202 = vmul.f32 %v3113, 0.5
      %v3203 = vmul.f32 %v3117, 0.5
      %v3204 = vmul.f32 %v3119, 0.5
      %v3205 = vmul.f32 %v3123, 0.5
      %v3206 = vmul.f32 %v3125, 0.5
      %v3207 = vmul.f32 %v3129, 0.5
      %v3208 = vmul.f32 %v3131, 0.5
      %v3209 = vmul.f32 %v3135, 0.5
      %v3210 = vmul.f32 %v3137, 0.5
      %v3211 = vmul.f32 %v3141, 0.5
      %v3212 = vmul.f32 %v3143, 0.5
      %v3213 = vmul.f32 %v3147, 0.5
      %v3214 = vmul.f32 %v3149, 0.5
      %v3215 = vmax.f32 %v3151, %v3152
      %3216 = vmax.xlane.f32.xlu0 %v3215
      %v3217 = vpop.xlane.xlu0 %3216
      %v3218 = vmax.f32 %v3153, %v3154
      %3219 = vmax.xlane.f32.xlu0 %v3218
      %v3220 = vpop.xlane.xlu0 %3219
      %v3221 = vmax.f32 %v3155, %v3156
      %3222 = vmax.xlane.f32.xlu0 %v3221
      %v3223 = vpop.xlane.xlu0 %3222
      %v3224 = vmax.f32 %v3157, %v3158
      %3225 = vmax.xlane.f32.xlu0 %v3224
      %v3226 = vpop.xlane.xlu0 %3225
      %v3227 = vmax.f32 %v3159, %v3160
      %3228 = vmax.xlane.f32.xlu0 %v3227
      %v3229 = vpop.xlane.xlu0 %3228
      %v3230 = vmax.f32 %v3161, %v3162
      %3231 = vmax.xlane.f32.xlu0 %v3230
      %v3232 = vpop.xlane.xlu0 %3231
      %v3233 = vmax.f32 %v3163, %v3164
      %3234 = vmax.xlane.f32.xlu0 %v3233
      %v3235 = vpop.xlane.xlu0 %3234
      %v3236 = vmax.f32 %v3165, %v3166
      %3237 = vmax.xlane.f32.xlu0 %v3236
      %v3238 = vpop.xlane.xlu0 %3237
      %v3239 = vmax.f32 %v3167, %v3168
      %3240 = vmax.xlane.f32.xlu0 %v3239
      %v3241 = vpop.xlane.xlu0 %3240
      %v3242 = vmax.f32 %v3169, %v3170
      %3243 = vmax.xlane.f32.xlu0 %v3242
      %v3244 = vpop.xlane.xlu0 %3243
      %v3245 = vmax.f32 %v3171, %v3172
      %3246 = vmax.xlane.f32.xlu0 %v3245
      %v3247 = vpop.xlane.xlu0 %3246
      %v3248 = vmax.f32 %v3173, %v3174
      %3249 = vmax.xlane.f32.xlu0 %v3248
      %v3250 = vpop.xlane.xlu0 %3249
      %v3251 = vmax.f32 %v3175, %v3176
      %3252 = vmax.xlane.f32.xlu0 %v3251
      %v3253 = vpop.xlane.xlu0 %3252
      %v3254 = vmax.f32 %v3177, %v3178
      %3255 = vmax.xlane.f32.xlu0 %v3254
      %v3256 = vpop.xlane.xlu0 %3255
      %v3257 = vmax.f32 %v3179, %v3180
      %3258 = vmax.xlane.f32.xlu0 %v3257
      %v3259 = vpop.xlane.xlu0 %3258
      %v3260 = vmax.f32 %v3181, %v3182
      %3261 = vmax.xlane.f32.xlu0 %v3260
      %v3262 = vpop.xlane.xlu0 %3261
      %v3263 = vmax.f32 %v3183, %v3184
      %3264 = vmax.xlane.f32.xlu0 %v3263
      %v3265 = vpop.xlane.xlu0 %3264
      %v3266 = vmax.f32 %v3185, %v3186
      %3267 = vmax.xlane.f32.xlu0 %v3266
      %v3268 = vpop.xlane.xlu0 %3267
      %v3269 = vmax.f32 %v3187, %v3188
      %3270 = vmax.xlane.f32.xlu0 %v3269
      %v3271 = vpop.xlane.xlu0 %3270
      %v3272 = vmax.f32 %v3189, %v3190
      %3273 = vmax.xlane.f32.xlu0 %v3272
      %v3274 = vpop.xlane.xlu0 %3273
      %v3275 = vmax.f32 %v3191, %v3192
      %3276 = vmax.xlane.f32.xlu0 %v3275
      %v3277 = vpop.xlane.xlu0 %3276
      %v3278 = vmax.f32 %v3193, %v3194
      %3279 = vmax.xlane.f32.xlu0 %v3278
      %v3280 = vpop.xlane.xlu0 %3279
      %v3281 = vmax.f32 %v3195, %v3196
      %3282 = vmax.xlane.f32.xlu0 %v3281
      %v3283 = vpop.xlane.xlu0 %3282
      %v3284 = vmax.f32 %v3197, %v3198
      %3285 = vmax.xlane.f32.xlu0 %v3284
      %v3286 = vpop.xlane.xlu0 %3285
      %v3287 = vmax.f32 %v3199, %v3200
      %3288 = vmax.xlane.f32.xlu0 %v3287
      %v3289 = vpop.xlane.xlu0 %3288
      %v3290 = vmax.f32 %v3201, %v3202
      %3291 = vmax.xlane.f32.xlu0 %v3290
      %v3292 = vpop.xlane.xlu0 %3291
      %v3293 = vmax.f32 %v3203, %v3204
      %3294 = vmax.xlane.f32.xlu0 %v3293
      %v3295 = vpop.xlane.xlu0 %3294
      %v3296 = vmax.f32 %v3205, %v3206
      %3297 = vmax.xlane.f32.xlu0 %v3296
      %v3298 = vpop.xlane.xlu0 %3297
      %v3299 = vmax.f32 %v3207, %v3208
      %3300 = vmax.xlane.f32.xlu0 %v3299
      %v3301 = vpop.xlane.xlu0 %3300
      %v3302 = vmax.f32 %v3209, %v3210
      %3303 = vmax.xlane.f32.xlu0 %v3302
      %v3304 = vpop.xlane.xlu0 %3303
      %v3305 = vmax.f32 %v3211, %v3212
      %3306 = vmax.xlane.f32.xlu0 %v3305
      %v3307 = vpop.xlane.xlu0 %3306
      %v3308 = vmax.f32 %v3213, %v3214
      %3309 = vmax.xlane.f32.xlu0 %v3308
      %v3310 = vpop.xlane.xlu0 %3309
      %v3311 = vsub.f32 %v3151, %v3217
      %v3312 = vsub.f32 %v3152, %v3217
      %v3313 = vsub.f32 %v3153, %v3220
      %v3314 = vsub.f32 %v3154, %v3220
      %v3315 = vsub.f32 %v3155, %v3223
      %v3316 = vsub.f32 %v3156, %v3223
      %v3317 = vsub.f32 %v3157, %v3226
      %v3318 = vsub.f32 %v3158, %v3226
      %v3319 = vsub.f32 %v3159, %v3229
      %v3320 = vsub.f32 %v3160, %v3229
      %v3321 = vsub.f32 %v3161, %v3232
      %v3322 = vsub.f32 %v3162, %v3232
      %v3323 = vsub.f32 %v3163, %v3235
      %v3324 = vsub.f32 %v3164, %v3235
      %v3325 = vsub.f32 %v3165, %v3238
      %v3326 = vsub.f32 %v3166, %v3238
      %v3327 = vsub.f32 %v3167, %v3241
      %v3328 = vsub.f32 %v3168, %v3241
      %v3329 = vsub.f32 %v3169, %v3244
      %v3330 = vsub.f32 %v3170, %v3244
      %v3331 = vsub.f32 %v3171, %v3247
      %v3332 = vsub.f32 %v3172, %v3247
      %v3333 = vsub.f32 %v3173, %v3250
      %v3334 = vsub.f32 %v3174, %v3250
      %v3335 = vsub.f32 %v3175, %v3253
      %v3336 = vsub.f32 %v3176, %v3253
      %v3337 = vsub.f32 %v3177, %v3256
      %v3338 = vsub.f32 %v3178, %v3256
      %v3339 = vsub.f32 %v3179, %v3259
      %v3340 = vsub.f32 %v3180, %v3259
      %v3341 = vsub.f32 %v3181, %v3262
      %v3342 = vsub.f32 %v3182, %v3262
      %v3343 = vsub.f32 %v3183, %v3265
      %v3344 = vsub.f32 %v3184, %v3265
      %v3345 = vsub.f32 %v3185, %v3268
      %v3346 = vsub.f32 %v3186, %v3268
      %v3347 = vsub.f32 %v3187, %v3271
      %v3348 = vsub.f32 %v3188, %v3271
      %v3349 = vsub.f32 %v3189, %v3274
      %v3350 = vsub.f32 %v3190, %v3274
      %v3351 = vsub.f32 %v3191, %v3277
      %v3352 = vsub.f32 %v3192, %v3277
      %v3353 = vsub.f32 %v3193, %v3280
      %v3354 = vsub.f32 %v3194, %v3280
      %v3355 = vsub.f32 %v3195, %v3283
      %v3356 = vsub.f32 %v3196, %v3283
      %v3357 = vsub.f32 %v3197, %v3286
      %v3358 = vsub.f32 %v3198, %v3286
      %v3359 = vsub.f32 %v3199, %v3289
      %v3360 = vsub.f32 %v3200, %v3289
      %v3361 = vsub.f32 %v3201, %v3292
      %v3362 = vsub.f32 %v3202, %v3292
      %v3363 = vsub.f32 %v3203, %v3295
      %v3364 = vsub.f32 %v3204, %v3295
      %v3365 = vsub.f32 %v3205, %v3298
      %v3366 = vsub.f32 %v3206, %v3298
      %v3367 = vsub.f32 %v3207, %v3301
      %v3368 = vsub.f32 %v3208, %v3301
      %v3369 = vsub.f32 %v3209, %v3304
      %v3370 = vsub.f32 %v3210, %v3304
      %v3371 = vsub.f32 %v3211, %v3307
      %v3372 = vsub.f32 %v3212, %v3307
      %v3373 = vsub.f32 %v3213, %v3310
      %v3374 = vsub.f32 %v3214, %v3310
      %v3375 = vmul.f32 %v3311, 1.442695
      %v3376 = vpow.pop %v3375
      %v3377 = vmul.f32 %v3312, 1.442695
      %v3378 = vpow.pop %v3377
      %v3379 = vmul.f32 %v3313, 1.442695
      %v3380 = vpow.pop %v3379
      %v3381 = vmul.f32 %v3314, 1.442695
      %v3382 = vpow.pop %v3381
      %v3383 = vmul.f32 %v3315, 1.442695
      %v3384 = vpow.pop %v3383
      %v3385 = vmul.f32 %v3316, 1.442695
      %v3386 = vpow.pop %v3385
      %v3387 = vmul.f32 %v3317, 1.442695
      %v3388 = vpow.pop %v3387
      %v3389 = vmul.f32 %v3318, 1.442695
      %v3390 = vpow.pop %v3389
      %v3391 = vmul.f32 %v3319, 1.442695
      %v3392 = vpow.pop %v3391
      %v3393 = vmul.f32 %v3320, 1.442695
      %v3394 = vpow.pop %v3393
      %v3395 = vmul.f32 %v3321, 1.442695
      %v3396 = vpow.pop %v3395
      %v3397 = vmul.f32 %v3322, 1.442695
      %v3398 = vpow.pop %v3397
      %v3399 = vmul.f32 %v3323, 1.442695
      %v3400 = vpow.pop %v3399
      %v3401 = vmul.f32 %v3324, 1.442695
      %v3402 = vpow.pop %v3401
      %v3403 = vmul.f32 %v3325, 1.442695
      %v3404 = vpow.pop %v3403
      %v3405 = vmul.f32 %v3326, 1.442695
      %v3406 = vpow.pop %v3405
      %v3407 = vmul.f32 %v3327, 1.442695
      %v3408 = vpow.pop %v3407
      %v3409 = vmul.f32 %v3328, 1.442695
      %v3410 = vpow.pop %v3409
      %v3411 = vmul.f32 %v3329, 1.442695
      %v3412 = vpow.pop %v3411
      %v3413 = vmul.f32 %v3330, 1.442695
      %v3414 = vpow.pop %v3413
      %v3415 = vmul.f32 %v3331, 1.442695
      %v3416 = vpow.pop %v3415
      %v3417 = vmul.f32 %v3332, 1.442695
      %v3418 = vpow.pop %v3417
      %v3419 = vmul.f32 %v3333, 1.442695
      %v3420 = vpow.pop %v3419
      %v3421 = vmul.f32 %v3334, 1.442695
      %v3422 = vpow.pop %v3421
      %v3423 = vmul.f32 %v3335, 1.442695
      %v3424 = vpow.pop %v3423
      %v3425 = vmul.f32 %v3336, 1.442695
      %v3426 = vpow.pop %v3425
      %v3427 = vmul.f32 %v3337, 1.442695
      %v3428 = vpow.pop %v3427
      %v3429 = vmul.f32 %v3338, 1.442695
      %v3430 = vpow.pop %v3429
      %v3431 = vmul.f32 %v3339, 1.442695
      %v3432 = vpow.pop %v3431
      %v3433 = vmul.f32 %v3340, 1.442695
      %v3434 = vpow.pop %v3433
      %v3435 = vmul.f32 %v3341, 1.442695
      %v3436 = vpow.pop %v3435
      %v3437 = vmul.f32 %v3342, 1.442695
      %v3438 = vpow.pop %v3437
      %v3439 = vmul.f32 %v3343, 1.442695
      %v3440 = vpow.pop %v3439
      %v3441 = vmul.f32 %v3344, 1.442695
      %v3442 = vpow.pop %v3441
      %v3443 = vmul.f32 %v3345, 1.442695
      %v3444 = vpow.pop %v3443
      %v3445 = vmul.f32 %v3346, 1.442695
      %v3446 = vpow.pop %v3445
      %v3447 = vmul.f32 %v3347, 1.442695
      %v3448 = vpow.pop %v3447
      %v3449 = vmul.f32 %v3348, 1.442695
      %v3450 = vpow.pop %v3449
      %v3451 = vmul.f32 %v3349, 1.442695
      %v3452 = vpow.pop %v3451
      %v3453 = vmul.f32 %v3350, 1.442695
      %v3454 = vpow.pop %v3453
      %v3455 = vmul.f32 %v3351, 1.442695
      %v3456 = vpow.pop %v3455
      %v3457 = vmul.f32 %v3352, 1.442695
      %v3458 = vpow.pop %v3457
      %v3459 = vmul.f32 %v3353, 1.442695
      %v3460 = vpow.pop %v3459
      %v3461 = vmul.f32 %v3354, 1.442695
      %v3462 = vpow.pop %v3461
      %v3463 = vmul.f32 %v3355, 1.442695
      %v3464 = vpow.pop %v3463
      %v3465 = vmul.f32 %v3356, 1.442695
      %v3466 = vpow.pop %v3465
      %v3467 = vmul.f32 %v3357, 1.442695
      %v3468 = vpow.pop %v3467
      %v3469 = vmul.f32 %v3358, 1.442695
      %v3470 = vpow.pop %v3469
      %v3471 = vmul.f32 %v3359, 1.442695
      %v3472 = vpow.pop %v3471
      %v3473 = vmul.f32 %v3360, 1.442695
      %v3474 = vpow.pop %v3473
      %v3475 = vmul.f32 %v3361, 1.442695
      %v3476 = vpow.pop %v3475
      %v3477 = vmul.f32 %v3362, 1.442695
      %v3478 = vpow.pop %v3477
      %v3479 = vmul.f32 %v3363, 1.442695
      %v3480 = vpow.pop %v3479
      %v3481 = vmul.f32 %v3364, 1.442695
      %v3482 = vpow.pop %v3481
      %v3483 = vmul.f32 %v3365, 1.442695
      %v3484 = vpow.pop %v3483
      %v3485 = vmul.f32 %v3366, 1.442695
      %v3486 = vpow.pop %v3485
      %v3487 = vmul.f32 %v3367, 1.442695
      %v3488 = vpow.pop %v3487
      %v3489 = vmul.f32 %v3368, 1.442695
      %v3490 = vpow.pop %v3489
      %v3491 = vmul.f32 %v3369, 1.442695
      %v3492 = vpow.pop %v3491
      %v3493 = vmul.f32 %v3370, 1.442695
      %v3494 = vpow.pop %v3493
      %v3495 = vmul.f32 %v3371, 1.442695
      %v3496 = vpow.pop %v3495
      %v3497 = vmul.f32 %v3372, 1.442695
      %v3498 = vpow.pop %v3497
      %v3499 = vmul.f32 %v3373, 1.442695
      %v3500 = vpow.pop %v3499
      %v3501 = vmul.f32 %v3374, 1.442695
      %v3502 = vpow.pop %v3501
      %v3503 = vadd.f32 %v3376, %v3378
      %3504 = vadd.xlane.f32.xlu0 %v3503
      %v3505 = vpop.xlane.xlu0 %3504
      %v3506 = vadd.f32 %v3380, %v3382
      %3507 = vadd.xlane.f32.xlu0 %v3506
      %v3508 = vpop.xlane.xlu0 %3507
      %v3509 = vadd.f32 %v3384, %v3386
      %3510 = vadd.xlane.f32.xlu0 %v3509
      %v3511 = vpop.xlane.xlu0 %3510
      %v3512 = vadd.f32 %v3388, %v3390
      %3513 = vadd.xlane.f32.xlu0 %v3512
      %v3514 = vpop.xlane.xlu0 %3513
      %v3515 = vadd.f32 %v3392, %v3394
      %3516 = vadd.xlane.f32.xlu0 %v3515
      %v3517 = vpop.xlane.xlu0 %3516
      %v3518 = vadd.f32 %v3396, %v3398
      %3519 = vadd.xlane.f32.xlu0 %v3518
      %v3520 = vpop.xlane.xlu0 %3519
      %v3521 = vadd.f32 %v3400, %v3402
      %3522 = vadd.xlane.f32.xlu0 %v3521
      %v3523 = vpop.xlane.xlu0 %3522
      %v3524 = vadd.f32 %v3404, %v3406
      %3525 = vadd.xlane.f32.xlu0 %v3524
      %v3526 = vpop.xlane.xlu0 %3525
      %v3527 = vadd.f32 %v3408, %v3410
      %3528 = vadd.xlane.f32.xlu0 %v3527
      %v3529 = vpop.xlane.xlu0 %3528
      %v3530 = vadd.f32 %v3412, %v3414
      %3531 = vadd.xlane.f32.xlu0 %v3530
      %v3532 = vpop.xlane.xlu0 %3531
      %v3533 = vadd.f32 %v3416, %v3418
      %3534 = vadd.xlane.f32.xlu0 %v3533
      %v3535 = vpop.xlane.xlu0 %3534
      %v3536 = vadd.f32 %v3420, %v3422
      %3537 = vadd.xlane.f32.xlu0 %v3536
      %v3538 = vpop.xlane.xlu0 %3537
      %v3539 = vadd.f32 %v3424, %v3426
      %3540 = vadd.xlane.f32.xlu0 %v3539
      %v3541 = vpop.xlane.xlu0 %3540
      %v3542 = vadd.f32 %v3428, %v3430
      %3543 = vadd.xlane.f32.xlu0 %v3542
      %v3544 = vpop.xlane.xlu0 %3543
      %v3545 = vadd.f32 %v3432, %v3434
      %3546 = vadd.xlane.f32.xlu0 %v3545
      %v3547 = vpop.xlane.xlu0 %3546
      %v3548 = vadd.f32 %v3436, %v3438
      %3549 = vadd.xlane.f32.xlu0 %v3548
      %v3550 = vpop.xlane.xlu0 %3549
      %v3551 = vadd.f32 %v3440, %v3442
      %3552 = vadd.xlane.f32.xlu0 %v3551
      %v3553 = vpop.xlane.xlu0 %3552
      %v3554 = vadd.f32 %v3444, %v3446
      %3555 = vadd.xlane.f32.xlu0 %v3554
      %v3556 = vpop.xlane.xlu0 %3555
      %v3557 = vadd.f32 %v3448, %v3450
      %3558 = vadd.xlane.f32.xlu0 %v3557
      %v3559 = vpop.xlane.xlu0 %3558
      %v3560 = vadd.f32 %v3452, %v3454
      %3561 = vadd.xlane.f32.xlu0 %v3560
      %v3562 = vpop.xlane.xlu0 %3561
      %v3563 = vadd.f32 %v3456, %v3458
      %3564 = vadd.xlane.f32.xlu0 %v3563
      %v3565 = vpop.xlane.xlu0 %3564
      %v3566 = vadd.f32 %v3460, %v3462
      %3567 = vadd.xlane.f32.xlu0 %v3566
      %v3568 = vpop.xlane.xlu0 %3567
      %v3569 = vadd.f32 %v3464, %v3466
      %3570 = vadd.xlane.f32.xlu0 %v3569
      %v3571 = vpop.xlane.xlu0 %3570
      %v3572 = vadd.f32 %v3468, %v3470
      %3573 = vadd.xlane.f32.xlu0 %v3572
      %v3574 = vpop.xlane.xlu0 %3573
      %v3575 = vadd.f32 %v3472, %v3474
      %3576 = vadd.xlane.f32.xlu0 %v3575
      %v3577 = vpop.xlane.xlu0 %3576
      %v3578 = vadd.f32 %v3476, %v3478
      %3579 = vadd.xlane.f32.xlu0 %v3578
      %v3580 = vpop.xlane.xlu0 %3579
      %v3581 = vadd.f32 %v3480, %v3482
      %3582 = vadd.xlane.f32.xlu0 %v3581
      %v3583 = vpop.xlane.xlu0 %3582
      %v3584 = vadd.f32 %v3484, %v3486
      %3585 = vadd.xlane.f32.xlu0 %v3584
      %v3586 = vpop.xlane.xlu0 %3585
      %v3587 = vadd.f32 %v3488, %v3490
      %3588 = vadd.xlane.f32.xlu0 %v3587
      %v3589 = vpop.xlane.xlu0 %3588
      %v3590 = vadd.f32 %v3492, %v3494
      %3591 = vadd.xlane.f32.xlu0 %v3590
      %v3592 = vpop.xlane.xlu0 %3591
      %v3593 = vadd.f32 %v3496, %v3498
      %3594 = vadd.xlane.f32.xlu0 %v3593
      %v3595 = vpop.xlane.xlu0 %3594
      %v3596 = vadd.f32 %v3500, %v3502
      %3597 = vadd.xlane.f32.xlu0 %v3596
      %v3598 = vpop.xlane.xlu0 %3597
      %v3599 = vrcp.pop %v3505
      %v3600 = vmul.f32 %v3376, %v3599
      %v3601 = vmul.f32 %v3378, %v3599
      %v3602 = vrcp.pop %v3508
      %v3603 = vmul.f32 %v3380, %v3602
      %v3604 = vmul.f32 %v3382, %v3602
      %v3605 = vrcp.pop %v3511
      %v3606 = vmul.f32 %v3384, %v3605
      %v3607 = vmul.f32 %v3386, %v3605
      %v3608 = vrcp.pop %v3514
      %v3609 = vmul.f32 %v3388, %v3608
      %v3610 = vmul.f32 %v3390, %v3608
      %v3611 = vrcp.pop %v3517
      %v3612 = vmul.f32 %v3392, %v3611
      %v3613 = vmul.f32 %v3394, %v3611
      %v3614 = vrcp.pop %v3520
      %v3615 = vmul.f32 %v3396, %v3614
      %v3616 = vmul.f32 %v3398, %v3614
      %v3617 = vrcp.pop %v3523
      %v3618 = vmul.f32 %v3400, %v3617
      %v3619 = vmul.f32 %v3402, %v3617
      %v3620 = vrcp.pop %v3526
      %v3621 = vmul.f32 %v3404, %v3620
      %v3622 = vmul.f32 %v3406, %v3620
      %v3623 = vrcp.pop %v3529
      %v3624 = vmul.f32 %v3408, %v3623
      %v3625 = vmul.f32 %v3410, %v3623
      %v3626 = vrcp.pop %v3532
      %v3627 = vmul.f32 %v3412, %v3626
      %v3628 = vmul.f32 %v3414, %v3626
      %v3629 = vrcp.pop %v3535
      %v3630 = vmul.f32 %v3416, %v3629
      %v3631 = vmul.f32 %v3418, %v3629
      %v3632 = vrcp.pop %v3538
      %v3633 = vmul.f32 %v3420, %v3632
      %v3634 = vmul.f32 %v3422, %v3632
      %v3635 = vrcp.pop %v3541
      %v3636 = vmul.f32 %v3424, %v3635
      %v3637 = vmul.f32 %v3426, %v3635
      %v3638 = vrcp.pop %v3544
      %v3639 = vmul.f32 %v3428, %v3638
      %v3640 = vmul.f32 %v3430, %v3638
      %v3641 = vrcp.pop %v3547
      %v3642 = vmul.f32 %v3432, %v3641
      %v3643 = vmul.f32 %v3434, %v3641
      %v3644 = vrcp.pop %v3550
      %v3645 = vmul.f32 %v3436, %v3644
      %v3646 = vmul.f32 %v3438, %v3644
      %v3647 = vrcp.pop %v3553
      %v3648 = vmul.f32 %v3440, %v3647
      %v3649 = vmul.f32 %v3442, %v3647
      %v3650 = vrcp.pop %v3556
      %v3651 = vmul.f32 %v3444, %v3650
      %v3652 = vmul.f32 %v3446, %v3650
      %v3653 = vrcp.pop %v3559
      %v3654 = vmul.f32 %v3448, %v3653
      %v3655 = vmul.f32 %v3450, %v3653
      %v3656 = vrcp.pop %v3562
      %v3657 = vmul.f32 %v3452, %v3656
      %v3658 = vmul.f32 %v3454, %v3656
      %v3659 = vrcp.pop %v3565
      %v3660 = vmul.f32 %v3456, %v3659
      %v3661 = vmul.f32 %v3458, %v3659
      %v3662 = vrcp.pop %v3568
      %v3663 = vmul.f32 %v3460, %v3662
      %v3664 = vmul.f32 %v3462, %v3662
      %v3665 = vrcp.pop %v3571
      %v3666 = vmul.f32 %v3464, %v3665
      %v3667 = vmul.f32 %v3466, %v3665
      %v3668 = vrcp.pop %v3574
      %v3669 = vmul.f32 %v3468, %v3668
      %v3670 = vmul.f32 %v3470, %v3668
      %v3671 = vrcp.pop %v3577
      %v3672 = vmul.f32 %v3472, %v3671
      %v3673 = vmul.f32 %v3474, %v3671
      %v3674 = vrcp.pop %v3580
      %v3675 = vmul.f32 %v3476, %v3674
      %v3676 = vmul.f32 %v3478, %v3674
      %v3677 = vrcp.pop %v3583
      %v3678 = vmul.f32 %v3480, %v3677
      %v3679 = vmul.f32 %v3482, %v3677
      %v3680 = vrcp.pop %v3586
      %v3681 = vmul.f32 %v3484, %v3680
      %v3682 = vmul.f32 %v3486, %v3680
      %v3683 = vrcp.pop %v3589
      %v3684 = vmul.f32 %v3488, %v3683
      %v3685 = vmul.f32 %v3490, %v3683
      %v3686 = vrcp.pop %v3592
      %v3687 = vmul.f32 %v3492, %v3686
      %v3688 = vmul.f32 %v3494, %v3686
      %v3689 = vrcp.pop %v3595
      %v3690 = vmul.f32 %v3496, %v3689
      %v3691 = vmul.f32 %v3498, %v3689
      %v3692 = vrcp.pop %v3598
      %v3693 = vmul.f32 %v3500, %v3692
      %v3694 = vmul.f32 %v3502, %v3692
      %3695 = vmatprep.subr.mxu0 %v3601
      %3696 = vmatpush1.xpose.msra.mxu0 %v3600
      %3697 = vmatprep.subr.mxu0 %v3604
      %3698 = vmatpush1.xpose.msra.mxu0 %v3603
      %3699 = vmatprep.subr.mxu0 %v3607
      %3700 = vmatpush1.xpose.msra.mxu0 %v3606
      %3701 = vmatprep.subr.mxu0 %v3610
      %3702 = vmatpush1.xpose.msra.mxu0 %v3609
      %3703 = vmatprep.subr.mxu0 %v3613
      %3704 = vmatpush1.xpose.msra.mxu0 %v3612
      %3705 = vmatprep.subr.mxu0 %v3616
      %3706 = vmatpush1.xpose.msra.mxu0 %v3615
      %3707 = vmatprep.subr.mxu0 %v3619
      %3708 = vmatpush1.xpose.msra.mxu0 %v3618
      %3709 = vmatprep.subr.mxu0 %v3622
      %3710 = vmatpush1.xpose.msra.mxu0 %v3621
      %3711 = vmatprep.subr.mxu0 %v3625
      %3712 = vmatpush1.xpose.msra.mxu0 %v3624
      %3713 = vmatprep.subr.mxu0 %v3628
      %3714 = vmatpush1.xpose.msra.mxu0 %v3627
      %3715 = vmatprep.subr.mxu0 %v3631
      %3716 = vmatpush1.xpose.msra.mxu0 %v3630
      %3717 = vmatprep.subr.mxu0 %v3634
      %3718 = vmatpush1.xpose.msra.mxu0 %v3633
      %3719 = vmatprep.subr.mxu0 %v3637
      %3720 = vmatpush1.xpose.msra.mxu0 %v3636
      %3721 = vmatprep.subr.mxu0 %v3640
      %3722 = vmatpush1.xpose.msra.mxu0 %v3639
      %3723 = vmatprep.subr.mxu0 %v3643
      %3724 = vmatpush1.xpose.msra.mxu0 %v3642
      %3725 = vmatprep.subr.mxu0 %v3646
      %3726 = vmatpush1.xpose.msra.mxu0 %v3645
      %3727 = vmatprep.subr.mxu0 %v3649
      %3728 = vmatpush1.xpose.msra.mxu0 %v3648
      %3729 = vmatprep.subr.mxu0 %v3652
      %3730 = vmatpush1.xpose.msra.mxu0 %v3651
      %3731 = vmatprep.subr.mxu0 %v3655
      %3732 = vmatpush1.xpose.msra.mxu0 %v3654
      %3733 = vmatprep.subr.mxu0 %v3658
      %3734 = vmatpush1.xpose.msra.mxu0 %v3657
      %3735 = vmatprep.subr.mxu0 %v3661
      %3736 = vmatpush1.xpose.msra.mxu0 %v3660
      %3737 = vmatprep.subr.mxu0 %v3664
      %3738 = vmatpush1.xpose.msra.mxu0 %v3663
      %3739 = vmatprep.subr.mxu0 %v3667
      %3740 = vmatpush1.xpose.msra.mxu0 %v3666
      %3741 = vmatprep.subr.mxu0 %v3670
      %3742 = vmatpush1.xpose.msra.mxu0 %v3669
      %3743 = vmatprep.subr.mxu0 %v3673
      %3744 = vmatpush1.xpose.msra.mxu0 %v3672
      %3745 = vmatprep.subr.mxu0 %v3676
      %3746 = vmatpush1.xpose.msra.mxu0 %v3675
      %3747 = vmatprep.subr.mxu0 %v3679
      %3748 = vmatpush1.xpose.msra.mxu0 %v3678
      %3749 = vmatprep.subr.mxu0 %v3682
      %3750 = vmatpush1.xpose.msra.mxu0 %v3681
      %3751 = vmatprep.subr.mxu0 %v3685
      %3752 = vmatpush1.xpose.msra.mxu0 %v3684
      %3753 = vmatprep.subr.mxu0 %v3688
      %3754 = vmatpush1.xpose.msra.mxu0 %v3687
      %3755 = vmatprep.subr.mxu0 %v3691
      %3756 = vmatpush1.xpose.msra.mxu0 %v3690
      %3757 = vmatprep.subr.mxu0 %v3694
      %3758 = vmatpush1.xpose.msra.mxu0 %v3693
      %3759 = vmatprep.mubr.f32.mxu0 %v612
      %3760 = vmatmul.mubr.f32.gmra.mrb[0].mxu0 %v610
      %v3761 = vpop.f32.mrb[0].mxu0
      %v3762 = vadd.f32 0.0, %v3761
      %v3763 = vpop.f32.mrb[0].mxu0
      %v3764 = vadd.f32 0.0, %v3763
      %3765 = vdwg.mxu0
      %v3768 = vrot.slane %v556, 4
      %v3769 = vrot.slane %v558, 4
      %3772 = vxpose.xlu0.b32.start [1/16] %v3768, 128
      %3773 = vxpose.xlu0.b32.cont [2/16] 0.0, 128
      %3774 = vxpose.xlu0.b32.cont [3/16] 0.0, 128
      %3775 = vxpose.xlu0.b32.cont [4/16] 0.0, 128
      %3776 = vxpose.xlu0.b32.cont [5/16] 0.0, 128
      %3777 = vxpose.xlu0.b32.cont [6/16] 0.0, 128
      %3778 = vxpose.xlu0.b32.cont [7/16] 0.0, 128
      %3779 = vxpose.xlu0.b32.cont [8/16] 0.0, 128
      %3780 = vxpose.xlu0.b32.cont [9/16] 0.0, 128
      %3781 = vxpose.xlu0.b32.cont [10/16] 0.0, 128
      %3782 = vxpose.xlu0.b32.cont [11/16] 0.0, 128
      %3783 = vxpose.xlu0.b32.cont [12/16] 0.0, 128
      %3784 = vxpose.xlu0.b32.cont [13/16] 0.0, 128
      %3785 = vxpose.xlu0.b32.cont [14/16] 0.0, 128
      %3786 = vxpose.xlu0.b32.cont [15/16] 0.0, 128
      %3787 = vxpose.xlu0.b32.end [16/16] 0.0, 128
      %v3788 = vpop.trf.xlu0
      %v3789 = vpop.trf.xlu0
      %v3790 = vpop.trf.xlu0
      %v3791 = vpop.trf.xlu0
      %v3792 = vpop.trf.xlu0
      %v3793 = vpop.trf.xlu0
      %v3794 = vpop.trf.xlu0
      %v3795 = vpop.trf.xlu0
      %v3796 = vpop.trf.xlu0
      %v3797 = vpop.trf.xlu0
      %v3798 = vpop.trf.xlu0
      %v3799 = vpop.trf.xlu0
      %v3800 = vpop.trf.xlu0
      %v3801 = vpop.trf.xlu0
      %v3802 = vpop.trf.xlu0
      %v3803 = vpop.trf.xlu0
      %3804 = vxpose.xlu0.b32.start [1/16] %v3769, 128
      %3805 = vxpose.xlu0.b32.cont [2/16] 0.0, 128
      %3806 = vxpose.xlu0.b32.cont [3/16] 0.0, 128
      %3807 = vxpose.xlu0.b32.cont [4/16] 0.0, 128
      %3808 = vxpose.xlu0.b32.cont [5/16] 0.0, 128
      %3809 = vxpose.xlu0.b32.cont [6/16] 0.0, 128
      %3810 = vxpose.xlu0.b32.cont [7/16] 0.0, 128
      %3811 = vxpose.xlu0.b32.cont [8/16] 0.0, 128
      %3812 = vxpose.xlu0.b32.cont [9/16] 0.0, 128
      %3813 = vxpose.xlu0.b32.cont [10/16] 0.0, 128
      %3814 = vxpose.xlu0.b32.cont [11/16] 0.0, 128
      %3815 = vxpose.xlu0.b32.cont [12/16] 0.0, 128
      %3816 = vxpose.xlu0.b32.cont [13/16] 0.0, 128
      %3817 = vxpose.xlu0.b32.cont [14/16] 0.0, 128
      %3818 = vxpose.xlu0.b32.cont [15/16] 0.0, 128
      %3819 = vxpose.xlu0.b32.end [16/16] 0.0, 128
      %v3820 = vpop.trf.xlu0
      %v3821 = vpop.trf.xlu0
      %v3822 = vpop.trf.xlu0
      %v3823 = vpop.trf.xlu0
      %v3824 = vpop.trf.xlu0
      %v3825 = vpop.trf.xlu0
      %v3826 = vpop.trf.xlu0
      %v3827 = vpop.trf.xlu0
      %v3828 = vpop.trf.xlu0
      %v3829 = vpop.trf.xlu0
      %v3830 = vpop.trf.xlu0
      %v3831 = vpop.trf.xlu0
      %v3832 = vpop.trf.xlu0
      %v3833 = vpop.trf.xlu0
      %v3834 = vpop.trf.xlu0
      %v3835 = vpop.trf.xlu0
      %v3836 = vrot.slane %v580, 4
      %v3837 = vrot.slane %v582, 4
      %v3839 = vsel %vm708, %v3788, 0
      %v3842 = vsel %vm708, %v3789, 0
      %v3845 = vsel %vm708, %v3790, 0
      %v3848 = vsel %vm708, %v3791, 0
      %v3851 = vsel %vm708, %v3792, 0
      %v3854 = vsel %vm708, %v3793, 0
      %v3857 = vsel %vm708, %v3794, 0
      %v3860 = vsel %vm708, %v3795, 0
      %v3863 = vsel %vm708, %v3796, 0
      %v3866 = vsel %vm708, %v3797, 0
      %v3869 = vsel %vm708, %v3798, 0
      %v3872 = vsel %vm708, %v3799, 0
      %v3875 = vsel %vm708, %v3800, 0
      %v3878 = vsel %vm708, %v3801, 0
      %v3881 = vsel %vm708, %v3802, 0
      %v3884 = vsel %vm708, %v3803, 0
      %v3887 = vsel %vm708, %v3820, 0
      %v3890 = vsel %vm708, %v3821, 0
      %v3893 = vsel %vm708, %v3822, 0
      %v3896 = vsel %vm708, %v3823, 0
      %v3899 = vsel %vm708, %v3824, 0
      %v3902 = vsel %vm708, %v3825, 0
      %v3905 = vsel %vm708, %v3826, 0
      %v3908 = vsel %vm708, %v3827, 0
      %v3911 = vsel %vm708, %v3828, 0
      %v3914 = vsel %vm708, %v3829, 0
      %v3917 = vsel %vm708, %v3830, 0
      %v3920 = vsel %vm708, %v3831, 0
      %v3923 = vsel %vm708, %v3832, 0
      %v3926 = vsel %vm708, %v3833, 0
      %v3929 = vsel %vm708, %v3834, 0
      %v3932 = vsel %vm708, %v3835, 0
      %v3934 = vsel %vm805, %v3836, 0
      %v3936 = vsel %vm805, %v3837, 0
      %3938 = vmatprep.subr.mxu0 %v3936
      %3939 = vmatpush1.msra.mxu0 %v3934
      %3940 = vmatprep.subr.mxu0 0.0
      %3941 = vmatpush1.msra.mxu0 0.0
      %3942 = vmatprep.subr.mxu0 0.0
      %3943 = vmatpush1.msra.mxu0 0.0
      %3944 = vmatprep.subr.mxu0 0.0
      %3945 = vmatpush1.msra.mxu0 0.0
      %3946 = vmatprep.subr.mxu0 0.0
      %3947 = vmatpush1.msra.mxu0 0.0
      %3948 = vmatprep.subr.mxu0 0.0
      %3949 = vmatpush1.msra.mxu0 0.0
      %3950 = vmatprep.subr.mxu0 0.0
      %3951 = vmatpush1.msra.mxu0 0.0
      %3952 = vmatprep.subr.mxu0 0.0
      %3953 = vmatpush1.msra.mxu0 0.0
      %3954 = vmatprep.subr.mxu0 0.0
      %3955 = vmatpush1.msra.mxu0 0.0
      %3956 = vmatprep.subr.mxu0 0.0
      %3957 = vmatpush1.msra.mxu0 0.0
      %3958 = vmatprep.subr.mxu0 0.0
      %3959 = vmatpush1.msra.mxu0 0.0
      %3960 = vmatprep.subr.mxu0 0.0
      %3961 = vmatpush1.msra.mxu0 0.0
      %3962 = vmatprep.subr.mxu0 0.0
      %3963 = vmatpush1.msra.mxu0 0.0
      %3964 = vmatprep.subr.mxu0 0.0
      %3965 = vmatpush1.msra.mxu0 0.0
      %3966 = vmatprep.subr.mxu0 0.0
      %3967 = vmatpush1.msra.mxu0 0.0
      %3968 = vmatprep.subr.mxu0 0.0
      %3969 = vmatpush1.msra.mxu0 0.0
      %3970 = vmatprep.subr.mxu0 0.0
      %3971 = vmatpush1.msra.mxu0 0.0
      %3972 = vmatprep.subr.mxu0 0.0
      %3973 = vmatpush1.msra.mxu0 0.0
      %3974 = vmatprep.subr.mxu0 0.0
      %3975 = vmatpush1.msra.mxu0 0.0
      %3976 = vmatprep.subr.mxu0 0.0
      %3977 = vmatpush1.msra.mxu0 0.0
      %3978 = vmatprep.subr.mxu0 0.0
      %3979 = vmatpush1.msra.mxu0 0.0
      %3980 = vmatprep.subr.mxu0 0.0
      %3981 = vmatpush1.msra.mxu0 0.0
      %3982 = vmatprep.subr.mxu0 0.0
      %3983 = vmatpush1.msra.mxu0 0.0
      %3984 = vmatprep.subr.mxu0 0.0
      %3985 = vmatpush1.msra.mxu0 0.0
      %3986 = vmatprep.subr.mxu0 0.0
      %3987 = vmatpush1.msra.mxu0 0.0
      %3988 = vmatprep.subr.mxu0 0.0
      %3989 = vmatpush1.msra.mxu0 0.0
      %3990 = vmatprep.subr.mxu0 0.0
      %3991 = vmatpush1.msra.mxu0 0.0
      %3992 = vmatprep.subr.mxu0 0.0
      %3993 = vmatpush1.msra.mxu0 0.0
      %3994 = vmatprep.subr.mxu0 0.0
      %3995 = vmatpush1.msra.mxu0 0.0
      %3996 = vmatprep.subr.mxu0 0.0
      %3997 = vmatpush1.msra.mxu0 0.0
      %3998 = vmatprep.subr.mxu0 0.0
      %3999 = vmatpush1.msra.mxu0 0.0
      %4000 = vmatprep.subr.mxu0 0.0
      %4001 = vmatpush1.msra.mxu0 0.0
      %4002 = vmatprep.mubr.f32.mxu0 0.0
      %4003 = vmatmul.mubr.f32.gmra.mrb[0].mxu0 %v3839
      %v4004 = vpop.f32.mrb[0].mxu0
      %v4005 = vadd.f32 0.0, %v4004
      %v4006 = vpop.f32.mrb[0].mxu0
      %v4007 = vadd.f32 0.0, %v4006
      %4008 = vmatprep.mubr.f32.mxu0 0.0
      %4009 = vmatmul.mubr.f32.gmra.mrb[0].mxu0 %v3842
      %v4010 = vpop.f32.mrb[0].mxu0
      %v4011 = vadd.f32 0.0, %v4010
      %v4012 = vpop.f32.mrb[0].mxu0
      %v4013 = vadd.f32 0.0, %v4012
      %4014 = vmatprep.mubr.f32.mxu0 0.0
      %4015 = vmatmul.mubr.f32.gmra.mrb[0].mxu0 %v3845
      %v4016 = vpop.f32.mrb[0].mxu0
      %v4017 = vadd.f32 0.0, %v4016
      %v4018 = vpop.f32.mrb[0].mxu0
      %v4019 = vadd.f32 0.0, %v4018
      %4020 = vmatprep.mubr.f32.mxu0 0.0
      %4021 = vmatmul.mubr.f32.gmra.mrb[0].mxu0 %v3848
      %v4022 = vpop.f32.mrb[0].mxu0
      %v4023 = vadd.f32 0.0, %v4022
      %v4024 = vpop.f32.mrb[0].mxu0
      %v4025 = vadd.f32 0.0, %v4024
      %4026 = vmatprep.mubr.f32.mxu0 0.0
      %4027 = vmatmul.mubr.f32.gmra.mrb[0].mxu0 %v3851
      %v4028 = vpop.f32.mrb[0].mxu0
      %v4029 = vadd.f32 0.0, %v4028
      %v4030 = vpop.f32.mrb[0].mxu0
      %v4031 = vadd.f32 0.0, %v4030
      %4032 = vmatprep.mubr.f32.mxu0 0.0
      %4033 = vmatmul.mubr.f32.gmra.mrb[0].mxu0 %v3854
      %v4034 = vpop.f32.mrb[0].mxu0
      %v4035 = vadd.f32 0.0, %v4034
      %v4036 = vpop.f32.mrb[0].mxu0
      %v4037 = vadd.f32 0.0, %v4036
      %4038 = vmatprep.mubr.f32.mxu0 0.0
      %4039 = vmatmul.mubr.f32.gmra.mrb[0].mxu0 %v3857
      %v4040 = vpop.f32.mrb[0].mxu0
      %v4041 = vadd.f32 0.0, %v4040
      %v4042 = vpop.f32.mrb[0].mxu0
      %v4043 = vadd.f32 0.0, %v4042
      %4044 = vmatprep.mubr.f32.mxu0 0.0
      %4045 = vmatmul.mubr.f32.gmra.mrb[0].mxu0 %v3860
      %v4046 = vpop.f32.mrb[0].mxu0
      %v4047 = vadd.f32 0.0, %v4046
      %v4048 = vpop.f32.mrb[0].mxu0
      %v4049 = vadd.f32 0.0, %v4048
      %4050 = vmatprep.mubr.f32.mxu0 0.0
      %4051 = vmatmul.mubr.f32.gmra.mrb[0].mxu0 %v3863
      %v4052 = vpop.f32.mrb[0].mxu0
      %v4053 = vadd.f32 0.0, %v4052
      %v4054 = vpop.f32.mrb[0].mxu0
      %v4055 = vadd.f32 0.0, %v4054
      %4056 = vmatprep.mubr.f32.mxu0 0.0
      %4057 = vmatmul.mubr.f32.gmra.mrb[0].mxu0 %v3866
      %v4058 = vpop.f32.mrb[0].mxu0
      %v4059 = vadd.f32 0.0, %v4058
      %v4060 = vpop.f32.mrb[0].mxu0
      %v4061 = vadd.f32 0.0, %v4060
      %4062 = vmatprep.mubr.f32.mxu0 0.0
      %4063 = vmatmul.mubr.f32.gmra.mrb[0].mxu0 %v3869
      %v4064 = vpop.f32.mrb[0].mxu0
      %v4065 = vadd.f32 0.0, %v4064
      %v4066 = vpop.f32.mrb[0].mxu0
      %v4067 = vadd.f32 0.0, %v4066
      %4068 = vmatprep.mubr.f32.mxu0 0.0
      %4069 = vmatmul.mubr.f32.gmra.mrb[0].mxu0 %v3872
      %v4070 = vpop.f32.mrb[0].mxu0
      %v4071 = vadd.f32 0.0, %v4070
      %v4072 = vpop.f32.mrb[0].mxu0
      %v4073 = vadd.f32 0.0, %v4072
      %4074 = vmatprep.mubr.f32.mxu0 0.0
      %4075 = vmatmul.mubr.f32.gmra.mrb[0].mxu0 %v3875
      %v4076 = vpop.f32.mrb[0].mxu0
      %v4077 = vadd.f32 0.0, %v4076
      %v4078 = vpop.f32.mrb[0].mxu0
      %v4079 = vadd.f32 0.0, %v4078
      %4080 = vmatprep.mubr.f32.mxu0 0.0
      %4081 = vmatmul.mubr.f32.gmra.mrb[0].mxu0 %v3878
      %v4082 = vpop.f32.mrb[0].mxu0
      %v4083 = vadd.f32 0.0, %v4082
      %v4084 = vpop.f32.mrb[0].mxu0
      %v4085 = vadd.f32 0.0, %v4084
      %4086 = vmatprep.mubr.f32.mxu0 0.0
      %4087 = vmatmul.mubr.f32.gmra.mrb[0].mxu0 %v3881
      %v4088 = vpop.f32.mrb[0].mxu0
      %v4089 = vadd.f32 0.0, %v4088
      %v4090 = vpop.f32.mrb[0].mxu0
      %v4091 = vadd.f32 0.0, %v4090
      %4092 = vmatprep.mubr.f32.mxu0 0.0
      %4093 = vmatmul.mubr.f32.gmra.mrb[0].mxu0 %v3884
      %v4094 = vpop.f32.mrb[0].mxu0
      %v4095 = vadd.f32 0.0, %v4094
      %v4096 = vpop.f32.mrb[0].mxu0
      %v4097 = vadd.f32 0.0, %v4096
      %4098 = vmatprep.mubr.f32.mxu0 0.0
      %4099 = vmatmul.mubr.f32.gmra.mrb[0].mxu0 %v3887
      %v4100 = vpop.f32.mrb[0].mxu0
      %v4101 = vadd.f32 0.0, %v4100
      %v4102 = vpop.f32.mrb[0].mxu0
      %v4103 = vadd.f32 0.0, %v4102
      %4104 = vmatprep.mubr.f32.mxu0 0.0
      %4105 = vmatmul.mubr.f32.gmra.mrb[0].mxu0 %v3890
      %v4106 = vpop.f32.mrb[0].mxu0
      %v4107 = vadd.f32 0.0, %v4106
      %v4108 = vpop.f32.mrb[0].mxu0
      %v4109 = vadd.f32 0.0, %v4108
      %4110 = vmatprep.mubr.f32.mxu0 0.0
      %4111 = vmatmul.mubr.f32.gmra.mrb[0].mxu0 %v3893
      %v4112 = vpop.f32.mrb[0].mxu0
      %v4113 = vadd.f32 0.0, %v4112
      %v4114 = vpop.f32.mrb[0].mxu0
      %v4115 = vadd.f32 0.0, %v4114
      %4116 = vmatprep.mubr.f32.mxu0 0.0
      %4117 = vmatmul.mubr.f32.gmra.mrb[0].mxu0 %v3896
      %v4118 = vpop.f32.mrb[0].mxu0
      %v4119 = vadd.f32 0.0, %v4118
      %v4120 = vpop.f32.mrb[0].mxu0
      %v4121 = vadd.f32 0.0, %v4120
      %4122 = vmatprep.mubr.f32.mxu0 0.0
      %4123 = vmatmul.mubr.f32.gmra.mrb[0].mxu0 %v3899
      %v4124 = vpop.f32.mrb[0].mxu0
      %v4125 = vadd.f32 0.0, %v4124
      %v4126 = vpop.f32.mrb[0].mxu0
      %v4127 = vadd.f32 0.0, %v4126
      %4128 = vmatprep.mubr.f32.mxu0 0.0
      %4129 = vmatmul.mubr.f32.gmra.mrb[0].mxu0 %v3902
      %v4130 = vpop.f32.mrb[0].mxu0
      %v4131 = vadd.f32 0.0, %v4130
      %v4132 = vpop.f32.mrb[0].mxu0
      %v4133 = vadd.f32 0.0, %v4132
      %4134 = vmatprep.mubr.f32.mxu0 0.0
      %4135 = vmatmul.mubr.f32.gmra.mrb[0].mxu0 %v3905
      %v4136 = vpop.f32.mrb[0].mxu0
      %v4137 = vadd.f32 0.0, %v4136
      %v4138 = vpop.f32.mrb[0].mxu0
      %v4139 = vadd.f32 0.0, %v4138
      %4140 = vmatprep.mubr.f32.mxu0 0.0
      %4141 = vmatmul.mubr.f32.gmra.mrb[0].mxu0 %v3908
      %v4142 = vpop.f32.mrb[0].mxu0
      %v4143 = vadd.f32 0.0, %v4142
      %v4144 = vpop.f32.mrb[0].mxu0
      %v4145 = vadd.f32 0.0, %v4144
      %4146 = vmatprep.mubr.f32.mxu0 0.0
      %4147 = vmatmul.mubr.f32.gmra.mrb[0].mxu0 %v3911
      %v4148 = vpop.f32.mrb[0].mxu0
      %v4149 = vadd.f32 0.0, %v4148
      %v4150 = vpop.f32.mrb[0].mxu0
      %v4151 = vadd.f32 0.0, %v4150
      %4152 = vmatprep.mubr.f32.mxu0 0.0
      %4153 = vmatmul.mubr.f32.gmra.mrb[0].mxu0 %v3914
      %v4154 = vpop.f32.mrb[0].mxu0
      %v4155 = vadd.f32 0.0, %v4154
      %v4156 = vpop.f32.mrb[0].mxu0
      %v4157 = vadd.f32 0.0, %v4156
      %4158 = vmatprep.mubr.f32.mxu0 0.0
      %4159 = vmatmul.mubr.f32.gmra.mrb[0].mxu0 %v3917
      %v4160 = vpop.f32.mrb[0].mxu0
      %v4161 = vadd.f32 0.0, %v4160
      %v4162 = vpop.f32.mrb[0].mxu0
      %v4163 = vadd.f32 0.0, %v4162
      %4164 = vmatprep.mubr.f32.mxu0 0.0
      %4165 = vmatmul.mubr.f32.gmra.mrb[0].mxu0 %v3920
      %v4166 = vpop.f32.mrb[0].mxu0
      %v4167 = vadd.f32 0.0, %v4166
      %v4168 = vpop.f32.mrb[0].mxu0
      %v4169 = vadd.f32 0.0, %v4168
      %4170 = vmatprep.mubr.f32.mxu0 0.0
      %4171 = vmatmul.mubr.f32.gmra.mrb[0].mxu0 %v3923
      %v4172 = vpop.f32.mrb[0].mxu0
      %v4173 = vadd.f32 0.0, %v4172
      %v4174 = vpop.f32.mrb[0].mxu0
      %v4175 = vadd.f32 0.0, %v4174
      %4176 = vmatprep.mubr.f32.mxu0 0.0
      %4177 = vmatmul.mubr.f32.gmra.mrb[0].mxu0 %v3926
      %v4178 = vpop.f32.mrb[0].mxu0
      %v4179 = vadd.f32 0.0, %v4178
      %v4180 = vpop.f32.mrb[0].mxu0
      %v4181 = vadd.f32 0.0, %v4180
      %4182 = vmatprep.mubr.f32.mxu0 0.0
      %4183 = vmatmul.mubr.f32.gmra.mrb[0].mxu0 %v3929
      %v4184 = vpop.f32.mrb[0].mxu0
      %v4185 = vadd.f32 0.0, %v4184
      %v4186 = vpop.f32.mrb[0].mxu0
      %v4187 = vadd.f32 0.0, %v4186
      %4188 = vmatprep.mubr.f32.mxu0 0.0
      %4189 = vmatmul.mubr.f32.gmra.mrb[0].mxu0 %v3932
      %v4190 = vpop.f32.mrb[0].mxu0
      %v4191 = vadd.f32 0.0, %v4190
      %v4192 = vpop.f32.mrb[0].mxu0
      %v4193 = vadd.f32 0.0, %v4192
      %4194 = vdwg.mxu0
      %v4195 = vmul.f32 %v4005, 0.5
      %v4196 = vmul.f32 %v4007, 0.5
      %v4197 = vmul.f32 %v4011, 0.5
      %v4198 = vmul.f32 %v4013, 0.5
      %v4199 = vmul.f32 %v4017, 0.5
      %v4200 = vmul.f32 %v4019, 0.5
      %v4201 = vmul.f32 %v4023, 0.5
      %v4202 = vmul.f32 %v4025, 0.5
      %v4203 = vmul.f32 %v4029, 0.5
      %v4204 = vmul.f32 %v4031, 0.5
      %v4205 = vmul.f32 %v4035, 0.5
      %v4206 = vmul.f32 %v4037, 0.5
      %v4207 = vmul.f32 %v4041, 0.5
      %v4208 = vmul.f32 %v4043, 0.5
      %v4209 = vmul.f32 %v4047, 0.5
      %v4210 = vmul.f32 %v4049, 0.5
      %v4211 = vmul.f32 %v4053, 0.5
      %v4212 = vmul.f32 %v4055, 0.5
      %v4213 = vmul.f32 %v4059, 0.5
      %v4214 = vmul.f32 %v4061, 0.5
      %v4215 = vmul.f32 %v4065, 0.5
      %v4216 = vmul.f32 %v4067, 0.5
      %v4217 = vmul.f32 %v4071, 0.5
      %v4218 = vmul.f32 %v4073, 0.5
      %v4219 = vmul.f32 %v4077, 0.5
      %v4220 = vmul.f32 %v4079, 0.5
      %v4221 = vmul.f32 %v4083, 0.5
      %v4222 = vmul.f32 %v4085, 0.5
      %v4223 = vmul.f32 %v4089, 0.5
      %v4224 = vmul.f32 %v4091, 0.5
      %v4225 = vmul.f32 %v4095, 0.5
      %v4226 = vmul.f32 %v4097, 0.5
      %v4227 = vmul.f32 %v4101, 0.5
      %v4228 = vmul.f32 %v4103, 0.5
      %v4229 = vmul.f32 %v4107, 0.5
      %v4230 = vmul.f32 %v4109, 0.5
      %v4231 = vmul.f32 %v4113, 0.5
      %v4232 = vmul.f32 %v4115, 0.5
      %v4233 = vmul.f32 %v4119, 0.5
      %v4234 = vmul.f32 %v4121, 0.5
      %v4235 = vmul.f32 %v4125, 0.5
      %v4236 = vmul.f32 %v4127, 0.5
      %v4237 = vmul.f32 %v4131, 0.5
      %v4238 = vmul.f32 %v4133, 0.5
      %v4239 = vmul.f32 %v4137, 0.5
      %v4240 = vmul.f32 %v4139, 0.5
      %v4241 = vmul.f32 %v4143, 0.5
      %v4242 = vmul.f32 %v4145, 0.5
      %v4243 = vmul.f32 %v4149, 0.5
      %v4244 = vmul.f32 %v4151, 0.5
      %v4245 = vmul.f32 %v4155, 0.5
      %v4246 = vmul.f32 %v4157, 0.5
      %v4247 = vmul.f32 %v4161, 0.5
      %v4248 = vmul.f32 %v4163, 0.5
      %v4249 = vmul.f32 %v4167, 0.5
      %v4250 = vmul.f32 %v4169, 0.5
      %v4251 = vmul.f32 %v4173, 0.5
      %v4252 = vmul.f32 %v4175, 0.5
      %v4253 = vmul.f32 %v4179, 0.5
      %v4254 = vmul.f32 %v4181, 0.5
      %v4255 = vmul.f32 %v4185, 0.5
      %v4256 = vmul.f32 %v4187, 0.5
      %v4257 = vmul.f32 %v4191, 0.5
      %v4258 = vmul.f32 %v4193, 0.5
      %v4259 = vmax.f32 %v4195, %v4196
      %4260 = vmax.xlane.f32.xlu0 %v4259
      %v4261 = vpop.xlane.xlu0 %4260
      %v4262 = vmax.f32 %v4197, %v4198
      %4263 = vmax.xlane.f32.xlu0 %v4262
      %v4264 = vpop.xlane.xlu0 %4263
      %v4265 = vmax.f32 %v4199, %v4200
      %4266 = vmax.xlane.f32.xlu0 %v4265
      %v4267 = vpop.xlane.xlu0 %4266
      %v4268 = vmax.f32 %v4201, %v4202
      %4269 = vmax.xlane.f32.xlu0 %v4268
      %v4270 = vpop.xlane.xlu0 %4269
      %v4271 = vmax.f32 %v4203, %v4204
      %4272 = vmax.xlane.f32.xlu0 %v4271
      %v4273 = vpop.xlane.xlu0 %4272
      %v4274 = vmax.f32 %v4205, %v4206
      %4275 = vmax.xlane.f32.xlu0 %v4274
      %v4276 = vpop.xlane.xlu0 %4275
      %v4277 = vmax.f32 %v4207, %v4208
      %4278 = vmax.xlane.f32.xlu0 %v4277
      %v4279 = vpop.xlane.xlu0 %4278
      %v4280 = vmax.f32 %v4209, %v4210
      %4281 = vmax.xlane.f32.xlu0 %v4280
      %v4282 = vpop.xlane.xlu0 %4281
      %v4283 = vmax.f32 %v4211, %v4212
      %4284 = vmax.xlane.f32.xlu0 %v4283
      %v4285 = vpop.xlane.xlu0 %4284
      %v4286 = vmax.f32 %v4213, %v4214
      %4287 = vmax.xlane.f32.xlu0 %v4286
      %v4288 = vpop.xlane.xlu0 %4287
      %v4289 = vmax.f32 %v4215, %v4216
      %4290 = vmax.xlane.f32.xlu0 %v4289
      %v4291 = vpop.xlane.xlu0 %4290
      %v4292 = vmax.f32 %v4217, %v4218
      %4293 = vmax.xlane.f32.xlu0 %v4292
      %v4294 = vpop.xlane.xlu0 %4293
      %v4295 = vmax.f32 %v4219, %v4220
      %4296 = vmax.xlane.f32.xlu0 %v4295
      %v4297 = vpop.xlane.xlu0 %4296
      %v4298 = vmax.f32 %v4221, %v4222
      %4299 = vmax.xlane.f32.xlu0 %v4298
      %v4300 = vpop.xlane.xlu0 %4299
      %v4301 = vmax.f32 %v4223, %v4224
      %4302 = vmax.xlane.f32.xlu0 %v4301
      %v4303 = vpop.xlane.xlu0 %4302
      %v4304 = vmax.f32 %v4225, %v4226
      %4305 = vmax.xlane.f32.xlu0 %v4304
      %v4306 = vpop.xlane.xlu0 %4305
      %v4307 = vmax.f32 %v4227, %v4228
      %4308 = vmax.xlane.f32.xlu0 %v4307
      %v4309 = vpop.xlane.xlu0 %4308
      %v4310 = vmax.f32 %v4229, %v4230
      %4311 = vmax.xlane.f32.xlu0 %v4310
      %v4312 = vpop.xlane.xlu0 %4311
      %v4313 = vmax.f32 %v4231, %v4232
      %4314 = vmax.xlane.f32.xlu0 %v4313
      %v4315 = vpop.xlane.xlu0 %4314
      %v4316 = vmax.f32 %v4233, %v4234
      %4317 = vmax.xlane.f32.xlu0 %v4316
      %v4318 = vpop.xlane.xlu0 %4317
      %v4319 = vmax.f32 %v4235, %v4236
      %4320 = vmax.xlane.f32.xlu0 %v4319
      %v4321 = vpop.xlane.xlu0 %4320
      %v4322 = vmax.f32 %v4237, %v4238
      %4323 = vmax.xlane.f32.xlu0 %v4322
      %v4324 = vpop.xlane.xlu0 %4323
      %v4325 = vmax.f32 %v4239, %v4240
      %4326 = vmax.xlane.f32.xlu0 %v4325
      %v4327 = vpop.xlane.xlu0 %4326
      %v4328 = vmax.f32 %v4241, %v4242
      %4329 = vmax.xlane.f32.xlu0 %v4328
      %v4330 = vpop.xlane.xlu0 %4329
      %v4331 = vmax.f32 %v4243, %v4244
      %4332 = vmax.xlane.f32.xlu0 %v4331
      %v4333 = vpop.xlane.xlu0 %4332
      %v4334 = vmax.f32 %v4245, %v4246
      %4335 = vmax.xlane.f32.xlu0 %v4334
      %v4336 = vpop.xlane.xlu0 %4335
      %v4337 = vmax.f32 %v4247, %v4248
      %4338 = vmax.xlane.f32.xlu0 %v4337
      %v4339 = vpop.xlane.xlu0 %4338
      %v4340 = vmax.f32 %v4249, %v4250
      %4341 = vmax.xlane.f32.xlu0 %v4340
      %v4342 = vpop.xlane.xlu0 %4341
      %v4343 = vmax.f32 %v4251, %v4252
      %4344 = vmax.xlane.f32.xlu0 %v4343
      %v4345 = vpop.xlane.xlu0 %4344
      %v4346 = vmax.f32 %v4253, %v4254
      %4347 = vmax.xlane.f32.xlu0 %v4346
      %v4348 = vpop.xlane.xlu0 %4347
      %v4349 = vmax.f32 %v4255, %v4256
      %4350 = vmax.xlane.f32.xlu0 %v4349
      %v4351 = vpop.xlane.xlu0 %4350
      %v4352 = vmax.f32 %v4257, %v4258
      %4353 = vmax.xlane.f32.xlu0 %v4352
      %v4354 = vpop.xlane.xlu0 %4353
      %v4355 = vsub.f32 %v4195, %v4261
      %v4356 = vsub.f32 %v4196, %v4261
      %v4357 = vsub.f32 %v4197, %v4264
      %v4358 = vsub.f32 %v4198, %v4264
      %v4359 = vsub.f32 %v4199, %v4267
      %v4360 = vsub.f32 %v4200, %v4267
      %v4361 = vsub.f32 %v4201, %v4270
      %v4362 = vsub.f32 %v4202, %v4270
      %v4363 = vsub.f32 %v4203, %v4273
      %v4364 = vsub.f32 %v4204, %v4273
      %v4365 = vsub.f32 %v4205, %v4276
      %v4366 = vsub.f32 %v4206, %v4276
      %v4367 = vsub.f32 %v4207, %v4279
      %v4368 = vsub.f32 %v4208, %v4279
      %v4369 = vsub.f32 %v4209, %v4282
      %v4370 = vsub.f32 %v4210, %v4282
      %v4371 = vsub.f32 %v4211, %v4285
      %v4372 = vsub.f32 %v4212, %v4285
      %v4373 = vsub.f32 %v4213, %v4288
      %v4374 = vsub.f32 %v4214, %v4288
      %v4375 = vsub.f32 %v4215, %v4291
      %v4376 = vsub.f32 %v4216, %v4291
      %v4377 = vsub.f32 %v4217, %v4294
      %v4378 = vsub.f32 %v4218, %v4294
      %v4379 = vsub.f32 %v4219, %v4297
      %v4380 = vsub.f32 %v4220, %v4297
      %v4381 = vsub.f32 %v4221, %v4300
      %v4382 = vsub.f32 %v4222, %v4300
      %v4383 = vsub.f32 %v4223, %v4303
      %v4384 = vsub.f32 %v4224, %v4303
      %v4385 = vsub.f32 %v4225, %v4306
      %v4386 = vsub.f32 %v4226, %v4306
      %v4387 = vsub.f32 %v4227, %v4309
      %v4388 = vsub.f32 %v4228, %v4309
      %v4389 = vsub.f32 %v4229, %v4312
      %v4390 = vsub.f32 %v4230, %v4312
      %v4391 = vsub.f32 %v4231, %v4315
      %v4392 = vsub.f32 %v4232, %v4315
      %v4393 = vsub.f32 %v4233, %v4318
      %v4394 = vsub.f32 %v4234, %v4318
      %v4395 = vsub.f32 %v4235, %v4321
      %v4396 = vsub.f32 %v4236, %v4321
      %v4397 = vsub.f32 %v4237, %v4324
      %v4398 = vsub.f32 %v4238, %v4324
      %v4399 = vsub.f32 %v4239, %v4327
      %v4400 = vsub.f32 %v4240, %v4327
      %v4401 = vsub.f32 %v4241, %v4330
      %v4402 = vsub.f32 %v4242, %v4330
      %v4403 = vsub.f32 %v4243, %v4333
      %v4404 = vsub.f32 %v4244, %v4333
      %v4405 = vsub.f32 %v4245, %v4336
      %v4406 = vsub.f32 %v4246, %v4336
      %v4407 = vsub.f32 %v4247, %v4339
      %v4408 = vsub.f32 %v4248, %v4339
      %v4409 = vsub.f32 %v4249, %v4342
      %v4410 = vsub.f32 %v4250, %v4342
      %v4411 = vsub.f32 %v4251, %v4345
      %v4412 = vsub.f32 %v4252, %v4345
      %v4413 = vsub.f32 %v4253, %v4348
      %v4414 = vsub.f32 %v4254, %v4348
      %v4415 = vsub.f32 %v4255, %v4351
      %v4416 = vsub.f32 %v4256, %v4351
      %v4417 = vsub.f32 %v4257, %v4354
      %v4418 = vsub.f32 %v4258, %v4354
      %v4419 = vmul.f32 %v4355, 1.442695
      %v4420 = vpow.pop %v4419
      %v4421 = vmul.f32 %v4356, 1.442695
      %v4422 = vpow.pop %v4421
      %v4423 = vmul.f32 %v4357, 1.442695
      %v4424 = vpow.pop %v4423
      %v4425 = vmul.f32 %v4358, 1.442695
      %v4426 = vpow.pop %v4425
      %v4427 = vmul.f32 %v4359, 1.442695
      %v4428 = vpow.pop %v4427
      %v4429 = vmul.f32 %v4360, 1.442695
      %v4430 = vpow.pop %v4429
      %v4431 = vmul.f32 %v4361, 1.442695
      %v4432 = vpow.pop %v4431
      %v4433 = vmul.f32 %v4362, 1.442695
      %v4434 = vpow.pop %v4433
      %v4435 = vmul.f32 %v4363, 1.442695
      %v4436 = vpow.pop %v4435
      %v4437 = vmul.f32 %v4364, 1.442695
      %v4438 = vpow.pop %v4437
      %v4439 = vmul.f32 %v4365, 1.442695
      %v4440 = vpow.pop %v4439
      %v4441 = vmul.f32 %v4366, 1.442695
      %v4442 = vpow.pop %v4441
      %v4443 = vmul.f32 %v4367, 1.442695
      %v4444 = vpow.pop %v4443
      %v4445 = vmul.f32 %v4368, 1.442695
      %v4446 = vpow.pop %v4445
      %v4447 = vmul.f32 %v4369, 1.442695
      %v4448 = vpow.pop %v4447
      %v4449 = vmul.f32 %v4370, 1.442695
      %v4450 = vpow.pop %v4449
      %v4451 = vmul.f32 %v4371, 1.442695
      %v4452 = vpow.pop %v4451
      %v4453 = vmul.f32 %v4372, 1.442695
      %v4454 = vpow.pop %v4453
      %v4455 = vmul.f32 %v4373, 1.442695
      %v4456 = vpow.pop %v4455
      %v4457 = vmul.f32 %v4374, 1.442695
      %v4458 = vpow.pop %v4457
      %v4459 = vmul.f32 %v4375, 1.442695
      %v4460 = vpow.pop %v4459
      %v4461 = vmul.f32 %v4376, 1.442695
      %v4462 = vpow.pop %v4461
      %v4463 = vmul.f32 %v4377, 1.442695
      %v4464 = vpow.pop %v4463
      %v4465 = vmul.f32 %v4378, 1.442695
      %v4466 = vpow.pop %v4465
      %v4467 = vmul.f32 %v4379, 1.442695
      %v4468 = vpow.pop %v4467
      %v4469 = vmul.f32 %v4380, 1.442695
      %v4470 = vpow.pop %v4469
      %v4471 = vmul.f32 %v4381, 1.442695
      %v4472 = vpow.pop %v4471
      %v4473 = vmul.f32 %v4382, 1.442695
      %v4474 = vpow.pop %v4473
      %v4475 = vmul.f32 %v4383, 1.442695
      %v4476 = vpow.pop %v4475
      %v4477 = vmul.f32 %v4384, 1.442695
      %v4478 = vpow.pop %v4477
      %v4479 = vmul.f32 %v4385, 1.442695
      %v4480 = vpow.pop %v4479
      %v4481 = vmul.f32 %v4386, 1.442695
      %v4482 = vpow.pop %v4481
      %v4483 = vmul.f32 %v4387, 1.442695
      %v4484 = vpow.pop %v4483
      %v4485 = vmul.f32 %v4388, 1.442695
      %v4486 = vpow.pop %v4485
      %v4487 = vmul.f32 %v4389, 1.442695
      %v4488 = vpow.pop %v4487
      %v4489 = vmul.f32 %v4390, 1.442695
      %v4490 = vpow.pop %v4489
      %v4491 = vmul.f32 %v4391, 1.442695
      %v4492 = vpow.pop %v4491
      %v4493 = vmul.f32 %v4392, 1.442695
      %v4494 = vpow.pop %v4493
      %v4495 = vmul.f32 %v4393, 1.442695
      %v4496 = vpow.pop %v4495
      %v4497 = vmul.f32 %v4394, 1.442695
      %v4498 = vpow.pop %v4497
      %v4499 = vmul.f32 %v4395, 1.442695
      %v4500 = vpow.pop %v4499
      %v4501 = vmul.f32 %v4396, 1.442695
      %v4502 = vpow.pop %v4501
      %v4503 = vmul.f32 %v4397, 1.442695
      %v4504 = vpow.pop %v4503
      %v4505 = vmul.f32 %v4398, 1.442695
      %v4506 = vpow.pop %v4505
      %v4507 = vmul.f32 %v4399, 1.442695
      %v4508 = vpow.pop %v4507
      %v4509 = vmul.f32 %v4400, 1.442695
      %v4510 = vpow.pop %v4509
      %v4511 = vmul.f32 %v4401, 1.442695
      %v4512 = vpow.pop %v4511
      %v4513 = vmul.f32 %v4402, 1.442695
      %v4514 = vpow.pop %v4513
      %v4515 = vmul.f32 %v4403, 1.442695
      %v4516 = vpow.pop %v4515
      %v4517 = vmul.f32 %v4404, 1.442695
      %v4518 = vpow.pop %v4517
      %v4519 = vmul.f32 %v4405, 1.442695
      %v4520 = vpow.pop %v4519
      %v4521 = vmul.f32 %v4406, 1.442695
      %v4522 = vpow.pop %v4521
      %v4523 = vmul.f32 %v4407, 1.442695
      %v4524 = vpow.pop %v4523
      %v4525 = vmul.f32 %v4408, 1.442695
      %v4526 = vpow.pop %v4525
      %v4527 = vmul.f32 %v4409, 1.442695
      %v4528 = vpow.pop %v4527
      %v4529 = vmul.f32 %v4410, 1.442695
      %v4530 = vpow.pop %v4529
      %v4531 = vmul.f32 %v4411, 1.442695
      %v4532 = vpow.pop %v4531
      %v4533 = vmul.f32 %v4412, 1.442695
      %v4534 = vpow.pop %v4533
      %v4535 = vmul.f32 %v4413, 1.442695
      %v4536 = vpow.pop %v4535
      %v4537 = vmul.f32 %v4414, 1.442695
      %v4538 = vpow.pop %v4537
      %v4539 = vmul.f32 %v4415, 1.442695
      %v4540 = vpow.pop %v4539
      %v4541 = vmul.f32 %v4416, 1.442695
      %v4542 = vpow.pop %v4541
      %v4543 = vmul.f32 %v4417, 1.442695
      %v4544 = vpow.pop %v4543
      %v4545 = vmul.f32 %v4418, 1.442695
      %v4546 = vpow.pop %v4545
      %v4547 = vadd.f32 %v4420, %v4422
      %4548 = vadd.xlane.f32.xlu0 %v4547
      %v4549 = vpop.xlane.xlu0 %4548
      %v4550 = vadd.f32 %v4424, %v4426
      %4551 = vadd.xlane.f32.xlu0 %v4550
      %v4552 = vpop.xlane.xlu0 %4551
      %v4553 = vadd.f32 %v4428, %v4430
      %4554 = vadd.xlane.f32.xlu0 %v4553
      %v4555 = vpop.xlane.xlu0 %4554
      %v4556 = vadd.f32 %v4432, %v4434
      %4557 = vadd.xlane.f32.xlu0 %v4556
      %v4558 = vpop.xlane.xlu0 %4557
      %v4559 = vadd.f32 %v4436, %v4438
      %4560 = vadd.xlane.f32.xlu0 %v4559
      %v4561 = vpop.xlane.xlu0 %4560
      %v4562 = vadd.f32 %v4440, %v4442
      %4563 = vadd.xlane.f32.xlu0 %v4562
      %v4564 = vpop.xlane.xlu0 %4563
      %v4565 = vadd.f32 %v4444, %v4446
      %4566 = vadd.xlane.f32.xlu0 %v4565
      %v4567 = vpop.xlane.xlu0 %4566
      %v4568 = vadd.f32 %v4448, %v4450
      %4569 = vadd.xlane.f32.xlu0 %v4568
      %v4570 = vpop.xlane.xlu0 %4569
      %v4571 = vadd.f32 %v4452, %v4454
      %4572 = vadd.xlane.f32.xlu0 %v4571
      %v4573 = vpop.xlane.xlu0 %4572
      %v4574 = vadd.f32 %v4456, %v4458
      %4575 = vadd.xlane.f32.xlu0 %v4574
      %v4576 = vpop.xlane.xlu0 %4575
      %v4577 = vadd.f32 %v4460, %v4462
      %4578 = vadd.xlane.f32.xlu0 %v4577
      %v4579 = vpop.xlane.xlu0 %4578
      %v4580 = vadd.f32 %v4464, %v4466
      %4581 = vadd.xlane.f32.xlu0 %v4580
      %v4582 = vpop.xlane.xlu0 %4581
      %v4583 = vadd.f32 %v4468, %v4470
      %4584 = vadd.xlane.f32.xlu0 %v4583
      %v4585 = vpop.xlane.xlu0 %4584
      %v4586 = vadd.f32 %v4472, %v4474
      %4587 = vadd.xlane.f32.xlu0 %v4586
      %v4588 = vpop.xlane.xlu0 %4587
      %v4589 = vadd.f32 %v4476, %v4478
      %4590 = vadd.xlane.f32.xlu0 %v4589
      %v4591 = vpop.xlane.xlu0 %4590
      %v4592 = vadd.f32 %v4480, %v4482
      %4593 = vadd.xlane.f32.xlu0 %v4592
      %v4594 = vpop.xlane.xlu0 %4593
      %v4595 = vadd.f32 %v4484, %v4486
      %4596 = vadd.xlane.f32.xlu0 %v4595
      %v4597 = vpop.xlane.xlu0 %4596
      %v4598 = vadd.f32 %v4488, %v4490
      %4599 = vadd.xlane.f32.xlu0 %v4598
      %v4600 = vpop.xlane.xlu0 %4599
      %v4601 = vadd.f32 %v4492, %v4494
      %4602 = vadd.xlane.f32.xlu0 %v4601
      %v4603 = vpop.xlane.xlu0 %4602
      %v4604 = vadd.f32 %v4496, %v4498
      %4605 = vadd.xlane.f32.xlu0 %v4604
      %v4606 = vpop.xlane.xlu0 %4605
      %v4607 = vadd.f32 %v4500, %v4502
      %4608 = vadd.xlane.f32.xlu0 %v4607
      %v4609 = vpop.xlane.xlu0 %4608
      %v4610 = vadd.f32 %v4504, %v4506
      %4611 = vadd.xlane.f32.xlu0 %v4610
      %v4612 = vpop.xlane.xlu0 %4611
      %v4613 = vadd.f32 %v4508, %v4510
      %4614 = vadd.xlane.f32.xlu0 %v4613
      %v4615 = vpop.xlane.xlu0 %4614
      %v4616 = vadd.f32 %v4512, %v4514
      %4617 = vadd.xlane.f32.xlu0 %v4616
      %v4618 = vpop.xlane.xlu0 %4617
      %v4619 = vadd.f32 %v4516, %v4518
      %4620 = vadd.xlane.f32.xlu0 %v4619
      %v4621 = vpop.xlane.xlu0 %4620
      %v4622 = vadd.f32 %v4520, %v4522
      %4623 = vadd.xlane.f32.xlu0 %v4622
      %v4624 = vpop.xlane.xlu0 %4623
      %v4625 = vadd.f32 %v4524, %v4526
      %4626 = vadd.xlane.f32.xlu0 %v4625
      %v4627 = vpop.xlane.xlu0 %4626
      %v4628 = vadd.f32 %v4528, %v4530
      %4629 = vadd.xlane.f32.xlu0 %v4628
      %v4630 = vpop.xlane.xlu0 %4629
      %v4631 = vadd.f32 %v4532, %v4534
      %4632 = vadd.xlane.f32.xlu0 %v4631
      %v4633 = vpop.xlane.xlu0 %4632
      %v4634 = vadd.f32 %v4536, %v4538
      %4635 = vadd.xlane.f32.xlu0 %v4634
      %v4636 = vpop.xlane.xlu0 %4635
      %v4637 = vadd.f32 %v4540, %v4542
      %4638 = vadd.xlane.f32.xlu0 %v4637
      %v4639 = vpop.xlane.xlu0 %4638
      %v4640 = vadd.f32 %v4544, %v4546
      %4641 = vadd.xlane.f32.xlu0 %v4640
      %v4642 = vpop.xlane.xlu0 %4641
      %v4643 = vrcp.pop %v4549
      %v4644 = vmul.f32 %v4420, %v4643
      %v4645 = vmul.f32 %v4422, %v4643
      %v4646 = vrcp.pop %v4552
      %v4647 = vmul.f32 %v4424, %v4646
      %v4648 = vmul.f32 %v4426, %v4646
      %v4649 = vrcp.pop %v4555
      %v4650 = vmul.f32 %v4428, %v4649
      %v4651 = vmul.f32 %v4430, %v4649
      %v4652 = vrcp.pop %v4558
      %v4653 = vmul.f32 %v4432, %v4652
      %v4654 = vmul.f32 %v4434, %v4652
      %v4655 = vrcp.pop %v4561
      %v4656 = vmul.f32 %v4436, %v4655
      %v4657 = vmul.f32 %v4438, %v4655
      %v4658 = vrcp.pop %v4564
      %v4659 = vmul.f32 %v4440, %v4658
      %v4660 = vmul.f32 %v4442, %v4658
      %v4661 = vrcp.pop %v4567
      %v4662 = vmul.f32 %v4444, %v4661
      %v4663 = vmul.f32 %v4446, %v4661
      %v4664 = vrcp.pop %v4570
      %v4665 = vmul.f32 %v4448, %v4664
      %v4666 = vmul.f32 %v4450, %v4664
      %v4667 = vrcp.pop %v4573
      %v4668 = vmul.f32 %v4452, %v4667
      %v4669 = vmul.f32 %v4454, %v4667
      %v4670 = vrcp.pop %v4576
      %v4671 = vmul.f32 %v4456, %v4670
      %v4672 = vmul.f32 %v4458, %v4670
      %v4673 = vrcp.pop %v4579
      %v4674 = vmul.f32 %v4460, %v4673
      %v4675 = vmul.f32 %v4462, %v4673
      %v4676 = vrcp.pop %v4582
      %v4677 = vmul.f32 %v4464, %v4676
      %v4678 = vmul.f32 %v4466, %v4676
      %v4679 = vrcp.pop %v4585
      %v4680 = vmul.f32 %v4468, %v4679
      %v4681 = vmul.f32 %v4470, %v4679
      %v4682 = vrcp.pop %v4588
      %v4683 = vmul.f32 %v4472, %v4682
      %v4684 = vmul.f32 %v4474, %v4682
      %v4685 = vrcp.pop %v4591
      %v4686 = vmul.f32 %v4476, %v4685
      %v4687 = vmul.f32 %v4478, %v4685
      %v4688 = vrcp.pop %v4594
      %v4689 = vmul.f32 %v4480, %v4688
      %v4690 = vmul.f32 %v4482, %v4688
      %v4691 = vrcp.pop %v4597
      %v4692 = vmul.f32 %v4484, %v4691
      %v4693 = vmul.f32 %v4486, %v4691
      %v4694 = vrcp.pop %v4600
      %v4695 = vmul.f32 %v4488, %v4694
      %v4696 = vmul.f32 %v4490, %v4694
      %v4697 = vrcp.pop %v4603
      %v4698 = vmul.f32 %v4492, %v4697
      %v4699 = vmul.f32 %v4494, %v4697
      %v4700 = vrcp.pop %v4606
      %v4701 = vmul.f32 %v4496, %v4700
      %v4702 = vmul.f32 %v4498, %v4700
      %v4703 = vrcp.pop %v4609
      %v4704 = vmul.f32 %v4500, %v4703
      %v4705 = vmul.f32 %v4502, %v4703
      %v4706 = vrcp.pop %v4612
      %v4707 = vmul.f32 %v4504, %v4706
      %v4708 = vmul.f32 %v4506, %v4706
      %v4709 = vrcp.pop %v4615
      %v4710 = vmul.f32 %v4508, %v4709
      %v4711 = vmul.f32 %v4510, %v4709
      %v4712 = vrcp.pop %v4618
      %v4713 = vmul.f32 %v4512, %v4712
      %v4714 = vmul.f32 %v4514, %v4712
      %v4715 = vrcp.pop %v4621
      %v4716 = vmul.f32 %v4516, %v4715
      %v4717 = vmul.f32 %v4518, %v4715
      %v4718 = vrcp.pop %v4624
      %v4719 = vmul.f32 %v4520, %v4718
      %v4720 = vmul.f32 %v4522, %v4718
      %v4721 = vrcp.pop %v4627
      %v4722 = vmul.f32 %v4524, %v4721
      %v4723 = vmul.f32 %v4526, %v4721
      %v4724 = vrcp.pop %v4630
      %v4725 = vmul.f32 %v4528, %v4724
      %v4726 = vmul.f32 %v4530, %v4724
      %v4727 = vrcp.pop %v4633
      %v4728 = vmul.f32 %v4532, %v4727
      %v4729 = vmul.f32 %v4534, %v4727
      %v4730 = vrcp.pop %v4636
      %v4731 = vmul.f32 %v4536, %v4730
      %v4732 = vmul.f32 %v4538, %v4730
      %v4733 = vrcp.pop %v4639
      %v4734 = vmul.f32 %v4540, %v4733
      %v4735 = vmul.f32 %v4542, %v4733
      %v4736 = vrcp.pop %v4642
      %v4737 = vmul.f32 %v4544, %v4736
      %v4738 = vmul.f32 %v4546, %v4736
      %4739 = vmatprep.subr.mxu0 %v4645
      %4740 = vmatpush1.xpose.msra.mxu0 %v4644
      %4741 = vmatprep.subr.mxu0 %v4648
      %4742 = vmatpush1.xpose.msra.mxu0 %v4647
      %4743 = vmatprep.subr.mxu0 %v4651
      %4744 = vmatpush1.xpose.msra.mxu0 %v4650
      %4745 = vmatprep.subr.mxu0 %v4654
      %4746 = vmatpush1.xpose.msra.mxu0 %v4653
      %4747 = vmatprep.subr.mxu0 %v4657
      %4748 = vmatpush1.xpose.msra.mxu0 %v4656
      %4749 = vmatprep.subr.mxu0 %v4660
      %4750 = vmatpush1.xpose.msra.mxu0 %v4659
      %4751 = vmatprep.subr.mxu0 %v4663
      %4752 = vmatpush1.xpose.msra.mxu0 %v4662
      %4753 = vmatprep.subr.mxu0 %v4666
      %4754 = vmatpush1.xpose.msra.mxu0 %v4665
      %4755 = vmatprep.subr.mxu0 %v4669
      %4756 = vmatpush1.xpose.msra.mxu0 %v4668
      %4757 = vmatprep.subr.mxu0 %v4672
      %4758 = vmatpush1.xpose.msra.mxu0 %v4671
      %4759 = vmatprep.subr.mxu0 %v4675
      %4760 = vmatpush1.xpose.msra.mxu0 %v4674
      %4761 = vmatprep.subr.mxu0 %v4678
      %4762 = vmatpush1.xpose.msra.mxu0 %v4677
      %4763 = vmatprep.subr.mxu0 %v4681
      %4764 = vmatpush1.xpose.msra.mxu0 %v4680
      %4765 = vmatprep.subr.mxu0 %v4684
      %4766 = vmatpush1.xpose.msra.mxu0 %v4683
      %4767 = vmatprep.subr.mxu0 %v4687
      %4768 = vmatpush1.xpose.msra.mxu0 %v4686
      %4769 = vmatprep.subr.mxu0 %v4690
      %4770 = vmatpush1.xpose.msra.mxu0 %v4689
      %4771 = vmatprep.subr.mxu0 %v4693
      %4772 = vmatpush1.xpose.msra.mxu0 %v4692
      %4773 = vmatprep.subr.mxu0 %v4696
      %4774 = vmatpush1.xpose.msra.mxu0 %v4695
      %4775 = vmatprep.subr.mxu0 %v4699
      %4776 = vmatpush1.xpose.msra.mxu0 %v4698
      %4777 = vmatprep.subr.mxu0 %v4702
      %4778 = vmatpush1.xpose.msra.mxu0 %v4701
      %4779 = vmatprep.subr.mxu0 %v4705
      %4780 = vmatpush1.xpose.msra.mxu0 %v4704
      %4781 = vmatprep.subr.mxu0 %v4708
      %4782 = vmatpush1.xpose.msra.mxu0 %v4707
      %4783 = vmatprep.subr.mxu0 %v4711
      %4784 = vmatpush1.xpose.msra.mxu0 %v4710
      %4785 = vmatprep.subr.mxu0 %v4714
      %4786 = vmatpush1.xpose.msra.mxu0 %v4713
      %4787 = vmatprep.subr.mxu0 %v4717
      %4788 = vmatpush1.xpose.msra.mxu0 %v4716
      %4789 = vmatprep.subr.mxu0 %v4720
      %4790 = vmatpush1.xpose.msra.mxu0 %v4719
      %4791 = vmatprep.subr.mxu0 %v4723
      %4792 = vmatpush1.xpose.msra.mxu0 %v4722
      %4793 = vmatprep.subr.mxu0 %v4726
      %4794 = vmatpush1.xpose.msra.mxu0 %v4725
      %4795 = vmatprep.subr.mxu0 %v4729
      %4796 = vmatpush1.xpose.msra.mxu0 %v4728
      %4797 = vmatprep.subr.mxu0 %v4732
      %4798 = vmatpush1.xpose.msra.mxu0 %v4731
      %4799 = vmatprep.subr.mxu0 %v4735
      %4800 = vmatpush1.xpose.msra.mxu0 %v4734
      %4801 = vmatprep.subr.mxu0 %v4738
      %4802 = vmatpush1.xpose.msra.mxu0 %v4737
      %4803 = vmatprep.mubr.f32.mxu0 %v618
      %4804 = vmatmul.mubr.f32.gmra.mrb[0].mxu0 %v616
      %v4805 = vpop.f32.mrb[0].mxu0
      %v4806 = vadd.f32 0.0, %v4805
      %v4807 = vpop.f32.mrb[0].mxu0
      %v4808 = vadd.f32 0.0, %v4807
      %4809 = vdwg.mxu0
      %4810 = vxpose.xlu0.b32.start [1/16] %v562, 128
      %4811 = vxpose.xlu0.b32.cont [2/16] 0.0, 128
      %4812 = vxpose.xlu0.b32.cont [3/16] 0.0, 128
      %4813 = vxpose.xlu0.b32.cont [4/16] 0.0, 128
      %4814 = vxpose.xlu0.b32.cont [5/16] 0.0, 128
      %4815 = vxpose.xlu0.b32.cont [6/16] 0.0, 128
      %4816 = vxpose.xlu0.b32.cont [7/16] 0.0, 128
      %4817 = vxpose.xlu0.b32.cont [8/16] 0.0, 128
      %4818 = vxpose.xlu0.b32.cont [9/16] 0.0, 128
      %4819 = vxpose.xlu0.b32.cont [10/16] 0.0, 128
      %4820 = vxpose.xlu0.b32.cont [11/16] 0.0, 128
      %4821 = vxpose.xlu0.b32.cont [12/16] 0.0, 128
      %4822 = vxpose.xlu0.b32.cont [13/16] 0.0, 128
      %4823 = vxpose.xlu0.b32.cont [14/16] 0.0, 128
      %4824 = vxpose.xlu0.b32.cont [15/16] 0.0, 128
      %4825 = vxpose.xlu0.b32.end [16/16] 0.0, 128
      %v4826 = vpop.trf.xlu0
      %v4827 = vpop.trf.xlu0
      %v4828 = vpop.trf.xlu0
      %v4829 = vpop.trf.xlu0
      %v4830 = vpop.trf.xlu0
      %v4831 = vpop.trf.xlu0
      %v4832 = vpop.trf.xlu0
      %v4833 = vpop.trf.xlu0
      %v4834 = vpop.trf.xlu0
      %v4835 = vpop.trf.xlu0
      %v4836 = vpop.trf.xlu0
      %v4837 = vpop.trf.xlu0
      %v4838 = vpop.trf.xlu0
      %v4839 = vpop.trf.xlu0
      %v4840 = vpop.trf.xlu0
      %v4841 = vpop.trf.xlu0
      %4842 = vxpose.xlu0.b32.start [1/16] %v564, 128
      %4843 = vxpose.xlu0.b32.cont [2/16] 0.0, 128
      %4844 = vxpose.xlu0.b32.cont [3/16] 0.0, 128
      %4845 = vxpose.xlu0.b32.cont [4/16] 0.0, 128
      %4846 = vxpose.xlu0.b32.cont [5/16] 0.0, 128
      %4847 = vxpose.xlu0.b32.cont [6/16] 0.0, 128
      %4848 = vxpose.xlu0.b32.cont [7/16] 0.0, 128
      %4849 = vxpose.xlu0.b32.cont [8/16] 0.0, 128
      %4850 = vxpose.xlu0.b32.cont [9/16] 0.0, 128
      %4851 = vxpose.xlu0.b32.cont [10/16] 0.0, 128
      %4852 = vxpose.xlu0.b32.cont [11/16] 0.0, 128
      %4853 = vxpose.xlu0.b32.cont [12/16] 0.0, 128
      %4854 = vxpose.xlu0.b32.cont [13/16] 0.0, 128
      %4855 = vxpose.xlu0.b32.cont [14/16] 0.0, 128
      %4856 = vxpose.xlu0.b32.cont [15/16] 0.0, 128
      %4857 = vxpose.xlu0.b32.end [16/16] 0.0, 128
      %v4858 = vpop.trf.xlu0
      %v4859 = vpop.trf.xlu0
      %v4860 = vpop.trf.xlu0
      %v4861 = vpop.trf.xlu0
      %v4862 = vpop.trf.xlu0
      %v4863 = vpop.trf.xlu0
      %v4864 = vpop.trf.xlu0
      %v4865 = vpop.trf.xlu0
      %v4866 = vpop.trf.xlu0
      %v4867 = vpop.trf.xlu0
      %v4868 = vpop.trf.xlu0
      %v4869 = vpop.trf.xlu0
      %v4870 = vpop.trf.xlu0
      %v4871 = vpop.trf.xlu0
      %v4872 = vpop.trf.xlu0
      %v4873 = vpop.trf.xlu0
      %v4875 = vsel %vm708, %v4826, 0
      %v4878 = vsel %vm708, %v4827, 0
      %v4881 = vsel %vm708, %v4828, 0
      %v4884 = vsel %vm708, %v4829, 0
      %v4887 = vsel %vm708, %v4830, 0
      %v4890 = vsel %vm708, %v4831, 0
      %v4893 = vsel %vm708, %v4832, 0
      %v4896 = vsel %vm708, %v4833, 0
      %v4899 = vsel %vm708, %v4834, 0
      %v4902 = vsel %vm708, %v4835, 0
      %v4905 = vsel %vm708, %v4836, 0
      %v4908 = vsel %vm708, %v4837, 0
      %v4911 = vsel %vm708, %v4838, 0
      %v4914 = vsel %vm708, %v4839, 0
      %v4917 = vsel %vm708, %v4840, 0
      %v4920 = vsel %vm708, %v4841, 0
      %v4923 = vsel %vm708, %v4858, 0
      %v4926 = vsel %vm708, %v4859, 0
      %v4929 = vsel %vm708, %v4860, 0
      %v4932 = vsel %vm708, %v4861, 0
      %v4935 = vsel %vm708, %v4862, 0
      %v4938 = vsel %vm708, %v4863, 0
      %v4941 = vsel %vm708, %v4864, 0
      %v4944 = vsel %vm708, %v4865, 0
      %v4947 = vsel %vm708, %v4866, 0
      %v4950 = vsel %vm708, %v4867, 0
      %v4953 = vsel %vm708, %v4868, 0
      %v4956 = vsel %vm708, %v4869, 0
      %v4959 = vsel %vm708, %v4870, 0
      %v4962 = vsel %vm708, %v4871, 0
      %v4965 = vsel %vm708, %v4872, 0
      %v4968 = vsel %vm708, %v4873, 0
      %v4971 = vsel %vm805, %v586, 0
      %v4974 = vsel %vm805, %v588, 0
      %4976 = vmatprep.subr.mxu0 %v4974
      %4977 = vmatpush1.msra.mxu0 %v4971
      %4978 = vmatprep.subr.mxu0 0.0
      %4979 = vmatpush1.msra.mxu0 0.0
      %4980 = vmatprep.subr.mxu0 0.0
      %4981 = vmatpush1.msra.mxu0 0.0
      %4982 = vmatprep.subr.mxu0 0.0
      %4983 = vmatpush1.msra.mxu0 0.0
      %4984 = vmatprep.subr.mxu0 0.0
      %4985 = vmatpush1.msra.mxu0 0.0
      %4986 = vmatprep.subr.mxu0 0.0
      %4987 = vmatpush1.msra.mxu0 0.0
      %4988 = vmatprep.subr.mxu0 0.0
      %4989 = vmatpush1.msra.mxu0 0.0
      %4990 = vmatprep.subr.mxu0 0.0
      %4991 = vmatpush1.msra.mxu0 0.0
      %4992 = vmatprep.subr.mxu0 0.0
      %4993 = vmatpush1.msra.mxu0 0.0
      %4994 = vmatprep.subr.mxu0 0.0
      %4995 = vmatpush1.msra.mxu0 0.0
      %4996 = vmatprep.subr.mxu0 0.0
      %4997 = vmatpush1.msra.mxu0 0.0
      %4998 = vmatprep.subr.mxu0 0.0
      %4999 = vmatpush1.msra.mxu0 0.0
      %5000 = vmatprep.subr.mxu0 0.0
      %5001 = vmatpush1.msra.mxu0 0.0
      %5002 = vmatprep.subr.mxu0 0.0
      %5003 = vmatpush1.msra.mxu0 0.0
      %5004 = vmatprep.subr.mxu0 0.0
      %5005 = vmatpush1.msra.mxu0 0.0
      %5006 = vmatprep.subr.mxu0 0.0
      %5007 = vmatpush1.msra.mxu0 0.0
      %5008 = vmatprep.subr.mxu0 0.0
      %5009 = vmatpush1.msra.mxu0 0.0
      %5010 = vmatprep.subr.mxu0 0.0
      %5011 = vmatpush1.msra.mxu0 0.0
      %5012 = vmatprep.subr.mxu0 0.0
      %5013 = vmatpush1.msra.mxu0 0.0
      %5014 = vmatprep.subr.mxu0 0.0
      %5015 = vmatpush1.msra.mxu0 0.0
      %5016 = vmatprep.subr.mxu0 0.0
      %5017 = vmatpush1.msra.mxu0 0.0
      %5018 = vmatprep.subr.mxu0 0.0
      %5019 = vmatpush1.msra.mxu0 0.0
      %5020 = vmatprep.subr.mxu0 0.0
      %5021 = vmatpush1.msra.mxu0 0.0
      %5022 = vmatprep.subr.mxu0 0.0
      %5023 = vmatpush1.msra.mxu0 0.0
      %5024 = vmatprep.subr.mxu0 0.0
      %5025 = vmatpush1.msra.mxu0 0.0
      %5026 = vmatprep.subr.mxu0 0.0
      %5027 = vmatpush1.msra.mxu0 0.0
      %5028 = vmatprep.subr.mxu0 0.0
      %5029 = vmatpush1.msra.mxu0 0.0
      %5030 = vmatprep.subr.mxu0 0.0
      %5031 = vmatpush1.msra.mxu0 0.0
      %5032 = vmatprep.subr.mxu0 0.0
      %5033 = vmatpush1.msra.mxu0 0.0
      %5034 = vmatprep.subr.mxu0 0.0
      %5035 = vmatpush1.msra.mxu0 0.0
      %5036 = vmatprep.subr.mxu0 0.0
      %5037 = vmatpush1.msra.mxu0 0.0
      %5038 = vmatprep.subr.mxu0 0.0
      %5039 = vmatpush1.msra.mxu0 0.0
      %5040 = vmatprep.mubr.f32.mxu0 0.0
      %5041 = vmatmul.mubr.f32.gmra.mrb[0].mxu0 %v4875
      %v5042 = vpop.f32.mrb[0].mxu0
      %v5043 = vadd.f32 0.0, %v5042
      %v5044 = vpop.f32.mrb[0].mxu0
      %v5045 = vadd.f32 0.0, %v5044
      %5046 = vmatprep.mubr.f32.mxu0 0.0
      %5047 = vmatmul.mubr.f32.gmra.mrb[0].mxu0 %v4878
      %v5048 = vpop.f32.mrb[0].mxu0
      %v5049 = vadd.f32 0.0, %v5048
      %v5050 = vpop.f32.mrb[0].mxu0
      %v5051 = vadd.f32 0.0, %v5050
      %5052 = vmatprep.mubr.f32.mxu0 0.0
      %5053 = vmatmul.mubr.f32.gmra.mrb[0].mxu0 %v4881
      %v5054 = vpop.f32.mrb[0].mxu0
      %v5055 = vadd.f32 0.0, %v5054
      %v5056 = vpop.f32.mrb[0].mxu0
      %v5057 = vadd.f32 0.0, %v5056
      %5058 = vmatprep.mubr.f32.mxu0 0.0
      %5059 = vmatmul.mubr.f32.gmra.mrb[0].mxu0 %v4884
      %v5060 = vpop.f32.mrb[0].mxu0
      %v5061 = vadd.f32 0.0, %v5060
      %v5062 = vpop.f32.mrb[0].mxu0
      %v5063 = vadd.f32 0.0, %v5062
      %5064 = vmatprep.mubr.f32.mxu0 0.0
      %5065 = vmatmul.mubr.f32.gmra.mrb[0].mxu0 %v4887
      %v5066 = vpop.f32.mrb[0].mxu0
      %v5067 = vadd.f32 0.0, %v5066
      %v5068 = vpop.f32.mrb[0].mxu0
      %v5069 = vadd.f32 0.0, %v5068
      %5070 = vmatprep.mubr.f32.mxu0 0.0
      %5071 = vmatmul.mubr.f32.gmra.mrb[0].mxu0 %v4890
      %v5072 = vpop.f32.mrb[0].mxu0
      %v5073 = vadd.f32 0.0, %v5072
      %v5074 = vpop.f32.mrb[0].mxu0
      %v5075 = vadd.f32 0.0, %v5074
      %5076 = vmatprep.mubr.f32.mxu0 0.0
      %5077 = vmatmul.mubr.f32.gmra.mrb[0].mxu0 %v4893
      %v5078 = vpop.f32.mrb[0].mxu0
      %v5079 = vadd.f32 0.0, %v5078
      %v5080 = vpop.f32.mrb[0].mxu0
      %v5081 = vadd.f32 0.0, %v5080
      %5082 = vmatprep.mubr.f32.mxu0 0.0
      %5083 = vmatmul.mubr.f32.gmra.mrb[0].mxu0 %v4896
      %v5084 = vpop.f32.mrb[0].mxu0
      %v5085 = vadd.f32 0.0, %v5084
      %v5086 = vpop.f32.mrb[0].mxu0
      %v5087 = vadd.f32 0.0, %v5086
      %5088 = vmatprep.mubr.f32.mxu0 0.0
      %5089 = vmatmul.mubr.f32.gmra.mrb[0].mxu0 %v4899
      %v5090 = vpop.f32.mrb[0].mxu0
      %v5091 = vadd.f32 0.0, %v5090
      %v5092 = vpop.f32.mrb[0].mxu0
      %v5093 = vadd.f32 0.0, %v5092
      %5094 = vmatprep.mubr.f32.mxu0 0.0
      %5095 = vmatmul.mubr.f32.gmra.mrb[0].mxu0 %v4902
      %v5096 = vpop.f32.mrb[0].mxu0
      %v5097 = vadd.f32 0.0, %v5096
      %v5098 = vpop.f32.mrb[0].mxu0
      %v5099 = vadd.f32 0.0, %v5098
      %5100 = vmatprep.mubr.f32.mxu0 0.0
      %5101 = vmatmul.mubr.f32.gmra.mrb[0].mxu0 %v4905
      %v5102 = vpop.f32.mrb[0].mxu0
      %v5103 = vadd.f32 0.0, %v5102
      %v5104 = vpop.f32.mrb[0].mxu0
      %v5105 = vadd.f32 0.0, %v5104
      %5106 = vmatprep.mubr.f32.mxu0 0.0
      %5107 = vmatmul.mubr.f32.gmra.mrb[0].mxu0 %v4908
      %v5108 = vpop.f32.mrb[0].mxu0
      %v5109 = vadd.f32 0.0, %v5108
      %v5110 = vpop.f32.mrb[0].mxu0
      %v5111 = vadd.f32 0.0, %v5110
      %5112 = vmatprep.mubr.f32.mxu0 0.0
      %5113 = vmatmul.mubr.f32.gmra.mrb[0].mxu0 %v4911
      %v5114 = vpop.f32.mrb[0].mxu0
      %v5115 = vadd.f32 0.0, %v5114
      %v5116 = vpop.f32.mrb[0].mxu0
      %v5117 = vadd.f32 0.0, %v5116
      %5118 = vmatprep.mubr.f32.mxu0 0.0
      %5119 = vmatmul.mubr.f32.gmra.mrb[0].mxu0 %v4914
      %v5120 = vpop.f32.mrb[0].mxu0
      %v5121 = vadd.f32 0.0, %v5120
      %v5122 = vpop.f32.mrb[0].mxu0
      %v5123 = vadd.f32 0.0, %v5122
      %5124 = vmatprep.mubr.f32.mxu0 0.0
      %5125 = vmatmul.mubr.f32.gmra.mrb[0].mxu0 %v4917
      %v5126 = vpop.f32.mrb[0].mxu0
      %v5127 = vadd.f32 0.0, %v5126
      %v5128 = vpop.f32.mrb[0].mxu0
      %v5129 = vadd.f32 0.0, %v5128
      %5130 = vmatprep.mubr.f32.mxu0 0.0
      %5131 = vmatmul.mubr.f32.gmra.mrb[0].mxu0 %v4920
      %v5132 = vpop.f32.mrb[0].mxu0
      %v5133 = vadd.f32 0.0, %v5132
      %v5134 = vpop.f32.mrb[0].mxu0
      %v5135 = vadd.f32 0.0, %v5134
      %5136 = vmatprep.mubr.f32.mxu0 0.0
      %5137 = vmatmul.mubr.f32.gmra.mrb[0].mxu0 %v4923
      %v5138 = vpop.f32.mrb[0].mxu0
      %v5139 = vadd.f32 0.0, %v5138
      %v5140 = vpop.f32.mrb[0].mxu0
      %v5141 = vadd.f32 0.0, %v5140
      %5142 = vmatprep.mubr.f32.mxu0 0.0
      %5143 = vmatmul.mubr.f32.gmra.mrb[0].mxu0 %v4926
      %v5144 = vpop.f32.mrb[0].mxu0
      %v5145 = vadd.f32 0.0, %v5144
      %v5146 = vpop.f32.mrb[0].mxu0
      %v5147 = vadd.f32 0.0, %v5146
      %5148 = vmatprep.mubr.f32.mxu0 0.0
      %5149 = vmatmul.mubr.f32.gmra.mrb[0].mxu0 %v4929
      %v5150 = vpop.f32.mrb[0].mxu0
      %v5151 = vadd.f32 0.0, %v5150
      %v5152 = vpop.f32.mrb[0].mxu0
      %v5153 = vadd.f32 0.0, %v5152
      %5154 = vmatprep.mubr.f32.mxu0 0.0
      %5155 = vmatmul.mubr.f32.gmra.mrb[0].mxu0 %v4932
      %v5156 = vpop.f32.mrb[0].mxu0
      %v5157 = vadd.f32 0.0, %v5156
      %v5158 = vpop.f32.mrb[0].mxu0
      %v5159 = vadd.f32 0.0, %v5158
      %5160 = vmatprep.mubr.f32.mxu0 0.0
      %5161 = vmatmul.mubr.f32.gmra.mrb[0].mxu0 %v4935
      %v5162 = vpop.f32.mrb[0].mxu0
      %v5163 = vadd.f32 0.0, %v5162
      %v5164 = vpop.f32.mrb[0].mxu0
      %v5165 = vadd.f32 0.0, %v5164
      %5166 = vmatprep.mubr.f32.mxu0 0.0
      %5167 = vmatmul.mubr.f32.gmra.mrb[0].mxu0 %v4938
      %v5168 = vpop.f32.mrb[0].mxu0
      %v5169 = vadd.f32 0.0, %v5168
      %v5170 = vpop.f32.mrb[0].mxu0
      %v5171 = vadd.f32 0.0, %v5170
      %5172 = vmatprep.mubr.f32.mxu0 0.0
      %5173 = vmatmul.mubr.f32.gmra.mrb[0].mxu0 %v4941
      %v5174 = vpop.f32.mrb[0].mxu0
      %v5175 = vadd.f32 0.0, %v5174
      %v5176 = vpop.f32.mrb[0].mxu0
      %v5177 = vadd.f32 0.0, %v5176
      %5178 = vmatprep.mubr.f32.mxu0 0.0
      %5179 = vmatmul.mubr.f32.gmra.mrb[0].mxu0 %v4944
      %v5180 = vpop.f32.mrb[0].mxu0
      %v5181 = vadd.f32 0.0, %v5180
      %v5182 = vpop.f32.mrb[0].mxu0
      %v5183 = vadd.f32 0.0, %v5182
      %5184 = vmatprep.mubr.f32.mxu0 0.0
      %5185 = vmatmul.mubr.f32.gmra.mrb[0].mxu0 %v4947
      %v5186 = vpop.f32.mrb[0].mxu0
      %v5187 = vadd.f32 0.0, %v5186
      %v5188 = vpop.f32.mrb[0].mxu0
      %v5189 = vadd.f32 0.0, %v5188
      %5190 = vmatprep.mubr.f32.mxu0 0.0
      %5191 = vmatmul.mubr.f32.gmra.mrb[0].mxu0 %v4950
      %v5192 = vpop.f32.mrb[0].mxu0
      %v5193 = vadd.f32 0.0, %v5192
      %v5194 = vpop.f32.mrb[0].mxu0
      %v5195 = vadd.f32 0.0, %v5194
      %5196 = vmatprep.mubr.f32.mxu0 0.0
      %5197 = vmatmul.mubr.f32.gmra.mrb[0].mxu0 %v4953
      %v5198 = vpop.f32.mrb[0].mxu0
      %v5199 = vadd.f32 0.0, %v5198
      %v5200 = vpop.f32.mrb[0].mxu0
      %v5201 = vadd.f32 0.0, %v5200
      %5202 = vmatprep.mubr.f32.mxu0 0.0
      %5203 = vmatmul.mubr.f32.gmra.mrb[0].mxu0 %v4956
      %v5204 = vpop.f32.mrb[0].mxu0
      %v5205 = vadd.f32 0.0, %v5204
      %v5206 = vpop.f32.mrb[0].mxu0
      %v5207 = vadd.f32 0.0, %v5206
      %5208 = vmatprep.mubr.f32.mxu0 0.0
      %5209 = vmatmul.mubr.f32.gmra.mrb[0].mxu0 %v4959
      %v5210 = vpop.f32.mrb[0].mxu0
      %v5211 = vadd.f32 0.0, %v5210
      %v5212 = vpop.f32.mrb[0].mxu0
      %v5213 = vadd.f32 0.0, %v5212
      %5214 = vmatprep.mubr.f32.mxu0 0.0
      %5215 = vmatmul.mubr.f32.gmra.mrb[0].mxu0 %v4962
      %v5216 = vpop.f32.mrb[0].mxu0
      %v5217 = vadd.f32 0.0, %v5216
      %v5218 = vpop.f32.mrb[0].mxu0
      %v5219 = vadd.f32 0.0, %v5218
      %5220 = vmatprep.mubr.f32.mxu0 0.0
      %5221 = vmatmul.mubr.f32.gmra.mrb[0].mxu0 %v4965
      %v5222 = vpop.f32.mrb[0].mxu0
      %v5223 = vadd.f32 0.0, %v5222
      %v5224 = vpop.f32.mrb[0].mxu0
      %v5225 = vadd.f32 0.0, %v5224
      %5226 = vmatprep.mubr.f32.mxu0 0.0
      %5227 = vmatmul.mubr.f32.gmra.mrb[0].mxu0 %v4968
      %v5228 = vpop.f32.mrb[0].mxu0
      %v5229 = vadd.f32 0.0, %v5228
      %v5230 = vpop.f32.mrb[0].mxu0
      %v5231 = vadd.f32 0.0, %v5230
      %5232 = vdwg.mxu0
      %v5233 = vmul.f32 %v5043, 0.5
      %v5234 = vmul.f32 %v5045, 0.5
      %v5235 = vmul.f32 %v5049, 0.5
      %v5236 = vmul.f32 %v5051, 0.5
      %v5237 = vmul.f32 %v5055, 0.5
      %v5238 = vmul.f32 %v5057, 0.5
      %v5239 = vmul.f32 %v5061, 0.5
      %v5240 = vmul.f32 %v5063, 0.5
      %v5241 = vmul.f32 %v5067, 0.5
      %v5242 = vmul.f32 %v5069, 0.5
      %v5243 = vmul.f32 %v5073, 0.5
      %v5244 = vmul.f32 %v5075, 0.5
      %v5245 = vmul.f32 %v5079, 0.5
      %v5246 = vmul.f32 %v5081, 0.5
      %v5247 = vmul.f32 %v5085, 0.5
      %v5248 = vmul.f32 %v5087, 0.5
      %v5249 = vmul.f32 %v5091, 0.5
      %v5250 = vmul.f32 %v5093, 0.5
      %v5251 = vmul.f32 %v5097, 0.5
      %v5252 = vmul.f32 %v5099, 0.5
      %v5253 = vmul.f32 %v5103, 0.5
      %v5254 = vmul.f32 %v5105, 0.5
      %v5255 = vmul.f32 %v5109, 0.5
      %v5256 = vmul.f32 %v5111, 0.5
      %v5257 = vmul.f32 %v5115, 0.5
      %v5258 = vmul.f32 %v5117, 0.5
      %v5259 = vmul.f32 %v5121, 0.5
      %v5260 = vmul.f32 %v5123, 0.5
      %v5261 = vmul.f32 %v5127, 0.5
      %v5262 = vmul.f32 %v5129, 0.5
      %v5263 = vmul.f32 %v5133, 0.5
      %v5264 = vmul.f32 %v5135, 0.5
      %v5265 = vmul.f32 %v5139, 0.5
      %v5266 = vmul.f32 %v5141, 0.5
      %v5267 = vmul.f32 %v5145, 0.5
      %v5268 = vmul.f32 %v5147, 0.5
      %v5269 = vmul.f32 %v5151, 0.5
      %v5270 = vmul.f32 %v5153, 0.5
      %v5271 = vmul.f32 %v5157, 0.5
      %v5272 = vmul.f32 %v5159, 0.5
      %v5273 = vmul.f32 %v5163, 0.5
      %v5274 = vmul.f32 %v5165, 0.5
      %v5275 = vmul.f32 %v5169, 0.5
      %v5276 = vmul.f32 %v5171, 0.5
      %v5277 = vmul.f32 %v5175, 0.5
      %v5278 = vmul.f32 %v5177, 0.5
      %v5279 = vmul.f32 %v5181, 0.5
      %v5280 = vmul.f32 %v5183, 0.5
      %v5281 = vmul.f32 %v5187, 0.5
      %v5282 = vmul.f32 %v5189, 0.5
      %v5283 = vmul.f32 %v5193, 0.5
      %v5284 = vmul.f32 %v5195, 0.5
      %v5285 = vmul.f32 %v5199, 0.5
      %v5286 = vmul.f32 %v5201, 0.5
      %v5287 = vmul.f32 %v5205, 0.5
      %v5288 = vmul.f32 %v5207, 0.5
      %v5289 = vmul.f32 %v5211, 0.5
      %v5290 = vmul.f32 %v5213, 0.5
      %v5291 = vmul.f32 %v5217, 0.5
      %v5292 = vmul.f32 %v5219, 0.5
      %v5293 = vmul.f32 %v5223, 0.5
      %v5294 = vmul.f32 %v5225, 0.5
      %v5295 = vmul.f32 %v5229, 0.5
      %v5296 = vmul.f32 %v5231, 0.5
      %v5297 = vmax.f32 %v5233, %v5234
      %5298 = vmax.xlane.f32.xlu0 %v5297
      %v5299 = vpop.xlane.xlu0 %5298
      %v5300 = vmax.f32 %v5235, %v5236
      %5301 = vmax.xlane.f32.xlu0 %v5300
      %v5302 = vpop.xlane.xlu0 %5301
      %v5303 = vmax.f32 %v5237, %v5238
      %5304 = vmax.xlane.f32.xlu0 %v5303
      %v5305 = vpop.xlane.xlu0 %5304
      %v5306 = vmax.f32 %v5239, %v5240
      %5307 = vmax.xlane.f32.xlu0 %v5306
      %v5308 = vpop.xlane.xlu0 %5307
      %v5309 = vmax.f32 %v5241, %v5242
      %5310 = vmax.xlane.f32.xlu0 %v5309
      %v5311 = vpop.xlane.xlu0 %5310
      %v5312 = vmax.f32 %v5243, %v5244
      %5313 = vmax.xlane.f32.xlu0 %v5312
      %v5314 = vpop.xlane.xlu0 %5313
      %v5315 = vmax.f32 %v5245, %v5246
      %5316 = vmax.xlane.f32.xlu0 %v5315
      %v5317 = vpop.xlane.xlu0 %5316
      %v5318 = vmax.f32 %v5247, %v5248
      %5319 = vmax.xlane.f32.xlu0 %v5318
      %v5320 = vpop.xlane.xlu0 %5319
      %v5321 = vmax.f32 %v5249, %v5250
      %5322 = vmax.xlane.f32.xlu0 %v5321
      %v5323 = vpop.xlane.xlu0 %5322
      %v5324 = vmax.f32 %v5251, %v5252
      %5325 = vmax.xlane.f32.xlu0 %v5324
      %v5326 = vpop.xlane.xlu0 %5325
      %v5327 = vmax.f32 %v5253, %v5254
      %5328 = vmax.xlane.f32.xlu0 %v5327
      %v5329 = vpop.xlane.xlu0 %5328
      %v5330 = vmax.f32 %v5255, %v5256
      %5331 = vmax.xlane.f32.xlu0 %v5330
      %v5332 = vpop.xlane.xlu0 %5331
      %v5333 = vmax.f32 %v5257, %v5258
      %5334 = vmax.xlane.f32.xlu0 %v5333
      %v5335 = vpop.xlane.xlu0 %5334
      %v5336 = vmax.f32 %v5259, %v5260
      %5337 = vmax.xlane.f32.xlu0 %v5336
      %v5338 = vpop.xlane.xlu0 %5337
      %v5339 = vmax.f32 %v5261, %v5262
      %5340 = vmax.xlane.f32.xlu0 %v5339
      %v5341 = vpop.xlane.xlu0 %5340
      %v5342 = vmax.f32 %v5263, %v5264
      %5343 = vmax.xlane.f32.xlu0 %v5342
      %v5344 = vpop.xlane.xlu0 %5343
      %v5345 = vmax.f32 %v5265, %v5266
      %5346 = vmax.xlane.f32.xlu0 %v5345
      %v5347 = vpop.xlane.xlu0 %5346
      %v5348 = vmax.f32 %v5267, %v5268
      %5349 = vmax.xlane.f32.xlu0 %v5348
      %v5350 = vpop.xlane.xlu0 %5349
      %v5351 = vmax.f32 %v5269, %v5270
      %5352 = vmax.xlane.f32.xlu0 %v5351
      %v5353 = vpop.xlane.xlu0 %5352
      %v5354 = vmax.f32 %v5271, %v5272
      %5355 = vmax.xlane.f32.xlu0 %v5354
      %v5356 = vpop.xlane.xlu0 %5355
      %v5357 = vmax.f32 %v5273, %v5274
      %5358 = vmax.xlane.f32.xlu0 %v5357
      %v5359 = vpop.xlane.xlu0 %5358
      %v5360 = vmax.f32 %v5275, %v5276
      %5361 = vmax.xlane.f32.xlu0 %v5360
      %v5362 = vpop.xlane.xlu0 %5361
      %v5363 = vmax.f32 %v5277, %v5278
      %5364 = vmax.xlane.f32.xlu0 %v5363
      %v5365 = vpop.xlane.xlu0 %5364
      %v5366 = vmax.f32 %v5279, %v5280
      %5367 = vmax.xlane.f32.xlu0 %v5366
      %v5368 = vpop.xlane.xlu0 %5367
      %v5369 = vmax.f32 %v5281, %v5282
      %5370 = vmax.xlane.f32.xlu0 %v5369
      %v5371 = vpop.xlane.xlu0 %5370
      %v5372 = vmax.f32 %v5283, %v5284
      %5373 = vmax.xlane.f32.xlu0 %v5372
      %v5374 = vpop.xlane.xlu0 %5373
      %v5375 = vmax.f32 %v5285, %v5286
      %5376 = vmax.xlane.f32.xlu0 %v5375
      %v5377 = vpop.xlane.xlu0 %5376
      %v5378 = vmax.f32 %v5287, %v5288
      %5379 = vmax.xlane.f32.xlu0 %v5378
      %v5380 = vpop.xlane.xlu0 %5379
      %v5381 = vmax.f32 %v5289, %v5290
      %5382 = vmax.xlane.f32.xlu0 %v5381
      %v5383 = vpop.xlane.xlu0 %5382
      %v5384 = vmax.f32 %v5291, %v5292
      %5385 = vmax.xlane.f32.xlu0 %v5384
      %v5386 = vpop.xlane.xlu0 %5385
      %v5387 = vmax.f32 %v5293, %v5294
      %5388 = vmax.xlane.f32.xlu0 %v5387
      %v5389 = vpop.xlane.xlu0 %5388
      %v5390 = vmax.f32 %v5295, %v5296
      %5391 = vmax.xlane.f32.xlu0 %v5390
      %v5392 = vpop.xlane.xlu0 %5391
      %v5393 = vsub.f32 %v5233, %v5299
      %v5394 = vsub.f32 %v5234, %v5299
      %v5395 = vsub.f32 %v5235, %v5302
      %v5396 = vsub.f32 %v5236, %v5302
      %v5397 = vsub.f32 %v5237, %v5305
      %v5398 = vsub.f32 %v5238, %v5305
      %v5399 = vsub.f32 %v5239, %v5308
      %v5400 = vsub.f32 %v5240, %v5308
      %v5401 = vsub.f32 %v5241, %v5311
      %v5402 = vsub.f32 %v5242, %v5311
      %v5403 = vsub.f32 %v5243, %v5314
      %v5404 = vsub.f32 %v5244, %v5314
      %v5405 = vsub.f32 %v5245, %v5317
      %v5406 = vsub.f32 %v5246, %v5317
      %v5407 = vsub.f32 %v5247, %v5320
      %v5408 = vsub.f32 %v5248, %v5320
      %v5409 = vsub.f32 %v5249, %v5323
      %v5410 = vsub.f32 %v5250, %v5323
      %v5411 = vsub.f32 %v5251, %v5326
      %v5412 = vsub.f32 %v5252, %v5326
      %v5413 = vsub.f32 %v5253, %v5329
      %v5414 = vsub.f32 %v5254, %v5329
      %v5415 = vsub.f32 %v5255, %v5332
      %v5416 = vsub.f32 %v5256, %v5332
      %v5417 = vsub.f32 %v5257, %v5335
      %v5418 = vsub.f32 %v5258, %v5335
      %v5419 = vsub.f32 %v5259, %v5338
      %v5420 = vsub.f32 %v5260, %v5338
      %v5421 = vsub.f32 %v5261, %v5341
      %v5422 = vsub.f32 %v5262, %v5341
      %v5423 = vsub.f32 %v5263, %v5344
      %v5424 = vsub.f32 %v5264, %v5344
      %v5425 = vsub.f32 %v5265, %v5347
      %v5426 = vsub.f32 %v5266, %v5347
      %v5427 = vsub.f32 %v5267, %v5350
      %v5428 = vsub.f32 %v5268, %v5350
      %v5429 = vsub.f32 %v5269, %v5353
      %v5430 = vsub.f32 %v5270, %v5353
      %v5431 = vsub.f32 %v5271, %v5356
      %v5432 = vsub.f32 %v5272, %v5356
      %v5433 = vsub.f32 %v5273, %v5359
      %v5434 = vsub.f32 %v5274, %v5359
      %v5435 = vsub.f32 %v5275, %v5362
      %v5436 = vsub.f32 %v5276, %v5362
      %v5437 = vsub.f32 %v5277, %v5365
      %v5438 = vsub.f32 %v5278, %v5365
      %v5439 = vsub.f32 %v5279, %v5368
      %v5440 = vsub.f32 %v5280, %v5368
      %v5441 = vsub.f32 %v5281, %v5371
      %v5442 = vsub.f32 %v5282, %v5371
      %v5443 = vsub.f32 %v5283, %v5374
      %v5444 = vsub.f32 %v5284, %v5374
      %v5445 = vsub.f32 %v5285, %v5377
      %v5446 = vsub.f32 %v5286, %v5377
      %v5447 = vsub.f32 %v5287, %v5380
      %v5448 = vsub.f32 %v5288, %v5380
      %v5449 = vsub.f32 %v5289, %v5383
      %v5450 = vsub.f32 %v5290, %v5383
      %v5451 = vsub.f32 %v5291, %v5386
      %v5452 = vsub.f32 %v5292, %v5386
      %v5453 = vsub.f32 %v5293, %v5389
      %v5454 = vsub.f32 %v5294, %v5389
      %v5455 = vsub.f32 %v5295, %v5392
      %v5456 = vsub.f32 %v5296, %v5392
      %v5457 = vmul.f32 %v5393, 1.442695
      %v5458 = vpow.pop %v5457
      %v5459 = vmul.f32 %v5394, 1.442695
      %v5460 = vpow.pop %v5459
      %v5461 = vmul.f32 %v5395, 1.442695
      %v5462 = vpow.pop %v5461
      %v5463 = vmul.f32 %v5396, 1.442695
      %v5464 = vpow.pop %v5463
      %v5465 = vmul.f32 %v5397, 1.442695
      %v5466 = vpow.pop %v5465
      %v5467 = vmul.f32 %v5398, 1.442695
      %v5468 = vpow.pop %v5467
      %v5469 = vmul.f32 %v5399, 1.442695
      %v5470 = vpow.pop %v5469
      %v5471 = vmul.f32 %v5400, 1.442695
      %v5472 = vpow.pop %v5471
      %v5473 = vmul.f32 %v5401, 1.442695
      %v5474 = vpow.pop %v5473
      %v5475 = vmul.f32 %v5402, 1.442695
      %v5476 = vpow.pop %v5475
      %v5477 = vmul.f32 %v5403, 1.442695
      %v5478 = vpow.pop %v5477
      %v5479 = vmul.f32 %v5404, 1.442695
      %v5480 = vpow.pop %v5479
      %v5481 = vmul.f32 %v5405, 1.442695
      %v5482 = vpow.pop %v5481
      %v5483 = vmul.f32 %v5406, 1.442695
      %v5484 = vpow.pop %v5483
      %v5485 = vmul.f32 %v5407, 1.442695
      %v5486 = vpow.pop %v5485
      %v5487 = vmul.f32 %v5408, 1.442695
      %v5488 = vpow.pop %v5487
      %v5489 = vmul.f32 %v5409, 1.442695
      %v5490 = vpow.pop %v5489
      %v5491 = vmul.f32 %v5410, 1.442695
      %v5492 = vpow.pop %v5491
      %v5493 = vmul.f32 %v5411, 1.442695
      %v5494 = vpow.pop %v5493
      %v5495 = vmul.f32 %v5412, 1.442695
      %v5496 = vpow.pop %v5495
      %v5497 = vmul.f32 %v5413, 1.442695
      %v5498 = vpow.pop %v5497
      %v5499 = vmul.f32 %v5414, 1.442695
      %v5500 = vpow.pop %v5499
      %v5501 = vmul.f32 %v5415, 1.442695
      %v5502 = vpow.pop %v5501
      %v5503 = vmul.f32 %v5416, 1.442695
      %v5504 = vpow.pop %v5503
      %v5505 = vmul.f32 %v5417, 1.442695
      %v5506 = vpow.pop %v5505
      %v5507 = vmul.f32 %v5418, 1.442695
      %v5508 = vpow.pop %v5507
      %v5509 = vmul.f32 %v5419, 1.442695
      %v5510 = vpow.pop %v5509
      %v5511 = vmul.f32 %v5420, 1.442695
      %v5512 = vpow.pop %v5511
      %v5513 = vmul.f32 %v5421, 1.442695
      %v5514 = vpow.pop %v5513
      %v5515 = vmul.f32 %v5422, 1.442695
      %v5516 = vpow.pop %v5515
      %v5517 = vmul.f32 %v5423, 1.442695
      %v5518 = vpow.pop %v5517
      %v5519 = vmul.f32 %v5424, 1.442695
      %v5520 = vpow.pop %v5519
      %v5521 = vmul.f32 %v5425, 1.442695
      %v5522 = vpow.pop %v5521
      %v5523 = vmul.f32 %v5426, 1.442695
      %v5524 = vpow.pop %v5523
      %v5525 = vmul.f32 %v5427, 1.442695
      %v5526 = vpow.pop %v5525
      %v5527 = vmul.f32 %v5428, 1.442695
      %v5528 = vpow.pop %v5527
      %v5529 = vmul.f32 %v5429, 1.442695
      %v5530 = vpow.pop %v5529
      %v5531 = vmul.f32 %v5430, 1.442695
      %v5532 = vpow.pop %v5531
      %v5533 = vmul.f32 %v5431, 1.442695
      %v5534 = vpow.pop %v5533
      %v5535 = vmul.f32 %v5432, 1.442695
      %v5536 = vpow.pop %v5535
      %v5537 = vmul.f32 %v5433, 1.442695
      %v5538 = vpow.pop %v5537
      %v5539 = vmul.f32 %v5434, 1.442695
      %v5540 = vpow.pop %v5539
      %v5541 = vmul.f32 %v5435, 1.442695
      %v5542 = vpow.pop %v5541
      %v5543 = vmul.f32 %v5436, 1.442695
      %v5544 = vpow.pop %v5543
      %v5545 = vmul.f32 %v5437, 1.442695
      %v5546 = vpow.pop %v5545
      %v5547 = vmul.f32 %v5438, 1.442695
      %v5548 = vpow.pop %v5547
      %v5549 = vmul.f32 %v5439, 1.442695
      %v5550 = vpow.pop %v5549
      %v5551 = vmul.f32 %v5440, 1.442695
      %v5552 = vpow.pop %v5551
      %v5553 = vmul.f32 %v5441, 1.442695
      %v5554 = vpow.pop %v5553
      %v5555 = vmul.f32 %v5442, 1.442695
      %v5556 = vpow.pop %v5555
      %v5557 = vmul.f32 %v5443, 1.442695
      %v5558 = vpow.pop %v5557
      %v5559 = vmul.f32 %v5444, 1.442695
      %v5560 = vpow.pop %v5559
      %v5561 = vmul.f32 %v5445, 1.442695
      %v5562 = vpow.pop %v5561
      %v5563 = vmul.f32 %v5446, 1.442695
      %v5564 = vpow.pop %v5563
      %v5565 = vmul.f32 %v5447, 1.442695
      %v5566 = vpow.pop %v5565
      %v5567 = vmul.f32 %v5448, 1.442695
      %v5568 = vpow.pop %v5567
      %v5569 = vmul.f32 %v5449, 1.442695
      %v5570 = vpow.pop %v5569
      %v5571 = vmul.f32 %v5450, 1.442695
      %v5572 = vpow.pop %v5571
      %v5573 = vmul.f32 %v5451, 1.442695
      %v5574 = vpow.pop %v5573
      %v5575 = vmul.f32 %v5452, 1.442695
      %v5576 = vpow.pop %v5575
      %v5577 = vmul.f32 %v5453, 1.442695
      %v5578 = vpow.pop %v5577
      %v5579 = vmul.f32 %v5454, 1.442695
      %v5580 = vpow.pop %v5579
      %v5581 = vmul.f32 %v5455, 1.442695
      %v5582 = vpow.pop %v5581
      %v5583 = vmul.f32 %v5456, 1.442695
      %v5584 = vpow.pop %v5583
      %v5585 = vadd.f32 %v5458, %v5460
      %5586 = vadd.xlane.f32.xlu0 %v5585
      %v5587 = vpop.xlane.xlu0 %5586
      %v5588 = vadd.f32 %v5462, %v5464
      %5589 = vadd.xlane.f32.xlu0 %v5588
      %v5590 = vpop.xlane.xlu0 %5589
      %v5591 = vadd.f32 %v5466, %v5468
      %5592 = vadd.xlane.f32.xlu0 %v5591
      %v5593 = vpop.xlane.xlu0 %5592
      %v5594 = vadd.f32 %v5470, %v5472
      %5595 = vadd.xlane.f32.xlu0 %v5594
      %v5596 = vpop.xlane.xlu0 %5595
      %v5597 = vadd.f32 %v5474, %v5476
      %5598 = vadd.xlane.f32.xlu0 %v5597
      %v5599 = vpop.xlane.xlu0 %5598
      %v5600 = vadd.f32 %v5478, %v5480
      %5601 = vadd.xlane.f32.xlu0 %v5600
      %v5602 = vpop.xlane.xlu0 %5601
      %v5603 = vadd.f32 %v5482, %v5484
      %5604 = vadd.xlane.f32.xlu0 %v5603
      %v5605 = vpop.xlane.xlu0 %5604
      %v5606 = vadd.f32 %v5486, %v5488
      %5607 = vadd.xlane.f32.xlu0 %v5606
      %v5608 = vpop.xlane.xlu0 %5607
      %v5609 = vadd.f32 %v5490, %v5492
      %5610 = vadd.xlane.f32.xlu0 %v5609
      %v5611 = vpop.xlane.xlu0 %5610
      %v5612 = vadd.f32 %v5494, %v5496
      %5613 = vadd.xlane.f32.xlu0 %v5612
      %v5614 = vpop.xlane.xlu0 %5613
      %v5615 = vadd.f32 %v5498, %v5500
      %5616 = vadd.xlane.f32.xlu0 %v5615
      %v5617 = vpop.xlane.xlu0 %5616
      %v5618 = vadd.f32 %v5502, %v5504
      %5619 = vadd.xlane.f32.xlu0 %v5618
      %v5620 = vpop.xlane.xlu0 %5619
      %v5621 = vadd.f32 %v5506, %v5508
      %5622 = vadd.xlane.f32.xlu0 %v5621
      %v5623 = vpop.xlane.xlu0 %5622
      %v5624 = vadd.f32 %v5510, %v5512
      %5625 = vadd.xlane.f32.xlu0 %v5624
      %v5626 = vpop.xlane.xlu0 %5625
      %v5627 = vadd.f32 %v5514, %v5516
      %5628 = vadd.xlane.f32.xlu0 %v5627
      %v5629 = vpop.xlane.xlu0 %5628
      %v5630 = vadd.f32 %v5518, %v5520
      %5631 = vadd.xlane.f32.xlu0 %v5630
      %v5632 = vpop.xlane.xlu0 %5631
      %v5633 = vadd.f32 %v5522, %v5524
      %5634 = vadd.xlane.f32.xlu0 %v5633
      %v5635 = vpop.xlane.xlu0 %5634
      %v5636 = vadd.f32 %v5526, %v5528
      %5637 = vadd.xlane.f32.xlu0 %v5636
      %v5638 = vpop.xlane.xlu0 %5637
      %v5639 = vadd.f32 %v5530, %v5532
      %5640 = vadd.xlane.f32.xlu0 %v5639
      %v5641 = vpop.xlane.xlu0 %5640
      %v5642 = vadd.f32 %v5534, %v5536
      %5643 = vadd.xlane.f32.xlu0 %v5642
      %v5644 = vpop.xlane.xlu0 %5643
      %v5645 = vadd.f32 %v5538, %v5540
      %5646 = vadd.xlane.f32.xlu0 %v5645
      %v5647 = vpop.xlane.xlu0 %5646
      %v5648 = vadd.f32 %v5542, %v5544
      %5649 = vadd.xlane.f32.xlu0 %v5648
      %v5650 = vpop.xlane.xlu0 %5649
      %v5651 = vadd.f32 %v5546, %v5548
      %5652 = vadd.xlane.f32.xlu0 %v5651
      %v5653 = vpop.xlane.xlu0 %5652
      %v5654 = vadd.f32 %v5550, %v5552
      %5655 = vadd.xlane.f32.xlu0 %v5654
      %v5656 = vpop.xlane.xlu0 %5655
      %v5657 = vadd.f32 %v5554, %v5556
      %5658 = vadd.xlane.f32.xlu0 %v5657
      %v5659 = vpop.xlane.xlu0 %5658
      %v5660 = vadd.f32 %v5558, %v5560
      %5661 = vadd.xlane.f32.xlu0 %v5660
      %v5662 = vpop.xlane.xlu0 %5661
      %v5663 = vadd.f32 %v5562, %v5564
      %5664 = vadd.xlane.f32.xlu0 %v5663
      %v5665 = vpop.xlane.xlu0 %5664
      %v5666 = vadd.f32 %v5566, %v5568
      %5667 = vadd.xlane.f32.xlu0 %v5666
      %v5668 = vpop.xlane.xlu0 %5667
      %v5669 = vadd.f32 %v5570, %v5572
      %5670 = vadd.xlane.f32.xlu0 %v5669
      %v5671 = vpop.xlane.xlu0 %5670
      %v5672 = vadd.f32 %v5574, %v5576
      %5673 = vadd.xlane.f32.xlu0 %v5672
      %v5674 = vpop.xlane.xlu0 %5673
      %v5675 = vadd.f32 %v5578, %v5580
      %5676 = vadd.xlane.f32.xlu0 %v5675
      %v5677 = vpop.xlane.xlu0 %5676
      %v5678 = vadd.f32 %v5582, %v5584
      %5679 = vadd.xlane.f32.xlu0 %v5678
      %v5680 = vpop.xlane.xlu0 %5679
      %v5681 = vrcp.pop %v5587
      %v5682 = vmul.f32 %v5458, %v5681
      %v5683 = vmul.f32 %v5460, %v5681
      %v5684 = vrcp.pop %v5590
      %v5685 = vmul.f32 %v5462, %v5684
      %v5686 = vmul.f32 %v5464, %v5684
      %v5687 = vrcp.pop %v5593
      %v5688 = vmul.f32 %v5466, %v5687
      %v5689 = vmul.f32 %v5468, %v5687
      %v5690 = vrcp.pop %v5596
      %v5691 = vmul.f32 %v5470, %v5690
      %v5692 = vmul.f32 %v5472, %v5690
      %v5693 = vrcp.pop %v5599
      %v5694 = vmul.f32 %v5474, %v5693
      %v5695 = vmul.f32 %v5476, %v5693
      %v5696 = vrcp.pop %v5602
      %v5697 = vmul.f32 %v5478, %v5696
      %v5698 = vmul.f32 %v5480, %v5696
      %v5699 = vrcp.pop %v5605
      %v5700 = vmul.f32 %v5482, %v5699
      %v5701 = vmul.f32 %v5484, %v5699
      %v5702 = vrcp.pop %v5608
      %v5703 = vmul.f32 %v5486, %v5702
      %v5704 = vmul.f32 %v5488, %v5702
      %v5705 = vrcp.pop %v5611
      %v5706 = vmul.f32 %v5490, %v5705
      %v5707 = vmul.f32 %v5492, %v5705
      %v5708 = vrcp.pop %v5614
      %v5709 = vmul.f32 %v5494, %v5708
      %v5710 = vmul.f32 %v5496, %v5708
      %v5711 = vrcp.pop %v5617
      %v5712 = vmul.f32 %v5498, %v5711
      %v5713 = vmul.f32 %v5500, %v5711
      %v5714 = vrcp.pop %v5620
      %v5715 = vmul.f32 %v5502, %v5714
      %v5716 = vmul.f32 %v5504, %v5714
      %v5717 = vrcp.pop %v5623
      %v5718 = vmul.f32 %v5506, %v5717
      %v5719 = vmul.f32 %v5508, %v5717
      %v5720 = vrcp.pop %v5626
      %v5721 = vmul.f32 %v5510, %v5720
      %v5722 = vmul.f32 %v5512, %v5720
      %v5723 = vrcp.pop %v5629
      %v5724 = vmul.f32 %v5514, %v5723
      %v5725 = vmul.f32 %v5516, %v5723
      %v5726 = vrcp.pop %v5632
      %v5727 = vmul.f32 %v5518, %v5726
      %v5728 = vmul.f32 %v5520, %v5726
      %v5729 = vrcp.pop %v5635
      %v5730 = vmul.f32 %v5522, %v5729
      %v5731 = vmul.f32 %v5524, %v5729
      %v5732 = vrcp.pop %v5638
      %v5733 = vmul.f32 %v5526, %v5732
      %v5734 = vmul.f32 %v5528, %v5732
      %v5735 = vrcp.pop %v5641
      %v5736 = vmul.f32 %v5530, %v5735
      %v5737 = vmul.f32 %v5532, %v5735
      %v5738 = vrcp.pop %v5644
      %v5739 = vmul.f32 %v5534, %v5738
      %v5740 = vmul.f32 %v5536, %v5738
      %v5741 = vrcp.pop %v5647
      %v5742 = vmul.f32 %v5538, %v5741
      %v5743 = vmul.f32 %v5540, %v5741
      %v5744 = vrcp.pop %v5650
      %v5745 = vmul.f32 %v5542, %v5744
      %v5746 = vmul.f32 %v5544, %v5744
      %v5747 = vrcp.pop %v5653
      %v5748 = vmul.f32 %v5546, %v5747
      %v5749 = vmul.f32 %v5548, %v5747
      %v5750 = vrcp.pop %v5656
      %v5751 = vmul.f32 %v5550, %v5750
      %v5752 = vmul.f32 %v5552, %v5750
      %v5753 = vrcp.pop %v5659
      %v5754 = vmul.f32 %v5554, %v5753
      %v5755 = vmul.f32 %v5556, %v5753
      %v5756 = vrcp.pop %v5662
      %v5757 = vmul.f32 %v5558, %v5756
      %v5758 = vmul.f32 %v5560, %v5756
      %v5759 = vrcp.pop %v5665
      %v5760 = vmul.f32 %v5562, %v5759
      %v5761 = vmul.f32 %v5564, %v5759
      %v5762 = vrcp.pop %v5668
      %v5763 = vmul.f32 %v5566, %v5762
      %v5764 = vmul.f32 %v5568, %v5762
      %v5765 = vrcp.pop %v5671
      %v5766 = vmul.f32 %v5570, %v5765
      %v5767 = vmul.f32 %v5572, %v5765
      %v5768 = vrcp.pop %v5674
      %v5769 = vmul.f32 %v5574, %v5768
      %v5770 = vmul.f32 %v5576, %v5768
      %v5771 = vrcp.pop %v5677
      %v5772 = vmul.f32 %v5578, %v5771
      %v5773 = vmul.f32 %v5580, %v5771
      %v5774 = vrcp.pop %v5680
      %v5775 = vmul.f32 %v5582, %v5774
      %v5776 = vmul.f32 %v5584, %v5774
      %5777 = vmatprep.subr.mxu0 %v5683
      %5778 = vmatpush1.xpose.msra.mxu0 %v5682
      %5779 = vmatprep.subr.mxu0 %v5686
      %5780 = vmatpush1.xpose.msra.mxu0 %v5685
      %5781 = vmatprep.subr.mxu0 %v5689
      %5782 = vmatpush1.xpose.msra.mxu0 %v5688
      %5783 = vmatprep.subr.mxu0 %v5692
      %5784 = vmatpush1.xpose.msra.mxu0 %v5691
      %5785 = vmatprep.subr.mxu0 %v5695
      %5786 = vmatpush1.xpose.msra.mxu0 %v5694
      %5787 = vmatprep.subr.mxu0 %v5698
      %5788 = vmatpush1.xpose.msra.mxu0 %v5697
      %5789 = vmatprep.subr.mxu0 %v5701
      %5790 = vmatpush1.xpose.msra.mxu0 %v5700
      %5791 = vmatprep.subr.mxu0 %v5704
      %5792 = vmatpush1.xpose.msra.mxu0 %v5703
      %5793 = vmatprep.subr.mxu0 %v5707
      %5794 = vmatpush1.xpose.msra.mxu0 %v5706
      %5795 = vmatprep.subr.mxu0 %v5710
      %5796 = vmatpush1.xpose.msra.mxu0 %v5709
      %5797 = vmatprep.subr.mxu0 %v5713
      %5798 = vmatpush1.xpose.msra.mxu0 %v5712
      %5799 = vmatprep.subr.mxu0 %v5716
      %5800 = vmatpush1.xpose.msra.mxu0 %v5715
      %5801 = vmatprep.subr.mxu0 %v5719
      %5802 = vmatpush1.xpose.msra.mxu0 %v5718
      %5803 = vmatprep.subr.mxu0 %v5722
      %5804 = vmatpush1.xpose.msra.mxu0 %v5721
      %5805 = vmatprep.subr.mxu0 %v5725
      %5806 = vmatpush1.xpose.msra.mxu0 %v5724
      %5807 = vmatprep.subr.mxu0 %v5728
      %5808 = vmatpush1.xpose.msra.mxu0 %v5727
      %5809 = vmatprep.subr.mxu0 %v5731
      %5810 = vmatpush1.xpose.msra.mxu0 %v5730
      %5811 = vmatprep.subr.mxu0 %v5734
      %5812 = vmatpush1.xpose.msra.mxu0 %v5733
      %5813 = vmatprep.subr.mxu0 %v5737
      %5814 = vmatpush1.xpose.msra.mxu0 %v5736
      %5815 = vmatprep.subr.mxu0 %v5740
      %5816 = vmatpush1.xpose.msra.mxu0 %v5739
      %5817 = vmatprep.subr.mxu0 %v5743
      %5818 = vmatpush1.xpose.msra.mxu0 %v5742
      %5819 = vmatprep.subr.mxu0 %v5746
      %5820 = vmatpush1.xpose.msra.mxu0 %v5745
      %5821 = vmatprep.subr.mxu0 %v5749
      %5822 = vmatpush1.xpose.msra.mxu0 %v5748
      %5823 = vmatprep.subr.mxu0 %v5752
      %5824 = vmatpush1.xpose.msra.mxu0 %v5751
      %5825 = vmatprep.subr.mxu0 %v5755
      %5826 = vmatpush1.xpose.msra.mxu0 %v5754
      %5827 = vmatprep.subr.mxu0 %v5758
      %5828 = vmatpush1.xpose.msra.mxu0 %v5757
      %5829 = vmatprep.subr.mxu0 %v5761
      %5830 = vmatpush1.xpose.msra.mxu0 %v5760
      %5831 = vmatprep.subr.mxu0 %v5764
      %5832 = vmatpush1.xpose.msra.mxu0 %v5763
      %5833 = vmatprep.subr.mxu0 %v5767
      %5834 = vmatpush1.xpose.msra.mxu0 %v5766
      %5835 = vmatprep.subr.mxu0 %v5770
      %5836 = vmatpush1.xpose.msra.mxu0 %v5769
      %5837 = vmatprep.subr.mxu0 %v5773
      %5838 = vmatpush1.xpose.msra.mxu0 %v5772
      %5839 = vmatprep.subr.mxu0 %v5776
      %5840 = vmatpush1.xpose.msra.mxu0 %v5775
      %5841 = vmatprep.mubr.f32.mxu0 %v624
      %5842 = vmatmul.mubr.f32.gmra.mrb[0].mxu0 %v622
      %v5843 = vpop.f32.mrb[0].mxu0
      %v5844 = vadd.f32 0.0, %v5843
      %v5845 = vpop.f32.mrb[0].mxu0
      %v5846 = vadd.f32 0.0, %v5845
      %5847 = vdwg.mxu0
      %v5850 = vrot.slane %v562, 4
      %v5851 = vrot.slane %v564, 4
      %5854 = vxpose.xlu0.b32.start [1/16] %v5850, 128
      %5855 = vxpose.xlu0.b32.cont [2/16] 0.0, 128
      %5856 = vxpose.xlu0.b32.cont [3/16] 0.0, 128
      %5857 = vxpose.xlu0.b32.cont [4/16] 0.0, 128
      %5858 = vxpose.xlu0.b32.cont [5/16] 0.0, 128
      %5859 = vxpose.xlu0.b32.cont [6/16] 0.0, 128
      %5860 = vxpose.xlu0.b32.cont [7/16] 0.0, 128
      %5861 = vxpose.xlu0.b32.cont [8/16] 0.0, 128
      %5862 = vxpose.xlu0.b32.cont [9/16] 0.0, 128
      %5863 = vxpose.xlu0.b32.cont [10/16] 0.0, 128
      %5864 = vxpose.xlu0.b32.cont [11/16] 0.0, 128
      %5865 = vxpose.xlu0.b32.cont [12/16] 0.0, 128
      %5866 = vxpose.xlu0.b32.cont [13/16] 0.0, 128
      %5867 = vxpose.xlu0.b32.cont [14/16] 0.0, 128
      %5868 = vxpose.xlu0.b32.cont [15/16] 0.0, 128
      %5869 = vxpose.xlu0.b32.end [16/16] 0.0, 128
      %v5870 = vpop.trf.xlu0
      %v5871 = vpop.trf.xlu0
      %v5872 = vpop.trf.xlu0
      %v5873 = vpop.trf.xlu0
      %v5874 = vpop.trf.xlu0
      %v5875 = vpop.trf.xlu0
      %v5876 = vpop.trf.xlu0
      %v5877 = vpop.trf.xlu0
      %v5878 = vpop.trf.xlu0
      %v5879 = vpop.trf.xlu0
      %v5880 = vpop.trf.xlu0
      %v5881 = vpop.trf.xlu0
      %v5882 = vpop.trf.xlu0
      %v5883 = vpop.trf.xlu0
      %v5884 = vpop.trf.xlu0
      %v5885 = vpop.trf.xlu0
      %5886 = vxpose.xlu0.b32.start [1/16] %v5851, 128
      %5887 = vxpose.xlu0.b32.cont [2/16] 0.0, 128
      %5888 = vxpose.xlu0.b32.cont [3/16] 0.0, 128
      %5889 = vxpose.xlu0.b32.cont [4/16] 0.0, 128
      %5890 = vxpose.xlu0.b32.cont [5/16] 0.0, 128
      %5891 = vxpose.xlu0.b32.cont [6/16] 0.0, 128
      %5892 = vxpose.xlu0.b32.cont [7/16] 0.0, 128
      %5893 = vxpose.xlu0.b32.cont [8/16] 0.0, 128
      %5894 = vxpose.xlu0.b32.cont [9/16] 0.0, 128
      %5895 = vxpose.xlu0.b32.cont [10/16] 0.0, 128
      %5896 = vxpose.xlu0.b32.cont [11/16] 0.0, 128
      %5897 = vxpose.xlu0.b32.cont [12/16] 0.0, 128
      %5898 = vxpose.xlu0.b32.cont [13/16] 0.0, 128
      %5899 = vxpose.xlu0.b32.cont [14/16] 0.0, 128
      %5900 = vxpose.xlu0.b32.cont [15/16] 0.0, 128
      %5901 = vxpose.xlu0.b32.end [16/16] 0.0, 128
      %v5902 = vpop.trf.xlu0
      %v5903 = vpop.trf.xlu0
      %v5904 = vpop.trf.xlu0
      %v5905 = vpop.trf.xlu0
      %v5906 = vpop.trf.xlu0
      %v5907 = vpop.trf.xlu0
      %v5908 = vpop.trf.xlu0
      %v5909 = vpop.trf.xlu0
      %v5910 = vpop.trf.xlu0
      %v5911 = vpop.trf.xlu0
      %v5912 = vpop.trf.xlu0
      %v5913 = vpop.trf.xlu0
      %v5914 = vpop.trf.xlu0
      %v5915 = vpop.trf.xlu0
      %v5916 = vpop.trf.xlu0
      %v5917 = vpop.trf.xlu0
      %v5918 = vrot.slane %v586, 4
      %v5919 = vrot.slane %v588, 4
      %v5921 = vsel %vm708, %v5870, 0
      %v5924 = vsel %vm708, %v5871, 0
      %v5927 = vsel %vm708, %v5872, 0
      %v5930 = vsel %vm708, %v5873, 0
      %v5933 = vsel %vm708, %v5874, 0
      %v5936 = vsel %vm708, %v5875, 0
      %v5939 = vsel %vm708, %v5876, 0
      %v5942 = vsel %vm708, %v5877, 0
      %v5945 = vsel %vm708, %v5878, 0
      %v5948 = vsel %vm708, %v5879, 0
      %v5951 = vsel %vm708, %v5880, 0
      %v5954 = vsel %vm708, %v5881, 0
      %v5957 = vsel %vm708, %v5882, 0
      %v5960 = vsel %vm708, %v5883, 0
      %v5963 = vsel %vm708, %v5884, 0
      %v5966 = vsel %vm708, %v5885, 0
      %v5969 = vsel %vm708, %v5902, 0
      %v5972 = vsel %vm708, %v5903, 0
      %v5975 = vsel %vm708, %v5904, 0
      %v5978 = vsel %vm708, %v5905, 0
      %v5981 = vsel %vm708, %v5906, 0
      %v5984 = vsel %vm708, %v5907, 0
      %v5987 = vsel %vm708, %v5908, 0
      %v5990 = vsel %vm708, %v5909, 0
      %v5993 = vsel %vm708, %v5910, 0
      %v5996 = vsel %vm708, %v5911, 0
      %v5999 = vsel %vm708, %v5912, 0
      %v6002 = vsel %vm708, %v5913, 0
      %v6005 = vsel %vm708, %v5914, 0
      %v6008 = vsel %vm708, %v5915, 0
      %v6011 = vsel %vm708, %v5916, 0
      %v6014 = vsel %vm708, %v5917, 0
      %v6016 = vsel %vm805, %v5918, 0
      %v6018 = vsel %vm805, %v5919, 0
      %6020 = vmatprep.subr.mxu0 %v6018
      %6021 = vmatpush1.msra.mxu0 %v6016
      %6022 = vmatprep.subr.mxu0 0.0
      %6023 = vmatpush1.msra.mxu0 0.0
      %6024 = vmatprep.subr.mxu0 0.0
      %6025 = vmatpush1.msra.mxu0 0.0
      %6026 = vmatprep.subr.mxu0 0.0
      %6027 = vmatpush1.msra.mxu0 0.0
      %6028 = vmatprep.subr.mxu0 0.0
      %6029 = vmatpush1.msra.mxu0 0.0
      %6030 = vmatprep.subr.mxu0 0.0
      %6031 = vmatpush1.msra.mxu0 0.0
      %6032 = vmatprep.subr.mxu0 0.0
      %6033 = vmatpush1.msra.mxu0 0.0
      %6034 = vmatprep.subr.mxu0 0.0
      %6035 = vmatpush1.msra.mxu0 0.0
      %6036 = vmatprep.subr.mxu0 0.0
      %6037 = vmatpush1.msra.mxu0 0.0
      %6038 = vmatprep.subr.mxu0 0.0
      %6039 = vmatpush1.msra.mxu0 0.0
      %6040 = vmatprep.subr.mxu0 0.0
      %6041 = vmatpush1.msra.mxu0 0.0
      %6042 = vmatprep.subr.mxu0 0.0
      %6043 = vmatpush1.msra.mxu0 0.0
      %6044 = vmatprep.subr.mxu0 0.0
      %6045 = vmatpush1.msra.mxu0 0.0
      %6046 = vmatprep.subr.mxu0 0.0
      %6047 = vmatpush1.msra.mxu0 0.0
      %6048 = vmatprep.subr.mxu0 0.0
      %6049 = vmatpush1.msra.mxu0 0.0
      %6050 = vmatprep.subr.mxu0 0.0
      %6051 = vmatpush1.msra.mxu0 0.0
      %6052 = vmatprep.subr.mxu0 0.0
      %6053 = vmatpush1.msra.mxu0 0.0
      %6054 = vmatprep.subr.mxu0 0.0
      %6055 = vmatpush1.msra.mxu0 0.0
      %6056 = vmatprep.subr.mxu0 0.0
      %6057 = vmatpush1.msra.mxu0 0.0
      %6058 = vmatprep.subr.mxu0 0.0
      %6059 = vmatpush1.msra.mxu0 0.0
      %6060 = vmatprep.subr.mxu0 0.0
      %6061 = vmatpush1.msra.mxu0 0.0
      %6062 = vmatprep.subr.mxu0 0.0
      %6063 = vmatpush1.msra.mxu0 0.0
      %6064 = vmatprep.subr.mxu0 0.0
      %6065 = vmatpush1.msra.mxu0 0.0
      %6066 = vmatprep.subr.mxu0 0.0
      %6067 = vmatpush1.msra.mxu0 0.0
      %6068 = vmatprep.subr.mxu0 0.0
      %6069 = vmatpush1.msra.mxu0 0.0
      %6070 = vmatprep.subr.mxu0 0.0
      %6071 = vmatpush1.msra.mxu0 0.0
      %6072 = vmatprep.subr.mxu0 0.0
      %6073 = vmatpush1.msra.mxu0 0.0
      %6074 = vmatprep.subr.mxu0 0.0
      %6075 = vmatpush1.msra.mxu0 0.0
      %6076 = vmatprep.subr.mxu0 0.0
      %6077 = vmatpush1.msra.mxu0 0.0
      %6078 = vmatprep.subr.mxu0 0.0
      %6079 = vmatpush1.msra.mxu0 0.0
      %6080 = vmatprep.subr.mxu0 0.0
      %6081 = vmatpush1.msra.mxu0 0.0
      %6082 = vmatprep.subr.mxu0 0.0
      %6083 = vmatpush1.msra.mxu0 0.0
      %6084 = vmatprep.mubr.f32.mxu0 0.0
      %6085 = vmatmul.mubr.f32.gmra.mrb[0].mxu0 %v5921
      %v6086 = vpop.f32.mrb[0].mxu0
      %v6087 = vadd.f32 0.0, %v6086
      %v6088 = vpop.f32.mrb[0].mxu0
      %v6089 = vadd.f32 0.0, %v6088
      %6090 = vmatprep.mubr.f32.mxu0 0.0
      %6091 = vmatmul.mubr.f32.gmra.mrb[0].mxu0 %v5924
      %v6092 = vpop.f32.mrb[0].mxu0
      %v6093 = vadd.f32 0.0, %v6092
      %v6094 = vpop.f32.mrb[0].mxu0
      %v6095 = vadd.f32 0.0, %v6094
      %6096 = vmatprep.mubr.f32.mxu0 0.0
      %6097 = vmatmul.mubr.f32.gmra.mrb[0].mxu0 %v5927
      %v6098 = vpop.f32.mrb[0].mxu0
      %v6099 = vadd.f32 0.0, %v6098
      %v6100 = vpop.f32.mrb[0].mxu0
      %v6101 = vadd.f32 0.0, %v6100
      %6102 = vmatprep.mubr.f32.mxu0 0.0
      %6103 = vmatmul.mubr.f32.gmra.mrb[0].mxu0 %v5930
      %v6104 = vpop.f32.mrb[0].mxu0
      %v6105 = vadd.f32 0.0, %v6104
      %v6106 = vpop.f32.mrb[0].mxu0
      %v6107 = vadd.f32 0.0, %v6106
      %6108 = vmatprep.mubr.f32.mxu0 0.0
      %6109 = vmatmul.mubr.f32.gmra.mrb[0].mxu0 %v5933
      %v6110 = vpop.f32.mrb[0].mxu0
      %v6111 = vadd.f32 0.0, %v6110
      %v6112 = vpop.f32.mrb[0].mxu0
      %v6113 = vadd.f32 0.0, %v6112
      %6114 = vmatprep.mubr.f32.mxu0 0.0
      %6115 = vmatmul.mubr.f32.gmra.mrb[0].mxu0 %v5936
      %v6116 = vpop.f32.mrb[0].mxu0
      %v6117 = vadd.f32 0.0, %v6116
      %v6118 = vpop.f32.mrb[0].mxu0
      %v6119 = vadd.f32 0.0, %v6118
      %6120 = vmatprep.mubr.f32.mxu0 0.0
      %6121 = vmatmul.mubr.f32.gmra.mrb[0].mxu0 %v5939
      %v6122 = vpop.f32.mrb[0].mxu0
      %v6123 = vadd.f32 0.0, %v6122
      %v6124 = vpop.f32.mrb[0].mxu0
      %v6125 = vadd.f32 0.0, %v6124
      %6126 = vmatprep.mubr.f32.mxu0 0.0
      %6127 = vmatmul.mubr.f32.gmra.mrb[0].mxu0 %v5942
      %v6128 = vpop.f32.mrb[0].mxu0
      %v6129 = vadd.f32 0.0, %v6128
      %v6130 = vpop.f32.mrb[0].mxu0
      %v6131 = vadd.f32 0.0, %v6130
      %6132 = vmatprep.mubr.f32.mxu0 0.0
      %6133 = vmatmul.mubr.f32.gmra.mrb[0].mxu0 %v5945
      %v6134 = vpop.f32.mrb[0].mxu0
      %v6135 = vadd.f32 0.0, %v6134
      %v6136 = vpop.f32.mrb[0].mxu0
      %v6137 = vadd.f32 0.0, %v6136
      %6138 = vmatprep.mubr.f32.mxu0 0.0
      %6139 = vmatmul.mubr.f32.gmra.mrb[0].mxu0 %v5948
      %v6140 = vpop.f32.mrb[0].mxu0
      %v6141 = vadd.f32 0.0, %v6140
      %v6142 = vpop.f32.mrb[0].mxu0
      %v6143 = vadd.f32 0.0, %v6142
      %6144 = vmatprep.mubr.f32.mxu0 0.0
      %6145 = vmatmul.mubr.f32.gmra.mrb[0].mxu0 %v5951
      %v6146 = vpop.f32.mrb[0].mxu0
      %v6147 = vadd.f32 0.0, %v6146
      %v6148 = vpop.f32.mrb[0].mxu0
      %v6149 = vadd.f32 0.0, %v6148
      %6150 = vmatprep.mubr.f32.mxu0 0.0
      %6151 = vmatmul.mubr.f32.gmra.mrb[0].mxu0 %v5954
      %v6152 = vpop.f32.mrb[0].mxu0
      %v6153 = vadd.f32 0.0, %v6152
      %v6154 = vpop.f32.mrb[0].mxu0
      %v6155 = vadd.f32 0.0, %v6154
      %6156 = vmatprep.mubr.f32.mxu0 0.0
      %6157 = vmatmul.mubr.f32.gmra.mrb[0].mxu0 %v5957
      %v6158 = vpop.f32.mrb[0].mxu0
      %v6159 = vadd.f32 0.0, %v6158
      %v6160 = vpop.f32.mrb[0].mxu0
      %v6161 = vadd.f32 0.0, %v6160
      %6162 = vmatprep.mubr.f32.mxu0 0.0
      %6163 = vmatmul.mubr.f32.gmra.mrb[0].mxu0 %v5960
      %v6164 = vpop.f32.mrb[0].mxu0
      %v6165 = vadd.f32 0.0, %v6164
      %v6166 = vpop.f32.mrb[0].mxu0
      %v6167 = vadd.f32 0.0, %v6166
      %6168 = vmatprep.mubr.f32.mxu0 0.0
      %6169 = vmatmul.mubr.f32.gmra.mrb[0].mxu0 %v5963
      %v6170 = vpop.f32.mrb[0].mxu0
      %v6171 = vadd.f32 0.0, %v6170
      %v6172 = vpop.f32.mrb[0].mxu0
      %v6173 = vadd.f32 0.0, %v6172
      %6174 = vmatprep.mubr.f32.mxu0 0.0
      %6175 = vmatmul.mubr.f32.gmra.mrb[0].mxu0 %v5966
      %v6176 = vpop.f32.mrb[0].mxu0
      %v6177 = vadd.f32 0.0, %v6176
      %v6178 = vpop.f32.mrb[0].mxu0
      %v6179 = vadd.f32 0.0, %v6178
      %6180 = vmatprep.mubr.f32.mxu0 0.0
      %6181 = vmatmul.mubr.f32.gmra.mrb[0].mxu0 %v5969
      %v6182 = vpop.f32.mrb[0].mxu0
      %v6183 = vadd.f32 0.0, %v6182
      %v6184 = vpop.f32.mrb[0].mxu0
      %v6185 = vadd.f32 0.0, %v6184
      %6186 = vmatprep.mubr.f32.mxu0 0.0
      %6187 = vmatmul.mubr.f32.gmra.mrb[0].mxu0 %v5972
      %v6188 = vpop.f32.mrb[0].mxu0
      %v6189 = vadd.f32 0.0, %v6188
      %v6190 = vpop.f32.mrb[0].mxu0
      %v6191 = vadd.f32 0.0, %v6190
      %6192 = vmatprep.mubr.f32.mxu0 0.0
      %6193 = vmatmul.mubr.f32.gmra.mrb[0].mxu0 %v5975
      %v6194 = vpop.f32.mrb[0].mxu0
      %v6195 = vadd.f32 0.0, %v6194
      %v6196 = vpop.f32.mrb[0].mxu0
      %v6197 = vadd.f32 0.0, %v6196
      %6198 = vmatprep.mubr.f32.mxu0 0.0
      %6199 = vmatmul.mubr.f32.gmra.mrb[0].mxu0 %v5978
      %v6200 = vpop.f32.mrb[0].mxu0
      %v6201 = vadd.f32 0.0, %v6200
      %v6202 = vpop.f32.mrb[0].mxu0
      %v6203 = vadd.f32 0.0, %v6202
      %6204 = vmatprep.mubr.f32.mxu0 0.0
      %6205 = vmatmul.mubr.f32.gmra.mrb[0].mxu0 %v5981
      %v6206 = vpop.f32.mrb[0].mxu0
      %v6207 = vadd.f32 0.0, %v6206
      %v6208 = vpop.f32.mrb[0].mxu0
      %v6209 = vadd.f32 0.0, %v6208
      %6210 = vmatprep.mubr.f32.mxu0 0.0
      %6211 = vmatmul.mubr.f32.gmra.mrb[0].mxu0 %v5984
      %v6212 = vpop.f32.mrb[0].mxu0
      %v6213 = vadd.f32 0.0, %v6212
      %v6214 = vpop.f32.mrb[0].mxu0
      %v6215 = vadd.f32 0.0, %v6214
      %6216 = vmatprep.mubr.f32.mxu0 0.0
      %6217 = vmatmul.mubr.f32.gmra.mrb[0].mxu0 %v5987
      %v6218 = vpop.f32.mrb[0].mxu0
      %v6219 = vadd.f32 0.0, %v6218
      %v6220 = vpop.f32.mrb[0].mxu0
      %v6221 = vadd.f32 0.0, %v6220
      %6222 = vmatprep.mubr.f32.mxu0 0.0
      %6223 = vmatmul.mubr.f32.gmra.mrb[0].mxu0 %v5990
      %v6224 = vpop.f32.mrb[0].mxu0
      %v6225 = vadd.f32 0.0, %v6224
      %v6226 = vpop.f32.mrb[0].mxu0
      %v6227 = vadd.f32 0.0, %v6226
      %6228 = vmatprep.mubr.f32.mxu0 0.0
      %6229 = vmatmul.mubr.f32.gmra.mrb[0].mxu0 %v5993
      %v6230 = vpop.f32.mrb[0].mxu0
      %v6231 = vadd.f32 0.0, %v6230
      %v6232 = vpop.f32.mrb[0].mxu0
      %v6233 = vadd.f32 0.0, %v6232
      %6234 = vmatprep.mubr.f32.mxu0 0.0
      %6235 = vmatmul.mubr.f32.gmra.mrb[0].mxu0 %v5996
      %v6236 = vpop.f32.mrb[0].mxu0
      %v6237 = vadd.f32 0.0, %v6236
      %v6238 = vpop.f32.mrb[0].mxu0
      %v6239 = vadd.f32 0.0, %v6238
      %6240 = vmatprep.mubr.f32.mxu0 0.0
      %6241 = vmatmul.mubr.f32.gmra.mrb[0].mxu0 %v5999
      %v6242 = vpop.f32.mrb[0].mxu0
      %v6243 = vadd.f32 0.0, %v6242
      %v6244 = vpop.f32.mrb[0].mxu0
      %v6245 = vadd.f32 0.0, %v6244
      %6246 = vmatprep.mubr.f32.mxu0 0.0
      %6247 = vmatmul.mubr.f32.gmra.mrb[0].mxu0 %v6002
      %v6248 = vpop.f32.mrb[0].mxu0
      %v6249 = vadd.f32 0.0, %v6248
      %v6250 = vpop.f32.mrb[0].mxu0
      %v6251 = vadd.f32 0.0, %v6250
      %6252 = vmatprep.mubr.f32.mxu0 0.0
      %6253 = vmatmul.mubr.f32.gmra.mrb[0].mxu0 %v6005
      %v6254 = vpop.f32.mrb[0].mxu0
      %v6255 = vadd.f32 0.0, %v6254
      %v6256 = vpop.f32.mrb[0].mxu0
      %v6257 = vadd.f32 0.0, %v6256
      %6258 = vmatprep.mubr.f32.mxu0 0.0
      %6259 = vmatmul.mubr.f32.gmra.mrb[0].mxu0 %v6008
      %v6260 = vpop.f32.mrb[0].mxu0
      %v6261 = vadd.f32 0.0, %v6260
      %v6262 = vpop.f32.mrb[0].mxu0
      %v6263 = vadd.f32 0.0, %v6262
      %6264 = vmatprep.mubr.f32.mxu0 0.0
      %6265 = vmatmul.mubr.f32.gmra.mrb[0].mxu0 %v6011
      %v6266 = vpop.f32.mrb[0].mxu0
      %v6267 = vadd.f32 0.0, %v6266
      %v6268 = vpop.f32.mrb[0].mxu0
      %v6269 = vadd.f32 0.0, %v6268
      %6270 = vmatprep.mubr.f32.mxu0 0.0
      %6271 = vmatmul.mubr.f32.gmra.mrb[0].mxu0 %v6014
      %v6272 = vpop.f32.mrb[0].mxu0
      %v6273 = vadd.f32 0.0, %v6272
      %v6274 = vpop.f32.mrb[0].mxu0
      %v6275 = vadd.f32 0.0, %v6274
      %6276 = vdwg.mxu0
      %v6277 = vmul.f32 %v6087, 0.5
      %v6278 = vmul.f32 %v6089, 0.5
      %v6279 = vmul.f32 %v6093, 0.5
      %v6280 = vmul.f32 %v6095, 0.5
      %v6281 = vmul.f32 %v6099, 0.5
      %v6282 = vmul.f32 %v6101, 0.5
      %v6283 = vmul.f32 %v6105, 0.5
      %v6284 = vmul.f32 %v6107, 0.5
      %v6285 = vmul.f32 %v6111, 0.5
      %v6286 = vmul.f32 %v6113, 0.5
      %v6287 = vmul.f32 %v6117, 0.5
      %v6288 = vmul.f32 %v6119, 0.5
      %v6289 = vmul.f32 %v6123, 0.5
      %v6290 = vmul.f32 %v6125, 0.5
      %v6291 = vmul.f32 %v6129, 0.5
      %v6292 = vmul.f32 %v6131, 0.5
      %v6293 = vmul.f32 %v6135, 0.5
      %v6294 = vmul.f32 %v6137, 0.5
      %v6295 = vmul.f32 %v6141, 0.5
      %v6296 = vmul.f32 %v6143, 0.5
      %v6297 = vmul.f32 %v6147, 0.5
      %v6298 = vmul.f32 %v6149, 0.5
      %v6299 = vmul.f32 %v6153, 0.5
      %v6300 = vmul.f32 %v6155, 0.5
      %v6301 = vmul.f32 %v6159, 0.5
      %v6302 = vmul.f32 %v6161, 0.5
      %v6303 = vmul.f32 %v6165, 0.5
      %v6304 = vmul.f32 %v6167, 0.5
      %v6305 = vmul.f32 %v6171, 0.5
      %v6306 = vmul.f32 %v6173, 0.5
      %v6307 = vmul.f32 %v6177, 0.5
      %v6308 = vmul.f32 %v6179, 0.5
      %v6309 = vmul.f32 %v6183, 0.5
      %v6310 = vmul.f32 %v6185, 0.5
      %v6311 = vmul.f32 %v6189, 0.5
      %v6312 = vmul.f32 %v6191, 0.5
      %v6313 = vmul.f32 %v6195, 0.5
      %v6314 = vmul.f32 %v6197, 0.5
      %v6315 = vmul.f32 %v6201, 0.5
      %v6316 = vmul.f32 %v6203, 0.5
      %v6317 = vmul.f32 %v6207, 0.5
      %v6318 = vmul.f32 %v6209, 0.5
      %v6319 = vmul.f32 %v6213, 0.5
      %v6320 = vmul.f32 %v6215, 0.5
      %v6321 = vmul.f32 %v6219, 0.5
      %v6322 = vmul.f32 %v6221, 0.5
      %v6323 = vmul.f32 %v6225, 0.5
      %v6324 = vmul.f32 %v6227, 0.5
      %v6325 = vmul.f32 %v6231, 0.5
      %v6326 = vmul.f32 %v6233, 0.5
      %v6327 = vmul.f32 %v6237, 0.5
      %v6328 = vmul.f32 %v6239, 0.5
      %v6329 = vmul.f32 %v6243, 0.5
      %v6330 = vmul.f32 %v6245, 0.5
      %v6331 = vmul.f32 %v6249, 0.5
      %v6332 = vmul.f32 %v6251, 0.5
      %v6333 = vmul.f32 %v6255, 0.5
      %v6334 = vmul.f32 %v6257, 0.5
      %v6335 = vmul.f32 %v6261, 0.5
      %v6336 = vmul.f32 %v6263, 0.5
      %v6337 = vmul.f32 %v6267, 0.5
      %v6338 = vmul.f32 %v6269, 0.5
      %v6339 = vmul.f32 %v6273, 0.5
      %v6340 = vmul.f32 %v6275, 0.5
      %v6341 = vmax.f32 %v6277, %v6278
      %6342 = vmax.xlane.f32.xlu0 %v6341
      %v6343 = vpop.xlane.xlu0 %6342
      %v6344 = vmax.f32 %v6279, %v6280
      %6345 = vmax.xlane.f32.xlu0 %v6344
      %v6346 = vpop.xlane.xlu0 %6345
      %v6347 = vmax.f32 %v6281, %v6282
      %6348 = vmax.xlane.f32.xlu0 %v6347
      %v6349 = vpop.xlane.xlu0 %6348
      %v6350 = vmax.f32 %v6283, %v6284
      %6351 = vmax.xlane.f32.xlu0 %v6350
      %v6352 = vpop.xlane.xlu0 %6351
      %v6353 = vmax.f32 %v6285, %v6286
      %6354 = vmax.xlane.f32.xlu0 %v6353
      %v6355 = vpop.xlane.xlu0 %6354
      %v6356 = vmax.f32 %v6287, %v6288
      %6357 = vmax.xlane.f32.xlu0 %v6356
      %v6358 = vpop.xlane.xlu0 %6357
      %v6359 = vmax.f32 %v6289, %v6290
      %6360 = vmax.xlane.f32.xlu0 %v6359
      %v6361 = vpop.xlane.xlu0 %6360
      %v6362 = vmax.f32 %v6291, %v6292
      %6363 = vmax.xlane.f32.xlu0 %v6362
      %v6364 = vpop.xlane.xlu0 %6363
      %v6365 = vmax.f32 %v6293, %v6294
      %6366 = vmax.xlane.f32.xlu0 %v6365
      %v6367 = vpop.xlane.xlu0 %6366
      %v6368 = vmax.f32 %v6295, %v6296
      %6369 = vmax.xlane.f32.xlu0 %v6368
      %v6370 = vpop.xlane.xlu0 %6369
      %v6371 = vmax.f32 %v6297, %v6298
      %6372 = vmax.xlane.f32.xlu0 %v6371
      %v6373 = vpop.xlane.xlu0 %6372
      %v6374 = vmax.f32 %v6299, %v6300
      %6375 = vmax.xlane.f32.xlu0 %v6374
      %v6376 = vpop.xlane.xlu0 %6375
      %v6377 = vmax.f32 %v6301, %v6302
      %6378 = vmax.xlane.f32.xlu0 %v6377
      %v6379 = vpop.xlane.xlu0 %6378
      %v6380 = vmax.f32 %v6303, %v6304
      %6381 = vmax.xlane.f32.xlu0 %v6380
      %v6382 = vpop.xlane.xlu0 %6381
      %v6383 = vmax.f32 %v6305, %v6306
      %6384 = vmax.xlane.f32.xlu0 %v6383
      %v6385 = vpop.xlane.xlu0 %6384
      %v6386 = vmax.f32 %v6307, %v6308
      %6387 = vmax.xlane.f32.xlu0 %v6386
      %v6388 = vpop.xlane.xlu0 %6387
      %v6389 = vmax.f32 %v6309, %v6310
      %6390 = vmax.xlane.f32.xlu0 %v6389
      %v6391 = vpop.xlane.xlu0 %6390
      %v6392 = vmax.f32 %v6311, %v6312
      %6393 = vmax.xlane.f32.xlu0 %v6392
      %v6394 = vpop.xlane.xlu0 %6393
      %v6395 = vmax.f32 %v6313, %v6314
      %6396 = vmax.xlane.f32.xlu0 %v6395
      %v6397 = vpop.xlane.xlu0 %6396
      %v6398 = vmax.f32 %v6315, %v6316
      %6399 = vmax.xlane.f32.xlu0 %v6398
      %v6400 = vpop.xlane.xlu0 %6399
      %v6401 = vmax.f32 %v6317, %v6318
      %6402 = vmax.xlane.f32.xlu0 %v6401
      %v6403 = vpop.xlane.xlu0 %6402
      %v6404 = vmax.f32 %v6319, %v6320
      %6405 = vmax.xlane.f32.xlu0 %v6404
      %v6406 = vpop.xlane.xlu0 %6405
      %v6407 = vmax.f32 %v6321, %v6322
      %6408 = vmax.xlane.f32.xlu0 %v6407
      %v6409 = vpop.xlane.xlu0 %6408
      %v6410 = vmax.f32 %v6323, %v6324
      %6411 = vmax.xlane.f32.xlu0 %v6410
      %v6412 = vpop.xlane.xlu0 %6411
      %v6413 = vmax.f32 %v6325, %v6326
      %6414 = vmax.xlane.f32.xlu0 %v6413
      %v6415 = vpop.xlane.xlu0 %6414
      %v6416 = vmax.f32 %v6327, %v6328
      %6417 = vmax.xlane.f32.xlu0 %v6416
      %v6418 = vpop.xlane.xlu0 %6417
      %v6419 = vmax.f32 %v6329, %v6330
      %6420 = vmax.xlane.f32.xlu0 %v6419
      %v6421 = vpop.xlane.xlu0 %6420
      %v6422 = vmax.f32 %v6331, %v6332
      %6423 = vmax.xlane.f32.xlu0 %v6422
      %v6424 = vpop.xlane.xlu0 %6423
      %v6425 = vmax.f32 %v6333, %v6334
      %6426 = vmax.xlane.f32.xlu0 %v6425
      %v6427 = vpop.xlane.xlu0 %6426
      %v6428 = vmax.f32 %v6335, %v6336
      %6429 = vmax.xlane.f32.xlu0 %v6428
      %v6430 = vpop.xlane.xlu0 %6429
      %v6431 = vmax.f32 %v6337, %v6338
      %6432 = vmax.xlane.f32.xlu0 %v6431
      %v6433 = vpop.xlane.xlu0 %6432
      %v6434 = vmax.f32 %v6339, %v6340
      %6435 = vmax.xlane.f32.xlu0 %v6434
      %v6436 = vpop.xlane.xlu0 %6435
      %v6437 = vsub.f32 %v6277, %v6343
      %v6438 = vsub.f32 %v6278, %v6343
      %v6439 = vsub.f32 %v6279, %v6346
      %v6440 = vsub.f32 %v6280, %v6346
      %v6441 = vsub.f32 %v6281, %v6349
      %v6442 = vsub.f32 %v6282, %v6349
      %v6443 = vsub.f32 %v6283, %v6352
      %v6444 = vsub.f32 %v6284, %v6352
      %v6445 = vsub.f32 %v6285, %v6355
      %v6446 = vsub.f32 %v6286, %v6355
      %v6447 = vsub.f32 %v6287, %v6358
      %v6448 = vsub.f32 %v6288, %v6358
      %v6449 = vsub.f32 %v6289, %v6361
      %v6450 = vsub.f32 %v6290, %v6361
      %v6451 = vsub.f32 %v6291, %v6364
      %v6452 = vsub.f32 %v6292, %v6364
      %v6453 = vsub.f32 %v6293, %v6367
      %v6454 = vsub.f32 %v6294, %v6367
      %v6455 = vsub.f32 %v6295, %v6370
      %v6456 = vsub.f32 %v6296, %v6370
      %v6457 = vsub.f32 %v6297, %v6373
      %v6458 = vsub.f32 %v6298, %v6373
      %v6459 = vsub.f32 %v6299, %v6376
      %v6460 = vsub.f32 %v6300, %v6376
      %v6461 = vsub.f32 %v6301, %v6379
      %v6462 = vsub.f32 %v6302, %v6379
      %v6463 = vsub.f32 %v6303, %v6382
      %v6464 = vsub.f32 %v6304, %v6382
      %v6465 = vsub.f32 %v6305, %v6385
      %v6466 = vsub.f32 %v6306, %v6385
      %v6467 = vsub.f32 %v6307, %v6388
      %v6468 = vsub.f32 %v6308, %v6388
      %v6469 = vsub.f32 %v6309, %v6391
      %v6470 = vsub.f32 %v6310, %v6391
      %v6471 = vsub.f32 %v6311, %v6394
      %v6472 = vsub.f32 %v6312, %v6394
      %v6473 = vsub.f32 %v6313, %v6397
      %v6474 = vsub.f32 %v6314, %v6397
      %v6475 = vsub.f32 %v6315, %v6400
      %v6476 = vsub.f32 %v6316, %v6400
      %v6477 = vsub.f32 %v6317, %v6403
      %v6478 = vsub.f32 %v6318, %v6403
      %v6479 = vsub.f32 %v6319, %v6406
      %v6480 = vsub.f32 %v6320, %v6406
      %v6481 = vsub.f32 %v6321, %v6409
      %v6482 = vsub.f32 %v6322, %v6409
      %v6483 = vsub.f32 %v6323, %v6412
      %v6484 = vsub.f32 %v6324, %v6412
      %v6485 = vsub.f32 %v6325, %v6415
      %v6486 = vsub.f32 %v6326, %v6415
      %v6487 = vsub.f32 %v6327, %v6418
      %v6488 = vsub.f32 %v6328, %v6418
      %v6489 = vsub.f32 %v6329, %v6421
      %v6490 = vsub.f32 %v6330, %v6421
      %v6491 = vsub.f32 %v6331, %v6424
      %v6492 = vsub.f32 %v6332, %v6424
      %v6493 = vsub.f32 %v6333, %v6427
      %v6494 = vsub.f32 %v6334, %v6427
      %v6495 = vsub.f32 %v6335, %v6430
      %v6496 = vsub.f32 %v6336, %v6430
      %v6497 = vsub.f32 %v6337, %v6433
      %v6498 = vsub.f32 %v6338, %v6433
      %v6499 = vsub.f32 %v6339, %v6436
      %v6500 = vsub.f32 %v6340, %v6436
      %v6501 = vmul.f32 %v6437, 1.442695
      %v6502 = vpow.pop %v6501
      %v6503 = vmul.f32 %v6438, 1.442695
      %v6504 = vpow.pop %v6503
      %v6505 = vmul.f32 %v6439, 1.442695
      %v6506 = vpow.pop %v6505
      %v6507 = vmul.f32 %v6440, 1.442695
      %v6508 = vpow.pop %v6507
      %v6509 = vmul.f32 %v6441, 1.442695
      %v6510 = vpow.pop %v6509
      %v6511 = vmul.f32 %v6442, 1.442695
      %v6512 = vpow.pop %v6511
      %v6513 = vmul.f32 %v6443, 1.442695
      %v6514 = vpow.pop %v6513
      %v6515 = vmul.f32 %v6444, 1.442695
      %v6516 = vpow.pop %v6515
      %v6517 = vmul.f32 %v6445, 1.442695
      %v6518 = vpow.pop %v6517
      %v6519 = vmul.f32 %v6446, 1.442695
      %v6520 = vpow.pop %v6519
      %v6521 = vmul.f32 %v6447, 1.442695
      %v6522 = vpow.pop %v6521
      %v6523 = vmul.f32 %v6448, 1.442695
      %v6524 = vpow.pop %v6523
      %v6525 = vmul.f32 %v6449, 1.442695
      %v6526 = vpow.pop %v6525
      %v6527 = vmul.f32 %v6450, 1.442695
      %v6528 = vpow.pop %v6527
      %v6529 = vmul.f32 %v6451, 1.442695
      %v6530 = vpow.pop %v6529
      %v6531 = vmul.f32 %v6452, 1.442695
      %v6532 = vpow.pop %v6531
      %v6533 = vmul.f32 %v6453, 1.442695
      %v6534 = vpow.pop %v6533
      %v6535 = vmul.f32 %v6454, 1.442695
      %v6536 = vpow.pop %v6535
      %v6537 = vmul.f32 %v6455, 1.442695
      %v6538 = vpow.pop %v6537
      %v6539 = vmul.f32 %v6456, 1.442695
      %v6540 = vpow.pop %v6539
      %v6541 = vmul.f32 %v6457, 1.442695
      %v6542 = vpow.pop %v6541
      %v6543 = vmul.f32 %v6458, 1.442695
      %v6544 = vpow.pop %v6543
      %v6545 = vmul.f32 %v6459, 1.442695
      %v6546 = vpow.pop %v6545
      %v6547 = vmul.f32 %v6460, 1.442695
      %v6548 = vpow.pop %v6547
      %v6549 = vmul.f32 %v6461, 1.442695
      %v6550 = vpow.pop %v6549
      %v6551 = vmul.f32 %v6462, 1.442695
      %v6552 = vpow.pop %v6551
      %v6553 = vmul.f32 %v6463, 1.442695
      %v6554 = vpow.pop %v6553
      %v6555 = vmul.f32 %v6464, 1.442695
      %v6556 = vpow.pop %v6555
      %v6557 = vmul.f32 %v6465, 1.442695
      %v6558 = vpow.pop %v6557
      %v6559 = vmul.f32 %v6466, 1.442695
      %v6560 = vpow.pop %v6559
      %v6561 = vmul.f32 %v6467, 1.442695
      %v6562 = vpow.pop %v6561
      %v6563 = vmul.f32 %v6468, 1.442695
      %v6564 = vpow.pop %v6563
      %v6565 = vmul.f32 %v6469, 1.442695
      %v6566 = vpow.pop %v6565
      %v6567 = vmul.f32 %v6470, 1.442695
      %v6568 = vpow.pop %v6567
      %v6569 = vmul.f32 %v6471, 1.442695
      %v6570 = vpow.pop %v6569
      %v6571 = vmul.f32 %v6472, 1.442695
      %v6572 = vpow.pop %v6571
      %v6573 = vmul.f32 %v6473, 1.442695
      %v6574 = vpow.pop %v6573
      %v6575 = vmul.f32 %v6474, 1.442695
      %v6576 = vpow.pop %v6575
      %v6577 = vmul.f32 %v6475, 1.442695
      %v6578 = vpow.pop %v6577
      %v6579 = vmul.f32 %v6476, 1.442695
      %v6580 = vpow.pop %v6579
      %v6581 = vmul.f32 %v6477, 1.442695
      %v6582 = vpow.pop %v6581
      %v6583 = vmul.f32 %v6478, 1.442695
      %v6584 = vpow.pop %v6583
      %v6585 = vmul.f32 %v6479, 1.442695
      %v6586 = vpow.pop %v6585
      %v6587 = vmul.f32 %v6480, 1.442695
      %v6588 = vpow.pop %v6587
      %v6589 = vmul.f32 %v6481, 1.442695
      %v6590 = vpow.pop %v6589
      %v6591 = vmul.f32 %v6482, 1.442695
      %v6592 = vpow.pop %v6591
      %v6593 = vmul.f32 %v6483, 1.442695
      %v6594 = vpow.pop %v6593
      %v6595 = vmul.f32 %v6484, 1.442695
      %v6596 = vpow.pop %v6595
      %v6597 = vmul.f32 %v6485, 1.442695
      %v6598 = vpow.pop %v6597
      %v6599 = vmul.f32 %v6486, 1.442695
      %v6600 = vpow.pop %v6599
      %v6601 = vmul.f32 %v6487, 1.442695
      %v6602 = vpow.pop %v6601
      %v6603 = vmul.f32 %v6488, 1.442695
      %v6604 = vpow.pop %v6603
      %v6605 = vmul.f32 %v6489, 1.442695
      %v6606 = vpow.pop %v6605
      %v6607 = vmul.f32 %v6490, 1.442695
      %v6608 = vpow.pop %v6607
      %v6609 = vmul.f32 %v6491, 1.442695
      %v6610 = vpow.pop %v6609
      %v6611 = vmul.f32 %v6492, 1.442695
      %v6612 = vpow.pop %v6611
      %v6613 = vmul.f32 %v6493, 1.442695
      %v6614 = vpow.pop %v6613
      %v6615 = vmul.f32 %v6494, 1.442695
      %v6616 = vpow.pop %v6615
      %v6617 = vmul.f32 %v6495, 1.442695
      %v6618 = vpow.pop %v6617
      %v6619 = vmul.f32 %v6496, 1.442695
      %v6620 = vpow.pop %v6619
      %v6621 = vmul.f32 %v6497, 1.442695
      %v6622 = vpow.pop %v6621
      %v6623 = vmul.f32 %v6498, 1.442695
      %v6624 = vpow.pop %v6623
      %v6625 = vmul.f32 %v6499, 1.442695
      %v6626 = vpow.pop %v6625
      %v6627 = vmul.f32 %v6500, 1.442695
      %v6628 = vpow.pop %v6627
      %v6629 = vadd.f32 %v6502, %v6504
      %6630 = vadd.xlane.f32.xlu0 %v6629
      %v6631 = vpop.xlane.xlu0 %6630
      %v6632 = vadd.f32 %v6506, %v6508
      %6633 = vadd.xlane.f32.xlu0 %v6632
      %v6634 = vpop.xlane.xlu0 %6633
      %v6635 = vadd.f32 %v6510, %v6512
      %6636 = vadd.xlane.f32.xlu0 %v6635
      %v6637 = vpop.xlane.xlu0 %6636
      %v6638 = vadd.f32 %v6514, %v6516
      %6639 = vadd.xlane.f32.xlu0 %v6638
      %v6640 = vpop.xlane.xlu0 %6639
      %v6641 = vadd.f32 %v6518, %v6520
      %6642 = vadd.xlane.f32.xlu0 %v6641
      %v6643 = vpop.xlane.xlu0 %6642
      %v6644 = vadd.f32 %v6522, %v6524
      %6645 = vadd.xlane.f32.xlu0 %v6644
      %v6646 = vpop.xlane.xlu0 %6645
      %v6647 = vadd.f32 %v6526, %v6528
      %6648 = vadd.xlane.f32.xlu0 %v6647
      %v6649 = vpop.xlane.xlu0 %6648
      %v6650 = vadd.f32 %v6530, %v6532
      %6651 = vadd.xlane.f32.xlu0 %v6650
      %v6652 = vpop.xlane.xlu0 %6651
      %v6653 = vadd.f32 %v6534, %v6536
      %6654 = vadd.xlane.f32.xlu0 %v6653
      %v6655 = vpop.xlane.xlu0 %6654
      %v6656 = vadd.f32 %v6538, %v6540
      %6657 = vadd.xlane.f32.xlu0 %v6656
      %v6658 = vpop.xlane.xlu0 %6657
      %v6659 = vadd.f32 %v6542, %v6544
      %6660 = vadd.xlane.f32.xlu0 %v6659
      %v6661 = vpop.xlane.xlu0 %6660
      %v6662 = vadd.f32 %v6546, %v6548
      %6663 = vadd.xlane.f32.xlu0 %v6662
      %v6664 = vpop.xlane.xlu0 %6663
      %v6665 = vadd.f32 %v6550, %v6552
      %6666 = vadd.xlane.f32.xlu0 %v6665
      %v6667 = vpop.xlane.xlu0 %6666
      %v6668 = vadd.f32 %v6554, %v6556
      %6669 = vadd.xlane.f32.xlu0 %v6668
      %v6670 = vpop.xlane.xlu0 %6669
      %v6671 = vadd.f32 %v6558, %v6560
      %6672 = vadd.xlane.f32.xlu0 %v6671
      %v6673 = vpop.xlane.xlu0 %6672
      %v6674 = vadd.f32 %v6562, %v6564
      %6675 = vadd.xlane.f32.xlu0 %v6674
      %v6676 = vpop.xlane.xlu0 %6675
      %v6677 = vadd.f32 %v6566, %v6568
      %6678 = vadd.xlane.f32.xlu0 %v6677
      %v6679 = vpop.xlane.xlu0 %6678
      %v6680 = vadd.f32 %v6570, %v6572
      %6681 = vadd.xlane.f32.xlu0 %v6680
      %v6682 = vpop.xlane.xlu0 %6681
      %v6683 = vadd.f32 %v6574, %v6576
      %6684 = vadd.xlane.f32.xlu0 %v6683
      %v6685 = vpop.xlane.xlu0 %6684
      %v6686 = vadd.f32 %v6578, %v6580
      %6687 = vadd.xlane.f32.xlu0 %v6686
      %v6688 = vpop.xlane.xlu0 %6687
      %v6689 = vadd.f32 %v6582, %v6584
      %6690 = vadd.xlane.f32.xlu0 %v6689
      %v6691 = vpop.xlane.xlu0 %6690
      %v6692 = vadd.f32 %v6586, %v6588
      %6693 = vadd.xlane.f32.xlu0 %v6692
      %v6694 = vpop.xlane.xlu0 %6693
      %v6695 = vadd.f32 %v6590, %v6592
      %6696 = vadd.xlane.f32.xlu0 %v6695
      %v6697 = vpop.xlane.xlu0 %6696
      %v6698 = vadd.f32 %v6594, %v6596
      %6699 = vadd.xlane.f32.xlu0 %v6698
      %v6700 = vpop.xlane.xlu0 %6699
      %v6701 = vadd.f32 %v6598, %v6600
      %6702 = vadd.xlane.f32.xlu0 %v6701
      %v6703 = vpop.xlane.xlu0 %6702
      %v6704 = vadd.f32 %v6602, %v6604
      %6705 = vadd.xlane.f32.xlu0 %v6704
      %v6706 = vpop.xlane.xlu0 %6705
      %v6707 = vadd.f32 %v6606, %v6608
      %6708 = vadd.xlane.f32.xlu0 %v6707
      %v6709 = vpop.xlane.xlu0 %6708
      %v6710 = vadd.f32 %v6610, %v6612
      %6711 = vadd.xlane.f32.xlu0 %v6710
      %v6712 = vpop.xlane.xlu0 %6711
      %v6713 = vadd.f32 %v6614, %v6616
      %6714 = vadd.xlane.f32.xlu0 %v6713
      %v6715 = vpop.xlane.xlu0 %6714
      %v6716 = vadd.f32 %v6618, %v6620
      %6717 = vadd.xlane.f32.xlu0 %v6716
      %v6718 = vpop.xlane.xlu0 %6717
      %v6719 = vadd.f32 %v6622, %v6624
      %6720 = vadd.xlane.f32.xlu0 %v6719
      %v6721 = vpop.xlane.xlu0 %6720
      %v6722 = vadd.f32 %v6626, %v6628
      %6723 = vadd.xlane.f32.xlu0 %v6722
      %v6724 = vpop.xlane.xlu0 %6723
      %v6725 = vrcp.pop %v6631
      %v6726 = vmul.f32 %v6502, %v6725
      %v6727 = vmul.f32 %v6504, %v6725
      %v6728 = vrcp.pop %v6634
      %v6729 = vmul.f32 %v6506, %v6728
      %v6730 = vmul.f32 %v6508, %v6728
      %v6731 = vrcp.pop %v6637
      %v6732 = vmul.f32 %v6510, %v6731
      %v6733 = vmul.f32 %v6512, %v6731
      %v6734 = vrcp.pop %v6640
      %v6735 = vmul.f32 %v6514, %v6734
      %v6736 = vmul.f32 %v6516, %v6734
      %v6737 = vrcp.pop %v6643
      %v6738 = vmul.f32 %v6518, %v6737
      %v6739 = vmul.f32 %v6520, %v6737
      %v6740 = vrcp.pop %v6646
      %v6741 = vmul.f32 %v6522, %v6740
      %v6742 = vmul.f32 %v6524, %v6740
      %v6743 = vrcp.pop %v6649
      %v6744 = vmul.f32 %v6526, %v6743
      %v6745 = vmul.f32 %v6528, %v6743
      %v6746 = vrcp.pop %v6652
      %v6747 = vmul.f32 %v6530, %v6746
      %v6748 = vmul.f32 %v6532, %v6746
      %v6749 = vrcp.pop %v6655
      %v6750 = vmul.f32 %v6534, %v6749
      %v6751 = vmul.f32 %v6536, %v6749
      %v6752 = vrcp.pop %v6658
      %v6753 = vmul.f32 %v6538, %v6752
      %v6754 = vmul.f32 %v6540, %v6752
      %v6755 = vrcp.pop %v6661
      %v6756 = vmul.f32 %v6542, %v6755
      %v6757 = vmul.f32 %v6544, %v6755
      %v6758 = vrcp.pop %v6664
      %v6759 = vmul.f32 %v6546, %v6758
      %v6760 = vmul.f32 %v6548, %v6758
      %v6761 = vrcp.pop %v6667
      %v6762 = vmul.f32 %v6550, %v6761
      %v6763 = vmul.f32 %v6552, %v6761
      %v6764 = vrcp.pop %v6670
      %v6765 = vmul.f32 %v6554, %v6764
      %v6766 = vmul.f32 %v6556, %v6764
      %v6767 = vrcp.pop %v6673
      %v6768 = vmul.f32 %v6558, %v6767
      %v6769 = vmul.f32 %v6560, %v6767
      %v6770 = vrcp.pop %v6676
      %v6771 = vmul.f32 %v6562, %v6770
      %v6772 = vmul.f32 %v6564, %v6770
      %v6773 = vrcp.pop %v6679
      %v6774 = vmul.f32 %v6566, %v6773
      %v6775 = vmul.f32 %v6568, %v6773
      %v6776 = vrcp.pop %v6682
      %v6777 = vmul.f32 %v6570, %v6776
      %v6778 = vmul.f32 %v6572, %v6776
      %v6779 = vrcp.pop %v6685
      %v6780 = vmul.f32 %v6574, %v6779
      %v6781 = vmul.f32 %v6576, %v6779
      %v6782 = vrcp.pop %v6688
      %v6783 = vmul.f32 %v6578, %v6782
      %v6784 = vmul.f32 %v6580, %v6782
      %v6785 = vrcp.pop %v6691
      %v6786 = vmul.f32 %v6582, %v6785
      %v6787 = vmul.f32 %v6584, %v6785
      %v6788 = vrcp.pop %v6694
      %v6789 = vmul.f32 %v6586, %v6788
      %v6790 = vmul.f32 %v6588, %v6788
      %v6791 = vrcp.pop %v6697
      %v6792 = vmul.f32 %v6590, %v6791
      %v6793 = vmul.f32 %v6592, %v6791
      %v6794 = vrcp.pop %v6700
      %v6795 = vmul.f32 %v6594, %v6794
      %v6796 = vmul.f32 %v6596, %v6794
      %v6797 = vrcp.pop %v6703
      %v6798 = vmul.f32 %v6598, %v6797
      %v6799 = vmul.f32 %v6600, %v6797
      %v6800 = vrcp.pop %v6706
      %v6801 = vmul.f32 %v6602, %v6800
      %v6802 = vmul.f32 %v6604, %v6800
      %v6803 = vrcp.pop %v6709
      %v6804 = vmul.f32 %v6606, %v6803
      %v6805 = vmul.f32 %v6608, %v6803
      %v6806 = vrcp.pop %v6712
      %v6807 = vmul.f32 %v6610, %v6806
      %v6808 = vmul.f32 %v6612, %v6806
      %v6809 = vrcp.pop %v6715
      %v6810 = vmul.f32 %v6614, %v6809
      %v6811 = vmul.f32 %v6616, %v6809
      %v6812 = vrcp.pop %v6718
      %v6813 = vmul.f32 %v6618, %v6812
      %v6814 = vmul.f32 %v6620, %v6812
      %v6815 = vrcp.pop %v6721
      %v6816 = vmul.f32 %v6622, %v6815
      %v6817 = vmul.f32 %v6624, %v6815
      %v6818 = vrcp.pop %v6724
      %v6819 = vmul.f32 %v6626, %v6818
      %v6820 = vmul.f32 %v6628, %v6818
      %6821 = vmatprep.subr.mxu0 %v6727
      %6822 = vmatpush1.xpose.msra.mxu0 %v6726
      %6823 = vmatprep.subr.mxu0 %v6730
      %6824 = vmatpush1.xpose.msra.mxu0 %v6729
      %6825 = vmatprep.subr.mxu0 %v6733
      %6826 = vmatpush1.xpose.msra.mxu0 %v6732
      %6827 = vmatprep.subr.mxu0 %v6736
      %6828 = vmatpush1.xpose.msra.mxu0 %v6735
      %6829 = vmatprep.subr.mxu0 %v6739
      %6830 = vmatpush1.xpose.msra.mxu0 %v6738
      %6831 = vmatprep.subr.mxu0 %v6742
      %6832 = vmatpush1.xpose.msra.mxu0 %v6741
      %6833 = vmatprep.subr.mxu0 %v6745
      %6834 = vmatpush1.xpose.msra.mxu0 %v6744
      %6835 = vmatprep.subr.mxu0 %v6748
      %6836 = vmatpush1.xpose.msra.mxu0 %v6747
      %6837 = vmatprep.subr.mxu0 %v6751
      %6838 = vmatpush1.xpose.msra.mxu0 %v6750
      %6839 = vmatprep.subr.mxu0 %v6754
      %6840 = vmatpush1.xpose.msra.mxu0 %v6753
      %6841 = vmatprep.subr.mxu0 %v6757
      %6842 = vmatpush1.xpose.msra.mxu0 %v6756
      %6843 = vmatprep.subr.mxu0 %v6760
      %6844 = vmatpush1.xpose.msra.mxu0 %v6759
      %6845 = vmatprep.subr.mxu0 %v6763
      %6846 = vmatpush1.xpose.msra.mxu0 %v6762
      %6847 = vmatprep.subr.mxu0 %v6766
      %6848 = vmatpush1.xpose.msra.mxu0 %v6765
      %6849 = vmatprep.subr.mxu0 %v6769
      %6850 = vmatpush1.xpose.msra.mxu0 %v6768
      %6851 = vmatprep.subr.mxu0 %v6772
      %6852 = vmatpush1.xpose.msra.mxu0 %v6771
      %6853 = vmatprep.subr.mxu0 %v6775
      %6854 = vmatpush1.xpose.msra.mxu0 %v6774
      %6855 = vmatprep.subr.mxu0 %v6778
      %6856 = vmatpush1.xpose.msra.mxu0 %v6777
      %6857 = vmatprep.subr.mxu0 %v6781
      %6858 = vmatpush1.xpose.msra.mxu0 %v6780
      %6859 = vmatprep.subr.mxu0 %v6784
      %6860 = vmatpush1.xpose.msra.mxu0 %v6783
      %6861 = vmatprep.subr.mxu0 %v6787
      %6862 = vmatpush1.xpose.msra.mxu0 %v6786
      %6863 = vmatprep.subr.mxu0 %v6790
      %6864 = vmatpush1.xpose.msra.mxu0 %v6789
      %6865 = vmatprep.subr.mxu0 %v6793
      %6866 = vmatpush1.xpose.msra.mxu0 %v6792
      %6867 = vmatprep.subr.mxu0 %v6796
      %6868 = vmatpush1.xpose.msra.mxu0 %v6795
      %6869 = vmatprep.subr.mxu0 %v6799
      %6870 = vmatpush1.xpose.msra.mxu0 %v6798
      %6871 = vmatprep.subr.mxu0 %v6802
      %6872 = vmatpush1.xpose.msra.mxu0 %v6801
      %6873 = vmatprep.subr.mxu0 %v6805
      %6874 = vmatpush1.xpose.msra.mxu0 %v6804
      %6875 = vmatprep.subr.mxu0 %v6808
      %6876 = vmatpush1.xpose.msra.mxu0 %v6807
      %6877 = vmatprep.subr.mxu0 %v6811
      %6878 = vmatpush1.xpose.msra.mxu0 %v6810
      %6879 = vmatprep.subr.mxu0 %v6814
      %6880 = vmatpush1.xpose.msra.mxu0 %v6813
      %6881 = vmatprep.subr.mxu0 %v6817
      %6882 = vmatpush1.xpose.msra.mxu0 %v6816
      %6883 = vmatprep.subr.mxu0 %v6820
      %6884 = vmatpush1.xpose.msra.mxu0 %v6819
      %6885 = vmatprep.mubr.f32.mxu0 %v630
      %6886 = vmatmul.mubr.f32.gmra.mrb[0].mxu0 %v628
      %v6887 = vpop.f32.mrb[0].mxu0
      %v6888 = vadd.f32 0.0, %v6887
      %v6889 = vpop.f32.mrb[0].mxu0
      %v6890 = vadd.f32 0.0, %v6889
      %6891 = vdwg.mxu0
      %6892 = vxpose.xlu0.b32.start [1/16] %v568, 128
      %6893 = vxpose.xlu0.b32.cont [2/16] 0.0, 128
      %6894 = vxpose.xlu0.b32.cont [3/16] 0.0, 128
      %6895 = vxpose.xlu0.b32.cont [4/16] 0.0, 128
      %6896 = vxpose.xlu0.b32.cont [5/16] 0.0, 128
      %6897 = vxpose.xlu0.b32.cont [6/16] 0.0, 128
      %6898 = vxpose.xlu0.b32.cont [7/16] 0.0, 128
      %6899 = vxpose.xlu0.b32.cont [8/16] 0.0, 128
      %6900 = vxpose.xlu0.b32.cont [9/16] 0.0, 128
      %6901 = vxpose.xlu0.b32.cont [10/16] 0.0, 128
      %6902 = vxpose.xlu0.b32.cont [11/16] 0.0, 128
      %6903 = vxpose.xlu0.b32.cont [12/16] 0.0, 128
      %6904 = vxpose.xlu0.b32.cont [13/16] 0.0, 128
      %6905 = vxpose.xlu0.b32.cont [14/16] 0.0, 128
      %6906 = vxpose.xlu0.b32.cont [15/16] 0.0, 128
      %6907 = vxpose.xlu0.b32.end [16/16] 0.0, 128
      %v6908 = vpop.trf.xlu0
      %v6909 = vpop.trf.xlu0
      %v6910 = vpop.trf.xlu0
      %v6911 = vpop.trf.xlu0
      %v6912 = vpop.trf.xlu0
      %v6913 = vpop.trf.xlu0
      %v6914 = vpop.trf.xlu0
      %v6915 = vpop.trf.xlu0
      %v6916 = vpop.trf.xlu0
      %v6917 = vpop.trf.xlu0
      %v6918 = vpop.trf.xlu0
      %v6919 = vpop.trf.xlu0
      %v6920 = vpop.trf.xlu0
      %v6921 = vpop.trf.xlu0
      %v6922 = vpop.trf.xlu0
      %v6923 = vpop.trf.xlu0
      %6924 = vxpose.xlu0.b32.start [1/16] %v570, 128
      %6925 = vxpose.xlu0.b32.cont [2/16] 0.0, 128
      %6926 = vxpose.xlu0.b32.cont [3/16] 0.0, 128
      %6927 = vxpose.xlu0.b32.cont [4/16] 0.0, 128
      %6928 = vxpose.xlu0.b32.cont [5/16] 0.0, 128
      %6929 = vxpose.xlu0.b32.cont [6/16] 0.0, 128
      %6930 = vxpose.xlu0.b32.cont [7/16] 0.0, 128
      %6931 = vxpose.xlu0.b32.cont [8/16] 0.0, 128
      %6932 = vxpose.xlu0.b32.cont [9/16] 0.0, 128
      %6933 = vxpose.xlu0.b32.cont [10/16] 0.0, 128
      %6934 = vxpose.xlu0.b32.cont [11/16] 0.0, 128
      %6935 = vxpose.xlu0.b32.cont [12/16] 0.0, 128
      %6936 = vxpose.xlu0.b32.cont [13/16] 0.0, 128
      %6937 = vxpose.xlu0.b32.cont [14/16] 0.0, 128
      %6938 = vxpose.xlu0.b32.cont [15/16] 0.0, 128
      %6939 = vxpose.xlu0.b32.end [16/16] 0.0, 128
      %v6940 = vpop.trf.xlu0
      %v6941 = vpop.trf.xlu0
      %v6942 = vpop.trf.xlu0
      %v6943 = vpop.trf.xlu0
      %v6944 = vpop.trf.xlu0
      %v6945 = vpop.trf.xlu0
      %v6946 = vpop.trf.xlu0
      %v6947 = vpop.trf.xlu0
      %v6948 = vpop.trf.xlu0
      %v6949 = vpop.trf.xlu0
      %v6950 = vpop.trf.xlu0
      %v6951 = vpop.trf.xlu0
      %v6952 = vpop.trf.xlu0
      %v6953 = vpop.trf.xlu0
      %v6954 = vpop.trf.xlu0
      %v6955 = vpop.trf.xlu0
      %v6957 = vsel %vm708, %v6908, 0
      %v6960 = vsel %vm708, %v6909, 0
      %v6963 = vsel %vm708, %v6910, 0
      %v6966 = vsel %vm708, %v6911, 0
      %v6969 = vsel %vm708, %v6912, 0
      %v6972 = vsel %vm708, %v6913, 0
      %v6975 = vsel %vm708, %v6914, 0
      %v6978 = vsel %vm708, %v6915, 0
      %v6981 = vsel %vm708, %v6916, 0
      %v6984 = vsel %vm708, %v6917, 0
      %v6987 = vsel %vm708, %v6918, 0
      %v6990 = vsel %vm708, %v6919, 0
      %v6993 = vsel %vm708, %v6920, 0
      %v6996 = vsel %vm708, %v6921, 0
      %v6999 = vsel %vm708, %v6922, 0
      %v7002 = vsel %vm708, %v6923, 0
      %v7005 = vsel %vm708, %v6940, 0
      %v7008 = vsel %vm708, %v6941, 0
      %v7011 = vsel %vm708, %v6942, 0
      %v7014 = vsel %vm708, %v6943, 0
      %v7017 = vsel %vm708, %v6944, 0
      %v7020 = vsel %vm708, %v6945, 0
      %v7023 = vsel %vm708, %v6946, 0
      %v7026 = vsel %vm708, %v6947, 0
      %v7029 = vsel %vm708, %v6948, 0
      %v7032 = vsel %vm708, %v6949, 0
      %v7035 = vsel %vm708, %v6950, 0
      %v7038 = vsel %vm708, %v6951, 0
      %v7041 = vsel %vm708, %v6952, 0
      %v7044 = vsel %vm708, %v6953, 0
      %v7047 = vsel %vm708, %v6954, 0
      %v7050 = vsel %vm708, %v6955, 0
      %v7053 = vsel %vm805, %v592, 0
      %v7056 = vsel %vm805, %v594, 0
      %7058 = vmatprep.subr.mxu0 %v7056
      %7059 = vmatpush1.msra.mxu0 %v7053
      %7060 = vmatprep.subr.mxu0 0.0
      %7061 = vmatpush1.msra.mxu0 0.0
      %7062 = vmatprep.subr.mxu0 0.0
      %7063 = vmatpush1.msra.mxu0 0.0
      %7064 = vmatprep.subr.mxu0 0.0
      %7065 = vmatpush1.msra.mxu0 0.0
      %7066 = vmatprep.subr.mxu0 0.0
      %7067 = vmatpush1.msra.mxu0 0.0
      %7068 = vmatprep.subr.mxu0 0.0
      %7069 = vmatpush1.msra.mxu0 0.0
      %7070 = vmatprep.subr.mxu0 0.0
      %7071 = vmatpush1.msra.mxu0 0.0
      %7072 = vmatprep.subr.mxu0 0.0
      %7073 = vmatpush1.msra.mxu0 0.0
      %7074 = vmatprep.subr.mxu0 0.0
      %7075 = vmatpush1.msra.mxu0 0.0
      %7076 = vmatprep.subr.mxu0 0.0
      %7077 = vmatpush1.msra.mxu0 0.0
      %7078 = vmatprep.subr.mxu0 0.0
      %7079 = vmatpush1.msra.mxu0 0.0
      %7080 = vmatprep.subr.mxu0 0.0
      %7081 = vmatpush1.msra.mxu0 0.0
      %7082 = vmatprep.subr.mxu0 0.0
      %7083 = vmatpush1.msra.mxu0 0.0
      %7084 = vmatprep.subr.mxu0 0.0
      %7085 = vmatpush1.msra.mxu0 0.0
      %7086 = vmatprep.subr.mxu0 0.0
      %7087 = vmatpush1.msra.mxu0 0.0
      %7088 = vmatprep.subr.mxu0 0.0
      %7089 = vmatpush1.msra.mxu0 0.0
      %7090 = vmatprep.subr.mxu0 0.0
      %7091 = vmatpush1.msra.mxu0 0.0
      %7092 = vmatprep.subr.mxu0 0.0
      %7093 = vmatpush1.msra.mxu0 0.0
      %7094 = vmatprep.subr.mxu0 0.0
      %7095 = vmatpush1.msra.mxu0 0.0
      %7096 = vmatprep.subr.mxu0 0.0
      %7097 = vmatpush1.msra.mxu0 0.0
      %7098 = vmatprep.subr.mxu0 0.0
      %7099 = vmatpush1.msra.mxu0 0.0
      %7100 = vmatprep.subr.mxu0 0.0
      %7101 = vmatpush1.msra.mxu0 0.0
      %7102 = vmatprep.subr.mxu0 0.0
      %7103 = vmatpush1.msra.mxu0 0.0
      %7104 = vmatprep.subr.mxu0 0.0
      %7105 = vmatpush1.msra.mxu0 0.0
      %7106 = vmatprep.subr.mxu0 0.0
      %7107 = vmatpush1.msra.mxu0 0.0
      %7108 = vmatprep.subr.mxu0 0.0
      %7109 = vmatpush1.msra.mxu0 0.0
      %7110 = vmatprep.subr.mxu0 0.0
      %7111 = vmatpush1.msra.mxu0 0.0
      %7112 = vmatprep.subr.mxu0 0.0
      %7113 = vmatpush1.msra.mxu0 0.0
      %7114 = vmatprep.subr.mxu0 0.0
      %7115 = vmatpush1.msra.mxu0 0.0
      %7116 = vmatprep.subr.mxu0 0.0
      %7117 = vmatpush1.msra.mxu0 0.0
      %7118 = vmatprep.subr.mxu0 0.0
      %7119 = vmatpush1.msra.mxu0 0.0
      %7120 = vmatprep.subr.mxu0 0.0
      %7121 = vmatpush1.msra.mxu0 0.0
      %7122 = vmatprep.mubr.f32.mxu0 0.0
      %7123 = vmatmul.mubr.f32.gmra.mrb[0].mxu0 %v6957
      %v7124 = vpop.f32.mrb[0].mxu0
      %v7125 = vadd.f32 0.0, %v7124
      %v7126 = vpop.f32.mrb[0].mxu0
      %v7127 = vadd.f32 0.0, %v7126
      %7128 = vmatprep.mubr.f32.mxu0 0.0
      %7129 = vmatmul.mubr.f32.gmra.mrb[0].mxu0 %v6960
      %v7130 = vpop.f32.mrb[0].mxu0
      %v7131 = vadd.f32 0.0, %v7130
      %v7132 = vpop.f32.mrb[0].mxu0
      %v7133 = vadd.f32 0.0, %v7132
      %7134 = vmatprep.mubr.f32.mxu0 0.0
      %7135 = vmatmul.mubr.f32.gmra.mrb[0].mxu0 %v6963
      %v7136 = vpop.f32.mrb[0].mxu0
      %v7137 = vadd.f32 0.0, %v7136
      %v7138 = vpop.f32.mrb[0].mxu0
      %v7139 = vadd.f32 0.0, %v7138
      %7140 = vmatprep.mubr.f32.mxu0 0.0
      %7141 = vmatmul.mubr.f32.gmra.mrb[0].mxu0 %v6966
      %v7142 = vpop.f32.mrb[0].mxu0
      %v7143 = vadd.f32 0.0, %v7142
      %v7144 = vpop.f32.mrb[0].mxu0
      %v7145 = vadd.f32 0.0, %v7144
      %7146 = vmatprep.mubr.f32.mxu0 0.0
      %7147 = vmatmul.mubr.f32.gmra.mrb[0].mxu0 %v6969
      %v7148 = vpop.f32.mrb[0].mxu0
      %v7149 = vadd.f32 0.0, %v7148
      %v7150 = vpop.f32.mrb[0].mxu0
      %v7151 = vadd.f32 0.0, %v7150
      %7152 = vmatprep.mubr.f32.mxu0 0.0
      %7153 = vmatmul.mubr.f32.gmra.mrb[0].mxu0 %v6972
      %v7154 = vpop.f32.mrb[0].mxu0
      %v7155 = vadd.f32 0.0, %v7154
      %v7156 = vpop.f32.mrb[0].mxu0
      %v7157 = vadd.f32 0.0, %v7156
      %7158 = vmatprep.mubr.f32.mxu0 0.0
      %7159 = vmatmul.mubr.f32.gmra.mrb[0].mxu0 %v6975
      %v7160 = vpop.f32.mrb[0].mxu0
      %v7161 = vadd.f32 0.0, %v7160
      %v7162 = vpop.f32.mrb[0].mxu0
      %v7163 = vadd.f32 0.0, %v7162
      %7164 = vmatprep.mubr.f32.mxu0 0.0
      %7165 = vmatmul.mubr.f32.gmra.mrb[0].mxu0 %v6978
      %v7166 = vpop.f32.mrb[0].mxu0
      %v7167 = vadd.f32 0.0, %v7166
      %v7168 = vpop.f32.mrb[0].mxu0
      %v7169 = vadd.f32 0.0, %v7168
      %7170 = vmatprep.mubr.f32.mxu0 0.0
      %7171 = vmatmul.mubr.f32.gmra.mrb[0].mxu0 %v6981
      %v7172 = vpop.f32.mrb[0].mxu0
      %v7173 = vadd.f32 0.0, %v7172
      %v7174 = vpop.f32.mrb[0].mxu0
      %v7175 = vadd.f32 0.0, %v7174
      %7176 = vmatprep.mubr.f32.mxu0 0.0
      %7177 = vmatmul.mubr.f32.gmra.mrb[0].mxu0 %v6984
      %v7178 = vpop.f32.mrb[0].mxu0
      %v7179 = vadd.f32 0.0, %v7178
      %v7180 = vpop.f32.mrb[0].mxu0
      %v7181 = vadd.f32 0.0, %v7180
      %7182 = vmatprep.mubr.f32.mxu0 0.0
      %7183 = vmatmul.mubr.f32.gmra.mrb[0].mxu0 %v6987
      %v7184 = vpop.f32.mrb[0].mxu0
      %v7185 = vadd.f32 0.0, %v7184
      %v7186 = vpop.f32.mrb[0].mxu0
      %v7187 = vadd.f32 0.0, %v7186
      %7188 = vmatprep.mubr.f32.mxu0 0.0
      %7189 = vmatmul.mubr.f32.gmra.mrb[0].mxu0 %v6990
      %v7190 = vpop.f32.mrb[0].mxu0
      %v7191 = vadd.f32 0.0, %v7190
      %v7192 = vpop.f32.mrb[0].mxu0
      %v7193 = vadd.f32 0.0, %v7192
      %7194 = vmatprep.mubr.f32.mxu0 0.0
      %7195 = vmatmul.mubr.f32.gmra.mrb[0].mxu0 %v6993
      %v7196 = vpop.f32.mrb[0].mxu0
      %v7197 = vadd.f32 0.0, %v7196
      %v7198 = vpop.f32.mrb[0].mxu0
      %v7199 = vadd.f32 0.0, %v7198
      %7200 = vmatprep.mubr.f32.mxu0 0.0
      %7201 = vmatmul.mubr.f32.gmra.mrb[0].mxu0 %v6996
      %v7202 = vpop.f32.mrb[0].mxu0
      %v7203 = vadd.f32 0.0, %v7202
      %v7204 = vpop.f32.mrb[0].mxu0
      %v7205 = vadd.f32 0.0, %v7204
      %7206 = vmatprep.mubr.f32.mxu0 0.0
      %7207 = vmatmul.mubr.f32.gmra.mrb[0].mxu0 %v6999
      %v7208 = vpop.f32.mrb[0].mxu0
      %v7209 = vadd.f32 0.0, %v7208
      %v7210 = vpop.f32.mrb[0].mxu0
      %v7211 = vadd.f32 0.0, %v7210
      %7212 = vmatprep.mubr.f32.mxu0 0.0
      %7213 = vmatmul.mubr.f32.gmra.mrb[0].mxu0 %v7002
      %v7214 = vpop.f32.mrb[0].mxu0
      %v7215 = vadd.f32 0.0, %v7214
      %v7216 = vpop.f32.mrb[0].mxu0
      %v7217 = vadd.f32 0.0, %v7216
      %7218 = vmatprep.mubr.f32.mxu0 0.0
      %7219 = vmatmul.mubr.f32.gmra.mrb[0].mxu0 %v7005
      %v7220 = vpop.f32.mrb[0].mxu0
      %v7221 = vadd.f32 0.0, %v7220
      %v7222 = vpop.f32.mrb[0].mxu0
      %v7223 = vadd.f32 0.0, %v7222
      %7224 = vmatprep.mubr.f32.mxu0 0.0
      %7225 = vmatmul.mubr.f32.gmra.mrb[0].mxu0 %v7008
      %v7226 = vpop.f32.mrb[0].mxu0
      %v7227 = vadd.f32 0.0, %v7226
      %v7228 = vpop.f32.mrb[0].mxu0
      %v7229 = vadd.f32 0.0, %v7228
      %7230 = vmatprep.mubr.f32.mxu0 0.0
      %7231 = vmatmul.mubr.f32.gmra.mrb[0].mxu0 %v7011
      %v7232 = vpop.f32.mrb[0].mxu0
      %v7233 = vadd.f32 0.0, %v7232
      %v7234 = vpop.f32.mrb[0].mxu0
      %v7235 = vadd.f32 0.0, %v7234
      %7236 = vmatprep.mubr.f32.mxu0 0.0
      %7237 = vmatmul.mubr.f32.gmra.mrb[0].mxu0 %v7014
      %v7238 = vpop.f32.mrb[0].mxu0
      %v7239 = vadd.f32 0.0, %v7238
      %v7240 = vpop.f32.mrb[0].mxu0
      %v7241 = vadd.f32 0.0, %v7240
      %7242 = vmatprep.mubr.f32.mxu0 0.0
      %7243 = vmatmul.mubr.f32.gmra.mrb[0].mxu0 %v7017
      %v7244 = vpop.f32.mrb[0].mxu0
      %v7245 = vadd.f32 0.0, %v7244
      %v7246 = vpop.f32.mrb[0].mxu0
      %v7247 = vadd.f32 0.0, %v7246
      %7248 = vmatprep.mubr.f32.mxu0 0.0
      %7249 = vmatmul.mubr.f32.gmra.mrb[0].mxu0 %v7020
      %v7250 = vpop.f32.mrb[0].mxu0
      %v7251 = vadd.f32 0.0, %v7250
      %v7252 = vpop.f32.mrb[0].mxu0
      %v7253 = vadd.f32 0.0, %v7252
      %7254 = vmatprep.mubr.f32.mxu0 0.0
      %7255 = vmatmul.mubr.f32.gmra.mrb[0].mxu0 %v7023
      %v7256 = vpop.f32.mrb[0].mxu0
      %v7257 = vadd.f32 0.0, %v7256
      %v7258 = vpop.f32.mrb[0].mxu0
      %v7259 = vadd.f32 0.0, %v7258
      %7260 = vmatprep.mubr.f32.mxu0 0.0
      %7261 = vmatmul.mubr.f32.gmra.mrb[0].mxu0 %v7026
      %v7262 = vpop.f32.mrb[0].mxu0
      %v7263 = vadd.f32 0.0, %v7262
      %v7264 = vpop.f32.mrb[0].mxu0
      %v7265 = vadd.f32 0.0, %v7264
      %7266 = vmatprep.mubr.f32.mxu0 0.0
      %7267 = vmatmul.mubr.f32.gmra.mrb[0].mxu0 %v7029
      %v7268 = vpop.f32.mrb[0].mxu0
      %v7269 = vadd.f32 0.0, %v7268
      %v7270 = vpop.f32.mrb[0].mxu0
      %v7271 = vadd.f32 0.0, %v7270
      %7272 = vmatprep.mubr.f32.mxu0 0.0
      %7273 = vmatmul.mubr.f32.gmra.mrb[0].mxu0 %v7032
      %v7274 = vpop.f32.mrb[0].mxu0
      %v7275 = vadd.f32 0.0, %v7274
      %v7276 = vpop.f32.mrb[0].mxu0
      %v7277 = vadd.f32 0.0, %v7276
      %7278 = vmatprep.mubr.f32.mxu0 0.0
      %7279 = vmatmul.mubr.f32.gmra.mrb[0].mxu0 %v7035
      %v7280 = vpop.f32.mrb[0].mxu0
      %v7281 = vadd.f32 0.0, %v7280
      %v7282 = vpop.f32.mrb[0].mxu0
      %v7283 = vadd.f32 0.0, %v7282
      %7284 = vmatprep.mubr.f32.mxu0 0.0
      %7285 = vmatmul.mubr.f32.gmra.mrb[0].mxu0 %v7038
      %v7286 = vpop.f32.mrb[0].mxu0
      %v7287 = vadd.f32 0.0, %v7286
      %v7288 = vpop.f32.mrb[0].mxu0
      %v7289 = vadd.f32 0.0, %v7288
      %7290 = vmatprep.mubr.f32.mxu0 0.0
      %7291 = vmatmul.mubr.f32.gmra.mrb[0].mxu0 %v7041
      %v7292 = vpop.f32.mrb[0].mxu0
      %v7293 = vadd.f32 0.0, %v7292
      %v7294 = vpop.f32.mrb[0].mxu0
      %v7295 = vadd.f32 0.0, %v7294
      %7296 = vmatprep.mubr.f32.mxu0 0.0
      %7297 = vmatmul.mubr.f32.gmra.mrb[0].mxu0 %v7044
      %v7298 = vpop.f32.mrb[0].mxu0
      %v7299 = vadd.f32 0.0, %v7298
      %v7300 = vpop.f32.mrb[0].mxu0
      %v7301 = vadd.f32 0.0, %v7300
      %7302 = vmatprep.mubr.f32.mxu0 0.0
      %7303 = vmatmul.mubr.f32.gmra.mrb[0].mxu0 %v7047
      %v7304 = vpop.f32.mrb[0].mxu0
      %v7305 = vadd.f32 0.0, %v7304
      %v7306 = vpop.f32.mrb[0].mxu0
      %v7307 = vadd.f32 0.0, %v7306
      %7308 = vmatprep.mubr.f32.mxu0 0.0
      %7309 = vmatmul.mubr.f32.gmra.mrb[0].mxu0 %v7050
      %v7310 = vpop.f32.mrb[0].mxu0
      %v7311 = vadd.f32 0.0, %v7310
      %v7312 = vpop.f32.mrb[0].mxu0
      %v7313 = vadd.f32 0.0, %v7312
      %7314 = vdwg.mxu0
      %v7315 = vmul.f32 %v7125, 0.5
      %v7316 = vmul.f32 %v7127, 0.5
      %v7317 = vmul.f32 %v7131, 0.5
      %v7318 = vmul.f32 %v7133, 0.5
      %v7319 = vmul.f32 %v7137, 0.5
      %v7320 = vmul.f32 %v7139, 0.5
      %v7321 = vmul.f32 %v7143, 0.5
      %v7322 = vmul.f32 %v7145, 0.5
      %v7323 = vmul.f32 %v7149, 0.5
      %v7324 = vmul.f32 %v7151, 0.5
      %v7325 = vmul.f32 %v7155, 0.5
      %v7326 = vmul.f32 %v7157, 0.5
      %v7327 = vmul.f32 %v7161, 0.5
      %v7328 = vmul.f32 %v7163, 0.5
      %v7329 = vmul.f32 %v7167, 0.5
      %v7330 = vmul.f32 %v7169, 0.5
      %v7331 = vmul.f32 %v7173, 0.5
      %v7332 = vmul.f32 %v7175, 0.5
      %v7333 = vmul.f32 %v7179, 0.5
      %v7334 = vmul.f32 %v7181, 0.5
      %v7335 = vmul.f32 %v7185, 0.5
      %v7336 = vmul.f32 %v7187, 0.5
      %v7337 = vmul.f32 %v7191, 0.5
      %v7338 = vmul.f32 %v7193, 0.5
      %v7339 = vmul.f32 %v7197, 0.5
      %v7340 = vmul.f32 %v7199, 0.5
      %v7341 = vmul.f32 %v7203, 0.5
      %v7342 = vmul.f32 %v7205, 0.5
      %v7343 = vmul.f32 %v7209, 0.5
      %v7344 = vmul.f32 %v7211, 0.5
      %v7345 = vmul.f32 %v7215, 0.5
      %v7346 = vmul.f32 %v7217, 0.5
      %v7347 = vmul.f32 %v7221, 0.5
      %v7348 = vmul.f32 %v7223, 0.5
      %v7349 = vmul.f32 %v7227, 0.5
      %v7350 = vmul.f32 %v7229, 0.5
      %v7351 = vmul.f32 %v7233, 0.5
      %v7352 = vmul.f32 %v7235, 0.5
      %v7353 = vmul.f32 %v7239, 0.5
      %v7354 = vmul.f32 %v7241, 0.5
      %v7355 = vmul.f32 %v7245, 0.5
      %v7356 = vmul.f32 %v7247, 0.5
      %v7357 = vmul.f32 %v7251, 0.5
      %v7358 = vmul.f32 %v7253, 0.5
      %v7359 = vmul.f32 %v7257, 0.5
      %v7360 = vmul.f32 %v7259, 0.5
      %v7361 = vmul.f32 %v7263, 0.5
      %v7362 = vmul.f32 %v7265, 0.5
      %v7363 = vmul.f32 %v7269, 0.5
      %v7364 = vmul.f32 %v7271, 0.5
      %v7365 = vmul.f32 %v7275, 0.5
      %v7366 = vmul.f32 %v7277, 0.5
      %v7367 = vmul.f32 %v7281, 0.5
      %v7368 = vmul.f32 %v7283, 0.5
      %v7369 = vmul.f32 %v7287, 0.5
      %v7370 = vmul.f32 %v7289, 0.5
      %v7371 = vmul.f32 %v7293, 0.5
      %v7372 = vmul.f32 %v7295, 0.5
      %v7373 = vmul.f32 %v7299, 0.5
      %v7374 = vmul.f32 %v7301, 0.5
      %v7375 = vmul.f32 %v7305, 0.5
      %v7376 = vmul.f32 %v7307, 0.5
      %v7377 = vmul.f32 %v7311, 0.5
      %v7378 = vmul.f32 %v7313, 0.5
      %v7379 = vmax.f32 %v7315, %v7316
      %7380 = vmax.xlane.f32.xlu0 %v7379
      %v7381 = vpop.xlane.xlu0 %7380
      %v7382 = vmax.f32 %v7317, %v7318
      %7383 = vmax.xlane.f32.xlu0 %v7382
      %v7384 = vpop.xlane.xlu0 %7383
      %v7385 = vmax.f32 %v7319, %v7320
      %7386 = vmax.xlane.f32.xlu0 %v7385
      %v7387 = vpop.xlane.xlu0 %7386
      %v7388 = vmax.f32 %v7321, %v7322
      %7389 = vmax.xlane.f32.xlu0 %v7388
      %v7390 = vpop.xlane.xlu0 %7389
      %v7391 = vmax.f32 %v7323, %v7324
      %7392 = vmax.xlane.f32.xlu0 %v7391
      %v7393 = vpop.xlane.xlu0 %7392
      %v7394 = vmax.f32 %v7325, %v7326
      %7395 = vmax.xlane.f32.xlu0 %v7394
      %v7396 = vpop.xlane.xlu0 %7395
      %v7397 = vmax.f32 %v7327, %v7328
      %7398 = vmax.xlane.f32.xlu0 %v7397
      %v7399 = vpop.xlane.xlu0 %7398
      %v7400 = vmax.f32 %v7329, %v7330
      %7401 = vmax.xlane.f32.xlu0 %v7400
      %v7402 = vpop.xlane.xlu0 %7401
      %v7403 = vmax.f32 %v7331, %v7332
      %7404 = vmax.xlane.f32.xlu0 %v7403
      %v7405 = vpop.xlane.xlu0 %7404
      %v7406 = vmax.f32 %v7333, %v7334
      %7407 = vmax.xlane.f32.xlu0 %v7406
      %v7408 = vpop.xlane.xlu0 %7407
      %v7409 = vmax.f32 %v7335, %v7336
      %7410 = vmax.xlane.f32.xlu0 %v7409
      %v7411 = vpop.xlane.xlu0 %7410
      %v7412 = vmax.f32 %v7337, %v7338
      %7413 = vmax.xlane.f32.xlu0 %v7412
      %v7414 = vpop.xlane.xlu0 %7413
      %v7415 = vmax.f32 %v7339, %v7340
      %7416 = vmax.xlane.f32.xlu0 %v7415
      %v7417 = vpop.xlane.xlu0 %7416
      %v7418 = vmax.f32 %v7341, %v7342
      %7419 = vmax.xlane.f32.xlu0 %v7418
      %v7420 = vpop.xlane.xlu0 %7419
      %v7421 = vmax.f32 %v7343, %v7344
      %7422 = vmax.xlane.f32.xlu0 %v7421
      %v7423 = vpop.xlane.xlu0 %7422
      %v7424 = vmax.f32 %v7345, %v7346
      %7425 = vmax.xlane.f32.xlu0 %v7424
      %v7426 = vpop.xlane.xlu0 %7425
      %v7427 = vmax.f32 %v7347, %v7348
      %7428 = vmax.xlane.f32.xlu0 %v7427
      %v7429 = vpop.xlane.xlu0 %7428
      %v7430 = vmax.f32 %v7349, %v7350
      %7431 = vmax.xlane.f32.xlu0 %v7430
      %v7432 = vpop.xlane.xlu0 %7431
      %v7433 = vmax.f32 %v7351, %v7352
      %7434 = vmax.xlane.f32.xlu0 %v7433
      %v7435 = vpop.xlane.xlu0 %7434
      %v7436 = vmax.f32 %v7353, %v7354
      %7437 = vmax.xlane.f32.xlu0 %v7436
      %v7438 = vpop.xlane.xlu0 %7437
      %v7439 = vmax.f32 %v7355, %v7356
      %7440 = vmax.xlane.f32.xlu0 %v7439
      %v7441 = vpop.xlane.xlu0 %7440
      %v7442 = vmax.f32 %v7357, %v7358
      %7443 = vmax.xlane.f32.xlu0 %v7442
      %v7444 = vpop.xlane.xlu0 %7443
      %v7445 = vmax.f32 %v7359, %v7360
      %7446 = vmax.xlane.f32.xlu0 %v7445
      %v7447 = vpop.xlane.xlu0 %7446
      %v7448 = vmax.f32 %v7361, %v7362
      %7449 = vmax.xlane.f32.xlu0 %v7448
      %v7450 = vpop.xlane.xlu0 %7449
      %v7451 = vmax.f32 %v7363, %v7364
      %7452 = vmax.xlane.f32.xlu0 %v7451
      %v7453 = vpop.xlane.xlu0 %7452
      %v7454 = vmax.f32 %v7365, %v7366
      %7455 = vmax.xlane.f32.xlu0 %v7454
      %v7456 = vpop.xlane.xlu0 %7455
      %v7457 = vmax.f32 %v7367, %v7368
      %7458 = vmax.xlane.f32.xlu0 %v7457
      %v7459 = vpop.xlane.xlu0 %7458
      %v7460 = vmax.f32 %v7369, %v7370
      %7461 = vmax.xlane.f32.xlu0 %v7460
      %v7462 = vpop.xlane.xlu0 %7461
      %v7463 = vmax.f32 %v7371, %v7372
      %7464 = vmax.xlane.f32.xlu0 %v7463
      %v7465 = vpop.xlane.xlu0 %7464
      %v7466 = vmax.f32 %v7373, %v7374
      %7467 = vmax.xlane.f32.xlu0 %v7466
      %v7468 = vpop.xlane.xlu0 %7467
      %v7469 = vmax.f32 %v7375, %v7376
      %7470 = vmax.xlane.f32.xlu0 %v7469
      %v7471 = vpop.xlane.xlu0 %7470
      %v7472 = vmax.f32 %v7377, %v7378
      %7473 = vmax.xlane.f32.xlu0 %v7472
      %v7474 = vpop.xlane.xlu0 %7473
      %v7475 = vsub.f32 %v7315, %v7381
      %v7476 = vsub.f32 %v7316, %v7381
      %v7477 = vsub.f32 %v7317, %v7384
      %v7478 = vsub.f32 %v7318, %v7384
      %v7479 = vsub.f32 %v7319, %v7387
      %v7480 = vsub.f32 %v7320, %v7387
      %v7481 = vsub.f32 %v7321, %v7390
      %v7482 = vsub.f32 %v7322, %v7390
      %v7483 = vsub.f32 %v7323, %v7393
      %v7484 = vsub.f32 %v7324, %v7393
      %v7485 = vsub.f32 %v7325, %v7396
      %v7486 = vsub.f32 %v7326, %v7396
      %v7487 = vsub.f32 %v7327, %v7399
      %v7488 = vsub.f32 %v7328, %v7399
      %v7489 = vsub.f32 %v7329, %v7402
      %v7490 = vsub.f32 %v7330, %v7402
      %v7491 = vsub.f32 %v7331, %v7405
      %v7492 = vsub.f32 %v7332, %v7405
      %v7493 = vsub.f32 %v7333, %v7408
      %v7494 = vsub.f32 %v7334, %v7408
      %v7495 = vsub.f32 %v7335, %v7411
      %v7496 = vsub.f32 %v7336, %v7411
      %v7497 = vsub.f32 %v7337, %v7414
      %v7498 = vsub.f32 %v7338, %v7414
      %v7499 = vsub.f32 %v7339, %v7417
      %v7500 = vsub.f32 %v7340, %v7417
      %v7501 = vsub.f32 %v7341, %v7420
      %v7502 = vsub.f32 %v7342, %v7420
      %v7503 = vsub.f32 %v7343, %v7423
      %v7504 = vsub.f32 %v7344, %v7423
      %v7505 = vsub.f32 %v7345, %v7426
      %v7506 = vsub.f32 %v7346, %v7426
      %v7507 = vsub.f32 %v7347, %v7429
      %v7508 = vsub.f32 %v7348, %v7429
      %v7509 = vsub.f32 %v7349, %v7432
      %v7510 = vsub.f32 %v7350, %v7432
      %v7511 = vsub.f32 %v7351, %v7435
      %v7512 = vsub.f32 %v7352, %v7435
      %v7513 = vsub.f32 %v7353, %v7438
      %v7514 = vsub.f32 %v7354, %v7438
      %v7515 = vsub.f32 %v7355, %v7441
      %v7516 = vsub.f32 %v7356, %v7441
      %v7517 = vsub.f32 %v7357, %v7444
      %v7518 = vsub.f32 %v7358, %v7444
      %v7519 = vsub.f32 %v7359, %v7447
      %v7520 = vsub.f32 %v7360, %v7447
      %v7521 = vsub.f32 %v7361, %v7450
      %v7522 = vsub.f32 %v7362, %v7450
      %v7523 = vsub.f32 %v7363, %v7453
      %v7524 = vsub.f32 %v7364, %v7453
      %v7525 = vsub.f32 %v7365, %v7456
      %v7526 = vsub.f32 %v7366, %v7456
      %v7527 = vsub.f32 %v7367, %v7459
      %v7528 = vsub.f32 %v7368, %v7459
      %v7529 = vsub.f32 %v7369, %v7462
      %v7530 = vsub.f32 %v7370, %v7462
      %v7531 = vsub.f32 %v7371, %v7465
      %v7532 = vsub.f32 %v7372, %v7465
      %v7533 = vsub.f32 %v7373, %v7468
      %v7534 = vsub.f32 %v7374, %v7468
      %v7535 = vsub.f32 %v7375, %v7471
      %v7536 = vsub.f32 %v7376, %v7471
      %v7537 = vsub.f32 %v7377, %v7474
      %v7538 = vsub.f32 %v7378, %v7474
      %v7539 = vmul.f32 %v7475, 1.442695
      %v7540 = vpow.pop %v7539
      %v7541 = vmul.f32 %v7476, 1.442695
      %v7542 = vpow.pop %v7541
      %v7543 = vmul.f32 %v7477, 1.442695
      %v7544 = vpow.pop %v7543
      %v7545 = vmul.f32 %v7478, 1.442695
      %v7546 = vpow.pop %v7545
      %v7547 = vmul.f32 %v7479, 1.442695
      %v7548 = vpow.pop %v7547
      %v7549 = vmul.f32 %v7480, 1.442695
      %v7550 = vpow.pop %v7549
      %v7551 = vmul.f32 %v7481, 1.442695
      %v7552 = vpow.pop %v7551
      %v7553 = vmul.f32 %v7482, 1.442695
      %v7554 = vpow.pop %v7553
      %v7555 = vmul.f32 %v7483, 1.442695
      %v7556 = vpow.pop %v7555
      %v7557 = vmul.f32 %v7484, 1.442695
      %v7558 = vpow.pop %v7557
      %v7559 = vmul.f32 %v7485, 1.442695
      %v7560 = vpow.pop %v7559
      %v7561 = vmul.f32 %v7486, 1.442695
      %v7562 = vpow.pop %v7561
      %v7563 = vmul.f32 %v7487, 1.442695
      %v7564 = vpow.pop %v7563
      %v7565 = vmul.f32 %v7488, 1.442695
      %v7566 = vpow.pop %v7565
      %v7567 = vmul.f32 %v7489, 1.442695
      %v7568 = vpow.pop %v7567
      %v7569 = vmul.f32 %v7490, 1.442695
      %v7570 = vpow.pop %v7569
      %v7571 = vmul.f32 %v7491, 1.442695
      %v7572 = vpow.pop %v7571
      %v7573 = vmul.f32 %v7492, 1.442695
      %v7574 = vpow.pop %v7573
      %v7575 = vmul.f32 %v7493, 1.442695
      %v7576 = vpow.pop %v7575
      %v7577 = vmul.f32 %v7494, 1.442695
      %v7578 = vpow.pop %v7577
      %v7579 = vmul.f32 %v7495, 1.442695
      %v7580 = vpow.pop %v7579
      %v7581 = vmul.f32 %v7496, 1.442695
      %v7582 = vpow.pop %v7581
      %v7583 = vmul.f32 %v7497, 1.442695
      %v7584 = vpow.pop %v7583
      %v7585 = vmul.f32 %v7498, 1.442695
      %v7586 = vpow.pop %v7585
      %v7587 = vmul.f32 %v7499, 1.442695
      %v7588 = vpow.pop %v7587
      %v7589 = vmul.f32 %v7500, 1.442695
      %v7590 = vpow.pop %v7589
      %v7591 = vmul.f32 %v7501, 1.442695
      %v7592 = vpow.pop %v7591
      %v7593 = vmul.f32 %v7502, 1.442695
      %v7594 = vpow.pop %v7593
      %v7595 = vmul.f32 %v7503, 1.442695
      %v7596 = vpow.pop %v7595
      %v7597 = vmul.f32 %v7504, 1.442695
      %v7598 = vpow.pop %v7597
      %v7599 = vmul.f32 %v7505, 1.442695
      %v7600 = vpow.pop %v7599
      %v7601 = vmul.f32 %v7506, 1.442695
      %v7602 = vpow.pop %v7601
      %v7603 = vmul.f32 %v7507, 1.442695
      %v7604 = vpow.pop %v7603
      %v7605 = vmul.f32 %v7508, 1.442695
      %v7606 = vpow.pop %v7605
      %v7607 = vmul.f32 %v7509, 1.442695
      %v7608 = vpow.pop %v7607
      %v7609 = vmul.f32 %v7510, 1.442695
      %v7610 = vpow.pop %v7609
      %v7611 = vmul.f32 %v7511, 1.442695
      %v7612 = vpow.pop %v7611
      %v7613 = vmul.f32 %v7512, 1.442695
      %v7614 = vpow.pop %v7613
      %v7615 = vmul.f32 %v7513, 1.442695
      %v7616 = vpow.pop %v7615
      %v7617 = vmul.f32 %v7514, 1.442695
      %v7618 = vpow.pop %v7617
      %v7619 = vmul.f32 %v7515, 1.442695
      %v7620 = vpow.pop %v7619
      %v7621 = vmul.f32 %v7516, 1.442695
      %v7622 = vpow.pop %v7621
      %v7623 = vmul.f32 %v7517, 1.442695
      %v7624 = vpow.pop %v7623
      %v7625 = vmul.f32 %v7518, 1.442695
      %v7626 = vpow.pop %v7625
      %v7627 = vmul.f32 %v7519, 1.442695
      %v7628 = vpow.pop %v7627
      %v7629 = vmul.f32 %v7520, 1.442695
      %v7630 = vpow.pop %v7629
      %v7631 = vmul.f32 %v7521, 1.442695
      %v7632 = vpow.pop %v7631
      %v7633 = vmul.f32 %v7522, 1.442695
      %v7634 = vpow.pop %v7633
      %v7635 = vmul.f32 %v7523, 1.442695
      %v7636 = vpow.pop %v7635
      %v7637 = vmul.f32 %v7524, 1.442695
      %v7638 = vpow.pop %v7637
      %v7639 = vmul.f32 %v7525, 1.442695
      %v7640 = vpow.pop %v7639
      %v7641 = vmul.f32 %v7526, 1.442695
      %v7642 = vpow.pop %v7641
      %v7643 = vmul.f32 %v7527, 1.442695
      %v7644 = vpow.pop %v7643
      %v7645 = vmul.f32 %v7528, 1.442695
      %v7646 = vpow.pop %v7645
      %v7647 = vmul.f32 %v7529, 1.442695
      %v7648 = vpow.pop %v7647
      %v7649 = vmul.f32 %v7530, 1.442695
      %v7650 = vpow.pop %v7649
      %v7651 = vmul.f32 %v7531, 1.442695
      %v7652 = vpow.pop %v7651
      %v7653 = vmul.f32 %v7532, 1.442695
      %v7654 = vpow.pop %v7653
      %v7655 = vmul.f32 %v7533, 1.442695
      %v7656 = vpow.pop %v7655
      %v7657 = vmul.f32 %v7534, 1.442695
      %v7658 = vpow.pop %v7657
      %v7659 = vmul.f32 %v7535, 1.442695
      %v7660 = vpow.pop %v7659
      %v7661 = vmul.f32 %v7536, 1.442695
      %v7662 = vpow.pop %v7661
      %v7663 = vmul.f32 %v7537, 1.442695
      %v7664 = vpow.pop %v7663
      %v7665 = vmul.f32 %v7538, 1.442695
      %v7666 = vpow.pop %v7665
      %v7667 = vadd.f32 %v7540, %v7542
      %7668 = vadd.xlane.f32.xlu0 %v7667
      %v7669 = vpop.xlane.xlu0 %7668
      %v7670 = vadd.f32 %v7544, %v7546
      %7671 = vadd.xlane.f32.xlu0 %v7670
      %v7672 = vpop.xlane.xlu0 %7671
      %v7673 = vadd.f32 %v7548, %v7550
      %7674 = vadd.xlane.f32.xlu0 %v7673
      %v7675 = vpop.xlane.xlu0 %7674
      %v7676 = vadd.f32 %v7552, %v7554
      %7677 = vadd.xlane.f32.xlu0 %v7676
      %v7678 = vpop.xlane.xlu0 %7677
      %v7679 = vadd.f32 %v7556, %v7558
      %7680 = vadd.xlane.f32.xlu0 %v7679
      %v7681 = vpop.xlane.xlu0 %7680
      %v7682 = vadd.f32 %v7560, %v7562
      %7683 = vadd.xlane.f32.xlu0 %v7682
      %v7684 = vpop.xlane.xlu0 %7683
      %v7685 = vadd.f32 %v7564, %v7566
      %7686 = vadd.xlane.f32.xlu0 %v7685
      %v7687 = vpop.xlane.xlu0 %7686
      %v7688 = vadd.f32 %v7568, %v7570
      %7689 = vadd.xlane.f32.xlu0 %v7688
      %v7690 = vpop.xlane.xlu0 %7689
      %v7691 = vadd.f32 %v7572, %v7574
      %7692 = vadd.xlane.f32.xlu0 %v7691
      %v7693 = vpop.xlane.xlu0 %7692
      %v7694 = vadd.f32 %v7576, %v7578
      %7695 = vadd.xlane.f32.xlu0 %v7694
      %v7696 = vpop.xlane.xlu0 %7695
      %v7697 = vadd.f32 %v7580, %v7582
      %7698 = vadd.xlane.f32.xlu0 %v7697
      %v7699 = vpop.xlane.xlu0 %7698
      %v7700 = vadd.f32 %v7584, %v7586
      %7701 = vadd.xlane.f32.xlu0 %v7700
      %v7702 = vpop.xlane.xlu0 %7701
      %v7703 = vadd.f32 %v7588, %v7590
      %7704 = vadd.xlane.f32.xlu0 %v7703
      %v7705 = vpop.xlane.xlu0 %7704
      %v7706 = vadd.f32 %v7592, %v7594
      %7707 = vadd.xlane.f32.xlu0 %v7706
      %v7708 = vpop.xlane.xlu0 %7707
      %v7709 = vadd.f32 %v7596, %v7598
      %7710 = vadd.xlane.f32.xlu0 %v7709
      %v7711 = vpop.xlane.xlu0 %7710
      %v7712 = vadd.f32 %v7600, %v7602
      %7713 = vadd.xlane.f32.xlu0 %v7712
      %v7714 = vpop.xlane.xlu0 %7713
      %v7715 = vadd.f32 %v7604, %v7606
      %7716 = vadd.xlane.f32.xlu0 %v7715
      %v7717 = vpop.xlane.xlu0 %7716
      %v7718 = vadd.f32 %v7608, %v7610
      %7719 = vadd.xlane.f32.xlu0 %v7718
      %v7720 = vpop.xlane.xlu0 %7719
      %v7721 = vadd.f32 %v7612, %v7614
      %7722 = vadd.xlane.f32.xlu0 %v7721
      %v7723 = vpop.xlane.xlu0 %7722
      %v7724 = vadd.f32 %v7616, %v7618
      %7725 = vadd.xlane.f32.xlu0 %v7724
      %v7726 = vpop.xlane.xlu0 %7725
      %v7727 = vadd.f32 %v7620, %v7622
      %7728 = vadd.xlane.f32.xlu0 %v7727
      %v7729 = vpop.xlane.xlu0 %7728
      %v7730 = vadd.f32 %v7624, %v7626
      %7731 = vadd.xlane.f32.xlu0 %v7730
      %v7732 = vpop.xlane.xlu0 %7731
      %v7733 = vadd.f32 %v7628, %v7630
      %7734 = vadd.xlane.f32.xlu0 %v7733
      %v7735 = vpop.xlane.xlu0 %7734
      %v7736 = vadd.f32 %v7632, %v7634
      %7737 = vadd.xlane.f32.xlu0 %v7736
      %v7738 = vpop.xlane.xlu0 %7737
      %v7739 = vadd.f32 %v7636, %v7638
      %7740 = vadd.xlane.f32.xlu0 %v7739
      %v7741 = vpop.xlane.xlu0 %7740
      %v7742 = vadd.f32 %v7640, %v7642
      %7743 = vadd.xlane.f32.xlu0 %v7742
      %v7744 = vpop.xlane.xlu0 %7743
      %v7745 = vadd.f32 %v7644, %v7646
      %7746 = vadd.xlane.f32.xlu0 %v7745
      %v7747 = vpop.xlane.xlu0 %7746
      %v7748 = vadd.f32 %v7648, %v7650
      %7749 = vadd.xlane.f32.xlu0 %v7748
      %v7750 = vpop.xlane.xlu0 %7749
      %v7751 = vadd.f32 %v7652, %v7654
      %7752 = vadd.xlane.f32.xlu0 %v7751
      %v7753 = vpop.xlane.xlu0 %7752
      %v7754 = vadd.f32 %v7656, %v7658
      %7755 = vadd.xlane.f32.xlu0 %v7754
      %v7756 = vpop.xlane.xlu0 %7755
      %v7757 = vadd.f32 %v7660, %v7662
      %7758 = vadd.xlane.f32.xlu0 %v7757
      %v7759 = vpop.xlane.xlu0 %7758
      %v7760 = vadd.f32 %v7664, %v7666
      %7761 = vadd.xlane.f32.xlu0 %v7760
      %v7762 = vpop.xlane.xlu0 %7761
      %v7763 = vrcp.pop %v7669
      %v7764 = vmul.f32 %v7540, %v7763
      %v7765 = vmul.f32 %v7542, %v7763
      %v7766 = vrcp.pop %v7672
      %v7767 = vmul.f32 %v7544, %v7766
      %v7768 = vmul.f32 %v7546, %v7766
      %v7769 = vrcp.pop %v7675
      %v7770 = vmul.f32 %v7548, %v7769
      %v7771 = vmul.f32 %v7550, %v7769
      %v7772 = vrcp.pop %v7678
      %v7773 = vmul.f32 %v7552, %v7772
      %v7774 = vmul.f32 %v7554, %v7772
      %v7775 = vrcp.pop %v7681
      %v7776 = vmul.f32 %v7556, %v7775
      %v7777 = vmul.f32 %v7558, %v7775
      %v7778 = vrcp.pop %v7684
      %v7779 = vmul.f32 %v7560, %v7778
      %v7780 = vmul.f32 %v7562, %v7778
      %v7781 = vrcp.pop %v7687
      %v7782 = vmul.f32 %v7564, %v7781
      %v7783 = vmul.f32 %v7566, %v7781
      %v7784 = vrcp.pop %v7690
      %v7785 = vmul.f32 %v7568, %v7784
      %v7786 = vmul.f32 %v7570, %v7784
      %v7787 = vrcp.pop %v7693
      %v7788 = vmul.f32 %v7572, %v7787
      %v7789 = vmul.f32 %v7574, %v7787
      %v7790 = vrcp.pop %v7696
      %v7791 = vmul.f32 %v7576, %v7790
      %v7792 = vmul.f32 %v7578, %v7790
      %v7793 = vrcp.pop %v7699
      %v7794 = vmul.f32 %v7580, %v7793
      %v7795 = vmul.f32 %v7582, %v7793
      %v7796 = vrcp.pop %v7702
      %v7797 = vmul.f32 %v7584, %v7796
      %v7798 = vmul.f32 %v7586, %v7796
      %v7799 = vrcp.pop %v7705
      %v7800 = vmul.f32 %v7588, %v7799
      %v7801 = vmul.f32 %v7590, %v7799
      %v7802 = vrcp.pop %v7708
      %v7803 = vmul.f32 %v7592, %v7802
      %v7804 = vmul.f32 %v7594, %v7802
      %v7805 = vrcp.pop %v7711
      %v7806 = vmul.f32 %v7596, %v7805
      %v7807 = vmul.f32 %v7598, %v7805
      %v7808 = vrcp.pop %v7714
      %v7809 = vmul.f32 %v7600, %v7808
      %v7810 = vmul.f32 %v7602, %v7808
      %v7811 = vrcp.pop %v7717
      %v7812 = vmul.f32 %v7604, %v7811
      %v7813 = vmul.f32 %v7606, %v7811
      %v7814 = vrcp.pop %v7720
      %v7815 = vmul.f32 %v7608, %v7814
      %v7816 = vmul.f32 %v7610, %v7814
      %v7817 = vrcp.pop %v7723
      %v7818 = vmul.f32 %v7612, %v7817
      %v7819 = vmul.f32 %v7614, %v7817
      %v7820 = vrcp.pop %v7726
      %v7821 = vmul.f32 %v7616, %v7820
      %v7822 = vmul.f32 %v7618, %v7820
      %v7823 = vrcp.pop %v7729
      %v7824 = vmul.f32 %v7620, %v7823
      %v7825 = vmul.f32 %v7622, %v7823
      %v7826 = vrcp.pop %v7732
      %v7827 = vmul.f32 %v7624, %v7826
      %v7828 = vmul.f32 %v7626, %v7826
      %v7829 = vrcp.pop %v7735
      %v7830 = vmul.f32 %v7628, %v7829
      %v7831 = vmul.f32 %v7630, %v7829
      %v7832 = vrcp.pop %v7738
      %v7833 = vmul.f32 %v7632, %v7832
      %v7834 = vmul.f32 %v7634, %v7832
      %v7835 = vrcp.pop %v7741
      %v7836 = vmul.f32 %v7636, %v7835
      %v7837 = vmul.f32 %v7638, %v7835
      %v7838 = vrcp.pop %v7744
      %v7839 = vmul.f32 %v7640, %v7838
      %v7840 = vmul.f32 %v7642, %v7838
      %v7841 = vrcp.pop %v7747
      %v7842 = vmul.f32 %v7644, %v7841
      %v7843 = vmul.f32 %v7646, %v7841
      %v7844 = vrcp.pop %v7750
      %v7845 = vmul.f32 %v7648, %v7844
      %v7846 = vmul.f32 %v7650, %v7844
      %v7847 = vrcp.pop %v7753
      %v7848 = vmul.f32 %v7652, %v7847
      %v7849 = vmul.f32 %v7654, %v7847
      %v7850 = vrcp.pop %v7756
      %v7851 = vmul.f32 %v7656, %v7850
      %v7852 = vmul.f32 %v7658, %v7850
      %v7853 = vrcp.pop %v7759
      %v7854 = vmul.f32 %v7660, %v7853
      %v7855 = vmul.f32 %v7662, %v7853
      %v7856 = vrcp.pop %v7762
      %v7857 = vmul.f32 %v7664, %v7856
      %v7858 = vmul.f32 %v7666, %v7856
      %7859 = vmatprep.subr.mxu0 %v7765
      %7860 = vmatpush1.xpose.msra.mxu0 %v7764
      %7861 = vmatprep.subr.mxu0 %v7768
      %7862 = vmatpush1.xpose.msra.mxu0 %v7767
      %7863 = vmatprep.subr.mxu0 %v7771
      %7864 = vmatpush1.xpose.msra.mxu0 %v7770
      %7865 = vmatprep.subr.mxu0 %v7774
      %7866 = vmatpush1.xpose.msra.mxu0 %v7773
      %7867 = vmatprep.subr.mxu0 %v7777
      %7868 = vmatpush1.xpose.msra.mxu0 %v7776
      %7869 = vmatprep.subr.mxu0 %v7780
      %7870 = vmatpush1.xpose.msra.mxu0 %v7779
      %7871 = vmatprep.subr.mxu0 %v7783
      %7872 = vmatpush1.xpose.msra.mxu0 %v7782
      %7873 = vmatprep.subr.mxu0 %v7786
      %7874 = vmatpush1.xpose.msra.mxu0 %v7785
      %7875 = vmatprep.subr.mxu0 %v7789
      %7876 = vmatpush1.xpose.msra.mxu0 %v7788
      %7877 = vmatprep.subr.mxu0 %v7792
      %7878 = vmatpush1.xpose.msra.mxu0 %v7791
      %7879 = vmatprep.subr.mxu0 %v7795
      %7880 = vmatpush1.xpose.msra.mxu0 %v7794
      %7881 = vmatprep.subr.mxu0 %v7798
      %7882 = vmatpush1.xpose.msra.mxu0 %v7797
      %7883 = vmatprep.subr.mxu0 %v7801
      %7884 = vmatpush1.xpose.msra.mxu0 %v7800
      %7885 = vmatprep.subr.mxu0 %v7804
      %7886 = vmatpush1.xpose.msra.mxu0 %v7803
      %7887 = vmatprep.subr.mxu0 %v7807
      %7888 = vmatpush1.xpose.msra.mxu0 %v7806
      %7889 = vmatprep.subr.mxu0 %v7810
      %7890 = vmatpush1.xpose.msra.mxu0 %v7809
      %7891 = vmatprep.subr.mxu0 %v7813
      %7892 = vmatpush1.xpose.msra.mxu0 %v7812
      %7893 = vmatprep.subr.mxu0 %v7816
      %7894 = vmatpush1.xpose.msra.mxu0 %v7815
      %7895 = vmatprep.subr.mxu0 %v7819
      %7896 = vmatpush1.xpose.msra.mxu0 %v7818
      %7897 = vmatprep.subr.mxu0 %v7822
      %7898 = vmatpush1.xpose.msra.mxu0 %v7821
      %7899 = vmatprep.subr.mxu0 %v7825
      %7900 = vmatpush1.xpose.msra.mxu0 %v7824
      %7901 = vmatprep.subr.mxu0 %v7828
      %7902 = vmatpush1.xpose.msra.mxu0 %v7827
      %7903 = vmatprep.subr.mxu0 %v7831
      %7904 = vmatpush1.xpose.msra.mxu0 %v7830
      %7905 = vmatprep.subr.mxu0 %v7834
      %7906 = vmatpush1.xpose.msra.mxu0 %v7833
      %7907 = vmatprep.subr.mxu0 %v7837
      %7908 = vmatpush1.xpose.msra.mxu0 %v7836
      %7909 = vmatprep.subr.mxu0 %v7840
      %7910 = vmatpush1.xpose.msra.mxu0 %v7839
      %7911 = vmatprep.subr.mxu0 %v7843
      %7912 = vmatpush1.xpose.msra.mxu0 %v7842
      %7913 = vmatprep.subr.mxu0 %v7846
      %7914 = vmatpush1.xpose.msra.mxu0 %v7845
      %7915 = vmatprep.subr.mxu0 %v7849
      %7916 = vmatpush1.xpose.msra.mxu0 %v7848
      %7917 = vmatprep.subr.mxu0 %v7852
      %7918 = vmatpush1.xpose.msra.mxu0 %v7851
      %7919 = vmatprep.subr.mxu0 %v7855
      %7920 = vmatpush1.xpose.msra.mxu0 %v7854
      %7921 = vmatprep.subr.mxu0 %v7858
      %7922 = vmatpush1.xpose.msra.mxu0 %v7857
      %7923 = vmatprep.mubr.f32.mxu0 %v636
      %7924 = vmatmul.mubr.f32.gmra.mrb[0].mxu0 %v634
      %v7925 = vpop.f32.mrb[0].mxu0
      %v7926 = vadd.f32 0.0, %v7925
      %v7927 = vpop.f32.mrb[0].mxu0
      %v7928 = vadd.f32 0.0, %v7927
      %7929 = vdwg.mxu0
      %v7932 = vrot.slane %v568, 4
      %v7933 = vrot.slane %v570, 4
      %7936 = vxpose.xlu0.b32.start [1/16] %v7932, 128
      %7937 = vxpose.xlu0.b32.cont [2/16] 0.0, 128
      %7938 = vxpose.xlu0.b32.cont [3/16] 0.0, 128
      %7939 = vxpose.xlu0.b32.cont [4/16] 0.0, 128
      %7940 = vxpose.xlu0.b32.cont [5/16] 0.0, 128
      %7941 = vxpose.xlu0.b32.cont [6/16] 0.0, 128
      %7942 = vxpose.xlu0.b32.cont [7/16] 0.0, 128
      %7943 = vxpose.xlu0.b32.cont [8/16] 0.0, 128
      %7944 = vxpose.xlu0.b32.cont [9/16] 0.0, 128
      %7945 = vxpose.xlu0.b32.cont [10/16] 0.0, 128
      %7946 = vxpose.xlu0.b32.cont [11/16] 0.0, 128
      %7947 = vxpose.xlu0.b32.cont [12/16] 0.0, 128
      %7948 = vxpose.xlu0.b32.cont [13/16] 0.0, 128
      %7949 = vxpose.xlu0.b32.cont [14/16] 0.0, 128
      %7950 = vxpose.xlu0.b32.cont [15/16] 0.0, 128
      %7951 = vxpose.xlu0.b32.end [16/16] 0.0, 128
      %v7952 = vpop.trf.xlu0
      %v7953 = vpop.trf.xlu0
      %v7954 = vpop.trf.xlu0
      %v7955 = vpop.trf.xlu0
      %v7956 = vpop.trf.xlu0
      %v7957 = vpop.trf.xlu0
      %v7958 = vpop.trf.xlu0
      %v7959 = vpop.trf.xlu0
      %v7960 = vpop.trf.xlu0
      %v7961 = vpop.trf.xlu0
      %v7962 = vpop.trf.xlu0
      %v7963 = vpop.trf.xlu0
      %v7964 = vpop.trf.xlu0
      %v7965 = vpop.trf.xlu0
      %v7966 = vpop.trf.xlu0
      %v7967 = vpop.trf.xlu0
      %7968 = vxpose.xlu0.b32.start [1/16] %v7933, 128
      %7969 = vxpose.xlu0.b32.cont [2/16] 0.0, 128
      %7970 = vxpose.xlu0.b32.cont [3/16] 0.0, 128
      %7971 = vxpose.xlu0.b32.cont [4/16] 0.0, 128
      %7972 = vxpose.xlu0.b32.cont [5/16] 0.0, 128
      %7973 = vxpose.xlu0.b32.cont [6/16] 0.0, 128
      %7974 = vxpose.xlu0.b32.cont [7/16] 0.0, 128
      %7975 = vxpose.xlu0.b32.cont [8/16] 0.0, 128
      %7976 = vxpose.xlu0.b32.cont [9/16] 0.0, 128
      %7977 = vxpose.xlu0.b32.cont [10/16] 0.0, 128
      %7978 = vxpose.xlu0.b32.cont [11/16] 0.0, 128
      %7979 = vxpose.xlu0.b32.cont [12/16] 0.0, 128
      %7980 = vxpose.xlu0.b32.cont [13/16] 0.0, 128
      %7981 = vxpose.xlu0.b32.cont [14/16] 0.0, 128
      %7982 = vxpose.xlu0.b32.cont [15/16] 0.0, 128
      %7983 = vxpose.xlu0.b32.end [16/16] 0.0, 128
      %v7984 = vpop.trf.xlu0
      %v7985 = vpop.trf.xlu0
      %v7986 = vpop.trf.xlu0
      %v7987 = vpop.trf.xlu0
      %v7988 = vpop.trf.xlu0
      %v7989 = vpop.trf.xlu0
      %v7990 = vpop.trf.xlu0
      %v7991 = vpop.trf.xlu0
      %v7992 = vpop.trf.xlu0
      %v7993 = vpop.trf.xlu0
      %v7994 = vpop.trf.xlu0
      %v7995 = vpop.trf.xlu0
      %v7996 = vpop.trf.xlu0
      %v7997 = vpop.trf.xlu0
      %v7998 = vpop.trf.xlu0
      %v7999 = vpop.trf.xlu0
      %v8000 = vrot.slane %v592, 4
      %v8001 = vrot.slane %v594, 4
      %v8003 = vsel %vm708, %v7952, 0
      %v8006 = vsel %vm708, %v7953, 0
      %v8009 = vsel %vm708, %v7954, 0
      %v8012 = vsel %vm708, %v7955, 0
      %v8015 = vsel %vm708, %v7956, 0
      %v8018 = vsel %vm708, %v7957, 0
      %v8021 = vsel %vm708, %v7958, 0
      %v8024 = vsel %vm708, %v7959, 0
      %v8027 = vsel %vm708, %v7960, 0
      %v8030 = vsel %vm708, %v7961, 0
      %v8033 = vsel %vm708, %v7962, 0
      %v8036 = vsel %vm708, %v7963, 0
      %v8039 = vsel %vm708, %v7964, 0
      %v8042 = vsel %vm708, %v7965, 0
      %v8045 = vsel %vm708, %v7966, 0
      %v8048 = vsel %vm708, %v7967, 0
      %v8051 = vsel %vm708, %v7984, 0
      %v8054 = vsel %vm708, %v7985, 0
      %v8057 = vsel %vm708, %v7986, 0
      %v8060 = vsel %vm708, %v7987, 0
      %v8063 = vsel %vm708, %v7988, 0
      %v8066 = vsel %vm708, %v7989, 0
      %v8069 = vsel %vm708, %v7990, 0
      %v8072 = vsel %vm708, %v7991, 0
      %v8075 = vsel %vm708, %v7992, 0
      %v8078 = vsel %vm708, %v7993, 0
      %v8081 = vsel %vm708, %v7994, 0
      %v8084 = vsel %vm708, %v7995, 0
      %v8087 = vsel %vm708, %v7996, 0
      %v8090 = vsel %vm708, %v7997, 0
      %v8093 = vsel %vm708, %v7998, 0
      %v8096 = vsel %vm708, %v7999, 0
      %v8098 = vsel %vm805, %v8000, 0
      %v8100 = vsel %vm805, %v8001, 0
      %8102 = vmatprep.subr.mxu0 %v8100
      %8103 = vmatpush1.msra.mxu0 %v8098
      %8104 = vmatprep.subr.mxu0 0.0
      %8105 = vmatpush1.msra.mxu0 0.0
      %8106 = vmatprep.subr.mxu0 0.0
      %8107 = vmatpush1.msra.mxu0 0.0
      %8108 = vmatprep.subr.mxu0 0.0
      %8109 = vmatpush1.msra.mxu0 0.0
      %8110 = vmatprep.subr.mxu0 0.0
      %8111 = vmatpush1.msra.mxu0 0.0
      %8112 = vmatprep.subr.mxu0 0.0
      %8113 = vmatpush1.msra.mxu0 0.0
      %8114 = vmatprep.subr.mxu0 0.0
      %8115 = vmatpush1.msra.mxu0 0.0
      %8116 = vmatprep.subr.mxu0 0.0
      %8117 = vmatpush1.msra.mxu0 0.0
      %8118 = vmatprep.subr.mxu0 0.0
      %8119 = vmatpush1.msra.mxu0 0.0
      %8120 = vmatprep.subr.mxu0 0.0
      %8121 = vmatpush1.msra.mxu0 0.0
      %8122 = vmatprep.subr.mxu0 0.0
      %8123 = vmatpush1.msra.mxu0 0.0
      %8124 = vmatprep.subr.mxu0 0.0
      %8125 = vmatpush1.msra.mxu0 0.0
      %8126 = vmatprep.subr.mxu0 0.0
      %8127 = vmatpush1.msra.mxu0 0.0
      %8128 = vmatprep.subr.mxu0 0.0
      %8129 = vmatpush1.msra.mxu0 0.0
      %8130 = vmatprep.subr.mxu0 0.0
      %8131 = vmatpush1.msra.mxu0 0.0
      %8132 = vmatprep.subr.mxu0 0.0
      %8133 = vmatpush1.msra.mxu0 0.0
      %8134 = vmatprep.subr.mxu0 0.0
      %8135 = vmatpush1.msra.mxu0 0.0
      %8136 = vmatprep.subr.mxu0 0.0
      %8137 = vmatpush1.msra.mxu0 0.0
      %8138 = vmatprep.subr.mxu0 0.0
      %8139 = vmatpush1.msra.mxu0 0.0
      %8140 = vmatprep.subr.mxu0 0.0
      %8141 = vmatpush1.msra.mxu0 0.0
      %8142 = vmatprep.subr.mxu0 0.0
      %8143 = vmatpush1.msra.mxu0 0.0
      %8144 = vmatprep.subr.mxu0 0.0
      %8145 = vmatpush1.msra.mxu0 0.0
      %8146 = vmatprep.subr.mxu0 0.0
      %8147 = vmatpush1.msra.mxu0 0.0
      %8148 = vmatprep.subr.mxu0 0.0
      %8149 = vmatpush1.msra.mxu0 0.0
      %8150 = vmatprep.subr.mxu0 0.0
      %8151 = vmatpush1.msra.mxu0 0.0
      %8152 = vmatprep.subr.mxu0 0.0
      %8153 = vmatpush1.msra.mxu0 0.0
      %8154 = vmatprep.subr.mxu0 0.0
      %8155 = vmatpush1.msra.mxu0 0.0
      %8156 = vmatprep.subr.mxu0 0.0
      %8157 = vmatpush1.msra.mxu0 0.0
      %8158 = vmatprep.subr.mxu0 0.0
      %8159 = vmatpush1.msra.mxu0 0.0
      %8160 = vmatprep.subr.mxu0 0.0
      %8161 = vmatpush1.msra.mxu0 0.0
      %8162 = vmatprep.subr.mxu0 0.0
      %8163 = vmatpush1.msra.mxu0 0.0
      %8164 = vmatprep.subr.mxu0 0.0
      %8165 = vmatpush1.msra.mxu0 0.0
      %8166 = vmatprep.mubr.f32.mxu0 0.0
      %8167 = vmatmul.mubr.f32.gmra.mrb[0].mxu0 %v8003
      %v8168 = vpop.f32.mrb[0].mxu0
      %v8169 = vadd.f32 0.0, %v8168
      %v8170 = vpop.f32.mrb[0].mxu0
      %v8171 = vadd.f32 0.0, %v8170
      %8172 = vmatprep.mubr.f32.mxu0 0.0
      %8173 = vmatmul.mubr.f32.gmra.mrb[0].mxu0 %v8006
      %v8174 = vpop.f32.mrb[0].mxu0
      %v8175 = vadd.f32 0.0, %v8174
      %v8176 = vpop.f32.mrb[0].mxu0
      %v8177 = vadd.f32 0.0, %v8176
      %8178 = vmatprep.mubr.f32.mxu0 0.0
      %8179 = vmatmul.mubr.f32.gmra.mrb[0].mxu0 %v8009
      %v8180 = vpop.f32.mrb[0].mxu0
      %v8181 = vadd.f32 0.0, %v8180
      %v8182 = vpop.f32.mrb[0].mxu0
      %v8183 = vadd.f32 0.0, %v8182
      %8184 = vmatprep.mubr.f32.mxu0 0.0
      %8185 = vmatmul.mubr.f32.gmra.mrb[0].mxu0 %v8012
      %v8186 = vpop.f32.mrb[0].mxu0
      %v8187 = vadd.f32 0.0, %v8186
      %v8188 = vpop.f32.mrb[0].mxu0
      %v8189 = vadd.f32 0.0, %v8188
      %8190 = vmatprep.mubr.f32.mxu0 0.0
      %8191 = vmatmul.mubr.f32.gmra.mrb[0].mxu0 %v8015
      %v8192 = vpop.f32.mrb[0].mxu0
      %v8193 = vadd.f32 0.0, %v8192
      %v8194 = vpop.f32.mrb[0].mxu0
      %v8195 = vadd.f32 0.0, %v8194
      %8196 = vmatprep.mubr.f32.mxu0 0.0
      %8197 = vmatmul.mubr.f32.gmra.mrb[0].mxu0 %v8018
      %v8198 = vpop.f32.mrb[0].mxu0
      %v8199 = vadd.f32 0.0, %v8198
      %v8200 = vpop.f32.mrb[0].mxu0
      %v8201 = vadd.f32 0.0, %v8200
      %8202 = vmatprep.mubr.f32.mxu0 0.0
      %8203 = vmatmul.mubr.f32.gmra.mrb[0].mxu0 %v8021
      %v8204 = vpop.f32.mrb[0].mxu0
      %v8205 = vadd.f32 0.0, %v8204
      %v8206 = vpop.f32.mrb[0].mxu0
      %v8207 = vadd.f32 0.0, %v8206
      %8208 = vmatprep.mubr.f32.mxu0 0.0
      %8209 = vmatmul.mubr.f32.gmra.mrb[0].mxu0 %v8024
      %v8210 = vpop.f32.mrb[0].mxu0
      %v8211 = vadd.f32 0.0, %v8210
      %v8212 = vpop.f32.mrb[0].mxu0
      %v8213 = vadd.f32 0.0, %v8212
      %8214 = vmatprep.mubr.f32.mxu0 0.0
      %8215 = vmatmul.mubr.f32.gmra.mrb[0].mxu0 %v8027
      %v8216 = vpop.f32.mrb[0].mxu0
      %v8217 = vadd.f32 0.0, %v8216
      %v8218 = vpop.f32.mrb[0].mxu0
      %v8219 = vadd.f32 0.0, %v8218
      %8220 = vmatprep.mubr.f32.mxu0 0.0
      %8221 = vmatmul.mubr.f32.gmra.mrb[0].mxu0 %v8030
      %v8222 = vpop.f32.mrb[0].mxu0
      %v8223 = vadd.f32 0.0, %v8222
      %v8224 = vpop.f32.mrb[0].mxu0
      %v8225 = vadd.f32 0.0, %v8224
      %8226 = vmatprep.mubr.f32.mxu0 0.0
      %8227 = vmatmul.mubr.f32.gmra.mrb[0].mxu0 %v8033
      %v8228 = vpop.f32.mrb[0].mxu0
      %v8229 = vadd.f32 0.0, %v8228
      %v8230 = vpop.f32.mrb[0].mxu0
      %v8231 = vadd.f32 0.0, %v8230
      %8232 = vmatprep.mubr.f32.mxu0 0.0
      %8233 = vmatmul.mubr.f32.gmra.mrb[0].mxu0 %v8036
      %v8234 = vpop.f32.mrb[0].mxu0
      %v8235 = vadd.f32 0.0, %v8234
      %v8236 = vpop.f32.mrb[0].mxu0
      %v8237 = vadd.f32 0.0, %v8236
      %8238 = vmatprep.mubr.f32.mxu0 0.0
      %8239 = vmatmul.mubr.f32.gmra.mrb[0].mxu0 %v8039
      %v8240 = vpop.f32.mrb[0].mxu0
      %v8241 = vadd.f32 0.0, %v8240
      %v8242 = vpop.f32.mrb[0].mxu0
      %v8243 = vadd.f32 0.0, %v8242
      %8244 = vmatprep.mubr.f32.mxu0 0.0
      %8245 = vmatmul.mubr.f32.gmra.mrb[0].mxu0 %v8042
      %v8246 = vpop.f32.mrb[0].mxu0
      %v8247 = vadd.f32 0.0, %v8246
      %v8248 = vpop.f32.mrb[0].mxu0
      %v8249 = vadd.f32 0.0, %v8248
      %8250 = vmatprep.mubr.f32.mxu0 0.0
      %8251 = vmatmul.mubr.f32.gmra.mrb[0].mxu0 %v8045
      %v8252 = vpop.f32.mrb[0].mxu0
      %v8253 = vadd.f32 0.0, %v8252
      %v8254 = vpop.f32.mrb[0].mxu0
      %v8255 = vadd.f32 0.0, %v8254
      %8256 = vmatprep.mubr.f32.mxu0 0.0
      %8257 = vmatmul.mubr.f32.gmra.mrb[0].mxu0 %v8048
      %v8258 = vpop.f32.mrb[0].mxu0
      %v8259 = vadd.f32 0.0, %v8258
      %v8260 = vpop.f32.mrb[0].mxu0
      %v8261 = vadd.f32 0.0, %v8260
      %8262 = vmatprep.mubr.f32.mxu0 0.0
      %8263 = vmatmul.mubr.f32.gmra.mrb[0].mxu0 %v8051
      %v8264 = vpop.f32.mrb[0].mxu0
      %v8265 = vadd.f32 0.0, %v8264
      %v8266 = vpop.f32.mrb[0].mxu0
      %v8267 = vadd.f32 0.0, %v8266
      %8268 = vmatprep.mubr.f32.mxu0 0.0
      %8269 = vmatmul.mubr.f32.gmra.mrb[0].mxu0 %v8054
      %v8270 = vpop.f32.mrb[0].mxu0
      %v8271 = vadd.f32 0.0, %v8270
      %v8272 = vpop.f32.mrb[0].mxu0
      %v8273 = vadd.f32 0.0, %v8272
      %8274 = vmatprep.mubr.f32.mxu0 0.0
      %8275 = vmatmul.mubr.f32.gmra.mrb[0].mxu0 %v8057
      %v8276 = vpop.f32.mrb[0].mxu0
      %v8277 = vadd.f32 0.0, %v8276
      %v8278 = vpop.f32.mrb[0].mxu0
      %v8279 = vadd.f32 0.0, %v8278
      %8280 = vmatprep.mubr.f32.mxu0 0.0
      %8281 = vmatmul.mubr.f32.gmra.mrb[0].mxu0 %v8060
      %v8282 = vpop.f32.mrb[0].mxu0
      %v8283 = vadd.f32 0.0, %v8282
      %v8284 = vpop.f32.mrb[0].mxu0
      %v8285 = vadd.f32 0.0, %v8284
      %8286 = vmatprep.mubr.f32.mxu0 0.0
      %8287 = vmatmul.mubr.f32.gmra.mrb[0].mxu0 %v8063
      %v8288 = vpop.f32.mrb[0].mxu0
      %v8289 = vadd.f32 0.0, %v8288
      %v8290 = vpop.f32.mrb[0].mxu0
      %v8291 = vadd.f32 0.0, %v8290
      %8292 = vmatprep.mubr.f32.mxu0 0.0
      %8293 = vmatmul.mubr.f32.gmra.mrb[0].mxu0 %v8066
      %v8294 = vpop.f32.mrb[0].mxu0
      %v8295 = vadd.f32 0.0, %v8294
      %v8296 = vpop.f32.mrb[0].mxu0
      %v8297 = vadd.f32 0.0, %v8296
      %8298 = vmatprep.mubr.f32.mxu0 0.0
      %8299 = vmatmul.mubr.f32.gmra.mrb[0].mxu0 %v8069
      %v8300 = vpop.f32.mrb[0].mxu0
      %v8301 = vadd.f32 0.0, %v8300
      %v8302 = vpop.f32.mrb[0].mxu0
      %v8303 = vadd.f32 0.0, %v8302
      %8304 = vmatprep.mubr.f32.mxu0 0.0
      %8305 = vmatmul.mubr.f32.gmra.mrb[0].mxu0 %v8072
      %v8306 = vpop.f32.mrb[0].mxu0
      %v8307 = vadd.f32 0.0, %v8306
      %v8308 = vpop.f32.mrb[0].mxu0
      %v8309 = vadd.f32 0.0, %v8308
      %8310 = vmatprep.mubr.f32.mxu0 0.0
      %8311 = vmatmul.mubr.f32.gmra.mrb[0].mxu0 %v8075
      %v8312 = vpop.f32.mrb[0].mxu0
      %v8313 = vadd.f32 0.0, %v8312
      %v8314 = vpop.f32.mrb[0].mxu0
      %v8315 = vadd.f32 0.0, %v8314
      %8316 = vmatprep.mubr.f32.mxu0 0.0
      %8317 = vmatmul.mubr.f32.gmra.mrb[0].mxu0 %v8078
      %v8318 = vpop.f32.mrb[0].mxu0
      %v8319 = vadd.f32 0.0, %v8318
      %v8320 = vpop.f32.mrb[0].mxu0
      %v8321 = vadd.f32 0.0, %v8320
      %8322 = vmatprep.mubr.f32.mxu0 0.0
      %8323 = vmatmul.mubr.f32.gmra.mrb[0].mxu0 %v8081
      %v8324 = vpop.f32.mrb[0].mxu0
      %v8325 = vadd.f32 0.0, %v8324
      %v8326 = vpop.f32.mrb[0].mxu0
      %v8327 = vadd.f32 0.0, %v8326
      %8328 = vmatprep.mubr.f32.mxu0 0.0
      %8329 = vmatmul.mubr.f32.gmra.mrb[0].mxu0 %v8084
      %v8330 = vpop.f32.mrb[0].mxu0
      %v8331 = vadd.f32 0.0, %v8330
      %v8332 = vpop.f32.mrb[0].mxu0
      %v8333 = vadd.f32 0.0, %v8332
      %8334 = vmatprep.mubr.f32.mxu0 0.0
      %8335 = vmatmul.mubr.f32.gmra.mrb[0].mxu0 %v8087
      %v8336 = vpop.f32.mrb[0].mxu0
      %v8337 = vadd.f32 0.0, %v8336
      %v8338 = vpop.f32.mrb[0].mxu0
      %v8339 = vadd.f32 0.0, %v8338
      %8340 = vmatprep.mubr.f32.mxu0 0.0
      %8341 = vmatmul.mubr.f32.gmra.mrb[0].mxu0 %v8090
      %v8342 = vpop.f32.mrb[0].mxu0
      %v8343 = vadd.f32 0.0, %v8342
      %v8344 = vpop.f32.mrb[0].mxu0
      %v8345 = vadd.f32 0.0, %v8344
      %8346 = vmatprep.mubr.f32.mxu0 0.0
      %8347 = vmatmul.mubr.f32.gmra.mrb[0].mxu0 %v8093
      %v8348 = vpop.f32.mrb[0].mxu0
      %v8349 = vadd.f32 0.0, %v8348
      %v8350 = vpop.f32.mrb[0].mxu0
      %v8351 = vadd.f32 0.0, %v8350
      %8352 = vmatprep.mubr.f32.mxu0 0.0
      %8353 = vmatmul.mubr.f32.gmra.mrb[0].mxu0 %v8096
      %v8354 = vpop.f32.mrb[0].mxu0
      %v8355 = vadd.f32 0.0, %v8354
      %v8356 = vpop.f32.mrb[0].mxu0
      %v8357 = vadd.f32 0.0, %v8356
      %8358 = vdwg.mxu0
      %v8359 = vmul.f32 %v8169, 0.5
      %v8360 = vmul.f32 %v8171, 0.5
      %v8361 = vmul.f32 %v8175, 0.5
      %v8362 = vmul.f32 %v8177, 0.5
      %v8363 = vmul.f32 %v8181, 0.5
      %v8364 = vmul.f32 %v8183, 0.5
      %v8365 = vmul.f32 %v8187, 0.5
      %v8366 = vmul.f32 %v8189, 0.5
      %v8367 = vmul.f32 %v8193, 0.5
      %v8368 = vmul.f32 %v8195, 0.5
      %v8369 = vmul.f32 %v8199, 0.5
      %v8370 = vmul.f32 %v8201, 0.5
      %v8371 = vmul.f32 %v8205, 0.5
      %v8372 = vmul.f32 %v8207, 0.5
      %v8373 = vmul.f32 %v8211, 0.5
      %v8374 = vmul.f32 %v8213, 0.5
      %v8375 = vmul.f32 %v8217, 0.5
      %v8376 = vmul.f32 %v8219, 0.5
      %v8377 = vmul.f32 %v8223, 0.5
      %v8378 = vmul.f32 %v8225, 0.5
      %v8379 = vmul.f32 %v8229, 0.5
      %v8380 = vmul.f32 %v8231, 0.5
      %v8381 = vmul.f32 %v8235, 0.5
      %v8382 = vmul.f32 %v8237, 0.5
      %v8383 = vmul.f32 %v8241, 0.5
      %v8384 = vmul.f32 %v8243, 0.5
      %v8385 = vmul.f32 %v8247, 0.5
      %v8386 = vmul.f32 %v8249, 0.5
      %v8387 = vmul.f32 %v8253, 0.5
      %v8388 = vmul.f32 %v8255, 0.5
      %v8389 = vmul.f32 %v8259, 0.5
      %v8390 = vmul.f32 %v8261, 0.5
      %v8391 = vmul.f32 %v8265, 0.5
      %v8392 = vmul.f32 %v8267, 0.5
      %v8393 = vmul.f32 %v8271, 0.5
      %v8394 = vmul.f32 %v8273, 0.5
      %v8395 = vmul.f32 %v8277, 0.5
      %v8396 = vmul.f32 %v8279, 0.5
      %v8397 = vmul.f32 %v8283, 0.5
      %v8398 = vmul.f32 %v8285, 0.5
      %v8399 = vmul.f32 %v8289, 0.5
      %v8400 = vmul.f32 %v8291, 0.5
      %v8401 = vmul.f32 %v8295, 0.5
      %v8402 = vmul.f32 %v8297, 0.5
      %v8403 = vmul.f32 %v8301, 0.5
      %v8404 = vmul.f32 %v8303, 0.5
      %v8405 = vmul.f32 %v8307, 0.5
      %v8406 = vmul.f32 %v8309, 0.5
      %v8407 = vmul.f32 %v8313, 0.5
      %v8408 = vmul.f32 %v8315, 0.5
      %v8409 = vmul.f32 %v8319, 0.5
      %v8410 = vmul.f32 %v8321, 0.5
      %v8411 = vmul.f32 %v8325, 0.5
      %v8412 = vmul.f32 %v8327, 0.5
      %v8413 = vmul.f32 %v8331, 0.5
      %v8414 = vmul.f32 %v8333, 0.5
      %v8415 = vmul.f32 %v8337, 0.5
      %v8416 = vmul.f32 %v8339, 0.5
      %v8417 = vmul.f32 %v8343, 0.5
      %v8418 = vmul.f32 %v8345, 0.5
      %v8419 = vmul.f32 %v8349, 0.5
      %v8420 = vmul.f32 %v8351, 0.5
      %v8421 = vmul.f32 %v8355, 0.5
      %v8422 = vmul.f32 %v8357, 0.5
      %v8423 = vmax.f32 %v8359, %v8360
      %8424 = vmax.xlane.f32.xlu0 %v8423
      %v8425 = vpop.xlane.xlu0 %8424
      %v8426 = vmax.f32 %v8361, %v8362
      %8427 = vmax.xlane.f32.xlu0 %v8426
      %v8428 = vpop.xlane.xlu0 %8427
      %v8429 = vmax.f32 %v8363, %v8364
      %8430 = vmax.xlane.f32.xlu0 %v8429
      %v8431 = vpop.xlane.xlu0 %8430
      %v8432 = vmax.f32 %v8365, %v8366
      %8433 = vmax.xlane.f32.xlu0 %v8432
      %v8434 = vpop.xlane.xlu0 %8433
      %v8435 = vmax.f32 %v8367, %v8368
      %8436 = vmax.xlane.f32.xlu0 %v8435
      %v8437 = vpop.xlane.xlu0 %8436
      %v8438 = vmax.f32 %v8369, %v8370
      %8439 = vmax.xlane.f32.xlu0 %v8438
      %v8440 = vpop.xlane.xlu0 %8439
      %v8441 = vmax.f32 %v8371, %v8372
      %8442 = vmax.xlane.f32.xlu0 %v8441
      %v8443 = vpop.xlane.xlu0 %8442
      %v8444 = vmax.f32 %v8373, %v8374
      %8445 = vmax.xlane.f32.xlu0 %v8444
      %v8446 = vpop.xlane.xlu0 %8445
      %v8447 = vmax.f32 %v8375, %v8376
      %8448 = vmax.xlane.f32.xlu0 %v8447
      %v8449 = vpop.xlane.xlu0 %8448
      %v8450 = vmax.f32 %v8377, %v8378
      %8451 = vmax.xlane.f32.xlu0 %v8450
      %v8452 = vpop.xlane.xlu0 %8451
      %v8453 = vmax.f32 %v8379, %v8380
      %8454 = vmax.xlane.f32.xlu0 %v8453
      %v8455 = vpop.xlane.xlu0 %8454
      %v8456 = vmax.f32 %v8381, %v8382
      %8457 = vmax.xlane.f32.xlu0 %v8456
      %v8458 = vpop.xlane.xlu0 %8457
      %v8459 = vmax.f32 %v8383, %v8384
      %8460 = vmax.xlane.f32.xlu0 %v8459
      %v8461 = vpop.xlane.xlu0 %8460
      %v8462 = vmax.f32 %v8385, %v8386
      %8463 = vmax.xlane.f32.xlu0 %v8462
      %v8464 = vpop.xlane.xlu0 %8463
      %v8465 = vmax.f32 %v8387, %v8388
      %8466 = vmax.xlane.f32.xlu0 %v8465
      %v8467 = vpop.xlane.xlu0 %8466
      %v8468 = vmax.f32 %v8389, %v8390
      %8469 = vmax.xlane.f32.xlu0 %v8468
      %v8470 = vpop.xlane.xlu0 %8469
      %v8471 = vmax.f32 %v8391, %v8392
      %8472 = vmax.xlane.f32.xlu0 %v8471
      %v8473 = vpop.xlane.xlu0 %8472
      %v8474 = vmax.f32 %v8393, %v8394
      %8475 = vmax.xlane.f32.xlu0 %v8474
      %v8476 = vpop.xlane.xlu0 %8475
      %v8477 = vmax.f32 %v8395, %v8396
      %8478 = vmax.xlane.f32.xlu0 %v8477
      %v8479 = vpop.xlane.xlu0 %8478
      %v8480 = vmax.f32 %v8397, %v8398
      %8481 = vmax.xlane.f32.xlu0 %v8480
      %v8482 = vpop.xlane.xlu0 %8481
      %v8483 = vmax.f32 %v8399, %v8400
      %8484 = vmax.xlane.f32.xlu0 %v8483
      %v8485 = vpop.xlane.xlu0 %8484
      %v8486 = vmax.f32 %v8401, %v8402
      %8487 = vmax.xlane.f32.xlu0 %v8486
      %v8488 = vpop.xlane.xlu0 %8487
      %v8489 = vmax.f32 %v8403, %v8404
      %8490 = vmax.xlane.f32.xlu0 %v8489
      %v8491 = vpop.xlane.xlu0 %8490
      %v8492 = vmax.f32 %v8405, %v8406
      %8493 = vmax.xlane.f32.xlu0 %v8492
      %v8494 = vpop.xlane.xlu0 %8493
      %v8495 = vmax.f32 %v8407, %v8408
      %8496 = vmax.xlane.f32.xlu0 %v8495
      %v8497 = vpop.xlane.xlu0 %8496
      %v8498 = vmax.f32 %v8409, %v8410
      %8499 = vmax.xlane.f32.xlu0 %v8498
      %v8500 = vpop.xlane.xlu0 %8499
      %v8501 = vmax.f32 %v8411, %v8412
      %8502 = vmax.xlane.f32.xlu0 %v8501
      %v8503 = vpop.xlane.xlu0 %8502
      %v8504 = vmax.f32 %v8413, %v8414
      %8505 = vmax.xlane.f32.xlu0 %v8504
      %v8506 = vpop.xlane.xlu0 %8505
      %v8507 = vmax.f32 %v8415, %v8416
      %8508 = vmax.xlane.f32.xlu0 %v8507
      %v8509 = vpop.xlane.xlu0 %8508
      %v8510 = vmax.f32 %v8417, %v8418
      %8511 = vmax.xlane.f32.xlu0 %v8510
      %v8512 = vpop.xlane.xlu0 %8511
      %v8513 = vmax.f32 %v8419, %v8420
      %8514 = vmax.xlane.f32.xlu0 %v8513
      %v8515 = vpop.xlane.xlu0 %8514
      %v8516 = vmax.f32 %v8421, %v8422
      %8517 = vmax.xlane.f32.xlu0 %v8516
      %v8518 = vpop.xlane.xlu0 %8517
      %v8519 = vsub.f32 %v8359, %v8425
      %v8520 = vsub.f32 %v8360, %v8425
      %v8521 = vsub.f32 %v8361, %v8428
      %v8522 = vsub.f32 %v8362, %v8428
      %v8523 = vsub.f32 %v8363, %v8431
      %v8524 = vsub.f32 %v8364, %v8431
      %v8525 = vsub.f32 %v8365, %v8434
      %v8526 = vsub.f32 %v8366, %v8434
      %v8527 = vsub.f32 %v8367, %v8437
      %v8528 = vsub.f32 %v8368, %v8437
      %v8529 = vsub.f32 %v8369, %v8440
      %v8530 = vsub.f32 %v8370, %v8440
      %v8531 = vsub.f32 %v8371, %v8443
      %v8532 = vsub.f32 %v8372, %v8443
      %v8533 = vsub.f32 %v8373, %v8446
      %v8534 = vsub.f32 %v8374, %v8446
      %v8535 = vsub.f32 %v8375, %v8449
      %v8536 = vsub.f32 %v8376, %v8449
      %v8537 = vsub.f32 %v8377, %v8452
      %v8538 = vsub.f32 %v8378, %v8452
      %v8539 = vsub.f32 %v8379, %v8455
      %v8540 = vsub.f32 %v8380, %v8455
      %v8541 = vsub.f32 %v8381, %v8458
      %v8542 = vsub.f32 %v8382, %v8458
      %v8543 = vsub.f32 %v8383, %v8461
      %v8544 = vsub.f32 %v8384, %v8461
      %v8545 = vsub.f32 %v8385, %v8464
      %v8546 = vsub.f32 %v8386, %v8464
      %v8547 = vsub.f32 %v8387, %v8467
      %v8548 = vsub.f32 %v8388, %v8467
      %v8549 = vsub.f32 %v8389, %v8470
      %v8550 = vsub.f32 %v8390, %v8470
      %v8551 = vsub.f32 %v8391, %v8473
      %v8552 = vsub.f32 %v8392, %v8473
      %v8553 = vsub.f32 %v8393, %v8476
      %v8554 = vsub.f32 %v8394, %v8476
      %v8555 = vsub.f32 %v8395, %v8479
      %v8556 = vsub.f32 %v8396, %v8479
      %v8557 = vsub.f32 %v8397, %v8482
      %v8558 = vsub.f32 %v8398, %v8482
      %v8559 = vsub.f32 %v8399, %v8485
      %v8560 = vsub.f32 %v8400, %v8485
      %v8561 = vsub.f32 %v8401, %v8488
      %v8562 = vsub.f32 %v8402, %v8488
      %v8563 = vsub.f32 %v8403, %v8491
      %v8564 = vsub.f32 %v8404, %v8491
      %v8565 = vsub.f32 %v8405, %v8494
      %v8566 = vsub.f32 %v8406, %v8494
      %v8567 = vsub.f32 %v8407, %v8497
      %v8568 = vsub.f32 %v8408, %v8497
      %v8569 = vsub.f32 %v8409, %v8500
      %v8570 = vsub.f32 %v8410, %v8500
      %v8571 = vsub.f32 %v8411, %v8503
      %v8572 = vsub.f32 %v8412, %v8503
      %v8573 = vsub.f32 %v8413, %v8506
      %v8574 = vsub.f32 %v8414, %v8506
      %v8575 = vsub.f32 %v8415, %v8509
      %v8576 = vsub.f32 %v8416, %v8509
      %v8577 = vsub.f32 %v8417, %v8512
      %v8578 = vsub.f32 %v8418, %v8512
      %v8579 = vsub.f32 %v8419, %v8515
      %v8580 = vsub.f32 %v8420, %v8515
      %v8581 = vsub.f32 %v8421, %v8518
      %v8582 = vsub.f32 %v8422, %v8518
      %v8583 = vmul.f32 %v8519, 1.442695
      %v8584 = vpow.pop %v8583
      %v8585 = vmul.f32 %v8520, 1.442695
      %v8586 = vpow.pop %v8585
      %v8587 = vmul.f32 %v8521, 1.442695
      %v8588 = vpow.pop %v8587
      %v8589 = vmul.f32 %v8522, 1.442695
      %v8590 = vpow.pop %v8589
      %v8591 = vmul.f32 %v8523, 1.442695
      %v8592 = vpow.pop %v8591
      %v8593 = vmul.f32 %v8524, 1.442695
      %v8594 = vpow.pop %v8593
      %v8595 = vmul.f32 %v8525, 1.442695
      %v8596 = vpow.pop %v8595
      %v8597 = vmul.f32 %v8526, 1.442695
      %v8598 = vpow.pop %v8597
      %v8599 = vmul.f32 %v8527, 1.442695
      %v8600 = vpow.pop %v8599
      %v8601 = vmul.f32 %v8528, 1.442695
      %v8602 = vpow.pop %v8601
      %v8603 = vmul.f32 %v8529, 1.442695
      %v8604 = vpow.pop %v8603
      %v8605 = vmul.f32 %v8530, 1.442695
      %v8606 = vpow.pop %v8605
      %v8607 = vmul.f32 %v8531, 1.442695
      %v8608 = vpow.pop %v8607
      %v8609 = vmul.f32 %v8532, 1.442695
      %v8610 = vpow.pop %v8609
      %v8611 = vmul.f32 %v8533, 1.442695
      %v8612 = vpow.pop %v8611
      %v8613 = vmul.f32 %v8534, 1.442695
      %v8614 = vpow.pop %v8613
      %v8615 = vmul.f32 %v8535, 1.442695
      %v8616 = vpow.pop %v8615
      %v8617 = vmul.f32 %v8536, 1.442695
      %v8618 = vpow.pop %v8617
      %v8619 = vmul.f32 %v8537, 1.442695
      %v8620 = vpow.pop %v8619
      %v8621 = vmul.f32 %v8538, 1.442695
      %v8622 = vpow.pop %v8621
      %v8623 = vmul.f32 %v8539, 1.442695
      %v8624 = vpow.pop %v8623
      %v8625 = vmul.f32 %v8540, 1.442695
      %v8626 = vpow.pop %v8625
      %v8627 = vmul.f32 %v8541, 1.442695
      %v8628 = vpow.pop %v8627
      %v8629 = vmul.f32 %v8542, 1.442695
      %v8630 = vpow.pop %v8629
      %v8631 = vmul.f32 %v8543, 1.442695
      %v8632 = vpow.pop %v8631
      %v8633 = vmul.f32 %v8544, 1.442695
      %v8634 = vpow.pop %v8633
      %v8635 = vmul.f32 %v8545, 1.442695
      %v8636 = vpow.pop %v8635
      %v8637 = vmul.f32 %v8546, 1.442695
      %v8638 = vpow.pop %v8637
      %v8639 = vmul.f32 %v8547, 1.442695
      %v8640 = vpow.pop %v8639
      %v8641 = vmul.f32 %v8548, 1.442695
      %v8642 = vpow.pop %v8641
      %v8643 = vmul.f32 %v8549, 1.442695
      %v8644 = vpow.pop %v8643
      %v8645 = vmul.f32 %v8550, 1.442695
      %v8646 = vpow.pop %v8645
      %v8647 = vmul.f32 %v8551, 1.442695
      %v8648 = vpow.pop %v8647
      %v8649 = vmul.f32 %v8552, 1.442695
      %v8650 = vpow.pop %v8649
      %v8651 = vmul.f32 %v8553, 1.442695
      %v8652 = vpow.pop %v8651
      %v8653 = vmul.f32 %v8554, 1.442695
      %v8654 = vpow.pop %v8653
      %v8655 = vmul.f32 %v8555, 1.442695
      %v8656 = vpow.pop %v8655
      %v8657 = vmul.f32 %v8556, 1.442695
      %v8658 = vpow.pop %v8657
      %v8659 = vmul.f32 %v8557, 1.442695
      %v8660 = vpow.pop %v8659
      %v8661 = vmul.f32 %v8558, 1.442695
      %v8662 = vpow.pop %v8661
      %v8663 = vmul.f32 %v8559, 1.442695
      %v8664 = vpow.pop %v8663
      %v8665 = vmul.f32 %v8560, 1.442695
      %v8666 = vpow.pop %v8665
      %v8667 = vmul.f32 %v8561, 1.442695
      %v8668 = vpow.pop %v8667
      %v8669 = vmul.f32 %v8562, 1.442695
      %v8670 = vpow.pop %v8669
      %v8671 = vmul.f32 %v8563, 1.442695
      %v8672 = vpow.pop %v8671
      %v8673 = vmul.f32 %v8564, 1.442695
      %v8674 = vpow.pop %v8673
      %v8675 = vmul.f32 %v8565, 1.442695
      %v8676 = vpow.pop %v8675
      %v8677 = vmul.f32 %v8566, 1.442695
      %v8678 = vpow.pop %v8677
      %v8679 = vmul.f32 %v8567, 1.442695
      %v8680 = vpow.pop %v8679
      %v8681 = vmul.f32 %v8568, 1.442695
      %v8682 = vpow.pop %v8681
      %v8683 = vmul.f32 %v8569, 1.442695
      %v8684 = vpow.pop %v8683
      %v8685 = vmul.f32 %v8570, 1.442695
      %v8686 = vpow.pop %v8685
      %v8687 = vmul.f32 %v8571, 1.442695
      %v8688 = vpow.pop %v8687
      %v8689 = vmul.f32 %v8572, 1.442695
      %v8690 = vpow.pop %v8689
      %v8691 = vmul.f32 %v8573, 1.442695
      %v8692 = vpow.pop %v8691
      %v8693 = vmul.f32 %v8574, 1.442695
      %v8694 = vpow.pop %v8693
      %v8695 = vmul.f32 %v8575, 1.442695
      %v8696 = vpow.pop %v8695
      %v8697 = vmul.f32 %v8576, 1.442695
      %v8698 = vpow.pop %v8697
      %v8699 = vmul.f32 %v8577, 1.442695
      %v8700 = vpow.pop %v8699
      %v8701 = vmul.f32 %v8578, 1.442695
      %v8702 = vpow.pop %v8701
      %v8703 = vmul.f32 %v8579, 1.442695
      %v8704 = vpow.pop %v8703
      %v8705 = vmul.f32 %v8580, 1.442695
      %v8706 = vpow.pop %v8705
      %v8707 = vmul.f32 %v8581, 1.442695
      %v8708 = vpow.pop %v8707
      %v8709 = vmul.f32 %v8582, 1.442695
      %v8710 = vpow.pop %v8709
      %v8711 = vadd.f32 %v8584, %v8586
      %8712 = vadd.xlane.f32.xlu0 %v8711
      %v8713 = vpop.xlane.xlu0 %8712
      %v8714 = vadd.f32 %v8588, %v8590
      %8715 = vadd.xlane.f32.xlu0 %v8714
      %v8716 = vpop.xlane.xlu0 %8715
      %v8717 = vadd.f32 %v8592, %v8594
      %8718 = vadd.xlane.f32.xlu0 %v8717
      %v8719 = vpop.xlane.xlu0 %8718
      %v8720 = vadd.f32 %v8596, %v8598
      %8721 = vadd.xlane.f32.xlu0 %v8720
      %v8722 = vpop.xlane.xlu0 %8721
      %v8723 = vadd.f32 %v8600, %v8602
      %8724 = vadd.xlane.f32.xlu0 %v8723
      %v8725 = vpop.xlane.xlu0 %8724
      %v8726 = vadd.f32 %v8604, %v8606
      %8727 = vadd.xlane.f32.xlu0 %v8726
      %v8728 = vpop.xlane.xlu0 %8727
      %v8729 = vadd.f32 %v8608, %v8610
      %8730 = vadd.xlane.f32.xlu0 %v8729
      %v8731 = vpop.xlane.xlu0 %8730
      %v8732 = vadd.f32 %v8612, %v8614
      %8733 = vadd.xlane.f32.xlu0 %v8732
      %v8734 = vpop.xlane.xlu0 %8733
      %v8735 = vadd.f32 %v8616, %v8618
      %8736 = vadd.xlane.f32.xlu0 %v8735
      %v8737 = vpop.xlane.xlu0 %8736
      %v8738 = vadd.f32 %v8620, %v8622
      %8739 = vadd.xlane.f32.xlu0 %v8738
      %v8740 = vpop.xlane.xlu0 %8739
      %v8741 = vadd.f32 %v8624, %v8626
      %8742 = vadd.xlane.f32.xlu0 %v8741
      %v8743 = vpop.xlane.xlu0 %8742
      %v8744 = vadd.f32 %v8628, %v8630
      %8745 = vadd.xlane.f32.xlu0 %v8744
      %v8746 = vpop.xlane.xlu0 %8745
      %v8747 = vadd.f32 %v8632, %v8634
      %8748 = vadd.xlane.f32.xlu0 %v8747
      %v8749 = vpop.xlane.xlu0 %8748
      %v8750 = vadd.f32 %v8636, %v8638
      %8751 = vadd.xlane.f32.xlu0 %v8750
      %v8752 = vpop.xlane.xlu0 %8751
      %v8753 = vadd.f32 %v8640, %v8642
      %8754 = vadd.xlane.f32.xlu0 %v8753
      %v8755 = vpop.xlane.xlu0 %8754
      %v8756 = vadd.f32 %v8644, %v8646
      %8757 = vadd.xlane.f32.xlu0 %v8756
      %v8758 = vpop.xlane.xlu0 %8757
      %v8759 = vadd.f32 %v8648, %v8650
      %8760 = vadd.xlane.f32.xlu0 %v8759
      %v8761 = vpop.xlane.xlu0 %8760
      %v8762 = vadd.f32 %v8652, %v8654
      %8763 = vadd.xlane.f32.xlu0 %v8762
      %v8764 = vpop.xlane.xlu0 %8763
      %v8765 = vadd.f32 %v8656, %v8658
      %8766 = vadd.xlane.f32.xlu0 %v8765
      %v8767 = vpop.xlane.xlu0 %8766
      %v8768 = vadd.f32 %v8660, %v8662
      %8769 = vadd.xlane.f32.xlu0 %v8768
      %v8770 = vpop.xlane.xlu0 %8769
      %v8771 = vadd.f32 %v8664, %v8666
      %8772 = vadd.xlane.f32.xlu0 %v8771
      %v8773 = vpop.xlane.xlu0 %8772
      %v8774 = vadd.f32 %v8668, %v8670
      %8775 = vadd.xlane.f32.xlu0 %v8774
      %v8776 = vpop.xlane.xlu0 %8775
      %v8777 = vadd.f32 %v8672, %v8674
      %8778 = vadd.xlane.f32.xlu0 %v8777
      %v8779 = vpop.xlane.xlu0 %8778
      %v8780 = vadd.f32 %v8676, %v8678
      %8781 = vadd.xlane.f32.xlu0 %v8780
      %v8782 = vpop.xlane.xlu0 %8781
      %v8783 = vadd.f32 %v8680, %v8682
      %8784 = vadd.xlane.f32.xlu0 %v8783
      %v8785 = vpop.xlane.xlu0 %8784
      %v8786 = vadd.f32 %v8684, %v8686
      %8787 = vadd.xlane.f32.xlu0 %v8786
      %v8788 = vpop.xlane.xlu0 %8787
      %v8789 = vadd.f32 %v8688, %v8690
      %8790 = vadd.xlane.f32.xlu0 %v8789
      %v8791 = vpop.xlane.xlu0 %8790
      %v8792 = vadd.f32 %v8692, %v8694
      %8793 = vadd.xlane.f32.xlu0 %v8792
      %v8794 = vpop.xlane.xlu0 %8793
      %v8795 = vadd.f32 %v8696, %v8698
      %8796 = vadd.xlane.f32.xlu0 %v8795
      %v8797 = vpop.xlane.xlu0 %8796
      %v8798 = vadd.f32 %v8700, %v8702
      %8799 = vadd.xlane.f32.xlu0 %v8798
      %v8800 = vpop.xlane.xlu0 %8799
      %v8801 = vadd.f32 %v8704, %v8706
      %8802 = vadd.xlane.f32.xlu0 %v8801
      %v8803 = vpop.xlane.xlu0 %8802
      %v8804 = vadd.f32 %v8708, %v8710
      %8805 = vadd.xlane.f32.xlu0 %v8804
      %v8806 = vpop.xlane.xlu0 %8805
      %v8807 = vrcp.pop %v8713
      %v8808 = vmul.f32 %v8584, %v8807
      %v8809 = vmul.f32 %v8586, %v8807
      %v8810 = vrcp.pop %v8716
      %v8811 = vmul.f32 %v8588, %v8810
      %v8812 = vmul.f32 %v8590, %v8810
      %v8813 = vrcp.pop %v8719
      %v8814 = vmul.f32 %v8592, %v8813
      %v8815 = vmul.f32 %v8594, %v8813
      %v8816 = vrcp.pop %v8722
      %v8817 = vmul.f32 %v8596, %v8816
      %v8818 = vmul.f32 %v8598, %v8816
      %v8819 = vrcp.pop %v8725
      %v8820 = vmul.f32 %v8600, %v8819
      %v8821 = vmul.f32 %v8602, %v8819
      %v8822 = vrcp.pop %v8728
      %v8823 = vmul.f32 %v8604, %v8822
      %v8824 = vmul.f32 %v8606, %v8822
      %v8825 = vrcp.pop %v8731
      %v8826 = vmul.f32 %v8608, %v8825
      %v8827 = vmul.f32 %v8610, %v8825
      %v8828 = vrcp.pop %v8734
      %v8829 = vmul.f32 %v8612, %v8828
      %v8830 = vmul.f32 %v8614, %v8828
      %v8831 = vrcp.pop %v8737
      %v8832 = vmul.f32 %v8616, %v8831
      %v8833 = vmul.f32 %v8618, %v8831
      %v8834 = vrcp.pop %v8740
      %v8835 = vmul.f32 %v8620, %v8834
      %v8836 = vmul.f32 %v8622, %v8834
      %v8837 = vrcp.pop %v8743
      %v8838 = vmul.f32 %v8624, %v8837
      %v8839 = vmul.f32 %v8626, %v8837
      %v8840 = vrcp.pop %v8746
      %v8841 = vmul.f32 %v8628, %v8840
      %v8842 = vmul.f32 %v8630, %v8840
      %v8843 = vrcp.pop %v8749
      %v8844 = vmul.f32 %v8632, %v8843
      %v8845 = vmul.f32 %v8634, %v8843
      %v8846 = vrcp.pop %v8752
      %v8847 = vmul.f32 %v8636, %v8846
      %v8848 = vmul.f32 %v8638, %v8846
      %v8849 = vrcp.pop %v8755
      %v8850 = vmul.f32 %v8640, %v8849
      %v8851 = vmul.f32 %v8642, %v8849
      %v8852 = vrcp.pop %v8758
      %v8853 = vmul.f32 %v8644, %v8852
      %v8854 = vmul.f32 %v8646, %v8852
      %v8855 = vrcp.pop %v8761
      %v8856 = vmul.f32 %v8648, %v8855
      %v8857 = vmul.f32 %v8650, %v8855
      %v8858 = vrcp.pop %v8764
      %v8859 = vmul.f32 %v8652, %v8858
      %v8860 = vmul.f32 %v8654, %v8858
      %v8861 = vrcp.pop %v8767
      %v8862 = vmul.f32 %v8656, %v8861
      %v8863 = vmul.f32 %v8658, %v8861
      %v8864 = vrcp.pop %v8770
      %v8865 = vmul.f32 %v8660, %v8864
      %v8866 = vmul.f32 %v8662, %v8864
      %v8867 = vrcp.pop %v8773
      %v8868 = vmul.f32 %v8664, %v8867
      %v8869 = vmul.f32 %v8666, %v8867
      %v8870 = vrcp.pop %v8776
      %v8871 = vmul.f32 %v8668, %v8870
      %v8872 = vmul.f32 %v8670, %v8870
      %v8873 = vrcp.pop %v8779
      %v8874 = vmul.f32 %v8672, %v8873
      %v8875 = vmul.f32 %v8674, %v8873
      %v8876 = vrcp.pop %v8782
      %v8877 = vmul.f32 %v8676, %v8876
      %v8878 = vmul.f32 %v8678, %v8876
      %v8879 = vrcp.pop %v8785
      %v8880 = vmul.f32 %v8680, %v8879
      %v8881 = vmul.f32 %v8682, %v8879
      %v8882 = vrcp.pop %v8788
      %v8883 = vmul.f32 %v8684, %v8882
      %v8884 = vmul.f32 %v8686, %v8882
      %v8885 = vrcp.pop %v8791
      %v8886 = vmul.f32 %v8688, %v8885
      %v8887 = vmul.f32 %v8690, %v8885
      %v8888 = vrcp.pop %v8794
      %v8889 = vmul.f32 %v8692, %v8888
      %v8890 = vmul.f32 %v8694, %v8888
      %v8891 = vrcp.pop %v8797
      %v8892 = vmul.f32 %v8696, %v8891
      %v8893 = vmul.f32 %v8698, %v8891
      %v8894 = vrcp.pop %v8800
      %v8895 = vmul.f32 %v8700, %v8894
      %v8896 = vmul.f32 %v8702, %v8894
      %v8897 = vrcp.pop %v8803
      %v8898 = vmul.f32 %v8704, %v8897
      %v8899 = vmul.f32 %v8706, %v8897
      %v8900 = vrcp.pop %v8806
      %v8901 = vmul.f32 %v8708, %v8900
      %v8902 = vmul.f32 %v8710, %v8900
      %8903 = vmatprep.subr.mxu0 %v8809
      %8904 = vmatpush1.xpose.msra.mxu0 %v8808
      %8905 = vmatprep.subr.mxu0 %v8812
      %8906 = vmatpush1.xpose.msra.mxu0 %v8811
      %8907 = vmatprep.subr.mxu0 %v8815
      %8908 = vmatpush1.xpose.msra.mxu0 %v8814
      %8909 = vmatprep.subr.mxu0 %v8818
      %8910 = vmatpush1.xpose.msra.mxu0 %v8817
      %8911 = vmatprep.subr.mxu0 %v8821
      %8912 = vmatpush1.xpose.msra.mxu0 %v8820
      %8913 = vmatprep.subr.mxu0 %v8824
      %8914 = vmatpush1.xpose.msra.mxu0 %v8823
      %8915 = vmatprep.subr.mxu0 %v8827
      %8916 = vmatpush1.xpose.msra.mxu0 %v8826
      %8917 = vmatprep.subr.mxu0 %v8830
      %8918 = vmatpush1.xpose.msra.mxu0 %v8829
      %8919 = vmatprep.subr.mxu0 %v8833
      %8920 = vmatpush1.xpose.msra.mxu0 %v8832
      %8921 = vmatprep.subr.mxu0 %v8836
      %8922 = vmatpush1.xpose.msra.mxu0 %v8835
      %8923 = vmatprep.subr.mxu0 %v8839
      %8924 = vmatpush1.xpose.msra.mxu0 %v8838
      %8925 = vmatprep.subr.mxu0 %v8842
      %8926 = vmatpush1.xpose.msra.mxu0 %v8841
      %8927 = vmatprep.subr.mxu0 %v8845
      %8928 = vmatpush1.xpose.msra.mxu0 %v8844
      %8929 = vmatprep.subr.mxu0 %v8848
      %8930 = vmatpush1.xpose.msra.mxu0 %v8847
      %8931 = vmatprep.subr.mxu0 %v8851
      %8932 = vmatpush1.xpose.msra.mxu0 %v8850
      %8933 = vmatprep.subr.mxu0 %v8854
      %8934 = vmatpush1.xpose.msra.mxu0 %v8853
      %8935 = vmatprep.subr.mxu0 %v8857
      %8936 = vmatpush1.xpose.msra.mxu0 %v8856
      %8937 = vmatprep.subr.mxu0 %v8860
      %8938 = vmatpush1.xpose.msra.mxu0 %v8859
      %8939 = vmatprep.subr.mxu0 %v8863
      %8940 = vmatpush1.xpose.msra.mxu0 %v8862
      %8941 = vmatprep.subr.mxu0 %v8866
      %8942 = vmatpush1.xpose.msra.mxu0 %v8865
      %8943 = vmatprep.subr.mxu0 %v8869
      %8944 = vmatpush1.xpose.msra.mxu0 %v8868
      %8945 = vmatprep.subr.mxu0 %v8872
      %8946 = vmatpush1.xpose.msra.mxu0 %v8871
      %8947 = vmatprep.subr.mxu0 %v8875
      %8948 = vmatpush1.xpose.msra.mxu0 %v8874
      %8949 = vmatprep.subr.mxu0 %v8878
      %8950 = vmatpush1.xpose.msra.mxu0 %v8877
      %8951 = vmatprep.subr.mxu0 %v8881
      %8952 = vmatpush1.xpose.msra.mxu0 %v8880
      %8953 = vmatprep.subr.mxu0 %v8884
      %8954 = vmatpush1.xpose.msra.mxu0 %v8883
      %8955 = vmatprep.subr.mxu0 %v8887
      %8956 = vmatpush1.xpose.msra.mxu0 %v8886
      %8957 = vmatprep.subr.mxu0 %v8890
      %8958 = vmatpush1.xpose.msra.mxu0 %v8889
      %8959 = vmatprep.subr.mxu0 %v8893
      %8960 = vmatpush1.xpose.msra.mxu0 %v8892
      %8961 = vmatprep.subr.mxu0 %v8896
      %8962 = vmatpush1.xpose.msra.mxu0 %v8895
      %8963 = vmatprep.subr.mxu0 %v8899
      %8964 = vmatpush1.xpose.msra.mxu0 %v8898
      %8965 = vmatprep.subr.mxu0 %v8902
      %8966 = vmatpush1.xpose.msra.mxu0 %v8901
      %8967 = vmatprep.mubr.f32.mxu0 %v642
      %8968 = vmatmul.mubr.f32.gmra.mrb[0].mxu0 %v640
      %v8969 = vpop.f32.mrb[0].mxu0
      %v8970 = vadd.f32 0.0, %v8969
      %v8971 = vpop.f32.mrb[0].mxu0
      %v8972 = vadd.f32 0.0, %v8971
      %8973 = vdwg.mxu0
      %v8974 = vld [vmem:[%s3] sm:$0xff]
      %v8975 = vld [vmem:[%s3 + $0x8] sm:$0xff]
      %v8976 = vld [vmem:[%s3 + $0x10] sm:$0xff]
      %v8977 = vld [vmem:[%s3 + $0x18] sm:$0xff]
      %v8978 = vld [vmem:[%s3 + $0x20] sm:$0xff]
      %v8979 = vld [vmem:[%s3 + $0x28] sm:$0xff]
      %v8980 = vld [vmem:[%s3 + $0x30] sm:$0xff]
      %v8981 = vld [vmem:[%s3 + $0x38] sm:$0xff]
      %v8982 = vld [vmem:[%s7] sm:$0xff]
      %v8983 = vld [vmem:[%s7 + $0x8] sm:$0xff]
      %v8984 = vld [vmem:[%s7 + $0x10] sm:$0x1]
      %v8985 = vld [vmem:[%s7 + $0x18] sm:$0x1]
      %v8986 = vld [vmem:[%s4] sm:$0xff]
      %v8987 = vld [vmem:[%s4 + $0x8] sm:$0xff]
      %v8988 = vld [vmem:[%s4 + $0x10] sm:$0xff]
      %v8989 = vld [vmem:[%s4 + $0x18] sm:$0xff]
      %v8990 = vld [vmem:[%s4 + $0x20] sm:$0xff]
      %v8991 = vld [vmem:[%s4 + $0x28] sm:$0xff]
      %v8992 = vld [vmem:[%s4 + $0x30] sm:$0xff]
      %v8993 = vld [vmem:[%s4 + $0x38] sm:$0xff]
      %8995 = vset.pattern.permute.xlu0 0
      %8996 = vperm.xlu0 %8995, %v8986
      %v8997 = vpop.permute.xlu0 %8996
      %9000 = vset.pattern.permute.xlu0 0
      %9001 = vperm.xlu0 %9000, %v8987
      %v9002 = vpop.permute.xlu0 %9001
      %9005 = vset.pattern.permute.xlu0 0
      %9006 = vperm.xlu0 %9005, %v8988
      %v9007 = vpop.permute.xlu0 %9006
      %9010 = vset.pattern.permute.xlu0 0
      %9011 = vperm.xlu0 %9010, %v8989
      %v9012 = vpop.permute.xlu0 %9011
      %9015 = vset.pattern.permute.xlu0 0
      %9016 = vperm.xlu0 %9015, %v8990
      %v9017 = vpop.permute.xlu0 %9016
      %9020 = vset.pattern.permute.xlu0 0
      %9021 = vperm.xlu0 %9020, %v8991
      %v9022 = vpop.permute.xlu0 %9021
      %9025 = vset.pattern.permute.xlu0 0
      %9026 = vperm.xlu0 %9025, %v8992
      %v9027 = vpop.permute.xlu0 %9026
      %9030 = vset.pattern.permute.xlu0 0
      %9031 = vperm.xlu0 %9030, %v8993
      %v9032 = vpop.permute.xlu0 %9031
      %9042 = vrot.lane.b32.xlu0 %v600, 17
      %v9043 = vpop.permute.xlu0 %9042
      %9044 = vrot.lane.b32.xlu0 %v606, 17
      %v9045 = vpop.permute.xlu0 %9044
      %9046 = vrot.lane.b32.xlu0 %v612, 17
      %v9047 = vpop.permute.xlu0 %9046
      %9048 = vrot.lane.b32.xlu0 %v618, 17
      %v9049 = vpop.permute.xlu0 %9048
      %9050 = vrot.lane.b32.xlu0 %v624, 17
      %v9051 = vpop.permute.xlu0 %9050
      %9052 = vrot.lane.b32.xlu0 %v630, 17
      %v9053 = vpop.permute.xlu0 %9052
      %9054 = vrot.lane.b32.xlu0 %v636, 17
      %v9055 = vpop.permute.xlu0 %9054
      %9056 = vrot.lane.b32.xlu0 %v642, 17
      %v9057 = vpop.permute.xlu0 %9056
      %9074 = vrot.lane.b32.xlu0 %v598, 17
      %v9075 = vpop.permute.xlu0 %9074
      %9076 = vrot.lane.b32.xlu0 %v604, 17
      %v9077 = vpop.permute.xlu0 %9076
      %9078 = vrot.lane.b32.xlu0 %v610, 17
      %v9079 = vpop.permute.xlu0 %9078
      %9080 = vrot.lane.b32.xlu0 %v616, 17
      %v9081 = vpop.permute.xlu0 %9080
      %9082 = vrot.lane.b32.xlu0 %v622, 17
      %v9083 = vpop.permute.xlu0 %9082
      %9084 = vrot.lane.b32.xlu0 %v628, 17
      %v9085 = vpop.permute.xlu0 %9084
      %9086 = vrot.lane.b32.xlu0 %v634, 17
      %v9087 = vpop.permute.xlu0 %9086
      %9088 = vrot.lane.b32.xlu0 %v640, 17
      %v9089 = vpop.permute.xlu0 %9088
      %vm9090 = vcmask 138240
      %v9091 = vsel %vm9090, %v9075, %v9043
      %v9092 = vsel %vm9090, %v9077, %v9045
      %v9093 = vsel %vm9090, %v9079, %v9047
      %v9094 = vsel %vm9090, %v9081, %v9049
      %v9095 = vsel %vm9090, %v9083, %v9051
      %v9096 = vsel %vm9090, %v9085, %v9053
      %v9097 = vsel %vm9090, %v9087, %v9055
      %v9098 = vsel %vm9090, %v9089, %v9057
      %v9115 = vsel %vm9090, %v9043, %v9075
      %v9116 = vsel %vm9090, %v9045, %v9077
      %v9117 = vsel %vm9090, %v9047, %v9079
      %v9118 = vsel %vm9090, %v9049, %v9081
      %v9119 = vsel %vm9090, %v9051, %v9083
      %v9120 = vsel %vm9090, %v9053, %v9085
      %v9121 = vsel %vm9090, %v9055, %v9087
      %v9122 = vsel %vm9090, %v9057, %v9089
      %v9123 = vlaneseq
      %v9124 = vshrl.u32 %v9123, 7
      %v9125 = vsub.s32 0, %v9124
      %v9126 = vrot.slane %v8982, %v9125
      %v9127 = vlaneseq
      %v9128 = vshrl.u32 %v9127, 7
      %v9129 = vsub.s32 0, %v9128
      %v9130 = vrot.slane %v8983, %v9129
      %v9131 = vmul.f32 %v9115, %v9126
      %v9132 = vmul.f32 %v9091, %v9130
      %v9133 = vmul.f32 %v9116, %v9126
      %v9134 = vmul.f32 %v9092, %v9130
      %v9135 = vmul.f32 %v9117, %v9126
      %v9136 = vmul.f32 %v9093, %v9130
      %v9137 = vmul.f32 %v9118, %v9126
      %v9138 = vmul.f32 %v9094, %v9130
      %v9139 = vmul.f32 %v9119, %v9126
      %v9140 = vmul.f32 %v9095, %v9130
      %v9141 = vmul.f32 %v9120, %v9126
      %v9142 = vmul.f32 %v9096, %v9130
      %v9143 = vmul.f32 %v9121, %v9126
      %v9144 = vmul.f32 %v9097, %v9130
      %v9145 = vmul.f32 %v9122, %v9126
      %v9146 = vmul.f32 %v9098, %v9130
      %9148 = vset.pattern.permute.xlu0 0
      %9149 = vperm.xlu0 %9148, %v8974
      %v9150 = vpop.permute.xlu0 %9149
      %9153 = vset.pattern.permute.xlu0 0
      %9154 = vperm.xlu0 %9153, %v8975
      %v9155 = vpop.permute.xlu0 %9154
      %9158 = vset.pattern.permute.xlu0 0
      %9159 = vperm.xlu0 %9158, %v8976
      %v9160 = vpop.permute.xlu0 %9159
      %9163 = vset.pattern.permute.xlu0 0
      %9164 = vperm.xlu0 %9163, %v8977
      %v9165 = vpop.permute.xlu0 %9164
      %9168 = vset.pattern.permute.xlu0 0
      %9169 = vperm.xlu0 %9168, %v8978
      %v9170 = vpop.permute.xlu0 %9169
      %9173 = vset.pattern.permute.xlu0 0
      %9174 = vperm.xlu0 %9173, %v8979
      %v9175 = vpop.permute.xlu0 %9174
      %9178 = vset.pattern.permute.xlu0 0
      %9179 = vperm.xlu0 %9178, %v8980
      %v9180 = vpop.permute.xlu0 %9179
      %9183 = vset.pattern.permute.xlu0 0
      %9184 = vperm.xlu0 %9183, %v8981
      %v9185 = vpop.permute.xlu0 %9184
      %v9187 = vmul.f32 %v9150, %v9131
      %v9188 = vmul.f32 %v9150, %v9132
      %v9189 = vmul.f32 %v9155, %v9133
      %v9190 = vmul.f32 %v9155, %v9134
      %v9191 = vmul.f32 %v9160, %v9135
      %v9192 = vmul.f32 %v9160, %v9136
      %v9193 = vmul.f32 %v9165, %v9137
      %v9194 = vmul.f32 %v9165, %v9138
      %v9195 = vmul.f32 %v9170, %v9139
      %v9196 = vmul.f32 %v9170, %v9140
      %v9197 = vmul.f32 %v9175, %v9141
      %v9198 = vmul.f32 %v9175, %v9142
      %v9199 = vmul.f32 %v9180, %v9143
      %v9200 = vmul.f32 %v9180, %v9144
      %v9201 = vmul.f32 %v9185, %v9145
      %v9202 = vmul.f32 %v9185, %v9146
      %v9203 = vadd.f32 %v8997, %v9187
      %v9204 = vadd.f32 %v8997, %v9188
      %v9205 = vadd.f32 %v9002, %v9189
      %v9206 = vadd.f32 %v9002, %v9190
      %v9207 = vadd.f32 %v9007, %v9191
      %v9208 = vadd.f32 %v9007, %v9192
      %v9209 = vadd.f32 %v9012, %v9193
      %v9210 = vadd.f32 %v9012, %v9194
      %v9211 = vadd.f32 %v9017, %v9195
      %v9212 = vadd.f32 %v9017, %v9196
      %v9213 = vadd.f32 %v9022, %v9197
      %v9214 = vadd.f32 %v9022, %v9198
      %v9215 = vadd.f32 %v9027, %v9199
      %v9216 = vadd.f32 %v9027, %v9200
      %v9217 = vadd.f32 %v9032, %v9201
      %v9218 = vadd.f32 %v9032, %v9202
      %9219 = vrot.lane.b32.xlu0 %v600, 16
      %v9220 = vpop.permute.xlu0 %9219
      %9221 = vrot.lane.b32.xlu0 %v606, 16
      %v9222 = vpop.permute.xlu0 %9221
      %9223 = vrot.lane.b32.xlu0 %v612, 16
      %v9224 = vpop.permute.xlu0 %9223
      %9225 = vrot.lane.b32.xlu0 %v618, 16
      %v9226 = vpop.permute.xlu0 %9225
      %9227 = vrot.lane.b32.xlu0 %v624, 16
      %v9228 = vpop.permute.xlu0 %9227
      %9229 = vrot.lane.b32.xlu0 %v630, 16
      %v9230 = vpop.permute.xlu0 %9229
      %9231 = vrot.lane.b32.xlu0 %v636, 16
      %v9232 = vpop.permute.xlu0 %9231
      %9233 = vrot.lane.b32.xlu0 %v642, 16
      %v9234 = vpop.permute.xlu0 %9233
      %9243 = vrot.lane.b32.xlu0 %v598, 16
      %v9244 = vpop.permute.xlu0 %9243
      %9245 = vrot.lane.b32.xlu0 %v604, 16
      %v9246 = vpop.permute.xlu0 %9245
      %9247 = vrot.lane.b32.xlu0 %v610, 16
      %v9248 = vpop.permute.xlu0 %9247
      %9249 = vrot.lane.b32.xlu0 %v616, 16
      %v9250 = vpop.permute.xlu0 %9249
      %9251 = vrot.lane.b32.xlu0 %v622, 16
      %v9252 = vpop.permute.xlu0 %9251
      %9253 = vrot.lane.b32.xlu0 %v628, 16
      %v9254 = vpop.permute.xlu0 %9253
      %9255 = vrot.lane.b32.xlu0 %v634, 16
      %v9256 = vpop.permute.xlu0 %9255
      %9257 = vrot.lane.b32.xlu0 %v640, 16
      %v9258 = vpop.permute.xlu0 %9257
      %vm9259 = vcmask 130048
      %v9260 = vsel %vm9259, %v9244, %v9220
      %v9261 = vsel %vm9259, %v9246, %v9222
      %v9262 = vsel %vm9259, %v9248, %v9224
      %v9263 = vsel %vm9259, %v9250, %v9226
      %v9264 = vsel %vm9259, %v9252, %v9228
      %v9265 = vsel %vm9259, %v9254, %v9230
      %v9266 = vsel %vm9259, %v9256, %v9232
      %v9267 = vsel %vm9259, %v9258, %v9234
      %v9284 = vsel %vm9259, %v9220, %v9244
      %v9285 = vsel %vm9259, %v9222, %v9246
      %v9286 = vsel %vm9259, %v9224, %v9248
      %v9287 = vsel %vm9259, %v9226, %v9250
      %v9288 = vsel %vm9259, %v9228, %v9252
      %v9289 = vsel %vm9259, %v9230, %v9254
      %v9290 = vsel %vm9259, %v9232, %v9256
      %v9291 = vsel %vm9259, %v9234, %v9258
      %v9292 = vlaneseq
      %v9293 = vshrl.u32 %v9292, 7
      %v9294 = vsub.s32 1, %v9293
      %v9295 = vrot.slane %v8982, %v9294
      %v9296 = vlaneseq
      %v9297 = vshrl.u32 %v9296, 7
      %v9298 = vsub.s32 1, %v9297
      %v9299 = vrot.slane %v8983, %v9298
      %v9300 = vmul.f32 %v9284, %v9295
      %v9301 = vmul.f32 %v9260, %v9299
      %v9302 = vmul.f32 %v9285, %v9295
      %v9303 = vmul.f32 %v9261, %v9299
      %v9304 = vmul.f32 %v9286, %v9295
      %v9305 = vmul.f32 %v9262, %v9299
      %v9306 = vmul.f32 %v9287, %v9295
      %v9307 = vmul.f32 %v9263, %v9299
      %v9308 = vmul.f32 %v9288, %v9295
      %v9309 = vmul.f32 %v9264, %v9299
      %v9310 = vmul.f32 %v9289, %v9295
      %v9311 = vmul.f32 %v9265, %v9299
      %v9312 = vmul.f32 %v9290, %v9295
      %v9313 = vmul.f32 %v9266, %v9299
      %v9314 = vmul.f32 %v9291, %v9295
      %v9315 = vmul.f32 %v9267, %v9299
      %9316 = vset.pattern.permute.xlu0 1
      %9317 = vperm.xlu0 %9316, %v8974
      %v9318 = vpop.permute.xlu0 %9317
      %9320 = vset.pattern.permute.xlu0 1
      %9321 = vperm.xlu0 %9320, %v8975
      %v9322 = vpop.permute.xlu0 %9321
      %9324 = vset.pattern.permute.xlu0 1
      %9325 = vperm.xlu0 %9324, %v8976
      %v9326 = vpop.permute.xlu0 %9325
      %9328 = vset.pattern.permute.xlu0 1
      %9329 = vperm.xlu0 %9328, %v8977
      %v9330 = vpop.permute.xlu0 %9329
      %9332 = vset.pattern.permute.xlu0 1
      %9333 = vperm.xlu0 %9332, %v8978
      %v9334 = vpop.permute.xlu0 %9333
      %9336 = vset.pattern.permute.xlu0 1
      %9337 = vperm.xlu0 %9336, %v8979
      %v9338 = vpop.permute.xlu0 %9337
      %9340 = vset.pattern.permute.xlu0 1
      %9341 = vperm.xlu0 %9340, %v8980
      %v9342 = vpop.permute.xlu0 %9341
      %9344 = vset.pattern.permute.xlu0 1
      %9345 = vperm.xlu0 %9344, %v8981
      %v9346 = vpop.permute.xlu0 %9345
      %v9348 = vmul.f32 %v9318, %v9300
      %v9349 = vmul.f32 %v9318, %v9301
      %v9350 = vmul.f32 %v9322, %v9302
      %v9351 = vmul.f32 %v9322, %v9303
      %v9352 = vmul.f32 %v9326, %v9304
      %v9353 = vmul.f32 %v9326, %v9305
      %v9354 = vmul.f32 %v9330, %v9306
      %v9355 = vmul.f32 %v9330, %v9307
      %v9356 = vmul.f32 %v9334, %v9308
      %v9357 = vmul.f32 %v9334, %v9309
      %v9358 = vmul.f32 %v9338, %v9310
      %v9359 = vmul.f32 %v9338, %v9311
      %v9360 = vmul.f32 %v9342, %v9312
      %v9361 = vmul.f32 %v9342, %v9313
      %v9362 = vmul.f32 %v9346, %v9314
      %v9363 = vmul.f32 %v9346, %v9315
      %v9364 = vadd.f32 %v9203, %v9348
      %v9365 = vadd.f32 %v9204, %v9349
      %v9366 = vadd.f32 %v9205, %v9350
      %v9367 = vadd.f32 %v9206, %v9351
      %v9368 = vadd.f32 %v9207, %v9352
      %v9369 = vadd.f32 %v9208, %v9353
      %v9370 = vadd.f32 %v9209, %v9354
      %v9371 = vadd.f32 %v9210, %v9355
      %v9372 = vadd.f32 %v9211, %v9356
      %v9373 = vadd.f32 %v9212, %v9357
      %v9374 = vadd.f32 %v9213, %v9358
      %v9375 = vadd.f32 %v9214, %v9359
      %v9376 = vadd.f32 %v9215, %v9360
      %v9377 = vadd.f32 %v9216, %v9361
      %v9378 = vadd.f32 %v9217, %v9362
      %v9379 = vadd.f32 %v9218, %v9363
      %9380 = vrot.lane.b32.xlu0 %v600, 15
      %v9381 = vpop.permute.xlu0 %9380
      %9382 = vrot.lane.b32.xlu0 %v606, 15
      %v9383 = vpop.permute.xlu0 %9382
      %9384 = vrot.lane.b32.xlu0 %v612, 15
      %v9385 = vpop.permute.xlu0 %9384
      %9386 = vrot.lane.b32.xlu0 %v618, 15
      %v9387 = vpop.permute.xlu0 %9386
      %9388 = vrot.lane.b32.xlu0 %v624, 15
      %v9389 = vpop.permute.xlu0 %9388
      %9390 = vrot.lane.b32.xlu0 %v630, 15
      %v9391 = vpop.permute.xlu0 %9390
      %9392 = vrot.lane.b32.xlu0 %v636, 15
      %v9393 = vpop.permute.xlu0 %9392
      %9394 = vrot.lane.b32.xlu0 %v642, 15
      %v9395 = vpop.permute.xlu0 %9394
      %9404 = vrot.lane.b32.xlu0 %v598, 15
      %v9405 = vpop.permute.xlu0 %9404
      %9406 = vrot.lane.b32.xlu0 %v604, 15
      %v9407 = vpop.permute.xlu0 %9406
      %9408 = vrot.lane.b32.xlu0 %v610, 15
      %v9409 = vpop.permute.xlu0 %9408
      %9410 = vrot.lane.b32.xlu0 %v616, 15
      %v9411 = vpop.permute.xlu0 %9410
      %9412 = vrot.lane.b32.xlu0 %v622, 15
      %v9413 = vpop.permute.xlu0 %9412
      %9414 = vrot.lane.b32.xlu0 %v628, 15
      %v9415 = vpop.permute.xlu0 %9414
      %9416 = vrot.lane.b32.xlu0 %v634, 15
      %v9417 = vpop.permute.xlu0 %9416
      %9418 = vrot.lane.b32.xlu0 %v640, 15
      %v9419 = vpop.permute.xlu0 %9418
      %vm9420 = vcmask 121856
      %v9421 = vsel %vm9420, %v9405, %v9381
      %v9422 = vsel %vm9420, %v9407, %v9383
      %v9423 = vsel %vm9420, %v9409, %v9385
      %v9424 = vsel %vm9420, %v9411, %v9387
      %v9425 = vsel %vm9420, %v9413, %v9389
      %v9426 = vsel %vm9420, %v9415, %v9391
      %v9427 = vsel %vm9420, %v9417, %v9393
      %v9428 = vsel %vm9420, %v9419, %v9395
      %v9445 = vsel %vm9420, %v9381, %v9405
      %v9446 = vsel %vm9420, %v9383, %v9407
      %v9447 = vsel %vm9420, %v9385, %v9409
      %v9448 = vsel %vm9420, %v9387, %v9411
      %v9449 = vsel %vm9420, %v9389, %v9413
      %v9450 = vsel %vm9420, %v9391, %v9415
      %v9451 = vsel %vm9420, %v9393, %v9417
      %v9452 = vsel %vm9420, %v9395, %v9419
      %v9453 = vlaneseq
      %v9454 = vshrl.u32 %v9453, 7
      %v9455 = vsub.s32 2, %v9454
      %v9456 = vrot.slane %v8982, %v9455
      %v9457 = vlaneseq
      %v9458 = vshrl.u32 %v9457, 7
      %v9459 = vsub.s32 2, %v9458
      %v9460 = vrot.slane %v8983, %v9459
      %v9461 = vmul.f32 %v9445, %v9456
      %v9462 = vmul.f32 %v9421, %v9460
      %v9463 = vmul.f32 %v9446, %v9456
      %v9464 = vmul.f32 %v9422, %v9460
      %v9465 = vmul.f32 %v9447, %v9456
      %v9466 = vmul.f32 %v9423, %v9460
      %v9467 = vmul.f32 %v9448, %v9456
      %v9468 = vmul.f32 %v9424, %v9460
      %v9469 = vmul.f32 %v9449, %v9456
      %v9470 = vmul.f32 %v9425, %v9460
      %v9471 = vmul.f32 %v9450, %v9456
      %v9472 = vmul.f32 %v9426, %v9460
      %v9473 = vmul.f32 %v9451, %v9456
      %v9474 = vmul.f32 %v9427, %v9460
      %v9475 = vmul.f32 %v9452, %v9456
      %v9476 = vmul.f32 %v9428, %v9460
      %9477 = vset.pattern.permute.xlu0 2
      %9478 = vperm.xlu0 %9477, %v8974
      %v9479 = vpop.permute.xlu0 %9478
      %9481 = vset.pattern.permute.xlu0 2
      %9482 = vperm.xlu0 %9481, %v8975
      %v9483 = vpop.permute.xlu0 %9482
      %9485 = vset.pattern.permute.xlu0 2
      %9486 = vperm.xlu0 %9485, %v8976
      %v9487 = vpop.permute.xlu0 %9486
      %9489 = vset.pattern.permute.xlu0 2
      %9490 = vperm.xlu0 %9489, %v8977
      %v9491 = vpop.permute.xlu0 %9490
      %9493 = vset.pattern.permute.xlu0 2
      %9494 = vperm.xlu0 %9493, %v8978
      %v9495 = vpop.permute.xlu0 %9494
      %9497 = vset.pattern.permute.xlu0 2
      %9498 = vperm.xlu0 %9497, %v8979
      %v9499 = vpop.permute.xlu0 %9498
      %9501 = vset.pattern.permute.xlu0 2
      %9502 = vperm.xlu0 %9501, %v8980
      %v9503 = vpop.permute.xlu0 %9502
      %9505 = vset.pattern.permute.xlu0 2
      %9506 = vperm.xlu0 %9505, %v8981
      %v9507 = vpop.permute.xlu0 %9506
      %v9509 = vmul.f32 %v9479, %v9461
      %v9510 = vmul.f32 %v9479, %v9462
      %v9511 = vmul.f32 %v9483, %v9463
      %v9512 = vmul.f32 %v9483, %v9464
      %v9513 = vmul.f32 %v9487, %v9465
      %v9514 = vmul.f32 %v9487, %v9466
      %v9515 = vmul.f32 %v9491, %v9467
      %v9516 = vmul.f32 %v9491, %v9468
      %v9517 = vmul.f32 %v9495, %v9469
      %v9518 = vmul.f32 %v9495, %v9470
      %v9519 = vmul.f32 %v9499, %v9471
      %v9520 = vmul.f32 %v9499, %v9472
      %v9521 = vmul.f32 %v9503, %v9473
      %v9522 = vmul.f32 %v9503, %v9474
      %v9523 = vmul.f32 %v9507, %v9475
      %v9524 = vmul.f32 %v9507, %v9476
      %v9525 = vadd.f32 %v9364, %v9509
      %v9526 = vadd.f32 %v9365, %v9510
      %v9527 = vadd.f32 %v9366, %v9511
      %v9528 = vadd.f32 %v9367, %v9512
      %v9529 = vadd.f32 %v9368, %v9513
      %v9530 = vadd.f32 %v9369, %v9514
      %v9531 = vadd.f32 %v9370, %v9515
      %v9532 = vadd.f32 %v9371, %v9516
      %v9533 = vadd.f32 %v9372, %v9517
      %v9534 = vadd.f32 %v9373, %v9518
      %v9535 = vadd.f32 %v9374, %v9519
      %v9536 = vadd.f32 %v9375, %v9520
      %v9537 = vadd.f32 %v9376, %v9521
      %v9538 = vadd.f32 %v9377, %v9522
      %v9539 = vadd.f32 %v9378, %v9523
      %v9540 = vadd.f32 %v9379, %v9524
      %9541 = vrot.lane.b32.xlu0 %v600, 1
      %v9542 = vpop.permute.xlu0 %9541
      %9543 = vrot.lane.b32.xlu0 %v606, 1
      %v9544 = vpop.permute.xlu0 %9543
      %9545 = vrot.lane.b32.xlu0 %v612, 1
      %v9546 = vpop.permute.xlu0 %9545
      %9547 = vrot.lane.b32.xlu0 %v618, 1
      %v9548 = vpop.permute.xlu0 %9547
      %9549 = vrot.lane.b32.xlu0 %v624, 1
      %v9550 = vpop.permute.xlu0 %9549
      %9551 = vrot.lane.b32.xlu0 %v630, 1
      %v9552 = vpop.permute.xlu0 %9551
      %9553 = vrot.lane.b32.xlu0 %v636, 1
      %v9554 = vpop.permute.xlu0 %9553
      %9555 = vrot.lane.b32.xlu0 %v642, 1
      %v9556 = vpop.permute.xlu0 %9555
      %9565 = vrot.lane.b32.xlu0 %v598, 1
      %v9566 = vpop.permute.xlu0 %9565
      %9567 = vrot.lane.b32.xlu0 %v604, 1
      %v9568 = vpop.permute.xlu0 %9567
      %9569 = vrot.lane.b32.xlu0 %v610, 1
      %v9570 = vpop.permute.xlu0 %9569
      %9571 = vrot.lane.b32.xlu0 %v616, 1
      %v9572 = vpop.permute.xlu0 %9571
      %9573 = vrot.lane.b32.xlu0 %v622, 1
      %v9574 = vpop.permute.xlu0 %9573
      %9575 = vrot.lane.b32.xlu0 %v628, 1
      %v9576 = vpop.permute.xlu0 %9575
      %9577 = vrot.lane.b32.xlu0 %v634, 1
      %v9578 = vpop.permute.xlu0 %9577
      %9579 = vrot.lane.b32.xlu0 %v640, 1
      %v9580 = vpop.permute.xlu0 %9579
      %vm9581 = vcmask 7168
      %v9582 = vsel %vm9581, %v9566, %v9542
      %v9583 = vsel %vm9581, %v9568, %v9544
      %v9584 = vsel %vm9581, %v9570, %v9546
      %v9585 = vsel %vm9581, %v9572, %v9548
      %v9586 = vsel %vm9581, %v9574, %v9550
      %v9587 = vsel %vm9581, %v9576, %v9552
      %v9588 = vsel %vm9581, %v9578, %v9554
      %v9589 = vsel %vm9581, %v9580, %v9556
      %v9606 = vsel %vm9581, %v9542, %v9566
      %v9607 = vsel %vm9581, %v9544, %v9568
      %v9608 = vsel %vm9581, %v9546, %v9570
      %v9609 = vsel %vm9581, %v9548, %v9572
      %v9610 = vsel %vm9581, %v9550, %v9574
      %v9611 = vsel %vm9581, %v9552, %v9576
      %v9612 = vsel %vm9581, %v9554, %v9578
      %v9613 = vsel %vm9581, %v9556, %v9580
      %v9614 = vlaneseq
      %v9615 = vshrl.u32 %v9614, 7
      %v9616 = vsub.s32 3, %v9615
      %v9617 = vrot.slane %v8982, %v9616
      %v9618 = vlaneseq
      %v9619 = vshrl.u32 %v9618, 7
      %v9620 = vsub.s32 3, %v9619
      %v9621 = vrot.slane %v8983, %v9620
      %v9622 = vmul.f32 %v9606, %v9617
      %v9623 = vmul.f32 %v9582, %v9621
      %v9624 = vmul.f32 %v9607, %v9617
      %v9625 = vmul.f32 %v9583, %v9621
      %v9626 = vmul.f32 %v9608, %v9617
      %v9627 = vmul.f32 %v9584, %v9621
      %v9628 = vmul.f32 %v9609, %v9617
      %v9629 = vmul.f32 %v9585, %v9621
      %v9630 = vmul.f32 %v9610, %v9617
      %v9631 = vmul.f32 %v9586, %v9621
      %v9632 = vmul.f32 %v9611, %v9617
      %v9633 = vmul.f32 %v9587, %v9621
      %v9634 = vmul.f32 %v9612, %v9617
      %v9635 = vmul.f32 %v9588, %v9621
      %v9636 = vmul.f32 %v9613, %v9617
      %v9637 = vmul.f32 %v9589, %v9621
      %9638 = vset.pattern.permute.xlu0 3
      %9639 = vperm.xlu0 %9638, %v8974
      %v9640 = vpop.permute.xlu0 %9639
      %9642 = vset.pattern.permute.xlu0 3
      %9643 = vperm.xlu0 %9642, %v8975
      %v9644 = vpop.permute.xlu0 %9643
      %9646 = vset.pattern.permute.xlu0 3
      %9647 = vperm.xlu0 %9646, %v8976
      %v9648 = vpop.permute.xlu0 %9647
      %9650 = vset.pattern.permute.xlu0 3
      %9651 = vperm.xlu0 %9650, %v8977
      %v9652 = vpop.permute.xlu0 %9651
      %9654 = vset.pattern.permute.xlu0 3
      %9655 = vperm.xlu0 %9654, %v8978
      %v9656 = vpop.permute.xlu0 %9655
      %9658 = vset.pattern.permute.xlu0 3
      %9659 = vperm.xlu0 %9658, %v8979
      %v9660 = vpop.permute.xlu0 %9659
      %9662 = vset.pattern.permute.xlu0 3
      %9663 = vperm.xlu0 %9662, %v8980
      %v9664 = vpop.permute.xlu0 %9663
      %9666 = vset.pattern.permute.xlu0 3
      %9667 = vperm.xlu0 %9666, %v8981
      %v9668 = vpop.permute.xlu0 %9667
      %v9670 = vmul.f32 %v9640, %v9622
      %v9671 = vmul.f32 %v9640, %v9623
      %v9672 = vmul.f32 %v9644, %v9624
      %v9673 = vmul.f32 %v9644, %v9625
      %v9674 = vmul.f32 %v9648, %v9626
      %v9675 = vmul.f32 %v9648, %v9627
      %v9676 = vmul.f32 %v9652, %v9628
      %v9677 = vmul.f32 %v9652, %v9629
      %v9678 = vmul.f32 %v9656, %v9630
      %v9679 = vmul.f32 %v9656, %v9631
      %v9680 = vmul.f32 %v9660, %v9632
      %v9681 = vmul.f32 %v9660, %v9633
      %v9682 = vmul.f32 %v9664, %v9634
      %v9683 = vmul.f32 %v9664, %v9635
      %v9684 = vmul.f32 %v9668, %v9636
      %v9685 = vmul.f32 %v9668, %v9637
      %v9686 = vadd.f32 %v9525, %v9670
      %v9687 = vadd.f32 %v9526, %v9671
      %v9688 = vadd.f32 %v9527, %v9672
      %v9689 = vadd.f32 %v9528, %v9673
      %v9690 = vadd.f32 %v9529, %v9674
      %v9691 = vadd.f32 %v9530, %v9675
      %v9692 = vadd.f32 %v9531, %v9676
      %v9693 = vadd.f32 %v9532, %v9677
      %v9694 = vadd.f32 %v9533, %v9678
      %v9695 = vadd.f32 %v9534, %v9679
      %v9696 = vadd.f32 %v9535, %v9680
      %v9697 = vadd.f32 %v9536, %v9681
      %v9698 = vadd.f32 %v9537, %v9682
      %v9699 = vadd.f32 %v9538, %v9683
      %v9700 = vadd.f32 %v9539, %v9684
      %v9701 = vadd.f32 %v9540, %v9685
      %v9702 = vlaneseq
      %v9703 = vshrl.u32 %v9702, 7
      %v9704 = vsub.s32 4, %v9703
      %v9705 = vrot.slane %v8982, %v9704
      %v9706 = vlaneseq
      %v9707 = vshrl.u32 %v9706, 7
      %v9708 = vsub.s32 4, %v9707
      %v9709 = vrot.slane %v8983, %v9708
      %v9710 = vmul.f32 %v598, %v9705
      %v9711 = vmul.f32 %v600, %v9709
      %v9712 = vmul.f32 %v604, %v9705
      %v9713 = vmul.f32 %v606, %v9709
      %v9714 = vmul.f32 %v610, %v9705
      %v9715 = vmul.f32 %v612, %v9709
      %v9716 = vmul.f32 %v616, %v9705
      %v9717 = vmul.f32 %v618, %v9709
      %v9718 = vmul.f32 %v622, %v9705
      %v9719 = vmul.f32 %v624, %v9709
      %v9720 = vmul.f32 %v628, %v9705
      %v9721 = vmul.f32 %v630, %v9709
      %v9722 = vmul.f32 %v634, %v9705
      %v9723 = vmul.f32 %v636, %v9709
      %v9724 = vmul.f32 %v640, %v9705
      %v9725 = vmul.f32 %v642, %v9709
      %9726 = vset.pattern.permute.xlu0 4
      %9727 = vperm.xlu0 %9726, %v8974
      %v9728 = vpop.permute.xlu0 %9727
      %9730 = vset.pattern.permute.xlu0 4
      %9731 = vperm.xlu0 %9730, %v8975
      %v9732 = vpop.permute.xlu0 %9731
      %9734 = vset.pattern.permute.xlu0 4
      %9735 = vperm.xlu0 %9734, %v8976
      %v9736 = vpop.permute.xlu0 %9735
      %9738 = vset.pattern.permute.xlu0 4
      %9739 = vperm.xlu0 %9738, %v8977
      %v9740 = vpop.permute.xlu0 %9739
      %9742 = vset.pattern.permute.xlu0 4
      %9743 = vperm.xlu0 %9742, %v8978
      %v9744 = vpop.permute.xlu0 %9743
      %9746 = vset.pattern.permute.xlu0 4
      %9747 = vperm.xlu0 %9746, %v8979
      %v9748 = vpop.permute.xlu0 %9747
      %9750 = vset.pattern.permute.xlu0 4
      %9751 = vperm.xlu0 %9750, %v8980
      %v9752 = vpop.permute.xlu0 %9751
      %9754 = vset.pattern.permute.xlu0 4
      %9755 = vperm.xlu0 %9754, %v8981
      %v9756 = vpop.permute.xlu0 %9755
      %v9758 = vmul.f32 %v9728, %v9710
      %v9759 = vmul.f32 %v9728, %v9711
      %v9760 = vmul.f32 %v9732, %v9712
      %v9761 = vmul.f32 %v9732, %v9713
      %v9762 = vmul.f32 %v9736, %v9714
      %v9763 = vmul.f32 %v9736, %v9715
      %v9764 = vmul.f32 %v9740, %v9716
      %v9765 = vmul.f32 %v9740, %v9717
      %v9766 = vmul.f32 %v9744, %v9718
      %v9767 = vmul.f32 %v9744, %v9719
      %v9768 = vmul.f32 %v9748, %v9720
      %v9769 = vmul.f32 %v9748, %v9721
      %v9770 = vmul.f32 %v9752, %v9722
      %v9771 = vmul.f32 %v9752, %v9723
      %v9772 = vmul.f32 %v9756, %v9724
      %v9773 = vmul.f32 %v9756, %v9725
      %v9774 = vadd.f32 %v9686, %v9758
      %v9775 = vadd.f32 %v9687, %v9759
      %v9776 = vadd.f32 %v9688, %v9760
      %v9777 = vadd.f32 %v9689, %v9761
      %v9778 = vadd.f32 %v9690, %v9762
      %v9779 = vadd.f32 %v9691, %v9763
      %v9780 = vadd.f32 %v9692, %v9764
      %v9781 = vadd.f32 %v9693, %v9765
      %v9782 = vadd.f32 %v9694, %v9766
      %v9783 = vadd.f32 %v9695, %v9767
      %v9784 = vadd.f32 %v9696, %v9768
      %v9785 = vadd.f32 %v9697, %v9769
      %v9786 = vadd.f32 %v9698, %v9770
      %v9787 = vadd.f32 %v9699, %v9771
      %v9788 = vadd.f32 %v9700, %v9772
      %v9789 = vadd.f32 %v9701, %v9773
      %9790 = vrot.lane.b32.xlu0 %v598, 127
      %v9791 = vpop.permute.xlu0 %9790
      %9792 = vrot.lane.b32.xlu0 %v600, 127
      %v9793 = vpop.permute.xlu0 %9792
      %9794 = vrot.lane.b32.xlu0 %v604, 127
      %v9795 = vpop.permute.xlu0 %9794
      %9796 = vrot.lane.b32.xlu0 %v606, 127
      %v9797 = vpop.permute.xlu0 %9796
      %9798 = vrot.lane.b32.xlu0 %v610, 127
      %v9799 = vpop.permute.xlu0 %9798
      %9800 = vrot.lane.b32.xlu0 %v612, 127
      %v9801 = vpop.permute.xlu0 %9800
      %9802 = vrot.lane.b32.xlu0 %v616, 127
      %v9803 = vpop.permute.xlu0 %9802
      %9804 = vrot.lane.b32.xlu0 %v618, 127
      %v9805 = vpop.permute.xlu0 %9804
      %9806 = vrot.lane.b32.xlu0 %v622, 127
      %v9807 = vpop.permute.xlu0 %9806
      %9808 = vrot.lane.b32.xlu0 %v624, 127
      %v9809 = vpop.permute.xlu0 %9808
      %9810 = vrot.lane.b32.xlu0 %v628, 127
      %v9811 = vpop.permute.xlu0 %9810
      %9812 = vrot.lane.b32.xlu0 %v630, 127
      %v9813 = vpop.permute.xlu0 %9812
      %9814 = vrot.lane.b32.xlu0 %v634, 127
      %v9815 = vpop.permute.xlu0 %9814
      %9816 = vrot.lane.b32.xlu0 %v636, 127
      %v9817 = vpop.permute.xlu0 %9816
      %9818 = vrot.lane.b32.xlu0 %v640, 127
      %v9819 = vpop.permute.xlu0 %9818
      %9820 = vrot.lane.b32.xlu0 %v642, 127
      %v9821 = vpop.permute.xlu0 %9820
      %vm9822 = vcmask 1039360
      %v9823 = vsel %vm9822, %v9791, %v9793
      %v9824 = vsel %vm9822, %v9795, %v9797
      %v9825 = vsel %vm9822, %v9799, %v9801
      %v9826 = vsel %vm9822, %v9803, %v9805
      %v9827 = vsel %vm9822, %v9807, %v9809
      %v9828 = vsel %vm9822, %v9811, %v9813
      %v9829 = vsel %vm9822, %v9815, %v9817
      %v9830 = vsel %vm9822, %v9819, %v9821
      %v9855 = vsel %vm9822, %v9793, %v9791
      %v9856 = vsel %vm9822, %v9797, %v9795
      %v9857 = vsel %vm9822, %v9801, %v9799
      %v9858 = vsel %vm9822, %v9805, %v9803
      %v9859 = vsel %vm9822, %v9809, %v9807
      %v9860 = vsel %vm9822, %v9813, %v9811
      %v9861 = vsel %vm9822, %v9817, %v9815
      %v9862 = vsel %vm9822, %v9821, %v9819
      %v9863 = vlaneseq
      %v9864 = vshrl.u32 %v9863, 7
      %v9865 = vsub.s32 5, %v9864
      %v9866 = vrot.slane %v8982, %v9865
      %v9867 = vlaneseq
      %v9868 = vshrl.u32 %v9867, 7
      %v9869 = vsub.s32 5, %v9868
      %v9870 = vrot.slane %v8983, %v9869
      %v9871 = vmul.f32 %v9823, %v9866
      %v9872 = vmul.f32 %v9855, %v9870
      %v9873 = vmul.f32 %v9824, %v9866
      %v9874 = vmul.f32 %v9856, %v9870
      %v9875 = vmul.f32 %v9825, %v9866
      %v9876 = vmul.f32 %v9857, %v9870
      %v9877 = vmul.f32 %v9826, %v9866
      %v9878 = vmul.f32 %v9858, %v9870
      %v9879 = vmul.f32 %v9827, %v9866
      %v9880 = vmul.f32 %v9859, %v9870
      %v9881 = vmul.f32 %v9828, %v9866
      %v9882 = vmul.f32 %v9860, %v9870
      %v9883 = vmul.f32 %v9829, %v9866
      %v9884 = vmul.f32 %v9861, %v9870
      %v9885 = vmul.f32 %v9830, %v9866
      %v9886 = vmul.f32 %v9862, %v9870
      %9887 = vset.pattern.permute.xlu0 5
      %9888 = vperm.xlu0 %9887, %v8974
      %v9889 = vpop.permute.xlu0 %9888
      %9891 = vset.pattern.permute.xlu0 5
      %9892 = vperm.xlu0 %9891, %v8975
      %v9893 = vpop.permute.xlu0 %9892
      %9895 = vset.pattern.permute.xlu0 5
      %9896 = vperm.xlu0 %9895, %v8976
      %v9897 = vpop.permute.xlu0 %9896
      %9899 = vset.pattern.permute.xlu0 5
      %9900 = vperm.xlu0 %9899, %v8977
      %v9901 = vpop.permute.xlu0 %9900
      %9903 = vset.pattern.permute.xlu0 5
      %9904 = vperm.xlu0 %9903, %v8978
      %v9905 = vpop.permute.xlu0 %9904
      %9907 = vset.pattern.permute.xlu0 5
      %9908 = vperm.xlu0 %9907, %v8979
      %v9909 = vpop.permute.xlu0 %9908
      %9911 = vset.pattern.permute.xlu0 5
      %9912 = vperm.xlu0 %9911, %v8980
      %v9913 = vpop.permute.xlu0 %9912
      %9915 = vset.pattern.permute.xlu0 5
      %9916 = vperm.xlu0 %9915, %v8981
      %v9917 = vpop.permute.xlu0 %9916
      %v9919 = vmul.f32 %v9889, %v9871
      %v9920 = vmul.f32 %v9889, %v9872
      %v9921 = vmul.f32 %v9893, %v9873
      %v9922 = vmul.f32 %v9893, %v9874
      %v9923 = vmul.f32 %v9897, %v9875
      %v9924 = vmul.f32 %v9897, %v9876
      %v9925 = vmul.f32 %v9901, %v9877
      %v9926 = vmul.f32 %v9901, %v9878
      %v9927 = vmul.f32 %v9905, %v9879
      %v9928 = vmul.f32 %v9905, %v9880
      %v9929 = vmul.f32 %v9909, %v9881
      %v9930 = vmul.f32 %v9909, %v9882
      %v9931 = vmul.f32 %v9913, %v9883
      %v9932 = vmul.f32 %v9913, %v9884
      %v9933 = vmul.f32 %v9917, %v9885
      %v9934 = vmul.f32 %v9917, %v9886
      %v9935 = vadd.f32 %v9774, %v9919
      %v9936 = vadd.f32 %v9775, %v9920
      %v9937 = vadd.f32 %v9776, %v9921
      %v9938 = vadd.f32 %v9777, %v9922
      %v9939 = vadd.f32 %v9778, %v9923
      %v9940 = vadd.f32 %v9779, %v9924
      %v9941 = vadd.f32 %v9780, %v9925
      %v9942 = vadd.f32 %v9781, %v9926
      %v9943 = vadd.f32 %v9782, %v9927
      %v9944 = vadd.f32 %v9783, %v9928
      %v9945 = vadd.f32 %v9784, %v9929
      %v9946 = vadd.f32 %v9785, %v9930
      %v9947 = vadd.f32 %v9786, %v9931
      %v9948 = vadd.f32 %v9787, %v9932
      %v9949 = vadd.f32 %v9788, %v9933
      %v9950 = vadd.f32 %v9789, %v9934
      %9951 = vrot.lane.b32.xlu0 %v598, 113
      %v9952 = vpop.permute.xlu0 %9951
      %9953 = vrot.lane.b32.xlu0 %v600, 113
      %v9954 = vpop.permute.xlu0 %9953
      %9955 = vrot.lane.b32.xlu0 %v604, 113
      %v9956 = vpop.permute.xlu0 %9955
      %9957 = vrot.lane.b32.xlu0 %v606, 113
      %v9958 = vpop.permute.xlu0 %9957
      %9959 = vrot.lane.b32.xlu0 %v610, 113
      %v9960 = vpop.permute.xlu0 %9959
      %9961 = vrot.lane.b32.xlu0 %v612, 113
      %v9962 = vpop.permute.xlu0 %9961
      %9963 = vrot.lane.b32.xlu0 %v616, 113
      %v9964 = vpop.permute.xlu0 %9963
      %9965 = vrot.lane.b32.xlu0 %v618, 113
      %v9966 = vpop.permute.xlu0 %9965
      %9967 = vrot.lane.b32.xlu0 %v622, 113
      %v9968 = vpop.permute.xlu0 %9967
      %9969 = vrot.lane.b32.xlu0 %v624, 113
      %v9970 = vpop.permute.xlu0 %9969
      %9971 = vrot.lane.b32.xlu0 %v628, 113
      %v9972 = vpop.permute.xlu0 %9971
      %9973 = vrot.lane.b32.xlu0 %v630, 113
      %v9974 = vpop.permute.xlu0 %9973
      %9975 = vrot.lane.b32.xlu0 %v634, 113
      %v9976 = vpop.permute.xlu0 %9975
      %9977 = vrot.lane.b32.xlu0 %v636, 113
      %v9978 = vpop.permute.xlu0 %9977
      %9979 = vrot.lane.b32.xlu0 %v640, 113
      %v9980 = vpop.permute.xlu0 %9979
      %9981 = vrot.lane.b32.xlu0 %v642, 113
      %v9982 = vpop.permute.xlu0 %9981
      %vm9983 = vcmask 924672
      %v9984 = vsel %vm9983, %v9952, %v9954
      %v9985 = vsel %vm9983, %v9956, %v9958
      %v9986 = vsel %vm9983, %v9960, %v9962
      %v9987 = vsel %vm9983, %v9964, %v9966
      %v9988 = vsel %vm9983, %v9968, %v9970
      %v9989 = vsel %vm9983, %v9972, %v9974
      %v9990 = vsel %vm9983, %v9976, %v9978
      %v9991 = vsel %vm9983, %v9980, %v9982
      %v10016 = vsel %vm9983, %v9954, %v9952
      %v10017 = vsel %vm9983, %v9958, %v9956
      %v10018 = vsel %vm9983, %v9962, %v9960
      %v10019 = vsel %vm9983, %v9966, %v9964
      %v10020 = vsel %vm9983, %v9970, %v9968
      %v10021 = vsel %vm9983, %v9974, %v9972
      %v10022 = vsel %vm9983, %v9978, %v9976
      %v10023 = vsel %vm9983, %v9982, %v9980
      %v10024 = vlaneseq
      %v10025 = vshrl.u32 %v10024, 7
      %v10026 = vsub.s32 6, %v10025
      %v10027 = vrot.slane %v8982, %v10026
      %v10028 = vlaneseq
      %v10029 = vshrl.u32 %v10028, 7
      %v10030 = vsub.s32 6, %v10029
      %v10031 = vrot.slane %v8983, %v10030
      %v10032 = vmul.f32 %v9984, %v10027
      %v10033 = vmul.f32 %v10016, %v10031
      %v10034 = vmul.f32 %v9985, %v10027
      %v10035 = vmul.f32 %v10017, %v10031
      %v10036 = vmul.f32 %v9986, %v10027
      %v10037 = vmul.f32 %v10018, %v10031
      %v10038 = vmul.f32 %v9987, %v10027
      %v10039 = vmul.f32 %v10019, %v10031
      %v10040 = vmul.f32 %v9988, %v10027
      %v10041 = vmul.f32 %v10020, %v10031
      %v10042 = vmul.f32 %v9989, %v10027
      %v10043 = vmul.f32 %v10021, %v10031
      %v10044 = vmul.f32 %v9990, %v10027
      %v10045 = vmul.f32 %v10022, %v10031
      %v10046 = vmul.f32 %v9991, %v10027
      %v10047 = vmul.f32 %v10023, %v10031
      %10048 = vset.pattern.permute.xlu0 6
      %10049 = vperm.xlu0 %10048, %v8974
      %v10050 = vpop.permute.xlu0 %10049
      %10052 = vset.pattern.permute.xlu0 6
      %10053 = vperm.xlu0 %10052, %v8975
      %v10054 = vpop.permute.xlu0 %10053
      %10056 = vset.pattern.permute.xlu0 6
      %10057 = vperm.xlu0 %10056, %v8976
      %v10058 = vpop.permute.xlu0 %10057
      %10060 = vset.pattern.permute.xlu0 6
      %10061 = vperm.xlu0 %10060, %v8977
      %v10062 = vpop.permute.xlu0 %10061
      %10064 = vset.pattern.permute.xlu0 6
      %10065 = vperm.xlu0 %10064, %v8978
      %v10066 = vpop.permute.xlu0 %10065
      %10068 = vset.pattern.permute.xlu0 6
      %10069 = vperm.xlu0 %10068, %v8979
      %v10070 = vpop.permute.xlu0 %10069
      %10072 = vset.pattern.permute.xlu0 6
      %10073 = vperm.xlu0 %10072, %v8980
      %v10074 = vpop.permute.xlu0 %10073
      %10076 = vset.pattern.permute.xlu0 6
      %10077 = vperm.xlu0 %10076, %v8981
      %v10078 = vpop.permute.xlu0 %10077
      %v10080 = vmul.f32 %v10050, %v10032
      %v10081 = vmul.f32 %v10050, %v10033
      %v10082 = vmul.f32 %v10054, %v10034
      %v10083 = vmul.f32 %v10054, %v10035
      %v10084 = vmul.f32 %v10058, %v10036
      %v10085 = vmul.f32 %v10058, %v10037
      %v10086 = vmul.f32 %v10062, %v10038
      %v10087 = vmul.f32 %v10062, %v10039
      %v10088 = vmul.f32 %v10066, %v10040
      %v10089 = vmul.f32 %v10066, %v10041
      %v10090 = vmul.f32 %v10070, %v10042
      %v10091 = vmul.f32 %v10070, %v10043
      %v10092 = vmul.f32 %v10074, %v10044
      %v10093 = vmul.f32 %v10074, %v10045
      %v10094 = vmul.f32 %v10078, %v10046
      %v10095 = vmul.f32 %v10078, %v10047
      %v10096 = vadd.f32 %v9935, %v10080
      %v10097 = vadd.f32 %v9936, %v10081
      %v10098 = vadd.f32 %v9937, %v10082
      %v10099 = vadd.f32 %v9938, %v10083
      %v10100 = vadd.f32 %v9939, %v10084
      %v10101 = vadd.f32 %v9940, %v10085
      %v10102 = vadd.f32 %v9941, %v10086
      %v10103 = vadd.f32 %v9942, %v10087
      %v10104 = vadd.f32 %v9943, %v10088
      %v10105 = vadd.f32 %v9944, %v10089
      %v10106 = vadd.f32 %v9945, %v10090
      %v10107 = vadd.f32 %v9946, %v10091
      %v10108 = vadd.f32 %v9947, %v10092
      %v10109 = vadd.f32 %v9948, %v10093
      %v10110 = vadd.f32 %v9949, %v10094
      %v10111 = vadd.f32 %v9950, %v10095
      %10112 = vrot.lane.b32.xlu0 %v598, 112
      %v10113 = vpop.permute.xlu0 %10112
      %10114 = vrot.lane.b32.xlu0 %v600, 112
      %v10115 = vpop.permute.xlu0 %10114
      %10116 = vrot.lane.b32.xlu0 %v604, 112
      %v10117 = vpop.permute.xlu0 %10116
      %10118 = vrot.lane.b32.xlu0 %v606, 112
      %v10119 = vpop.permute.xlu0 %10118
      %10120 = vrot.lane.b32.xlu0 %v610, 112
      %v10121 = vpop.permute.xlu0 %10120
      %10122 = vrot.lane.b32.xlu0 %v612, 112
      %v10123 = vpop.permute.xlu0 %10122
      %10124 = vrot.lane.b32.xlu0 %v616, 112
      %v10125 = vpop.permute.xlu0 %10124
      %10126 = vrot.lane.b32.xlu0 %v618, 112
      %v10127 = vpop.permute.xlu0 %10126
      %10128 = vrot.lane.b32.xlu0 %v622, 112
      %v10129 = vpop.permute.xlu0 %10128
      %10130 = vrot.lane.b32.xlu0 %v624, 112
      %v10131 = vpop.permute.xlu0 %10130
      %10132 = vrot.lane.b32.xlu0 %v628, 112
      %v10133 = vpop.permute.xlu0 %10132
      %10134 = vrot.lane.b32.xlu0 %v630, 112
      %v10135 = vpop.permute.xlu0 %10134
      %10136 = vrot.lane.b32.xlu0 %v634, 112
      %v10137 = vpop.permute.xlu0 %10136
      %10138 = vrot.lane.b32.xlu0 %v636, 112
      %v10139 = vpop.permute.xlu0 %10138
      %10140 = vrot.lane.b32.xlu0 %v640, 112
      %v10141 = vpop.permute.xlu0 %10140
      %10142 = vrot.lane.b32.xlu0 %v642, 112
      %v10143 = vpop.permute.xlu0 %10142
      %vm10144 = vcmask 916480
      %v10145 = vsel %vm10144, %v10113, %v10115
      %v10146 = vsel %vm10144, %v10117, %v10119
      %v10147 = vsel %vm10144, %v10121, %v10123
      %v10148 = vsel %vm10144, %v10125, %v10127
      %v10149 = vsel %vm10144, %v10129, %v10131
      %v10150 = vsel %vm10144, %v10133, %v10135
      %v10151 = vsel %vm10144, %v10137, %v10139
      %v10152 = vsel %vm10144, %v10141, %v10143
      %v10177 = vsel %vm10144, %v10115, %v10113
      %v10178 = vsel %vm10144, %v10119, %v10117
      %v10179 = vsel %vm10144, %v10123, %v10121
      %v10180 = vsel %vm10144, %v10127, %v10125
      %v10181 = vsel %vm10144, %v10131, %v10129
      %v10182 = vsel %vm10144, %v10135, %v10133
      %v10183 = vsel %vm10144, %v10139, %v10137
      %v10184 = vsel %vm10144, %v10143, %v10141
      %v10185 = vlaneseq
      %v10186 = vshrl.u32 %v10185, 7
      %v10187 = vsub.s32 7, %v10186
      %v10188 = vrot.slane %v8982, %v10187
      %v10189 = vlaneseq
      %v10190 = vshrl.u32 %v10189, 7
      %v10191 = vsub.s32 7, %v10190
      %v10192 = vrot.slane %v8983, %v10191
      %v10193 = vmul.f32 %v10145, %v10188
      %v10194 = vmul.f32 %v10177, %v10192
      %v10195 = vmul.f32 %v10146, %v10188
      %v10196 = vmul.f32 %v10178, %v10192
      %v10197 = vmul.f32 %v10147, %v10188
      %v10198 = vmul.f32 %v10179, %v10192
      %v10199 = vmul.f32 %v10148, %v10188
      %v10200 = vmul.f32 %v10180, %v10192
      %v10201 = vmul.f32 %v10149, %v10188
      %v10202 = vmul.f32 %v10181, %v10192
      %v10203 = vmul.f32 %v10150, %v10188
      %v10204 = vmul.f32 %v10182, %v10192
      %v10205 = vmul.f32 %v10151, %v10188
      %v10206 = vmul.f32 %v10183, %v10192
      %v10207 = vmul.f32 %v10152, %v10188
      %v10208 = vmul.f32 %v10184, %v10192
      %10209 = vset.pattern.permute.xlu0 7
      %10210 = vperm.xlu0 %10209, %v8974
      %v10211 = vpop.permute.xlu0 %10210
      %10213 = vset.pattern.permute.xlu0 7
      %10214 = vperm.xlu0 %10213, %v8975
      %v10215 = vpop.permute.xlu0 %10214
      %10217 = vset.pattern.permute.xlu0 7
      %10218 = vperm.xlu0 %10217, %v8976
      %v10219 = vpop.permute.xlu0 %10218
      %10221 = vset.pattern.permute.xlu0 7
      %10222 = vperm.xlu0 %10221, %v8977
      %v10223 = vpop.permute.xlu0 %10222
      %10225 = vset.pattern.permute.xlu0 7
      %10226 = vperm.xlu0 %10225, %v8978
      %v10227 = vpop.permute.xlu0 %10226
      %10229 = vset.pattern.permute.xlu0 7
      %10230 = vperm.xlu0 %10229, %v8979
      %v10231 = vpop.permute.xlu0 %10230
      %10233 = vset.pattern.permute.xlu0 7
      %10234 = vperm.xlu0 %10233, %v8980
      %v10235 = vpop.permute.xlu0 %10234
      %10237 = vset.pattern.permute.xlu0 7
      %10238 = vperm.xlu0 %10237, %v8981
      %v10239 = vpop.permute.xlu0 %10238
      %v10241 = vmul.f32 %v10211, %v10193
      %v10242 = vmul.f32 %v10211, %v10194
      %v10243 = vmul.f32 %v10215, %v10195
      %v10244 = vmul.f32 %v10215, %v10196
      %v10245 = vmul.f32 %v10219, %v10197
      %v10246 = vmul.f32 %v10219, %v10198
      %v10247 = vmul.f32 %v10223, %v10199
      %v10248 = vmul.f32 %v10223, %v10200
      %v10249 = vmul.f32 %v10227, %v10201
      %v10250 = vmul.f32 %v10227, %v10202
      %v10251 = vmul.f32 %v10231, %v10203
      %v10252 = vmul.f32 %v10231, %v10204
      %v10253 = vmul.f32 %v10235, %v10205
      %v10254 = vmul.f32 %v10235, %v10206
      %v10255 = vmul.f32 %v10239, %v10207
      %v10256 = vmul.f32 %v10239, %v10208
      %v10257 = vadd.f32 %v10096, %v10241
      %v10258 = vadd.f32 %v10097, %v10242
      %v10259 = vadd.f32 %v10098, %v10243
      %v10260 = vadd.f32 %v10099, %v10244
      %v10261 = vadd.f32 %v10100, %v10245
      %v10262 = vadd.f32 %v10101, %v10246
      %v10263 = vadd.f32 %v10102, %v10247
      %v10264 = vadd.f32 %v10103, %v10248
      %v10265 = vadd.f32 %v10104, %v10249
      %v10266 = vadd.f32 %v10105, %v10250
      %v10267 = vadd.f32 %v10106, %v10251
      %v10268 = vadd.f32 %v10107, %v10252
      %v10269 = vadd.f32 %v10108, %v10253
      %v10270 = vadd.f32 %v10109, %v10254
      %v10271 = vadd.f32 %v10110, %v10255
      %v10272 = vadd.f32 %v10111, %v10256
      %10273 = vrot.lane.b32.xlu0 %v598, 111
      %v10274 = vpop.permute.xlu0 %10273
      %10275 = vrot.lane.b32.xlu0 %v600, 111
      %v10276 = vpop.permute.xlu0 %10275
      %10277 = vrot.lane.b32.xlu0 %v604, 111
      %v10278 = vpop.permute.xlu0 %10277
      %10279 = vrot.lane.b32.xlu0 %v606, 111
      %v10280 = vpop.permute.xlu0 %10279
      %10281 = vrot.lane.b32.xlu0 %v610, 111
      %v10282 = vpop.permute.xlu0 %10281
      %10283 = vrot.lane.b32.xlu0 %v612, 111
      %v10284 = vpop.permute.xlu0 %10283
      %10285 = vrot.lane.b32.xlu0 %v616, 111
      %v10286 = vpop.permute.xlu0 %10285
      %10287 = vrot.lane.b32.xlu0 %v618, 111
      %v10288 = vpop.permute.xlu0 %10287
      %10289 = vrot.lane.b32.xlu0 %v622, 111
      %v10290 = vpop.permute.xlu0 %10289
      %10291 = vrot.lane.b32.xlu0 %v624, 111
      %v10292 = vpop.permute.xlu0 %10291
      %10293 = vrot.lane.b32.xlu0 %v628, 111
      %v10294 = vpop.permute.xlu0 %10293
      %10295 = vrot.lane.b32.xlu0 %v630, 111
      %v10296 = vpop.permute.xlu0 %10295
      %10297 = vrot.lane.b32.xlu0 %v634, 111
      %v10298 = vpop.permute.xlu0 %10297
      %10299 = vrot.lane.b32.xlu0 %v636, 111
      %v10300 = vpop.permute.xlu0 %10299
      %10301 = vrot.lane.b32.xlu0 %v640, 111
      %v10302 = vpop.permute.xlu0 %10301
      %10303 = vrot.lane.b32.xlu0 %v642, 111
      %v10304 = vpop.permute.xlu0 %10303
      %vm10305 = vcmask 908288
      %v10306 = vsel %vm10305, %v10274, %v10276
      %v10307 = vsel %vm10305, %v10278, %v10280
      %v10308 = vsel %vm10305, %v10282, %v10284
      %v10309 = vsel %vm10305, %v10286, %v10288
      %v10310 = vsel %vm10305, %v10290, %v10292
      %v10311 = vsel %vm10305, %v10294, %v10296
      %v10312 = vsel %vm10305, %v10298, %v10300
      %v10313 = vsel %vm10305, %v10302, %v10304
      %v10338 = vsel %vm10305, %v10276, %v10274
      %v10339 = vsel %vm10305, %v10280, %v10278
      %v10340 = vsel %vm10305, %v10284, %v10282
      %v10341 = vsel %vm10305, %v10288, %v10286
      %v10342 = vsel %vm10305, %v10292, %v10290
      %v10343 = vsel %vm10305, %v10296, %v10294
      %v10344 = vsel %vm10305, %v10300, %v10298
      %v10345 = vsel %vm10305, %v10304, %v10302
      %v10346 = vlaneseq
      %v10347 = vshrl.u32 %v10346, 7
      %v10348 = vsub.s32 0, %v10347
      %v10349 = vrot.slane %v8984, %v10348
      %v10350 = vlaneseq
      %v10351 = vshrl.u32 %v10350, 7
      %v10352 = vsub.s32 0, %v10351
      %v10353 = vrot.slane %v8985, %v10352
      %v10354 = vmul.f32 %v10306, %v10349
      %v10355 = vmul.f32 %v10338, %v10353
      %v10356 = vmul.f32 %v10307, %v10349
      %v10357 = vmul.f32 %v10339, %v10353
      %v10358 = vmul.f32 %v10308, %v10349
      %v10359 = vmul.f32 %v10340, %v10353
      %v10360 = vmul.f32 %v10309, %v10349
      %v10361 = vmul.f32 %v10341, %v10353
      %v10362 = vmul.f32 %v10310, %v10349
      %v10363 = vmul.f32 %v10342, %v10353
      %v10364 = vmul.f32 %v10311, %v10349
      %v10365 = vmul.f32 %v10343, %v10353
      %v10366 = vmul.f32 %v10312, %v10349
      %v10367 = vmul.f32 %v10344, %v10353
      %v10368 = vmul.f32 %v10313, %v10349
      %v10369 = vmul.f32 %v10345, %v10353
      %10370 = vset.pattern.permute.xlu0 8
      %10371 = vperm.xlu0 %10370, %v8974
      %v10372 = vpop.permute.xlu0 %10371
      %10374 = vset.pattern.permute.xlu0 8
      %10375 = vperm.xlu0 %10374, %v8975
      %v10376 = vpop.permute.xlu0 %10375
      %10378 = vset.pattern.permute.xlu0 8
      %10379 = vperm.xlu0 %10378, %v8976
      %v10380 = vpop.permute.xlu0 %10379
      %10382 = vset.pattern.permute.xlu0 8
      %10383 = vperm.xlu0 %10382, %v8977
      %v10384 = vpop.permute.xlu0 %10383
      %10386 = vset.pattern.permute.xlu0 8
      %10387 = vperm.xlu0 %10386, %v8978
      %v10388 = vpop.permute.xlu0 %10387
      %10390 = vset.pattern.permute.xlu0 8
      %10391 = vperm.xlu0 %10390, %v8979
      %v10392 = vpop.permute.xlu0 %10391
      %10394 = vset.pattern.permute.xlu0 8
      %10395 = vperm.xlu0 %10394, %v8980
      %v10396 = vpop.permute.xlu0 %10395
      %10398 = vset.pattern.permute.xlu0 8
      %10399 = vperm.xlu0 %10398, %v8981
      %v10400 = vpop.permute.xlu0 %10399
      %v10402 = vmul.f32 %v10372, %v10354
      %v10403 = vmul.f32 %v10372, %v10355
      %v10404 = vmul.f32 %v10376, %v10356
      %v10405 = vmul.f32 %v10376, %v10357
      %v10406 = vmul.f32 %v10380, %v10358
      %v10407 = vmul.f32 %v10380, %v10359
      %v10408 = vmul.f32 %v10384, %v10360
      %v10409 = vmul.f32 %v10384, %v10361
      %v10410 = vmul.f32 %v10388, %v10362
      %v10411 = vmul.f32 %v10388, %v10363
      %v10412 = vmul.f32 %v10392, %v10364
      %v10413 = vmul.f32 %v10392, %v10365
      %v10414 = vmul.f32 %v10396, %v10366
      %v10415 = vmul.f32 %v10396, %v10367
      %v10416 = vmul.f32 %v10400, %v10368
      %v10417 = vmul.f32 %v10400, %v10369
      %v10418 = vadd.f32 %v10257, %v10402
      %v10419 = vadd.f32 %v10258, %v10403
      %v10420 = vadd.f32 %v10259, %v10404
      %v10421 = vadd.f32 %v10260, %v10405
      %v10422 = vadd.f32 %v10261, %v10406
      %v10423 = vadd.f32 %v10262, %v10407
      %v10424 = vadd.f32 %v10263, %v10408
      %v10425 = vadd.f32 %v10264, %v10409
      %v10426 = vadd.f32 %v10265, %v10410
      %v10427 = vadd.f32 %v10266, %v10411
      %v10428 = vadd.f32 %v10267, %v10412
      %v10429 = vadd.f32 %v10268, %v10413
      %v10430 = vadd.f32 %v10269, %v10414
      %v10431 = vadd.f32 %v10270, %v10415
      %v10432 = vadd.f32 %v10271, %v10416
      %v10433 = vadd.f32 %v10272, %v10417
      %v10434 = vadd.f32 %v1680, %v10418
      %v10435 = vadd.f32 %v1682, %v10419
      %v10436 = vadd.f32 %v2724, %v10420
      %v10437 = vadd.f32 %v2726, %v10421
      %v10438 = vadd.f32 %v3762, %v10422
      %v10439 = vadd.f32 %v3764, %v10423
      %v10440 = vadd.f32 %v4806, %v10424
      %v10441 = vadd.f32 %v4808, %v10425
      %v10442 = vadd.f32 %v5844, %v10426
      %v10443 = vadd.f32 %v5846, %v10427
      %v10444 = vadd.f32 %v6888, %v10428
      %v10445 = vadd.f32 %v6890, %v10429
      %v10446 = vadd.f32 %v7926, %v10430
      %v10447 = vadd.f32 %v7928, %v10431
      %v10448 = vadd.f32 %v8970, %v10432
      %v10449 = vadd.f32 %v8972, %v10433
      %v10450 = vld [vmem:[%s5] sm:$0xff]
      %v10451 = vld [vmem:[%s5 + $0x8] sm:$0xff]
      %v10452 = vld [vmem:[%s5 + $0x10] sm:$0xff]
      %v10453 = vld [vmem:[%s5 + $0x18] sm:$0xff]
      %v10454 = vld [vmem:[%s5 + $0x20] sm:$0xff]
      %v10455 = vld [vmem:[%s5 + $0x28] sm:$0xff]
      %v10456 = vld [vmem:[%s5 + $0x30] sm:$0xff]
      %v10457 = vld [vmem:[%s5 + $0x38] sm:$0xff]
      %v10458 = vld [vmem:[%s6] sm:$0xff]
      %v10459 = vld [vmem:[%s6 + $0x8] sm:$0xff]
      %v10460 = vld [vmem:[%s6 + $0x10] sm:$0xff]
      %v10461 = vld [vmem:[%s6 + $0x18] sm:$0xff]
      %v10462 = vld [vmem:[%s6 + $0x20] sm:$0xff]
      %v10463 = vld [vmem:[%s6 + $0x28] sm:$0xff]
      %v10464 = vld [vmem:[%s6 + $0x30] sm:$0xff]
      %v10465 = vld [vmem:[%s6 + $0x38] sm:$0xff]
      %10467 = vset.pattern.permute.xlu0 0
      %10468 = vperm.xlu0 %10467, %v10458
      %v10469 = vpop.permute.xlu0 %10468
      %10472 = vset.pattern.permute.xlu0 0
      %10473 = vperm.xlu0 %10472, %v10459
      %v10474 = vpop.permute.xlu0 %10473
      %10477 = vset.pattern.permute.xlu0 0
      %10478 = vperm.xlu0 %10477, %v10460
      %v10479 = vpop.permute.xlu0 %10478
      %10482 = vset.pattern.permute.xlu0 0
      %10483 = vperm.xlu0 %10482, %v10461
      %v10484 = vpop.permute.xlu0 %10483
      %10487 = vset.pattern.permute.xlu0 0
      %10488 = vperm.xlu0 %10487, %v10462
      %v10489 = vpop.permute.xlu0 %10488
      %10492 = vset.pattern.permute.xlu0 0
      %10493 = vperm.xlu0 %10492, %v10463
      %v10494 = vpop.permute.xlu0 %10493
      %10497 = vset.pattern.permute.xlu0 0
      %10498 = vperm.xlu0 %10497, %v10464
      %v10499 = vpop.permute.xlu0 %10498
      %10502 = vset.pattern.permute.xlu0 0
      %10503 = vperm.xlu0 %10502, %v10465
      %v10504 = vpop.permute.xlu0 %10503
      %v10507 = vsel %vm434, %v10450, 0
      %v10510 = vsel %vm434, %v10451, 0
      %v10513 = vsel %vm434, %v10452, 0
      %v10516 = vsel %vm434, %v10453, 0
      %v10519 = vsel %vm434, %v10454, 0
      %v10522 = vsel %vm434, %v10455, 0
      %v10525 = vsel %vm434, %v10456, 0
      %v10528 = vsel %vm434, %v10457, 0
      %10530 = vmatprep.subr.mxu0 %v10435
      %10531 = vmatpush1.msra.mxu0 %v10434
      %10532 = vmatprep.subr.mxu0 %v10437
      %10533 = vmatpush1.msra.mxu0 %v10436
      %10534 = vmatprep.subr.mxu0 %v10439
      %10535 = vmatpush1.msra.mxu0 %v10438
      %10536 = vmatprep.subr.mxu0 %v10441
      %10537 = vmatpush1.msra.mxu0 %v10440
      %10538 = vmatprep.subr.mxu0 %v10443
      %10539 = vmatpush1.msra.mxu0 %v10442
      %10540 = vmatprep.subr.mxu0 %v10445
      %10541 = vmatpush1.msra.mxu0 %v10444
      %10542 = vmatprep.subr.mxu0 %v10447
      %10543 = vmatpush1.msra.mxu0 %v10446
      %10544 = vmatprep.subr.mxu0 %v10449
      %10545 = vmatpush1.msra.mxu0 %v10448
      %10546 = vmatprep.subr.mxu0 0.0
      %10547 = vmatpush1.msra.mxu0 0.0
      %10548 = vmatprep.subr.mxu0 0.0
      %10549 = vmatpush1.msra.mxu0 0.0
      %10550 = vmatprep.subr.mxu0 0.0
      %10551 = vmatpush1.msra.mxu0 0.0
      %10552 = vmatprep.subr.mxu0 0.0
      %10553 = vmatpush1.msra.mxu0 0.0
      %10554 = vmatprep.subr.mxu0 0.0
      %10555 = vmatpush1.msra.mxu0 0.0
      %10556 = vmatprep.subr.mxu0 0.0
      %10557 = vmatpush1.msra.mxu0 0.0
      %10558 = vmatprep.subr.mxu0 0.0
      %10559 = vmatpush1.msra.mxu0 0.0
      %10560 = vmatprep.subr.mxu0 0.0
      %10561 = vmatpush1.msra.mxu0 0.0
      %10562 = vmatprep.subr.mxu0 0.0
      %10563 = vmatpush1.msra.mxu0 0.0
      %10564 = vmatprep.subr.mxu0 0.0
      %10565 = vmatpush1.msra.mxu0 0.0
      %10566 = vmatprep.subr.mxu0 0.0
      %10567 = vmatpush1.msra.mxu0 0.0
      %10568 = vmatprep.subr.mxu0 0.0
      %10569 = vmatpush1.msra.mxu0 0.0
      %10570 = vmatprep.subr.mxu0 0.0
      %10571 = vmatpush1.msra.mxu0 0.0
      %10572 = vmatprep.subr.mxu0 0.0
      %10573 = vmatpush1.msra.mxu0 0.0
      %10574 = vmatprep.subr.mxu0 0.0
      %10575 = vmatpush1.msra.mxu0 0.0
      %10576 = vmatprep.subr.mxu0 0.0
      %10577 = vmatpush1.msra.mxu0 0.0
      %10578 = vmatprep.subr.mxu0 0.0
      %10579 = vmatpush1.msra.mxu0 0.0
      %10580 = vmatprep.subr.mxu0 0.0
      %10581 = vmatpush1.msra.mxu0 0.0
      %10582 = vmatprep.subr.mxu0 0.0
      %10583 = vmatpush1.msra.mxu0 0.0
      %10584 = vmatprep.subr.mxu0 0.0
      %10585 = vmatpush1.msra.mxu0 0.0
      %10586 = vmatprep.subr.mxu0 0.0
      %10587 = vmatpush1.msra.mxu0 0.0
      %10588 = vmatprep.subr.mxu0 0.0
      %10589 = vmatpush1.msra.mxu0 0.0
      %10590 = vmatprep.subr.mxu0 0.0
      %10591 = vmatpush1.msra.mxu0 0.0
      %10592 = vmatprep.subr.mxu0 0.0
      %10593 = vmatpush1.msra.mxu0 0.0
      %10594 = vmatprep.mubr.f32.mxu0 0.0
      %10595 = vmatmul.mubr.f32.gmra.mrb[0].mxu0 %v10507
      %v10596 = vpop.f32.mrb[0].mxu0
      %v10597 = vadd.f32 %v10469, %v10596
      %v10598 = vpop.f32.mrb[0].mxu0
      %v10599 = vadd.f32 %v10469, %v10598
      %10600 = vmatprep.mubr.f32.mxu0 0.0
      %10601 = vmatmul.mubr.f32.gmra.mrb[0].mxu0 %v10510
      %v10602 = vpop.f32.mrb[0].mxu0
      %v10603 = vadd.f32 %v10474, %v10602
      %v10604 = vpop.f32.mrb[0].mxu0
      %v10605 = vadd.f32 %v10474, %v10604
      %10606 = vmatprep.mubr.f32.mxu0 0.0
      %10607 = vmatmul.mubr.f32.gmra.mrb[0].mxu0 %v10513
      %v10608 = vpop.f32.mrb[0].mxu0
      %v10609 = vadd.f32 %v10479, %v10608
      %v10610 = vpop.f32.mrb[0].mxu0
      %v10611 = vadd.f32 %v10479, %v10610
      %10612 = vmatprep.mubr.f32.mxu0 0.0
      %10613 = vmatmul.mubr.f32.gmra.mrb[0].mxu0 %v10516
      %v10614 = vpop.f32.mrb[0].mxu0
      %v10615 = vadd.f32 %v10484, %v10614
      %v10616 = vpop.f32.mrb[0].mxu0
      %v10617 = vadd.f32 %v10484, %v10616
      %10618 = vmatprep.mubr.f32.mxu0 0.0
      %10619 = vmatmul.mubr.f32.gmra.mrb[0].mxu0 %v10519
      %v10620 = vpop.f32.mrb[0].mxu0
      %v10621 = vadd.f32 %v10489, %v10620
      %v10622 = vpop.f32.mrb[0].mxu0
      %v10623 = vadd.f32 %v10489, %v10622
      %10624 = vmatprep.mubr.f32.mxu0 0.0
      %10625 = vmatmul.mubr.f32.gmra.mrb[0].mxu0 %v10522
      %v10626 = vpop.f32.mrb[0].mxu0
      %v10627 = vadd.f32 %v10494, %v10626
      %v10628 = vpop.f32.mrb[0].mxu0
      %v10629 = vadd.f32 %v10494, %v10628
      %10630 = vmatprep.mubr.f32.mxu0 0.0
      %10631 = vmatmul.mubr.f32.gmra.mrb[0].mxu0 %v10525
      %v10632 = vpop.f32.mrb[0].mxu0
      %v10633 = vadd.f32 %v10499, %v10632
      %v10634 = vpop.f32.mrb[0].mxu0
      %v10635 = vadd.f32 %v10499, %v10634
      %10636 = vmatprep.mubr.f32.mxu0 0.0
      %10637 = vmatmul.mubr.f32.gmra.mrb[0].mxu0 %v10528
      %v10638 = vpop.f32.mrb[0].mxu0
      %v10639 = vadd.f32 %v10504, %v10638
      %v10640 = vpop.f32.mrb[0].mxu0
      %v10641 = vadd.f32 %v10504, %v10640
      %10642 = vdwg.mxu0
      %10643 = vst [vmem:[%s305] sm:$0xff] %v10597
      %10644 = vst [vmem:[%s305 + $0x8] sm:$0xff] %v10599
      %10645 = vst [vmem:[%s305 + $0x10] sm:$0xff] %v10603
      %10646 = vst [vmem:[%s305 + $0x18] sm:$0xff] %v10605
      %10647 = vst [vmem:[%s305 + $0x20] sm:$0xff] %v10609
      %10648 = vst [vmem:[%s305 + $0x28] sm:$0xff] %v10611
      %10649 = vst [vmem:[%s305 + $0x30] sm:$0xff] %v10615
      %10650 = vst [vmem:[%s305 + $0x38] sm:$0xff] %v10617
      %10651 = vst [vmem:[%s305 + $0x40] sm:$0xff] %v10621
      %10652 = vst [vmem:[%s305 + $0x48] sm:$0xff] %v10623
      %10653 = vst [vmem:[%s305 + $0x50] sm:$0xff] %v10627
      %10654 = vst [vmem:[%s305 + $0x58] sm:$0xff] %v10629
      %10655 = vst [vmem:[%s305 + $0x60] sm:$0xff] %v10633
      %10656 = vst [vmem:[%s305 + $0x68] sm:$0xff] %v10635
      %10657 = vst [vmem:[%s305 + $0x70] sm:$0xff] %v10639
      %10658 = vst [vmem:[%s305 + $0x78] sm:$0xff] %v10641
      %p10659 = scmp.lt.s32.totalorder %s19, 1
      %s10660 = scalar_select %p10659, %s19, 1
      %s10661 = smul.addr %s10660, 16
      %s10662 = smul.addr %s10661, 8
      %s10663 = scalar_lea.vmem %s8, %s10662
      // Predicated region
      $region53: #{attention_forward.1} parent=51 // pred_check
        %p10664 = pneg %p210
      $region54: #{attention_forward.1} parent=51 // pred_check_branch
        %10666 = sbr.rel (%p10664) target = $region56
      $region55: #{attention_forward.1} parent=51 // pred_region
        _
      $region56: #{attention_forward.1} parent=51 // pred_fallthru
        _
    $region52: #{attention_forward.1} parent=5 // pred_fallthru
      _
    %p10667 = scmp.le.s32.totalorder 2, %s14
    // Predicated region
    $region57: #{attention_forward.1} parent=5 // pred_check
      %p10668 = pneg %p10667
    $region58: #{attention_forward.1} parent=5 // pred_check_branch
      %10670 = sbr.rel (%p10668) target = $region60
    $region59: #{attention_forward.1} parent=5 // pred_region
      %s10671 = ssub.s32 %s14, 2
      // Predicated region
      $region61: #{attention_forward.1} parent=59 // pred_check
        %p10672 = pneg %p216
      $region62: #{attention_forward.1} parent=59 // pred_check_branch
        %10674 = sbr.rel (%p10672) target = $region64
      $region63: #{attention_forward.1} parent=59 // pred_region
        %p10675 = scmp.lt.s32.totalorder %s20, 1
        %s10676 = scalar_select %p10675, %s20, 1
        %s10677 = smul.addr %s10676, 16
        %s10678 = smul.addr %s10677, 8
        %s10679 = scalar_lea.vmem %s8, %s10678
      $region64: #{attention_forward.1} parent=59 // pred_fallthru
        _
    $region60: #{attention_forward.1} parent=5 // pred_fallthru
      _
  $region6: #{attention_forward.1} parent=0 // loop_footer
    %s18 = sadd.s32 1, %s14
  $region7: #{attention_forward.1} parent=0 // loop_footer_branch
    %13 = sbr.rel target = $region3
  $region8: #{attention_forward.1} parent=0 // loop_exit
    _

</llo_original>
